<compile_context>
chip_gen: v6e
topology: v6e:2x2x1
jax: 0.10.0
libtpu: 0.0.40
codegen_flags: <defaults>
</compile_context>

<pallas_src>
from functools import partial

import jax
import jax.numpy as jnp
from jax.experimental import pallas as pl
from jax.experimental.pallas import tpu as pltpu

EPS = 1e-5


def _instance_norm_2d(v, inv_hw):
    """Per-channel instance norm of a (H*W, C) tile (biased variance)."""
    mean = jnp.sum(v, axis=0, keepdims=True) * inv_hw          # (1, C)
    c = v - mean
    var = jnp.sum(c * c, axis=0, keepdims=True) * inv_hw       # (1, C)
    return c * jax.lax.rsqrt(var + EPS)


def resblock_kernel(xp_ref, w1_ref, w2_ref, o_ref, pscr, *, H, W, C):
    # xp_ref : (H+2, W+2, C)  spatially pre-padded input for one image
    # w*_ref : (9, C, C)      weights; w[dy*3+dx, ci, co]
    # o_ref  : (H, W, C)
    # pscr   : (H+2, W+2, C)  VMEM scratch holding the zero-padded intermediate
    inv_hw = 1.0 / float(H * W)

    # Zero only the 1-pixel border of the scratch (interior is fully overwritten
    # below).  Done every step so correctness does not depend on which core runs
    # which grid index when the batch axis is sharded across TensorCores.
    zr = jnp.zeros((1, W + 2, C), jnp.float32)
    zc = jnp.zeros((H + 2, 1, C), jnp.float32)
    pscr[0:1, :, :] = zr
    pscr[H + 1:H + 2, :, :] = zr
    pscr[:, 0:1, :] = zc
    pscr[:, W + 1:W + 2, :] = zc

    # Center patch of the input: reused for the (1,1) conv tap and the residual.
    x_center_2d = xp_ref[1:H + 1, 1:W + 1, :].reshape(H * W, C)

    # ---- conv1: 3x3 "same" as 9 MXU matmuls --------------------------------
    acc1 = jnp.zeros((H * W, C), jnp.float32)
    for dy in range(3):
        for dx in range(3):
            t = dy * 3 + dx
            if dy == 1 and dx == 1:
                patch2d = x_center_2d
            else:
                patch2d = xp_ref[dy:dy + H, dx:dx + W, :].reshape(H * W, C)
            acc1 = acc1 + jnp.dot(patch2d, w1_ref[t],
                                  preferred_element_type=jnp.float32)

    h = _instance_norm_2d(acc1, inv_hw)
    h = jnp.maximum(h, 0.0)                                     # ReLU

    # Write the intermediate into the padded scratch interior.
    pscr[1:H + 1, 1:W + 1, :] = h.reshape(H, W, C)

    # ---- conv2: 3x3 "same" as 9 MXU matmuls --------------------------------
    acc2 = jnp.zeros((H * W, C), jnp.float32)
    for dy in range(3):
        for dx in range(3):
            t = dy * 3 + dx
            patch2d = pscr[dy:dy + H, dx:dx + W, :].reshape(H * W, C)
            acc2 = acc2 + jnp.dot(patch2d, w2_ref[t],
                                  preferred_element_type=jnp.float32)

    h2 = _instance_norm_2d(acc2, inv_hw)

    # ---- residual add -------------------------------------------------------
    o_ref[...] = (x_center_2d + h2).reshape(H, W, C)


def resblock_forward(x_nchw, w1_oihw, w2_oihw):
    """Pallas ResBlock forward. Inputs/outputs use PyTorch NCHW convention."""
    N, C, H, W = x_nchw.shape
    x = jnp.transpose(x_nchw, (0, 2, 3, 1)).astype(jnp.float32)        # NHWC
    xp = jnp.pad(x, ((0, 0), (1, 1), (1, 1), (0, 0)))                  # pad=1

    def prep_w(w):  # OIHW -> (ky, kx, Cin, Cout) -> (9, Cin, Cout)
        return jnp.transpose(w, (2, 3, 1, 0)).reshape(9, C, C).astype(jnp.float32)

    w1 = prep_w(w1_oihw)
    w2 = prep_w(w2_oihw)

    kernel = partial(resblock_kernel, H=H, W=W, C=C)
    out_nhwc = pl.pallas_call(
        kernel,
        out_shape=jax.ShapeDtypeStruct((N, H, W, C), jnp.float32),
        grid_spec=pltpu.PrefetchScalarGridSpec(
            num_scalar_prefetch=0,
            grid=(N,),
            in_specs=[
                pl.BlockSpec((None, H + 2, W + 2, C), lambda n: (n, 0, 0, 0)),
                pl.BlockSpec((9, C, C), lambda n: (0, 0, 0)),
                pl.BlockSpec((9, C, C), lambda n: (0, 0, 0)),
            ],
            out_specs=pl.BlockSpec((None, H, W, C), lambda n: (n, 0, 0, 0)),
            scratch_shapes=[pltpu.VMEM((H + 2, W + 2, C), jnp.float32)],
        ),
        compiler_params=pltpu.CompilerParams(
            dimension_semantics=("parallel",)),
    )(xp, w1, w2)
    return jnp.transpose(out_nhwc, (0, 3, 1, 2))


def resblock_ref(x_nchw, w1, w2):
    """Pure-JAX reference (NCHW), mirrors the PyTorch module."""
    def conv(v, w):
        return jax.lax.conv_general_dilated(
            v, w, window_strides=(1, 1), padding=((1, 1), (1, 1)),
            dimension_numbers=("NCHW", "OIHW", "NCHW"))

    def inorm(v):
        m = jnp.mean(v, axis=(2, 3), keepdims=True)
        var = jnp.mean((v - m) ** 2, axis=(2, 3), keepdims=True)
        return (v - m) / jnp.sqrt(var + EPS)

    h = conv(x_nchw, w1)
    h = inorm(h)
    h = jnp.maximum(h, 0.0)
    h = conv(h, w2)
    h = inorm(h)
    return x_nchw + h


if __name__ == "__main__":
    key = jax.random.PRNGKey(0)
    kx, k1, k2 = jax.random.split(key, 3)

    N, C, H, W = 2, 4, 16, 16
    x = jax.random.normal(kx, (N, C, H, W), dtype=jnp.float32)

    # kaiming_normal_ (fan_in mode, leaky_relu a=0 => gain sqrt(2)), bias=False
    fan_in = C * 3 * 3
    std = (2.0 / fan_in) ** 0.5
    w1 = std * jax.random.normal(k1, (C, C, 3, 3), dtype=jnp.float32)
    w2 = std * jax.random.normal(k2, (C, C, 3, 3), dtype=jnp.float32)

    out = jax.block_until_ready(resblock_forward(x, w1, w2))
    ref = jax.block_until_ready(resblock_ref(x, w1, w2))

    err = float(jnp.max(jnp.abs(out - ref)))
    assert out.shape == x.shape, f"shape mismatch: {out.shape} vs {x.shape}"
    assert err < 1e-3, f"max abs err {err}"
    print("KERNEL_OK")
</pallas_src>

<mosaic_0001>
module attributes {stable_mosaic.version = 11 : i64} {
  func.func @resblock_kernel(%arg0: i32, %arg1: memref<1x18x18x4xf32, #tpu.memory_space<vmem>>, %arg2: memref<9x4x4xf32, #tpu.memory_space<vmem>>, %arg3: memref<9x4x4xf32, #tpu.memory_space<vmem>>, %arg4: memref<1x16x16x4xf32, #tpu.memory_space<vmem>>, %arg5: memref<18x18x4xf32, #tpu.memory_space<vmem>>) attributes {dimension_semantics = [#tpu.dimension_semantics<parallel>], iteration_bounds = array<i64: 2>, scalar_prefetch = 0 : i64, scratch_operands = 1 : i64, tpu.core_type = #tpu.core_type<tc>, window_params = [{transform_indices = @transform_0, window_bounds = array<i64: 1, 18, 18, 4>}, {pipeline_mode = #tpu.pipeline_mode<synchronous>, transform_indices = @transform_1, window_bounds = array<i64: 9, 4, 4>}, {pipeline_mode = #tpu.pipeline_mode<synchronous>, transform_indices = @transform_2, window_bounds = array<i64: 9, 4, 4>}, {transform_indices = @transform_3, window_bounds = array<i64: 1, 16, 16, 4>}]} {
    %cst = arith.constant 0.000000e+00 : f32
    %0 = vector.broadcast %cst : f32 to vector<1x18x4xf32>
    %cst_0 = arith.constant 0.000000e+00 : f32
    %1 = vector.broadcast %cst_0 : f32 to vector<18x1x4xf32>
    %c0 = arith.constant 0 : index
    %c0_1 = arith.constant 0 : index
    %c0_2 = arith.constant 0 : index
    %2 = vector.load %arg5[%c0, %c0_1, %c0_2] : memref<18x18x4xf32, #tpu.memory_space<vmem>>, vector<1x18x4xf32>
    tpu.vector_store %arg5[%c0, %c0_1, %c0_2], %0 {strides = array<i32>} : memref<18x18x4xf32, #tpu.memory_space<vmem>>, vector<1x18x4xf32>,
    %c17 = arith.constant 17 : index
    %c0_3 = arith.constant 0 : index
    %c0_4 = arith.constant 0 : index
    %3 = vector.load %arg5[%c17, %c0_3, %c0_4] : memref<18x18x4xf32, #tpu.memory_space<vmem>>, vector<1x18x4xf32>
    tpu.vector_store %arg5[%c17, %c0_3, %c0_4], %0 {strides = array<i32>} : memref<18x18x4xf32, #tpu.memory_space<vmem>>, vector<1x18x4xf32>,
    %c0_5 = arith.constant 0 : index
    %c0_6 = arith.constant 0 : index
    %c0_7 = arith.constant 0 : index
    %4 = vector.load %arg5[%c0_5, %c0_6, %c0_7] : memref<18x18x4xf32, #tpu.memory_space<vmem>>, vector<18x1x4xf32>
    tpu.vector_store %arg5[%c0_5, %c0_6, %c0_7], %1 {strides = array<i32>} : memref<18x18x4xf32, #tpu.memory_space<vmem>>, vector<18x1x4xf32>,
    %c0_8 = arith.constant 0 : index
    %c17_9 = arith.constant 17 : index
    %c0_10 = arith.constant 0 : index
    %5 = vector.load %arg5[%c0_8, %c17_9, %c0_10] : memref<18x18x4xf32, #tpu.memory_space<vmem>>, vector<18x1x4xf32>
    tpu.vector_store %arg5[%c0_8, %c17_9, %c0_10], %1 {strides = array<i32>} : memref<18x18x4xf32, #tpu.memory_space<vmem>>, vector<18x1x4xf32>,
    %c0_11 = arith.constant 0 : index
    %c1 = arith.constant 1 : index
    %c1_12 = arith.constant 1 : index
    %c0_13 = arith.constant 0 : index
    %6 = vector.load %arg1[%c0_11, %c1, %c1_12, %c0_13] : memref<1x18x18x4xf32, #tpu.memory_space<vmem>>, vector<1x16x16x4xf32>
    %7 = vector.shape_cast %6 : vector<1x16x16x4xf32> to vector<16x16x4xf32>
    %8 = vector.shape_cast %7 : vector<16x16x4xf32> to vector<256x4xf32>
    %cst_14 = arith.constant 0.000000e+00 : f32
    %9 = vector.broadcast %cst_14 : f32 to vector<256x4xf32>
    %c0_15 = arith.constant 0 : index
    %c0_16 = arith.constant 0 : index
    %c0_17 = arith.constant 0 : index
    %c0_18 = arith.constant 0 : index
    %10 = vector.load %arg1[%c0_15, %c0_16, %c0_17, %c0_18] : memref<1x18x18x4xf32, #tpu.memory_space<vmem>>, vector<1x16x16x4xf32>
    %11 = vector.shape_cast %10 : vector<1x16x16x4xf32> to vector<16x16x4xf32>
    %12 = vector.shape_cast %11 : vector<16x16x4xf32> to vector<256x4xf32>
    %c0_19 = arith.constant 0 : index
    %c0_20 = arith.constant 0 : index
    %c0_21 = arith.constant 0 : index
    %13 = vector.load %arg2[%c0_19, %c0_20, %c0_21] : memref<9x4x4xf32, #tpu.memory_space<vmem>>, vector<1x4x4xf32>
    %14 = vector.shape_cast %13 : vector<1x4x4xf32> to vector<4x4xf32>
    %cst_22 = arith.constant dense<0.000000e+00> : vector<256x4xf32>
    %15 = tpu.matmul %12, %14, %cst_22 {dimension_numbers = #tpu.dot_dimension_numbers<[1], [0], [0], [1], [0, 0, 1, 1], [], []>} : vector<256x4xf32>, vector<4x4xf32>, vector<256x4xf32> -> vector<256x4xf32>
    %16 = arith.addf %9, %15 : vector<256x4xf32>
    %c0_23 = arith.constant 0 : index
    %c0_24 = arith.constant 0 : index
    %c1_25 = arith.constant 1 : index
    %c0_26 = arith.constant 0 : index
    %17 = vector.load %arg1[%c0_23, %c0_24, %c1_25, %c0_26] : memref<1x18x18x4xf32, #tpu.memory_space<vmem>>, vector<1x16x16x4xf32>
    %18 = vector.shape_cast %17 : vector<1x16x16x4xf32> to vector<16x16x4xf32>
    %19 = vector.shape_cast %18 : vector<16x16x4xf32> to vector<256x4xf32>
    %c1_27 = arith.constant 1 : index
    %c0_28 = arith.constant 0 : index
    %c0_29 = arith.constant 0 : index
    %20 = vector.load %arg2[%c1_27, %c0_28, %c0_29] : memref<9x4x4xf32, #tpu.memory_space<vmem>>, vector<1x4x4xf32>
    %21 = vector.shape_cast %20 : vector<1x4x4xf32> to vector<4x4xf32>
    %cst_30 = arith.constant dense<0.000000e+00> : vector<256x4xf32>
    %22 = tpu.matmul %19, %21, %cst_30 {dimension_numbers = #tpu.dot_dimension_numbers<[1], [0], [0], [1], [0, 0, 1, 1], [], []>} : vector<256x4xf32>, vector<4x4xf32>, vector<256x4xf32> -> vector<256x4xf32>
    %23 = arith.addf %16, %22 : vector<256x4xf32>
    %c0_31 = arith.constant 0 : index
    %c0_32 = arith.constant 0 : index
    %c2 = arith.constant 2 : index
    %c0_33 = arith.constant 0 : index
    %24 = vector.load %arg1[%c0_31, %c0_32, %c2, %c0_33] : memref<1x18x18x4xf32, #tpu.memory_space<vmem>>, vector<1x16x16x4xf32>
    %25 = vector.shape_cast %24 : vector<1x16x16x4xf32> to vector<16x16x4xf32>
    %26 = vector.shape_cast %25 : vector<16x16x4xf32> to vector<256x4xf32>
    %c2_34 = arith.constant 2 : index
    %c0_35 = arith.constant 0 : index
    %c0_36 = arith.constant 0 : index
    %27 = vector.load %arg2[%c2_34, %c0_35, %c0_36] : memref<9x4x4xf32, #tpu.memory_space<vmem>>, vector<1x4x4xf32>
    %28 = vector.shape_cast %27 : vector<1x4x4xf32> to vector<4x4xf32>
    %cst_37 = arith.constant dense<0.000000e+00> : vector<256x4xf32>
    %29 = tpu.matmul %26, %28, %cst_37 {dimension_numbers = #tpu.dot_dimension_numbers<[1], [0], [0], [1], [0, 0, 1, 1], [], []>} : vector<256x4xf32>, vector<4x4xf32>, vector<256x4xf32> -> vector<256x4xf32>
    %30 = arith.addf %23, %29 : vector<256x4xf32>
    %c0_38 = arith.constant 0 : index
    %c1_39 = arith.constant 1 : index
    %c0_40 = arith.constant 0 : index
    %c0_41 = arith.constant 0 : index
    %31 = vector.load %arg1[%c0_38, %c1_39, %c0_40, %c0_41] : memref<1x18x18x4xf32, #tpu.memory_space<vmem>>, vector<1x16x16x4xf32>
    %32 = vector.shape_cast %31 : vector<1x16x16x4xf32> to vector<16x16x4xf32>
    %33 = vector.shape_cast %32 : vector<16x16x4xf32> to vector<256x4xf32>
    %c3 = arith.constant 3 : index
    %c0_42 = arith.constant 0 : index
    %c0_43 = arith.constant 0 : index
    %34 = vector.load %arg2[%c3, %c0_42, %c0_43] : memref<9x4x4xf32, #tpu.memory_space<vmem>>, vector<1x4x4xf32>
    %35 = vector.shape_cast %34 : vector<1x4x4xf32> to vector<4x4xf32>
    %cst_44 = arith.constant dense<0.000000e+00> : vector<256x4xf32>
    %36 = tpu.matmul %33, %35, %cst_44 {dimension_numbers = #tpu.dot_dimension_numbers<[1], [0], [0], [1], [0, 0, 1, 1], [], []>} : vector<256x4xf32>, vector<4x4xf32>, vector<256x4xf32> -> vector<256x4xf32>
    %37 = arith.addf %30, %36 : vector<256x4xf32>
    %c4 = arith.constant 4 : index
    %c0_45 = arith.constant 0 : index
    %c0_46 = arith.constant 0 : index
    %38 = vector.load %arg2[%c4, %c0_45, %c0_46] : memref<9x4x4xf32, #tpu.memory_space<vmem>>, vector<1x4x4xf32>
    %39 = vector.shape_cast %38 : vector<1x4x4xf32> to vector<4x4xf32>
    %cst_47 = arith.constant dense<0.000000e+00> : vector<256x4xf32>
    %40 = tpu.matmul %8, %39, %cst_47 {dimension_numbers = #tpu.dot_dimension_numbers<[1], [0], [0], [1], [0, 0, 1, 1], [], []>} : vector<256x4xf32>, vector<4x4xf32>, vector<256x4xf32> -> vector<256x4xf32>
    %41 = arith.addf %37, %40 : vector<256x4xf32>
    %c0_48 = arith.constant 0 : index
    %c1_49 = arith.constant 1 : index
    %c2_50 = arith.constant 2 : index
    %c0_51 = arith.constant 0 : index
    %42 = vector.load %arg1[%c0_48, %c1_49, %c2_50, %c0_51] : memref<1x18x18x4xf32, #tpu.memory_space<vmem>>, vector<1x16x16x4xf32>
    %43 = vector.shape_cast %42 : vector<1x16x16x4xf32> to vector<16x16x4xf32>
    %44 = vector.shape_cast %43 : vector<16x16x4xf32> to vector<256x4xf32>
    %c5 = arith.constant 5 : index
    %c0_52 = arith.constant 0 : index
    %c0_53 = arith.constant 0 : index
    %45 = vector.load %arg2[%c5, %c0_52, %c0_53] : memref<9x4x4xf32, #tpu.memory_space<vmem>>, vector<1x4x4xf32>
    %46 = vector.shape_cast %45 : vector<1x4x4xf32> to vector<4x4xf32>
    %cst_54 = arith.constant dense<0.000000e+00> : vector<256x4xf32>
    %47 = tpu.matmul %44, %46, %cst_54 {dimension_numbers = #tpu.dot_dimension_numbers<[1], [0], [0], [1], [0, 0, 1, 1], [], []>} : vector<256x4xf32>, vector<4x4xf32>, vector<256x4xf32> -> vector<256x4xf32>
    %48 = arith.addf %41, %47 : vector<256x4xf32>
    %c0_55 = arith.constant 0 : index
    %c2_56 = arith.constant 2 : index
    %c0_57 = arith.constant 0 : index
    %c0_58 = arith.constant 0 : index
    %49 = vector.load %arg1[%c0_55, %c2_56, %c0_57, %c0_58] : memref<1x18x18x4xf32, #tpu.memory_space<vmem>>, vector<1x16x16x4xf32>
    %50 = vector.shape_cast %49 : vector<1x16x16x4xf32> to vector<16x16x4xf32>
    %51 = vector.shape_cast %50 : vector<16x16x4xf32> to vector<256x4xf32>
    %c6 = arith.constant 6 : index
    %c0_59 = arith.constant 0 : index
    %c0_60 = arith.constant 0 : index
    %52 = vector.load %arg2[%c6, %c0_59, %c0_60] : memref<9x4x4xf32, #tpu.memory_space<vmem>>, vector<1x4x4xf32>
    %53 = vector.shape_cast %52 : vector<1x4x4xf32> to vector<4x4xf32>
    %cst_61 = arith.constant dense<0.000000e+00> : vector<256x4xf32>
    %54 = tpu.matmul %51, %53, %cst_61 {dimension_numbers = #tpu.dot_dimension_numbers<[1], [0], [0], [1], [0, 0, 1, 1], [], []>} : vector<256x4xf32>, vector<4x4xf32>, vector<256x4xf32> -> vector<256x4xf32>
    %55 = arith.addf %48, %54 : vector<256x4xf32>
    %c0_62 = arith.constant 0 : index
    %c2_63 = arith.constant 2 : index
    %c1_64 = arith.constant 1 : index
    %c0_65 = arith.constant 0 : index
    %56 = vector.load %arg1[%c0_62, %c2_63, %c1_64, %c0_65] : memref<1x18x18x4xf32, #tpu.memory_space<vmem>>, vector<1x16x16x4xf32>
    %57 = vector.shape_cast %56 : vector<1x16x16x4xf32> to vector<16x16x4xf32>
    %58 = vector.shape_cast %57 : vector<16x16x4xf32> to vector<256x4xf32>
    %c7 = arith.constant 7 : index
    %c0_66 = arith.constant 0 : index
    %c0_67 = arith.constant 0 : index
    %59 = vector.load %arg2[%c7, %c0_66, %c0_67] : memref<9x4x4xf32, #tpu.memory_space<vmem>>, vector<1x4x4xf32>
    %60 = vector.shape_cast %59 : vector<1x4x4xf32> to vector<4x4xf32>
    %cst_68 = arith.constant dense<0.000000e+00> : vector<256x4xf32>
    %61 = tpu.matmul %58, %60, %cst_68 {dimension_numbers = #tpu.dot_dimension_numbers<[1], [0], [0], [1], [0, 0, 1, 1], [], []>} : vector<256x4xf32>, vector<4x4xf32>, vector<256x4xf32> -> vector<256x4xf32>
    %62 = arith.addf %55, %61 : vector<256x4xf32>
    %c0_69 = arith.constant 0 : index
    %c2_70 = arith.constant 2 : index
    %c2_71 = arith.constant 2 : index
    %c0_72 = arith.constant 0 : index
    %63 = vector.load %arg1[%c0_69, %c2_70, %c2_71, %c0_72] : memref<1x18x18x4xf32, #tpu.memory_space<vmem>>, vector<1x16x16x4xf32>
    %64 = vector.shape_cast %63 : vector<1x16x16x4xf32> to vector<16x16x4xf32>
    %65 = vector.shape_cast %64 : vector<16x16x4xf32> to vector<256x4xf32>
    %c8 = arith.constant 8 : index
    %c0_73 = arith.constant 0 : index
    %c0_74 = arith.constant 0 : index
    %66 = vector.load %arg2[%c8, %c0_73, %c0_74] : memref<9x4x4xf32, #tpu.memory_space<vmem>>, vector<1x4x4xf32>
    %67 = vector.shape_cast %66 : vector<1x4x4xf32> to vector<4x4xf32>
    %cst_75 = arith.constant dense<0.000000e+00> : vector<256x4xf32>
    %68 = tpu.matmul %65, %67, %cst_75 {dimension_numbers = #tpu.dot_dimension_numbers<[1], [0], [0], [1], [0, 0, 1, 1], [], []>} : vector<256x4xf32>, vector<4x4xf32>, vector<256x4xf32> -> vector<256x4xf32>
    %69 = arith.addf %62, %68 : vector<256x4xf32>
    %cst_76 = arith.constant dense<0.000000e+00> : vector<4xf32>
    %70 = vector.multi_reduction <add>, %69, %cst_76 [0] : vector<256x4xf32> to vector<4xf32>
    %71 = vector.shape_cast %70 : vector<4xf32> to vector<1x4xf32>
    %cst_77 = arith.constant 3.906250e-03 : f32
    %72 = vector.broadcast %cst_77 : f32 to vector<1x4xf32>
    %73 = arith.mulf %71, %72 : vector<1x4xf32>
    %74 = vector.broadcast %73 : vector<1x4xf32> to vector<256x4xf32>
    %75 = arith.subf %69, %74 : vector<256x4xf32>
    %76 = arith.mulf %75, %75 : vector<256x4xf32>
    %cst_78 = arith.constant dense<0.000000e+00> : vector<4xf32>
    %77 = vector.multi_reduction <add>, %76, %cst_78 [0] : vector<256x4xf32> to vector<4xf32>
    %78 = vector.shape_cast %77 : vector<4xf32> to vector<1x4xf32>
    %cst_79 = arith.constant 3.906250e-03 : f32
    %79 = vector.broadcast %cst_79 : f32 to vector<1x4xf32>
    %80 = arith.mulf %78, %79 : vector<1x4xf32>
    %cst_80 = arith.constant 9.99999974E-6 : f32
    %81 = vector.broadcast %cst_80 : f32 to vector<1x4xf32>
    %82 = arith.addf %80, %81 : vector<1x4xf32>
    %83 = math.rsqrt %82 : vector<1x4xf32>
    %84 = vector.broadcast %83 : vector<1x4xf32> to vector<256x4xf32>
    %85 = arith.mulf %75, %84 : vector<256x4xf32>
    %cst_81 = arith.constant 0.000000e+00 : f32
    %86 = vector.broadcast %cst_81 : f32 to vector<256x4xf32>
    %87 = arith.maximumf %85, %86 : vector<256x4xf32>
    %88 = vector.shape_cast %87 : vector<256x4xf32> to vector<16x16x4xf32>
    %c1_82 = arith.constant 1 : index
    %c1_83 = arith.constant 1 : index
    %c0_84 = arith.constant 0 : index
    %89 = vector.load %arg5[%c1_82, %c1_83, %c0_84] : memref<18x18x4xf32, #tpu.memory_space<vmem>>, vector<16x16x4xf32>
    tpu.vector_store %arg5[%c1_82, %c1_83, %c0_84], %88 {strides = array<i32>} : memref<18x18x4xf32, #tpu.memory_space<vmem>>, vector<16x16x4xf32>,
    %cst_85 = arith.constant 0.000000e+00 : f32
    %90 = vector.broadcast %cst_85 : f32 to vector<256x4xf32>
    %c0_86 = arith.constant 0 : index
    %c0_87 = arith.constant 0 : index
    %c0_88 = arith.constant 0 : index
    %91 = vector.load %arg5[%c0_86, %c0_87, %c0_88] : memref<18x18x4xf32, #tpu.memory_space<vmem>>, vector<16x16x4xf32>
    %92 = vector.shape_cast %91 : vector<16x16x4xf32> to vector<256x4xf32>
    %c0_89 = arith.constant 0 : index
    %c0_90 = arith.constant 0 : index
    %c0_91 = arith.constant 0 : index
    %93 = vector.load %arg3[%c0_89, %c0_90, %c0_91] : memref<9x4x4xf32, #tpu.memory_space<vmem>>, vector<1x4x4xf32>
    %94 = vector.shape_cast %93 : vector<1x4x4xf32> to vector<4x4xf32>
    %cst_92 = arith.constant dense<0.000000e+00> : vector<256x4xf32>
    %95 = tpu.matmul %92, %94, %cst_92 {dimension_numbers = #tpu.dot_dimension_numbers<[1], [0], [0], [1], [0, 0, 1, 1], [], []>} : vector<256x4xf32>, vector<4x4xf32>, vector<256x4xf32> -> vector<256x4xf32>
    %96 = arith.addf %90, %95 : vector<256x4xf32>
    %c0_93 = arith.constant 0 : index
    %c1_94 = arith.constant 1 : index
    %c0_95 = arith.constant 0 : index
    %97 = vector.load %arg5[%c0_93, %c1_94, %c0_95] : memref<18x18x4xf32, #tpu.memory_space<vmem>>, vector<16x16x4xf32>
    %98 = vector.shape_cast %97 : vector<16x16x4xf32> to vector<256x4xf32>
    %c1_96 = arith.constant 1 : index
    %c0_97 = arith.constant 0 : index
    %c0_98 = arith.constant 0 : index
    %99 = vector.load %arg3[%c1_96, %c0_97, %c0_98] : memref<9x4x4xf32, #tpu.memory_space<vmem>>, vector<1x4x4xf32>
    %100 = vector.shape_cast %99 : vector<1x4x4xf32> to vector<4x4xf32>
    %cst_99 = arith.constant dense<0.000000e+00> : vector<256x4xf32>
    %101 = tpu.matmul %98, %100, %cst_99 {dimension_numbers = #tpu.dot_dimension_numbers<[1], [0], [0], [1], [0, 0, 1, 1], [], []>} : vector<256x4xf32>, vector<4x4xf32>, vector<256x4xf32> -> vector<256x4xf32>
    %102 = arith.addf %96, %101 : vector<256x4xf32>
    %c0_100 = arith.constant 0 : index
    %c2_101 = arith.constant 2 : index
    %c0_102 = arith.constant 0 : index
    %103 = vector.load %arg5[%c0_100, %c2_101, %c0_102] : memref<18x18x4xf32, #tpu.memory_space<vmem>>, vector<16x16x4xf32>
    %104 = vector.shape_cast %103 : vector<16x16x4xf32> to vector<256x4xf32>
    %c2_103 = arith.constant 2 : index
    %c0_104 = arith.constant 0 : index
    %c0_105 = arith.constant 0 : index
    %105 = vector.load %arg3[%c2_103, %c0_104, %c0_105] : memref<9x4x4xf32, #tpu.memory_space<vmem>>, vector<1x4x4xf32>
    %106 = vector.shape_cast %105 : vector<1x4x4xf32> to vector<4x4xf32>
    %cst_106 = arith.constant dense<0.000000e+00> : vector<256x4xf32>
    %107 = tpu.matmul %104, %106, %cst_106 {dimension_numbers = #tpu.dot_dimension_numbers<[1], [0], [0], [1], [0, 0, 1, 1], [], []>} : vector<256x4xf32>, vector<4x4xf32>, vector<256x4xf32> -> vector<256x4xf32>
    %108 = arith.addf %102, %107 : vector<256x4xf32>
    %c1_107 = arith.constant 1 : index
    %c0_108 = arith.constant 0 : index
    %c0_109 = arith.constant 0 : index
    %109 = vector.load %arg5[%c1_107, %c0_108, %c0_109] : memref<18x18x4xf32, #tpu.memory_space<vmem>>, vector<16x16x4xf32>
    %110 = vector.shape_cast %109 : vector<16x16x4xf32> to vector<256x4xf32>
    %c3_110 = arith.constant 3 : index
    %c0_111 = arith.constant 0 : index
    %c0_112 = arith.constant 0 : index
    %111 = vector.load %arg3[%c3_110, %c0_111, %c0_112] : memref<9x4x4xf32, #tpu.memory_space<vmem>>, vector<1x4x4xf32>
    %112 = vector.shape_cast %111 : vector<1x4x4xf32> to vector<4x4xf32>
    %cst_113 = arith.constant dense<0.000000e+00> : vector<256x4xf32>
    %113 = tpu.matmul %110, %112, %cst_113 {dimension_numbers = #tpu.dot_dimension_numbers<[1], [0], [0], [1], [0, 0, 1, 1], [], []>} : vector<256x4xf32>, vector<4x4xf32>, vector<256x4xf32> -> vector<256x4xf32>
    %114 = arith.addf %108, %113 : vector<256x4xf32>
    %c1_114 = arith.constant 1 : index
    %c1_115 = arith.constant 1 : index
    %c0_116 = arith.constant 0 : index
    %115 = vector.load %arg5[%c1_114, %c1_115, %c0_116] : memref<18x18x4xf32, #tpu.memory_space<vmem>>, vector<16x16x4xf32>
    %116 = vector.shape_cast %115 : vector<16x16x4xf32> to vector<256x4xf32>
    %c4_117 = arith.constant 4 : index
    %c0_118 = arith.constant 0 : index
    %c0_119 = arith.constant 0 : index
    %117 = vector.load %arg3[%c4_117, %c0_118, %c0_119] : memref<9x4x4xf32, #tpu.memory_space<vmem>>, vector<1x4x4xf32>
    %118 = vector.shape_cast %117 : vector<1x4x4xf32> to vector<4x4xf32>
    %cst_120 = arith.constant dense<0.000000e+00> : vector<256x4xf32>
    %119 = tpu.matmul %116, %118, %cst_120 {dimension_numbers = #tpu.dot_dimension_numbers<[1], [0], [0], [1], [0, 0, 1, 1], [], []>} : vector<256x4xf32>, vector<4x4xf32>, vector<256x4xf32> -> vector<256x4xf32>
    %120 = arith.addf %114, %119 : vector<256x4xf32>
    %c1_121 = arith.constant 1 : index
    %c2_122 = arith.constant 2 : index
    %c0_123 = arith.constant 0 : index
    %121 = vector.load %arg5[%c1_121, %c2_122, %c0_123] : memref<18x18x4xf32, #tpu.memory_space<vmem>>, vector<16x16x4xf32>
    %122 = vector.shape_cast %121 : vector<16x16x4xf32> to vector<256x4xf32>
    %c5_124 = arith.constant 5 : index
    %c0_125 = arith.constant 0 : index
    %c0_126 = arith.constant 0 : index
    %123 = vector.load %arg3[%c5_124, %c0_125, %c0_126] : memref<9x4x4xf32, #tpu.memory_space<vmem>>, vector<1x4x4xf32>
    %124 = vector.shape_cast %123 : vector<1x4x4xf32> to vector<4x4xf32>
    %cst_127 = arith.constant dense<0.000000e+00> : vector<256x4xf32>
    %125 = tpu.matmul %122, %124, %cst_127 {dimension_numbers = #tpu.dot_dimension_numbers<[1], [0], [0], [1], [0, 0, 1, 1], [], []>} : vector<256x4xf32>, vector<4x4xf32>, vector<256x4xf32> -> vector<256x4xf32>
    %126 = arith.addf %120, %125 : vector<256x4xf32>
    %c2_128 = arith.constant 2 : index
    %c0_129 = arith.constant 0 : index
    %c0_130 = arith.constant 0 : index
    %127 = vector.load %arg5[%c2_128, %c0_129, %c0_130] : memref<18x18x4xf32, #tpu.memory_space<vmem>>, vector<16x16x4xf32>
    %128 = vector.shape_cast %127 : vector<16x16x4xf32> to vector<256x4xf32>
    %c6_131 = arith.constant 6 : index
    %c0_132 = arith.constant 0 : index
    %c0_133 = arith.constant 0 : index
    %129 = vector.load %arg3[%c6_131, %c0_132, %c0_133] : memref<9x4x4xf32, #tpu.memory_space<vmem>>, vector<1x4x4xf32>
    %130 = vector.shape_cast %129 : vector<1x4x4xf32> to vector<4x4xf32>
    %cst_134 = arith.constant dense<0.000000e+00> : vector<256x4xf32>
    %131 = tpu.matmul %128, %130, %cst_134 {dimension_numbers = #tpu.dot_dimension_numbers<[1], [0], [0], [1], [0, 0, 1, 1], [], []>} : vector<256x4xf32>, vector<4x4xf32>, vector<256x4xf32> -> vector<256x4xf32>
    %132 = arith.addf %126, %131 : vector<256x4xf32>
    %c2_135 = arith.constant 2 : index
    %c1_136 = arith.constant 1 : index
    %c0_137 = arith.constant 0 : index
    %133 = vector.load %arg5[%c2_135, %c1_136, %c0_137] : memref<18x18x4xf32, #tpu.memory_space<vmem>>, vector<16x16x4xf32>
    %134 = vector.shape_cast %133 : vector<16x16x4xf32> to vector<256x4xf32>
    %c7_138 = arith.constant 7 : index
    %c0_139 = arith.constant 0 : index
    %c0_140 = arith.constant 0 : index
    %135 = vector.load %arg3[%c7_138, %c0_139, %c0_140] : memref<9x4x4xf32, #tpu.memory_space<vmem>>, vector<1x4x4xf32>
    %136 = vector.shape_cast %135 : vector<1x4x4xf32> to vector<4x4xf32>
    %cst_141 = arith.constant dense<0.000000e+00> : vector<256x4xf32>
    %137 = tpu.matmul %134, %136, %cst_141 {dimension_numbers = #tpu.dot_dimension_numbers<[1], [0], [0], [1], [0, 0, 1, 1], [], []>} : vector<256x4xf32>, vector<4x4xf32>, vector<256x4xf32> -> vector<256x4xf32>
    %138 = arith.addf %132, %137 : vector<256x4xf32>
    %c2_142 = arith.constant 2 : index
    %c2_143 = arith.constant 2 : index
    %c0_144 = arith.constant 0 : index
    %139 = vector.load %arg5[%c2_142, %c2_143, %c0_144] : memref<18x18x4xf32, #tpu.memory_space<vmem>>, vector<16x16x4xf32>
    %140 = vector.shape_cast %139 : vector<16x16x4xf32> to vector<256x4xf32>
    %c8_145 = arith.constant 8 : index
    %c0_146 = arith.constant 0 : index
    %c0_147 = arith.constant 0 : index
    %141 = vector.load %arg3[%c8_145, %c0_146, %c0_147] : memref<9x4x4xf32, #tpu.memory_space<vmem>>, vector<1x4x4xf32>
    %142 = vector.shape_cast %141 : vector<1x4x4xf32> to vector<4x4xf32>
    %cst_148 = arith.constant dense<0.000000e+00> : vector<256x4xf32>
    %143 = tpu.matmul %140, %142, %cst_148 {dimension_numbers = #tpu.dot_dimension_numbers<[1], [0], [0], [1], [0, 0, 1, 1], [], []>} : vector<256x4xf32>, vector<4x4xf32>, vector<256x4xf32> -> vector<256x4xf32>
    %144 = arith.addf %138, %143 : vector<256x4xf32>
    %cst_149 = arith.constant dense<0.000000e+00> : vector<4xf32>
    %145 = vector.multi_reduction <add>, %144, %cst_149 [0] : vector<256x4xf32> to vector<4xf32>
    %146 = vector.shape_cast %145 : vector<4xf32> to vector<1x4xf32>
    %cst_150 = arith.constant 3.906250e-03 : f32
    %147 = vector.broadcast %cst_150 : f32 to vector<1x4xf32>
    %148 = arith.mulf %146, %147 : vector<1x4xf32>
    %149 = vector.broadcast %148 : vector<1x4xf32> to vector<256x4xf32>
    %150 = arith.subf %144, %149 : vector<256x4xf32>
    %151 = arith.mulf %150, %150 : vector<256x4xf32>
    %cst_151 = arith.constant dense<0.000000e+00> : vector<4xf32>
    %152 = vector.multi_reduction <add>, %151, %cst_151 [0] : vector<256x4xf32> to vector<4xf32>
    %153 = vector.shape_cast %152 : vector<4xf32> to vector<1x4xf32>
    %cst_152 = arith.constant 3.906250e-03 : f32
    %154 = vector.broadcast %cst_152 : f32 to vector<1x4xf32>
    %155 = arith.mulf %153, %154 : vector<1x4xf32>
    %cst_153 = arith.constant 9.99999974E-6 : f32
    %156 = vector.broadcast %cst_153 : f32 to vector<1x4xf32>
    %157 = arith.addf %155, %156 : vector<1x4xf32>
    %158 = math.rsqrt %157 : vector<1x4xf32>
    %159 = vector.broadcast %158 : vector<1x4xf32> to vector<256x4xf32>
    %160 = arith.mulf %150, %159 : vector<256x4xf32>
    %161 = arith.addf %8, %160 : vector<256x4xf32>
    %162 = vector.shape_cast %161 : vector<256x4xf32> to vector<16x16x4xf32>
    %c0_154 = arith.constant 0 : index
    %c0_155 = arith.constant 0 : index
    %c0_156 = arith.constant 0 : index
    %c0_157 = arith.constant 0 : index
    %163 = vector.load %arg4[%c0_154, %c0_155, %c0_156, %c0_157] : memref<1x16x16x4xf32, #tpu.memory_space<vmem>>, vector<1x16x16x4xf32>
    %164 = vector.shape_cast %163 : vector<1x16x16x4xf32> to vector<16x16x4xf32>
    %165 = vector.shape_cast %162 : vector<16x16x4xf32> to vector<1x16x16x4xf32>
    tpu.vector_store %arg4[%c0_154, %c0_155, %c0_156, %c0_157], %165 {strides = array<i32>} : memref<1x16x16x4xf32, #tpu.memory_space<vmem>>, vector<1x16x16x4xf32>,
    return
  }
  func.func @transform_0(%arg0: i32) -> (i32, i32, i32, i32) {
    %c0_i32 = arith.constant 0 : i32
    %c0_i32_0 = arith.constant 0 : i32
    %c0_i32_1 = arith.constant 0 : i32
    %c0_i32_2 = arith.constant 0 : i32
    return %arg0, %c0_i32, %c0_i32_0, %c0_i32_1 : i32, i32, i32, i32
  }
  func.func @transform_1(%arg0: i32) -> (i32, i32, i32) {
    %c0_i32 = arith.constant 0 : i32
    %c0_i32_0 = arith.constant 0 : i32
    %c0_i32_1 = arith.constant 0 : i32
    %c0_i32_2 = arith.constant 0 : i32
    return %c0_i32, %c0_i32_0, %c0_i32_1 : i32, i32, i32
  }
  func.func @transform_2(%arg0: i32) -> (i32, i32, i32) {
    %c0_i32 = arith.constant 0 : i32
    %c0_i32_0 = arith.constant 0 : i32
    %c0_i32_1 = arith.constant 0 : i32
    %c0_i32_2 = arith.constant 0 : i32
    return %c0_i32, %c0_i32_0, %c0_i32_1 : i32, i32, i32
  }
  func.func @transform_3(%arg0: i32) -> (i32, i32, i32, i32) {
    %c0_i32 = arith.constant 0 : i32
    %c0_i32_0 = arith.constant 0 : i32
    %c0_i32_1 = arith.constant 0 : i32
    %c0_i32_2 = arith.constant 0 : i32
    return %arg0, %c0_i32, %c0_i32_0, %c0_i32_1 : i32, i32, i32, i32
  }
}

</mosaic_0001>

<llo_original>
// kernel: tpu_custom_call.1
$region0: #{tpu_custom_call.1}
  #allocation0 [shape = 'u32[]', space=smem, size = 0x4, offset = 0x4, fixed_abs, tag = 'smem constant byte address 0x4 - core index']
  #allocation1 [shape = 'u32[144,128]{1,0:T(1,128)}', space=vmem, size = 0x12000, scoped, tag = 'internal scratch']
  #allocation2 [shape = 'f32[18,18,4]{2,1,0:T(8,128)}', space=vmem, size = 0x36000, scoped, tag = 'scratch operand']
  %s0 = inlined_call_operand.vmem [shape: f32[2,18,18,4], index: 0, kind: input, shape index: {}]
  %s1 = inlined_call_operand.vmem [shape: f32[9,4,4], index: 1, kind: input, shape index: {}]
  %s2 = inlined_call_operand.vmem [shape: f32[9,4,4], index: 2, kind: input, shape index: {}]
  %s3 = inlined_call_operand.vmem [shape: f32[2,16,16,4], index: 3, kind: output, shape index: {}]
  %s4 = sld [smem:[#allocation0]]
  $region45: #{tpu_custom_call.1} parent=0
    _
  %s6 = ssub.s32 1, %s4
  %s7 = scalar_select 0, %s6, %s4
  loop: start=0, step=1, limit=4
  $region2: #{tpu_custom_call.1} parent=0 // loop_pre_header
    _
  $region3: #{tpu_custom_call.1} parent=0 // loop_header
    %s9 = sphi 0, %s13
    %p10 = scmp.ge.s32.totalorder %s9, 4
    %s19 = sphi 0, %s21
    %s22 = sphi 0, %s19
    %s23 = sphi 0, %s22
    %s39 = sphi 0, %s23
    %s43 = sphi 0, %s43
    %s45 = sphi 0, %s43
    %s46 = sphi 0, %s45
    %s60 = sphi 0, %s46
    %s64 = sphi 0, %s64
    %s66 = sphi 0, %s64
    %s67 = sphi 0, %s66
    %s81 = sphi 0, %s67
    %s87 = sphi 0, %s89
    %s90 = sphi 0, %s87
    %s91 = sphi 0, %s90
    %s107 = sphi 0, %s91
  $region4: #{tpu_custom_call.1} parent=0 // loop_header_branch
    %12 = sbr.rel (%p10) target = $region8
  $region5: #{tpu_custom_call.1} parent=0 // loop_body
    %s14 = ssub.s32 %s9, 1
    %s15 = ssub.s32 %s9, 2
    %s16 = sadd.s32 %s9, 1
    %s17 = ssub.s32 %s9, %s16
    %p18 = scmp.eq.s32.totalorder %s17, 0
    %s20 = sadd.s32 %s19, 1
    %s21 = scalar_select %p18, %s19, %s20
    %p24 = pneg %p18
    %p25 = scmp.eq.s32.totalorder %s9, 1
    %p26 = por %p24, %p25
    %p27 = scmp.ne.s32.totalorder %s19, %s22
    %p28 = scmp.eq.s32.totalorder %s9, 0
    %p29 = por %p27, %p28
    %p30 = scmp.ne.s32.totalorder %s19, %s22
    %p31 = scmp.eq.s32.totalorder %s14, 1
    %p32 = por %p30, %p31
    %p33 = scmp.ne.s32.totalorder %s22, %s23
    %p34 = scmp.eq.s32.totalorder %s14, 0
    %p35 = por %p33, %p34
    %p36 = scmp.ne.s32.totalorder %s22, %s23
    %p37 = scmp.eq.s32.totalorder %s15, 1
    %p38 = por %p36, %p37
    %p40 = scmp.ne.s32.totalorder %s23, %s39
    %p41 = scmp.eq.s32.totalorder %s15, 0
    %p42 = por %p40, %p41
    %s44 = sadd.s32 %s43, 1
    %p47 = scmp.eq.s32.totalorder %s9, 1
    %p48 = scmp.ne.s32.totalorder %s43, %s45
    %p49 = scmp.eq.s32.totalorder %s9, 0
    %p50 = por %p48, %p49
    %p51 = scmp.ne.s32.totalorder %s43, %s45
    %p52 = scmp.eq.s32.totalorder %s14, 1
    %p53 = por %p51, %p52
    %p54 = scmp.ne.s32.totalorder %s45, %s46
    %p55 = scmp.eq.s32.totalorder %s14, 0
    %p56 = por %p54, %p55
    %p57 = scmp.ne.s32.totalorder %s45, %s46
    %p58 = scmp.eq.s32.totalorder %s15, 1
    %p59 = por %p57, %p58
    %p61 = scmp.ne.s32.totalorder %s46, %s60
    %p62 = scmp.eq.s32.totalorder %s15, 0
    %p63 = por %p61, %p62
    %s65 = sadd.s32 %s64, 1
    %p68 = scmp.eq.s32.totalorder %s9, 1
    %p69 = scmp.ne.s32.totalorder %s64, %s66
    %p70 = scmp.eq.s32.totalorder %s9, 0
    %p71 = por %p69, %p70
    %p72 = scmp.ne.s32.totalorder %s64, %s66
    %p73 = scmp.eq.s32.totalorder %s14, 1
    %p74 = por %p72, %p73
    %p75 = scmp.ne.s32.totalorder %s66, %s67
    %p76 = scmp.eq.s32.totalorder %s14, 0
    %p77 = por %p75, %p76
    %p78 = scmp.ne.s32.totalorder %s66, %s67
    %p79 = scmp.eq.s32.totalorder %s15, 1
    %p80 = por %p78, %p79
    %p82 = scmp.ne.s32.totalorder %s67, %s81
    %p83 = scmp.eq.s32.totalorder %s15, 0
    %p84 = por %p82, %p83
    %s85 = ssub.s32 %s9, %s16
    %p86 = scmp.eq.s32.totalorder %s85, 0
    %s88 = sadd.s32 %s87, 1
    %s89 = scalar_select %p86, %s87, %s88
    %p92 = pneg %p86
    %p93 = scmp.eq.s32.totalorder %s9, 1
    %p94 = por %p92, %p93
    %p95 = scmp.ne.s32.totalorder %s87, %s90
    %p96 = scmp.eq.s32.totalorder %s9, 0
    %p97 = por %p95, %p96
    %p98 = scmp.ne.s32.totalorder %s87, %s90
    %p99 = scmp.eq.s32.totalorder %s14, 1
    %p100 = por %p98, %p99
    %p101 = scmp.ne.s32.totalorder %s90, %s91
    %p102 = scmp.eq.s32.totalorder %s14, 0
    %p103 = por %p101, %p102
    %p104 = scmp.ne.s32.totalorder %s90, %s91
    %p105 = scmp.eq.s32.totalorder %s15, 1
    %p106 = por %p104, %p105
    %p108 = scmp.ne.s32.totalorder %s91, %s107
    %p109 = scmp.eq.s32.totalorder %s15, 0
    %p110 = por %p108, %p109
    %p111 = scmp.le.s32.totalorder 1, %s9
    %p112 = scmp.lt.s32.totalorder %s9, 3
    %p113 = pnand %p111, %p112
    %p114 = pneg %p113
    // Predicated region
    $region9: #{tpu_custom_call.1} parent=5 // pred_check
      _
    $region10: #{tpu_custom_call.1} parent=5 // pred_check_branch
      %116 = sbr.rel (%p113) target = $region12
    $region11: #{tpu_custom_call.1} parent=5 // pred_region
      %s117 = ssub.s32 %s9, 1
      // Predicated region
      $region13: #{tpu_custom_call.1} parent=11 // pred_check
        %p118 = pneg %p56
      $region14: #{tpu_custom_call.1} parent=11 // pred_check_branch
        %120 = sbr.rel (%p118) target = $region16
      $region15: #{tpu_custom_call.1} parent=11 // pred_region
        _
      $region16: #{tpu_custom_call.1} parent=11 // pred_fallthru
        _
      // Predicated region
      $region17: #{tpu_custom_call.1} parent=11 // pred_check
        %p121 = pneg %p77
      $region18: #{tpu_custom_call.1} parent=11 // pred_check_branch
        %123 = sbr.rel (%p121) target = $region20
      $region19: #{tpu_custom_call.1} parent=11 // pred_region
        _
      $region20: #{tpu_custom_call.1} parent=11 // pred_fallthru
        _
    $region12: #{tpu_custom_call.1} parent=5 // pred_fallthru
      _
    %p124 = scmp.lt.s32.totalorder %s9, 2
    // Predicated region
    $region21: #{tpu_custom_call.1} parent=5 // pred_check
      %p125 = pneg %p124
    $region22: #{tpu_custom_call.1} parent=5 // pred_check_branch
      %127 = sbr.rel (%p125) target = $region24
    $region23: #{tpu_custom_call.1} parent=5 // pred_region
      // Predicated region
      $region25: #{tpu_custom_call.1} parent=23 // pred_check
        %p128 = pneg %p29
      $region26: #{tpu_custom_call.1} parent=23 // pred_check_branch
        %130 = sbr.rel (%p128) target = $region28
      $region27: #{tpu_custom_call.1} parent=23 // pred_region
        %p131 = scmp.lt.s32.totalorder %s9, 1
        %s132 = scalar_select %p131, %s9, 1
        %s133 = smul.addr %s132, 54
        %s134 = smul.addr %s133, 8
        %s135 = scalar_lea.vmem %s0, %s134
      $region28: #{tpu_custom_call.1} parent=23 // pred_fallthru
        _
    $region24: #{tpu_custom_call.1} parent=5 // pred_fallthru
      _
    %p136 = scmp.le.s32.totalorder 1, %s9
    %p137 = scmp.lt.s32.totalorder %s9, 3
    %p138 = pnand %p136, %p137
    %p139 = pneg %p138
    // Predicated region
    $region29: #{tpu_custom_call.1} parent=5 // pred_check
      _
    $region30: #{tpu_custom_call.1} parent=5 // pred_check_branch
      %141 = sbr.rel (%p138) target = $region32
    $region31: #{tpu_custom_call.1} parent=5 // pred_region
      %s142 = ssub.s32 %s9, 1
      %p143 = scmp.lt.s32.totalorder %s14, 1
      %s144 = scalar_select %p143, %s14, 1
      %s145 = smul.addr %s144, 54
      %s146 = smul.addr %s145, 8
      %s147 = scalar_lea.vmem %s0, %s146
      %p148 = pneg %p35
      %p149 = pneg %p32
      %p150 = pneg %p56
      %p151 = pneg %p53
      %p152 = pneg %p77
      %p153 = pneg %p74
      %p154 = pneg %p103
      %p155 = pneg %p100
      %p156 = scmp.lt.s32.totalorder %s14, 1
      %s157 = scalar_select %p156, %s14, 1
      %s158 = smul.addr %s157, 32
      %s159 = smul.addr %s158, 8
      %s160 = scalar_lea.vmem %s3, %s159
      %p161 = scmp.lt.s32.totalorder %s14, 1
      %s162 = scalar_select %p161, %s14, 1
      %s163 = smul.addr %s162, 54
      %s164 = smul.addr %s163, 8
      %s165 = scalar_lea.vmem %s0, %s164
      %p166 = scmp.lt.s32.totalorder %s14, 1
      %s167 = scalar_select %p166, %s14, 1
      %s168 = smul.addr %s167, 32
      %s169 = smul.addr %s168, 8
      %s170 = scalar_lea.vmem %s3, %s169
      %vm171 = vcmask 31744
      %172 = vst.msk [vmem:[#allocation2] sm:$0xff] %vm171, 0.0
      %173 = vst.msk [vmem:[#allocation2 + $0x8] sm:$0xff] %vm171, 0.0
      %vm174 = vcmask 25600
      %175 = vst.msk [vmem:[#allocation2 + $0x10] sm:$0x3] %vm174, 0.0
      %s176 = scalar_lea.vmem [#allocation2], 408
      %177 = vst.msk [vmem:[%s176] sm:$0xff] %vm171, 0.0
      %178 = vst.msk [vmem:[%s176 + $0x8] sm:$0xff] %vm171, 0.0
      %179 = vst.msk [vmem:[%s176 + $0x10] sm:$0x3] %vm174, 0.0
      %vm180 = vcmask 24576
      %181 = vst.msk [vmem:[#allocation2] sm:$0x1] %vm180, 0.0
      %182 = vst.msk [vmem:[#allocation2 + $0x18] sm:$0x1] %vm180, 0.0
      %183 = vst.msk [vmem:[#allocation2 + $0x30] sm:$0x1] %vm180, 0.0
      %184 = vst.msk [vmem:[#allocation2 + $0x48] sm:$0x1] %vm180, 0.0
      %185 = vst.msk [vmem:[#allocation2 + $0x60] sm:$0x1] %vm180, 0.0
      %186 = vst.msk [vmem:[#allocation2 + $0x78] sm:$0x1] %vm180, 0.0
      %187 = vst.msk [vmem:[#allocation2 + $0x90] sm:$0x1] %vm180, 0.0
      %188 = vst.msk [vmem:[#allocation2 + $0xa8] sm:$0x1] %vm180, 0.0
      %189 = vst.msk [vmem:[#allocation2 + $0xc0] sm:$0x1] %vm180, 0.0
      %190 = vst.msk [vmem:[#allocation2 + $0xd8] sm:$0x1] %vm180, 0.0
      %191 = vst.msk [vmem:[#allocation2 + $0xf0] sm:$0x1] %vm180, 0.0
      %192 = vst.msk [vmem:[#allocation2 + $0x108] sm:$0x1] %vm180, 0.0
      %193 = vst.msk [vmem:[#allocation2 + $0x120] sm:$0x1] %vm180, 0.0
      %194 = vst.msk [vmem:[#allocation2 + $0x138] sm:$0x1] %vm180, 0.0
      %195 = vst.msk [vmem:[#allocation2 + $0x150] sm:$0x1] %vm180, 0.0
      %196 = vst.msk [vmem:[#allocation2 + $0x168] sm:$0x1] %vm180, 0.0
      %197 = vst.msk [vmem:[#allocation2 + $0x180] sm:$0x1] %vm180, 0.0
      %198 = vst.msk [vmem:[#allocation2 + $0x198] sm:$0x1] %vm180, 0.0
      %199 = vst.msk [vmem:[#allocation2 + $0x11] sm:$0x1] %vm180, 0.0
      %200 = vst.msk [vmem:[#allocation2 + $0x29] sm:$0x1] %vm180, 0.0
      %201 = vst.msk [vmem:[#allocation2 + $0x41] sm:$0x1] %vm180, 0.0
      %202 = vst.msk [vmem:[#allocation2 + $0x59] sm:$0x1] %vm180, 0.0
      %203 = vst.msk [vmem:[#allocation2 + $0x71] sm:$0x1] %vm180, 0.0
      %204 = vst.msk [vmem:[#allocation2 + $0x89] sm:$0x1] %vm180, 0.0
      %205 = vst.msk [vmem:[#allocation2 + $0xa1] sm:$0x1] %vm180, 0.0
      %206 = vst.msk [vmem:[#allocation2 + $0xb9] sm:$0x1] %vm180, 0.0
      %207 = vst.msk [vmem:[#allocation2 + $0xd1] sm:$0x1] %vm180, 0.0
      %208 = vst.msk [vmem:[#allocation2 + $0xe9] sm:$0x1] %vm180, 0.0
      %209 = vst.msk [vmem:[#allocation2 + $0x101] sm:$0x1] %vm180, 0.0
      %210 = vst.msk [vmem:[#allocation2 + $0x119] sm:$0x1] %vm180, 0.0
      %211 = vst.msk [vmem:[#allocation2 + $0x131] sm:$0x1] %vm180, 0.0
      %212 = vst.msk [vmem:[#allocation2 + $0x149] sm:$0x1] %vm180, 0.0
      %213 = vst.msk [vmem:[#allocation2 + $0x161] sm:$0x1] %vm180, 0.0
      %214 = vst.msk [vmem:[#allocation2 + $0x179] sm:$0x1] %vm180, 0.0
      %215 = vst.msk [vmem:[#allocation2 + $0x191] sm:$0x1] %vm180, 0.0
      %216 = vst.msk [vmem:[#allocation2 + $0x1a9] sm:$0x1] %vm180, 0.0
      %s217 = scalar_lea.vmem %s165, 24
      %v218 = vld [vmem:[%s217 + $0x1] sm:$0xff]
      %v219 = vld [vmem:[%s217 + $0x9] sm:$0xff]
      %v220 = vld [vmem:[%s217 + $0x19] sm:$0xff]
      %v221 = vld [vmem:[%s217 + $0x21] sm:$0xff]
      %v222 = vld [vmem:[%s217 + $0x31] sm:$0xff]
      %v223 = vld [vmem:[%s217 + $0x39] sm:$0xff]
      %v224 = vld [vmem:[%s217 + $0x49] sm:$0xff]
      %v225 = vld [vmem:[%s217 + $0x51] sm:$0xff]
      %v226 = vld [vmem:[%s217 + $0x61] sm:$0xff]
      %v227 = vld [vmem:[%s217 + $0x69] sm:$0xff]
      %v228 = vld [vmem:[%s217 + $0x79] sm:$0xff]
      %v229 = vld [vmem:[%s217 + $0x81] sm:$0xff]
      %v230 = vld [vmem:[%s217 + $0x91] sm:$0xff]
      %v231 = vld [vmem:[%s217 + $0x99] sm:$0xff]
      %v232 = vld [vmem:[%s217 + $0xa9] sm:$0xff]
      %v233 = vld [vmem:[%s217 + $0xb1] sm:$0xff]
      %v234 = vld [vmem:[%s217 + $0xc1] sm:$0xff]
      %v235 = vld [vmem:[%s217 + $0xc9] sm:$0xff]
      %v236 = vld [vmem:[%s217 + $0xd9] sm:$0xff]
      %v237 = vld [vmem:[%s217 + $0xe1] sm:$0xff]
      %v238 = vld [vmem:[%s217 + $0xf1] sm:$0xff]
      %v239 = vld [vmem:[%s217 + $0xf9] sm:$0xff]
      %v240 = vld [vmem:[%s217 + $0x109] sm:$0xff]
      %v241 = vld [vmem:[%s217 + $0x111] sm:$0xff]
      %v242 = vld [vmem:[%s217 + $0x121] sm:$0xff]
      %v243 = vld [vmem:[%s217 + $0x129] sm:$0xff]
      %v244 = vld [vmem:[%s217 + $0x139] sm:$0xff]
      %v245 = vld [vmem:[%s217 + $0x141] sm:$0xff]
      %v246 = vld [vmem:[%s217 + $0x151] sm:$0xff]
      %v247 = vld [vmem:[%s217 + $0x159] sm:$0xff]
      %v248 = vld [vmem:[%s217 + $0x169] sm:$0xff]
      %v249 = vld [vmem:[%s217 + $0x171] sm:$0xff]
      %v250 = vld [vmem:[%s165] sm:$0xff]
      %v251 = vld [vmem:[%s165 + $0x8] sm:$0xff]
      %v252 = vld [vmem:[%s165 + $0x18] sm:$0xff]
      %v253 = vld [vmem:[%s165 + $0x20] sm:$0xff]
      %v254 = vld [vmem:[%s165 + $0x30] sm:$0xff]
      %v255 = vld [vmem:[%s165 + $0x38] sm:$0xff]
      %v256 = vld [vmem:[%s165 + $0x48] sm:$0xff]
      %v257 = vld [vmem:[%s165 + $0x50] sm:$0xff]
      %v258 = vld [vmem:[%s165 + $0x60] sm:$0xff]
      %v259 = vld [vmem:[%s165 + $0x68] sm:$0xff]
      %v260 = vld [vmem:[%s165 + $0x78] sm:$0xff]
      %v261 = vld [vmem:[%s165 + $0x80] sm:$0xff]
      %v262 = vld [vmem:[%s165 + $0x90] sm:$0xff]
      %v263 = vld [vmem:[%s165 + $0x98] sm:$0xff]
      %v264 = vld [vmem:[%s165 + $0xa8] sm:$0xff]
      %v265 = vld [vmem:[%s165 + $0xb0] sm:$0xff]
      %v266 = vld [vmem:[%s165 + $0xc0] sm:$0xff]
      %v267 = vld [vmem:[%s165 + $0xc8] sm:$0xff]
      %v268 = vld [vmem:[%s165 + $0xd8] sm:$0xff]
      %v269 = vld [vmem:[%s165 + $0xe0] sm:$0xff]
      %v270 = vld [vmem:[%s165 + $0xf0] sm:$0xff]
      %v271 = vld [vmem:[%s165 + $0xf8] sm:$0xff]
      %v272 = vld [vmem:[%s165 + $0x108] sm:$0xff]
      %v273 = vld [vmem:[%s165 + $0x110] sm:$0xff]
      %v274 = vld [vmem:[%s165 + $0x120] sm:$0xff]
      %v275 = vld [vmem:[%s165 + $0x128] sm:$0xff]
      %v276 = vld [vmem:[%s165 + $0x138] sm:$0xff]
      %v277 = vld [vmem:[%s165 + $0x140] sm:$0xff]
      %v278 = vld [vmem:[%s165 + $0x150] sm:$0xff]
      %v279 = vld [vmem:[%s165 + $0x158] sm:$0xff]
      %v280 = vld [vmem:[%s165 + $0x168] sm:$0xff]
      %v281 = vld [vmem:[%s165 + $0x170] sm:$0xff]
      %v282 = vld [vmem:[%s1] sm:$0xf]
      %v283 = vld [vmem:[%s165 + $0x1] sm:$0xff]
      %v284 = vld [vmem:[%s165 + $0x9] sm:$0xff]
      %v285 = vld [vmem:[%s165 + $0x19] sm:$0xff]
      %v286 = vld [vmem:[%s165 + $0x21] sm:$0xff]
      %v287 = vld [vmem:[%s165 + $0x31] sm:$0xff]
      %v288 = vld [vmem:[%s165 + $0x39] sm:$0xff]
      %v289 = vld [vmem:[%s165 + $0x49] sm:$0xff]
      %v290 = vld [vmem:[%s165 + $0x51] sm:$0xff]
      %v291 = vld [vmem:[%s165 + $0x61] sm:$0xff]
      %v292 = vld [vmem:[%s165 + $0x69] sm:$0xff]
      %v293 = vld [vmem:[%s165 + $0x79] sm:$0xff]
      %v294 = vld [vmem:[%s165 + $0x81] sm:$0xff]
      %v295 = vld [vmem:[%s165 + $0x91] sm:$0xff]
      %v296 = vld [vmem:[%s165 + $0x99] sm:$0xff]
      %v297 = vld [vmem:[%s165 + $0xa9] sm:$0xff]
      %v298 = vld [vmem:[%s165 + $0xb1] sm:$0xff]
      %v299 = vld [vmem:[%s165 + $0xc1] sm:$0xff]
      %v300 = vld [vmem:[%s165 + $0xc9] sm:$0xff]
      %v301 = vld [vmem:[%s165 + $0xd9] sm:$0xff]
      %v302 = vld [vmem:[%s165 + $0xe1] sm:$0xff]
      %v303 = vld [vmem:[%s165 + $0xf1] sm:$0xff]
      %v304 = vld [vmem:[%s165 + $0xf9] sm:$0xff]
      %v305 = vld [vmem:[%s165 + $0x109] sm:$0xff]
      %v306 = vld [vmem:[%s165 + $0x111] sm:$0xff]
      %v307 = vld [vmem:[%s165 + $0x121] sm:$0xff]
      %v308 = vld [vmem:[%s165 + $0x129] sm:$0xff]
      %v309 = vld [vmem:[%s165 + $0x139] sm:$0xff]
      %v310 = vld [vmem:[%s165 + $0x141] sm:$0xff]
      %v311 = vld [vmem:[%s165 + $0x151] sm:$0xff]
      %v312 = vld [vmem:[%s165 + $0x159] sm:$0xff]
      %v313 = vld [vmem:[%s165 + $0x169] sm:$0xff]
      %v314 = vld [vmem:[%s165 + $0x171] sm:$0xff]
      %s315 = scalar_lea.vmem %s1, 4
      %v316 = vld [vmem:[%s315] sm:$0xf]
      %v318 = vsel %vm171, %v283, 0
      %v321 = vsel %vm171, %v284, 0
      %v324 = vsel %vm171, %v285, 0
      %v327 = vsel %vm171, %v286, 0
      %v330 = vsel %vm171, %v287, 0
      %v333 = vsel %vm171, %v288, 0
      %v336 = vsel %vm171, %v289, 0
      %v339 = vsel %vm171, %v290, 0
      %v342 = vsel %vm171, %v291, 0
      %v345 = vsel %vm171, %v292, 0
      %v348 = vsel %vm171, %v293, 0
      %v351 = vsel %vm171, %v294, 0
      %v354 = vsel %vm171, %v295, 0
      %v357 = vsel %vm171, %v296, 0
      %v360 = vsel %vm171, %v297, 0
      %v363 = vsel %vm171, %v298, 0
      %v366 = vsel %vm171, %v299, 0
      %v369 = vsel %vm171, %v300, 0
      %v372 = vsel %vm171, %v301, 0
      %v375 = vsel %vm171, %v302, 0
      %v378 = vsel %vm171, %v303, 0
      %v381 = vsel %vm171, %v304, 0
      %v384 = vsel %vm171, %v305, 0
      %v387 = vsel %vm171, %v306, 0
      %v390 = vsel %vm171, %v307, 0
      %v393 = vsel %vm171, %v308, 0
      %v396 = vsel %vm171, %v309, 0
      %v399 = vsel %vm171, %v310, 0
      %v402 = vsel %vm171, %v311, 0
      %v405 = vsel %vm171, %v312, 0
      %v408 = vsel %vm171, %v313, 0
      %v411 = vsel %vm171, %v314, 0
      %vm413 = vcmask 1043456
      %v415 = vsel %vm413, %v316, 0
      %417 = vmatprep.subr.mxu0 0.0
      %418 = vmatpush1.msra.mxu0 0.0
      %419 = vmatprep.subr.mxu0 0.0
      %420 = vmatpush1.msra.mxu0 0.0
      %421 = vmatprep.subr.mxu0 0.0
      %422 = vmatpush1.msra.mxu0 0.0
      %423 = vmatprep.subr.mxu0 0.0
      %424 = vmatpush1.msra.mxu0 0.0
      %425 = vmatprep.subr.mxu0 0.0
      %426 = vmatpush1.msra.mxu0 0.0
      %427 = vmatprep.subr.mxu0 0.0
      %428 = vmatpush1.msra.mxu0 0.0
      %429 = vmatprep.subr.mxu0 0.0
      %430 = vmatpush1.msra.mxu0 0.0
      %431 = vmatprep.subr.mxu0 0.0
      %432 = vmatpush1.msra.mxu0 0.0
      %433 = vmatprep.subr.mxu0 0.0
      %434 = vmatpush1.msra.mxu0 0.0
      %435 = vmatprep.subr.mxu0 0.0
      %436 = vmatpush1.msra.mxu0 0.0
      %437 = vmatprep.subr.mxu0 0.0
      %438 = vmatpush1.msra.mxu0 0.0
      %439 = vmatprep.subr.mxu0 0.0
      %440 = vmatpush1.msra.mxu0 0.0
      %441 = vmatprep.subr.mxu0 0.0
      %442 = vmatpush1.msra.mxu0 0.0
      %443 = vmatprep.subr.mxu0 0.0
      %444 = vmatpush1.msra.mxu0 0.0
      %445 = vmatprep.subr.mxu0 0.0
      %446 = vmatpush1.msra.mxu0 0.0
      %447 = vmatprep.subr.mxu0 0.0
      %448 = vmatpush1.msra.mxu0 %v415
      %449 = vmatprep.subr.mxu0 0.0
      %450 = vmatpush2.msra.mxu0 0.0
      %451 = vmatprep.subr.mxu0 0.0
      %452 = vmatpush2.msra.mxu0 0.0
      %453 = vmatprep.subr.mxu0 0.0
      %454 = vmatpush2.msra.mxu0 0.0
      %455 = vmatprep.subr.mxu0 0.0
      %456 = vmatpush2.msra.mxu0 0.0
      %457 = vmatprep.subr.mxu0 0.0
      %458 = vmatpush2.msra.mxu0 0.0
      %459 = vmatprep.subr.mxu0 0.0
      %460 = vmatpush2.msra.mxu0 0.0
      %461 = vmatprep.subr.mxu0 0.0
      %462 = vmatpush2.msra.mxu0 0.0
      %463 = vmatprep.subr.mxu0 0.0
      %464 = vmatpush2.msra.mxu0 0.0
      %465 = vmatprep.subr.mxu0 0.0
      %466 = vmatpush2.msra.mxu0 0.0
      %467 = vmatprep.subr.mxu0 0.0
      %468 = vmatpush2.msra.mxu0 0.0
      %469 = vmatprep.subr.mxu0 0.0
      %470 = vmatpush2.msra.mxu0 0.0
      %471 = vmatprep.subr.mxu0 0.0
      %472 = vmatpush2.msra.mxu0 0.0
      %473 = vmatprep.subr.mxu0 0.0
      %474 = vmatpush2.msra.mxu0 0.0
      %475 = vmatprep.subr.mxu0 0.0
      %476 = vmatpush2.msra.mxu0 0.0
      %477 = vmatprep.subr.mxu0 0.0
      %478 = vmatpush2.msra.mxu0 0.0
      %479 = vmatprep.subr.mxu0 0.0
      %480 = vmatpush2.msra.mxu0 0.0
      %481 = vmatprep.mubr.f32.mxu0 0.0
      %482 = vmatmul.mubr.f32.gmra.mxu0 %v318
      %v483 = vpop.f32.mrf.mxu0
      %v484 = vadd.f32 0.0, %v483
      %v485 = vpop.f32.mrf.mxu0
      %486 = vmatprep.mubr.f32.mxu0 0.0
      %487 = vmatmul.mubr.f32.gmra.mxu0 %v321
      %v488 = vpop.f32.mrf.mxu0
      %v489 = vadd.f32 0.0, %v488
      %v490 = vpop.f32.mrf.mxu0
      %491 = vmatprep.mubr.f32.mxu0 0.0
      %492 = vmatmul.mubr.f32.gmra.mxu0 %v324
      %v493 = vpop.f32.mrf.mxu0
      %v494 = vadd.f32 0.0, %v493
      %v495 = vpop.f32.mrf.mxu0
      %496 = vmatprep.mubr.f32.mxu0 0.0
      %497 = vmatmul.mubr.f32.gmra.mxu0 %v327
      %v498 = vpop.f32.mrf.mxu0
      %v499 = vadd.f32 0.0, %v498
      %v500 = vpop.f32.mrf.mxu0
      %501 = vmatprep.mubr.f32.mxu0 0.0
      %502 = vmatmul.mubr.f32.gmra.mxu0 %v330
      %v503 = vpop.f32.mrf.mxu0
      %v504 = vadd.f32 0.0, %v503
      %v505 = vpop.f32.mrf.mxu0
      %506 = vmatprep.mubr.f32.mxu0 0.0
      %507 = vmatmul.mubr.f32.gmra.mxu0 %v333
      %v508 = vpop.f32.mrf.mxu0
      %v509 = vadd.f32 0.0, %v508
      %v510 = vpop.f32.mrf.mxu0
      %511 = vmatprep.mubr.f32.mxu0 0.0
      %512 = vmatmul.mubr.f32.gmra.mxu0 %v336
      %v513 = vpop.f32.mrf.mxu0
      %v514 = vadd.f32 0.0, %v513
      %v515 = vpop.f32.mrf.mxu0
      %516 = vmatprep.mubr.f32.mxu0 0.0
      %517 = vmatmul.mubr.f32.gmra.mxu0 %v339
      %v518 = vpop.f32.mrf.mxu0
      %v519 = vadd.f32 0.0, %v518
      %v520 = vpop.f32.mrf.mxu0
      %521 = vmatprep.mubr.f32.mxu0 0.0
      %522 = vmatmul.mubr.f32.gmra.mxu0 %v342
      %v523 = vpop.f32.mrf.mxu0
      %v524 = vadd.f32 0.0, %v523
      %v525 = vpop.f32.mrf.mxu0
      %526 = vmatprep.mubr.f32.mxu0 0.0
      %527 = vmatmul.mubr.f32.gmra.mxu0 %v345
      %v528 = vpop.f32.mrf.mxu0
      %v529 = vadd.f32 0.0, %v528
      %v530 = vpop.f32.mrf.mxu0
      %531 = vmatprep.mubr.f32.mxu0 0.0
      %532 = vmatmul.mubr.f32.gmra.mxu0 %v348
      %v533 = vpop.f32.mrf.mxu0
      %v534 = vadd.f32 0.0, %v533
      %v535 = vpop.f32.mrf.mxu0
      %536 = vmatprep.mubr.f32.mxu0 0.0
      %537 = vmatmul.mubr.f32.gmra.mxu0 %v351
      %v538 = vpop.f32.mrf.mxu0
      %v539 = vadd.f32 0.0, %v538
      %v540 = vpop.f32.mrf.mxu0
      %541 = vmatprep.mubr.f32.mxu0 0.0
      %542 = vmatmul.mubr.f32.gmra.mxu0 %v354
      %v543 = vpop.f32.mrf.mxu0
      %v544 = vadd.f32 0.0, %v543
      %v545 = vpop.f32.mrf.mxu0
      %546 = vmatprep.mubr.f32.mxu0 0.0
      %547 = vmatmul.mubr.f32.gmra.mxu0 %v357
      %v548 = vpop.f32.mrf.mxu0
      %v549 = vadd.f32 0.0, %v548
      %v550 = vpop.f32.mrf.mxu0
      %551 = vmatprep.mubr.f32.mxu0 0.0
      %552 = vmatmul.mubr.f32.gmra.mxu0 %v360
      %v553 = vpop.f32.mrf.mxu0
      %v554 = vadd.f32 0.0, %v553
      %v555 = vpop.f32.mrf.mxu0
      %556 = vmatprep.mubr.f32.mxu0 0.0
      %557 = vmatmul.mubr.f32.gmra.mxu0 %v363
      %v558 = vpop.f32.mrf.mxu0
      %v559 = vadd.f32 0.0, %v558
      %v560 = vpop.f32.mrf.mxu0
      %561 = vmatprep.mubr.f32.mxu0 0.0
      %562 = vmatmul.mubr.f32.gmra.mxu0 %v366
      %v563 = vpop.f32.mrf.mxu0
      %v564 = vadd.f32 0.0, %v563
      %v565 = vpop.f32.mrf.mxu0
      %566 = vmatprep.mubr.f32.mxu0 0.0
      %567 = vmatmul.mubr.f32.gmra.mxu0 %v369
      %v568 = vpop.f32.mrf.mxu0
      %v569 = vadd.f32 0.0, %v568
      %v570 = vpop.f32.mrf.mxu0
      %571 = vmatprep.mubr.f32.mxu0 0.0
      %572 = vmatmul.mubr.f32.gmra.mxu0 %v372
      %v573 = vpop.f32.mrf.mxu0
      %v574 = vadd.f32 0.0, %v573
      %v575 = vpop.f32.mrf.mxu0
      %576 = vmatprep.mubr.f32.mxu0 0.0
      %577 = vmatmul.mubr.f32.gmra.mxu0 %v375
      %v578 = vpop.f32.mrf.mxu0
      %v579 = vadd.f32 0.0, %v578
      %v580 = vpop.f32.mrf.mxu0
      %581 = vmatprep.mubr.f32.mxu0 0.0
      %582 = vmatmul.mubr.f32.gmra.mxu0 %v378
      %v583 = vpop.f32.mrf.mxu0
      %v584 = vadd.f32 0.0, %v583
      %v585 = vpop.f32.mrf.mxu0
      %586 = vmatprep.mubr.f32.mxu0 0.0
      %587 = vmatmul.mubr.f32.gmra.mxu0 %v381
      %v588 = vpop.f32.mrf.mxu0
      %v589 = vadd.f32 0.0, %v588
      %v590 = vpop.f32.mrf.mxu0
      %591 = vmatprep.mubr.f32.mxu0 0.0
      %592 = vmatmul.mubr.f32.gmra.mxu0 %v384
      %v593 = vpop.f32.mrf.mxu0
      %v594 = vadd.f32 0.0, %v593
      %v595 = vpop.f32.mrf.mxu0
      %596 = vmatprep.mubr.f32.mxu0 0.0
      %597 = vmatmul.mubr.f32.gmra.mxu0 %v387
      %v598 = vpop.f32.mrf.mxu0
      %v599 = vadd.f32 0.0, %v598
      %v600 = vpop.f32.mrf.mxu0
      %601 = vmatprep.mubr.f32.mxu0 0.0
      %602 = vmatmul.mubr.f32.gmra.mxu0 %v390
      %v603 = vpop.f32.mrf.mxu0
      %v604 = vadd.f32 0.0, %v603
      %v605 = vpop.f32.mrf.mxu0
      %606 = vmatprep.mubr.f32.mxu0 0.0
      %607 = vmatmul.mubr.f32.gmra.mxu0 %v393
      %v608 = vpop.f32.mrf.mxu0
      %v609 = vadd.f32 0.0, %v608
      %v610 = vpop.f32.mrf.mxu0
      %611 = vmatprep.mubr.f32.mxu0 0.0
      %612 = vmatmul.mubr.f32.gmra.mxu0 %v396
      %v613 = vpop.f32.mrf.mxu0
      %v614 = vadd.f32 0.0, %v613
      %v615 = vpop.f32.mrf.mxu0
      %616 = vmatprep.mubr.f32.mxu0 0.0
      %617 = vmatmul.mubr.f32.gmra.mxu0 %v399
      %v618 = vpop.f32.mrf.mxu0
      %v619 = vadd.f32 0.0, %v618
      %v620 = vpop.f32.mrf.mxu0
      %621 = vmatprep.mubr.f32.mxu0 0.0
      %622 = vmatmul.mubr.f32.gmra.mxu0 %v402
      %v623 = vpop.f32.mrf.mxu0
      %v624 = vadd.f32 0.0, %v623
      %v625 = vpop.f32.mrf.mxu0
      %626 = vmatprep.mubr.f32.mxu0 0.0
      %627 = vmatmul.mubr.f32.gmra.mxu0 %v405
      %v628 = vpop.f32.mrf.mxu0
      %v629 = vadd.f32 0.0, %v628
      %v630 = vpop.f32.mrf.mxu0
      %631 = vmatprep.mubr.f32.mxu0 0.0
      %632 = vmatmul.mubr.f32.gmra.mxu0 %v408
      %v633 = vpop.f32.mrf.mxu0
      %v634 = vadd.f32 0.0, %v633
      %v635 = vpop.f32.mrf.mxu0
      %636 = vmatprep.mubr.f32.mxu0 0.0
      %637 = vmatmul.mubr.f32.gmra.mxu0 %v411
      %v638 = vpop.f32.mrf.mxu0
      %v639 = vadd.f32 0.0, %v638
      %v640 = vpop.f32.mrf.mxu0
      %641 = vdwg.mxu0
      %v643 = vsel %vm171, %v250, 0
      %v646 = vsel %vm171, %v251, 0
      %v649 = vsel %vm171, %v252, 0
      %v652 = vsel %vm171, %v253, 0
      %v655 = vsel %vm171, %v254, 0
      %v658 = vsel %vm171, %v255, 0
      %v661 = vsel %vm171, %v256, 0
      %v664 = vsel %vm171, %v257, 0
      %v667 = vsel %vm171, %v258, 0
      %v670 = vsel %vm171, %v259, 0
      %v673 = vsel %vm171, %v260, 0
      %v676 = vsel %vm171, %v261, 0
      %v679 = vsel %vm171, %v262, 0
      %v682 = vsel %vm171, %v263, 0
      %v685 = vsel %vm171, %v264, 0
      %v688 = vsel %vm171, %v265, 0
      %v691 = vsel %vm171, %v266, 0
      %v694 = vsel %vm171, %v267, 0
      %v697 = vsel %vm171, %v268, 0
      %v700 = vsel %vm171, %v269, 0
      %v703 = vsel %vm171, %v270, 0
      %v706 = vsel %vm171, %v271, 0
      %v709 = vsel %vm171, %v272, 0
      %v712 = vsel %vm171, %v273, 0
      %v715 = vsel %vm171, %v274, 0
      %v718 = vsel %vm171, %v275, 0
      %v721 = vsel %vm171, %v276, 0
      %v724 = vsel %vm171, %v277, 0
      %v727 = vsel %vm171, %v278, 0
      %v730 = vsel %vm171, %v279, 0
      %v733 = vsel %vm171, %v280, 0
      %v736 = vsel %vm171, %v281, 0
      %v739 = vsel %vm413, %v282, 0
      %741 = vmatprep.subr.mxu0 0.0
      %742 = vmatpush1.msra.mxu0 0.0
      %743 = vmatprep.subr.mxu0 0.0
      %744 = vmatpush1.msra.mxu0 0.0
      %745 = vmatprep.subr.mxu0 0.0
      %746 = vmatpush1.msra.mxu0 0.0
      %747 = vmatprep.subr.mxu0 0.0
      %748 = vmatpush1.msra.mxu0 0.0
      %749 = vmatprep.subr.mxu0 0.0
      %750 = vmatpush1.msra.mxu0 0.0
      %751 = vmatprep.subr.mxu0 0.0
      %752 = vmatpush1.msra.mxu0 0.0
      %753 = vmatprep.subr.mxu0 0.0
      %754 = vmatpush1.msra.mxu0 0.0
      %755 = vmatprep.subr.mxu0 0.0
      %756 = vmatpush1.msra.mxu0 0.0
      %757 = vmatprep.subr.mxu0 0.0
      %758 = vmatpush1.msra.mxu0 0.0
      %759 = vmatprep.subr.mxu0 0.0
      %760 = vmatpush1.msra.mxu0 0.0
      %761 = vmatprep.subr.mxu0 0.0
      %762 = vmatpush1.msra.mxu0 0.0
      %763 = vmatprep.subr.mxu0 0.0
      %764 = vmatpush1.msra.mxu0 0.0
      %765 = vmatprep.subr.mxu0 0.0
      %766 = vmatpush1.msra.mxu0 0.0
      %767 = vmatprep.subr.mxu0 0.0
      %768 = vmatpush1.msra.mxu0 0.0
      %769 = vmatprep.subr.mxu0 0.0
      %770 = vmatpush1.msra.mxu0 0.0
      %771 = vmatprep.subr.mxu0 0.0
      %772 = vmatpush1.msra.mxu0 %v739
      %773 = vmatprep.subr.mxu0 0.0
      %774 = vmatpush2.msra.mxu0 0.0
      %775 = vmatprep.subr.mxu0 0.0
      %776 = vmatpush2.msra.mxu0 0.0
      %777 = vmatprep.subr.mxu0 0.0
      %778 = vmatpush2.msra.mxu0 0.0
      %779 = vmatprep.subr.mxu0 0.0
      %780 = vmatpush2.msra.mxu0 0.0
      %781 = vmatprep.subr.mxu0 0.0
      %782 = vmatpush2.msra.mxu0 0.0
      %783 = vmatprep.subr.mxu0 0.0
      %784 = vmatpush2.msra.mxu0 0.0
      %785 = vmatprep.subr.mxu0 0.0
      %786 = vmatpush2.msra.mxu0 0.0
      %787 = vmatprep.subr.mxu0 0.0
      %788 = vmatpush2.msra.mxu0 0.0
      %789 = vmatprep.subr.mxu0 0.0
      %790 = vmatpush2.msra.mxu0 0.0
      %791 = vmatprep.subr.mxu0 0.0
      %792 = vmatpush2.msra.mxu0 0.0
      %793 = vmatprep.subr.mxu0 0.0
      %794 = vmatpush2.msra.mxu0 0.0
      %795 = vmatprep.subr.mxu0 0.0
      %796 = vmatpush2.msra.mxu0 0.0
      %797 = vmatprep.subr.mxu0 0.0
      %798 = vmatpush2.msra.mxu0 0.0
      %799 = vmatprep.subr.mxu0 0.0
      %800 = vmatpush2.msra.mxu0 0.0
      %801 = vmatprep.subr.mxu0 0.0
      %802 = vmatpush2.msra.mxu0 0.0
      %803 = vmatprep.subr.mxu0 0.0
      %804 = vmatpush2.msra.mxu0 0.0
      %805 = vmatprep.mubr.f32.mxu0 0.0
      %806 = vmatmul.mubr.f32.gmra.mxu0 %v643
      %v807 = vpop.f32.mrf.mxu0
      %v808 = vadd.f32 %v484, %v807
      %v809 = vpop.f32.mrf.mxu0
      %810 = vmatprep.mubr.f32.mxu0 0.0
      %811 = vmatmul.mubr.f32.gmra.mxu0 %v646
      %v812 = vpop.f32.mrf.mxu0
      %v813 = vadd.f32 %v489, %v812
      %v814 = vpop.f32.mrf.mxu0
      %815 = vmatprep.mubr.f32.mxu0 0.0
      %816 = vmatmul.mubr.f32.gmra.mxu0 %v649
      %v817 = vpop.f32.mrf.mxu0
      %v818 = vadd.f32 %v494, %v817
      %v819 = vpop.f32.mrf.mxu0
      %820 = vmatprep.mubr.f32.mxu0 0.0
      %821 = vmatmul.mubr.f32.gmra.mxu0 %v652
      %v822 = vpop.f32.mrf.mxu0
      %v823 = vadd.f32 %v499, %v822
      %v824 = vpop.f32.mrf.mxu0
      %825 = vmatprep.mubr.f32.mxu0 0.0
      %826 = vmatmul.mubr.f32.gmra.mxu0 %v655
      %v827 = vpop.f32.mrf.mxu0
      %v828 = vadd.f32 %v504, %v827
      %v829 = vpop.f32.mrf.mxu0
      %830 = vmatprep.mubr.f32.mxu0 0.0
      %831 = vmatmul.mubr.f32.gmra.mxu0 %v658
      %v832 = vpop.f32.mrf.mxu0
      %v833 = vadd.f32 %v509, %v832
      %v834 = vpop.f32.mrf.mxu0
      %835 = vmatprep.mubr.f32.mxu0 0.0
      %836 = vmatmul.mubr.f32.gmra.mxu0 %v661
      %v837 = vpop.f32.mrf.mxu0
      %v838 = vadd.f32 %v514, %v837
      %v839 = vpop.f32.mrf.mxu0
      %840 = vmatprep.mubr.f32.mxu0 0.0
      %841 = vmatmul.mubr.f32.gmra.mxu0 %v664
      %v842 = vpop.f32.mrf.mxu0
      %v843 = vadd.f32 %v519, %v842
      %v844 = vpop.f32.mrf.mxu0
      %845 = vmatprep.mubr.f32.mxu0 0.0
      %846 = vmatmul.mubr.f32.gmra.mxu0 %v667
      %v847 = vpop.f32.mrf.mxu0
      %v848 = vadd.f32 %v524, %v847
      %v849 = vpop.f32.mrf.mxu0
      %850 = vmatprep.mubr.f32.mxu0 0.0
      %851 = vmatmul.mubr.f32.gmra.mxu0 %v670
      %v852 = vpop.f32.mrf.mxu0
      %v853 = vadd.f32 %v529, %v852
      %v854 = vpop.f32.mrf.mxu0
      %855 = vmatprep.mubr.f32.mxu0 0.0
      %856 = vmatmul.mubr.f32.gmra.mxu0 %v673
      %v857 = vpop.f32.mrf.mxu0
      %v858 = vadd.f32 %v534, %v857
      %v859 = vpop.f32.mrf.mxu0
      %860 = vmatprep.mubr.f32.mxu0 0.0
      %861 = vmatmul.mubr.f32.gmra.mxu0 %v676
      %v862 = vpop.f32.mrf.mxu0
      %v863 = vadd.f32 %v539, %v862
      %v864 = vpop.f32.mrf.mxu0
      %865 = vmatprep.mubr.f32.mxu0 0.0
      %866 = vmatmul.mubr.f32.gmra.mxu0 %v679
      %v867 = vpop.f32.mrf.mxu0
      %v868 = vadd.f32 %v544, %v867
      %v869 = vpop.f32.mrf.mxu0
      %870 = vmatprep.mubr.f32.mxu0 0.0
      %871 = vmatmul.mubr.f32.gmra.mxu0 %v682
      %v872 = vpop.f32.mrf.mxu0
      %v873 = vadd.f32 %v549, %v872
      %v874 = vpop.f32.mrf.mxu0
      %875 = vmatprep.mubr.f32.mxu0 0.0
      %876 = vmatmul.mubr.f32.gmra.mxu0 %v685
      %v877 = vpop.f32.mrf.mxu0
      %v878 = vadd.f32 %v554, %v877
      %v879 = vpop.f32.mrf.mxu0
      %880 = vmatprep.mubr.f32.mxu0 0.0
      %881 = vmatmul.mubr.f32.gmra.mxu0 %v688
      %v882 = vpop.f32.mrf.mxu0
      %v883 = vadd.f32 %v559, %v882
      %v884 = vpop.f32.mrf.mxu0
      %885 = vmatprep.mubr.f32.mxu0 0.0
      %886 = vmatmul.mubr.f32.gmra.mxu0 %v691
      %v887 = vpop.f32.mrf.mxu0
      %v888 = vadd.f32 %v564, %v887
      %v889 = vpop.f32.mrf.mxu0
      %890 = vmatprep.mubr.f32.mxu0 0.0
      %891 = vmatmul.mubr.f32.gmra.mxu0 %v694
      %v892 = vpop.f32.mrf.mxu0
      %v893 = vadd.f32 %v569, %v892
      %v894 = vpop.f32.mrf.mxu0
      %895 = vmatprep.mubr.f32.mxu0 0.0
      %896 = vmatmul.mubr.f32.gmra.mxu0 %v697
      %v897 = vpop.f32.mrf.mxu0
      %v898 = vadd.f32 %v574, %v897
      %v899 = vpop.f32.mrf.mxu0
      %900 = vmatprep.mubr.f32.mxu0 0.0
      %901 = vmatmul.mubr.f32.gmra.mxu0 %v700
      %v902 = vpop.f32.mrf.mxu0
      %v903 = vadd.f32 %v579, %v902
      %v904 = vpop.f32.mrf.mxu0
      %905 = vmatprep.mubr.f32.mxu0 0.0
      %906 = vmatmul.mubr.f32.gmra.mxu0 %v703
      %v907 = vpop.f32.mrf.mxu0
      %v908 = vadd.f32 %v584, %v907
      %v909 = vpop.f32.mrf.mxu0
      %910 = vmatprep.mubr.f32.mxu0 0.0
      %911 = vmatmul.mubr.f32.gmra.mxu0 %v706
      %v912 = vpop.f32.mrf.mxu0
      %v913 = vadd.f32 %v589, %v912
      %v914 = vpop.f32.mrf.mxu0
      %915 = vmatprep.mubr.f32.mxu0 0.0
      %916 = vmatmul.mubr.f32.gmra.mxu0 %v709
      %v917 = vpop.f32.mrf.mxu0
      %v918 = vadd.f32 %v594, %v917
      %v919 = vpop.f32.mrf.mxu0
      %920 = vmatprep.mubr.f32.mxu0 0.0
      %921 = vmatmul.mubr.f32.gmra.mxu0 %v712
      %v922 = vpop.f32.mrf.mxu0
      %v923 = vadd.f32 %v599, %v922
      %v924 = vpop.f32.mrf.mxu0
      %925 = vmatprep.mubr.f32.mxu0 0.0
      %926 = vmatmul.mubr.f32.gmra.mxu0 %v715
      %v927 = vpop.f32.mrf.mxu0
      %v928 = vadd.f32 %v604, %v927
      %v929 = vpop.f32.mrf.mxu0
      %930 = vmatprep.mubr.f32.mxu0 0.0
      %931 = vmatmul.mubr.f32.gmra.mxu0 %v718
      %v932 = vpop.f32.mrf.mxu0
      %v933 = vadd.f32 %v609, %v932
      %v934 = vpop.f32.mrf.mxu0
      %935 = vmatprep.mubr.f32.mxu0 0.0
      %936 = vmatmul.mubr.f32.gmra.mxu0 %v721
      %v937 = vpop.f32.mrf.mxu0
      %v938 = vadd.f32 %v614, %v937
      %v939 = vpop.f32.mrf.mxu0
      %940 = vmatprep.mubr.f32.mxu0 0.0
      %941 = vmatmul.mubr.f32.gmra.mxu0 %v724
      %v942 = vpop.f32.mrf.mxu0
      %v943 = vadd.f32 %v619, %v942
      %v944 = vpop.f32.mrf.mxu0
      %945 = vmatprep.mubr.f32.mxu0 0.0
      %946 = vmatmul.mubr.f32.gmra.mxu0 %v727
      %v947 = vpop.f32.mrf.mxu0
      %v948 = vadd.f32 %v624, %v947
      %v949 = vpop.f32.mrf.mxu0
      %950 = vmatprep.mubr.f32.mxu0 0.0
      %951 = vmatmul.mubr.f32.gmra.mxu0 %v730
      %v952 = vpop.f32.mrf.mxu0
      %v953 = vadd.f32 %v629, %v952
      %v954 = vpop.f32.mrf.mxu0
      %955 = vmatprep.mubr.f32.mxu0 0.0
      %956 = vmatmul.mubr.f32.gmra.mxu0 %v733
      %v957 = vpop.f32.mrf.mxu0
      %v958 = vadd.f32 %v634, %v957
      %v959 = vpop.f32.mrf.mxu0
      %960 = vmatprep.mubr.f32.mxu0 0.0
      %961 = vmatmul.mubr.f32.gmra.mxu0 %v736
      %v962 = vpop.f32.mrf.mxu0
      %v963 = vadd.f32 %v639, %v962
      %v964 = vpop.f32.mrf.mxu0
      %965 = vdwg.mxu0
      %v966 = vld [vmem:[%s165 + $0x2] sm:$0xff]
      %v967 = vld [vmem:[%s165 + $0xa] sm:$0xff]
      %v968 = vld [vmem:[%s165 + $0x1a] sm:$0xff]
      %v969 = vld [vmem:[%s165 + $0x22] sm:$0xff]
      %v970 = vld [vmem:[%s165 + $0x32] sm:$0xff]
      %v971 = vld [vmem:[%s165 + $0x3a] sm:$0xff]
      %v972 = vld [vmem:[%s165 + $0x4a] sm:$0xff]
      %v973 = vld [vmem:[%s165 + $0x52] sm:$0xff]
      %v974 = vld [vmem:[%s165 + $0x62] sm:$0xff]
      %v975 = vld [vmem:[%s165 + $0x6a] sm:$0xff]
      %v976 = vld [vmem:[%s165 + $0x7a] sm:$0xff]
      %v977 = vld [vmem:[%s165 + $0x82] sm:$0xff]
      %v978 = vld [vmem:[%s165 + $0x92] sm:$0xff]
      %v979 = vld [vmem:[%s165 + $0x9a] sm:$0xff]
      %v980 = vld [vmem:[%s165 + $0xaa] sm:$0xff]
      %v981 = vld [vmem:[%s165 + $0xb2] sm:$0xff]
      %v982 = vld [vmem:[%s165 + $0xc2] sm:$0xff]
      %v983 = vld [vmem:[%s165 + $0xca] sm:$0xff]
      %v984 = vld [vmem:[%s165 + $0xda] sm:$0xff]
      %v985 = vld [vmem:[%s165 + $0xe2] sm:$0xff]
      %v986 = vld [vmem:[%s165 + $0xf2] sm:$0xff]
      %v987 = vld [vmem:[%s165 + $0xfa] sm:$0xff]
      %v988 = vld [vmem:[%s165 + $0x10a] sm:$0xff]
      %v989 = vld [vmem:[%s165 + $0x112] sm:$0xff]
      %v990 = vld [vmem:[%s165 + $0x122] sm:$0xff]
      %v991 = vld [vmem:[%s165 + $0x12a] sm:$0xff]
      %v992 = vld [vmem:[%s165 + $0x13a] sm:$0xff]
      %v993 = vld [vmem:[%s165 + $0x142] sm:$0xff]
      %v994 = vld [vmem:[%s165 + $0x152] sm:$0xff]
      %v995 = vld [vmem:[%s165 + $0x15a] sm:$0xff]
      %v996 = vld [vmem:[%s165 + $0x16a] sm:$0xff]
      %v997 = vld [vmem:[%s165 + $0x172] sm:$0xff]
      %s998 = scalar_lea.vmem %s1, 8
      %v999 = vld [vmem:[%s998] sm:$0xf]
      %v1001 = vsel %vm171, %v966, 0
      %v1004 = vsel %vm171, %v967, 0
      %v1007 = vsel %vm171, %v968, 0
      %v1010 = vsel %vm171, %v969, 0
      %v1013 = vsel %vm171, %v970, 0
      %v1016 = vsel %vm171, %v971, 0
      %v1019 = vsel %vm171, %v972, 0
      %v1022 = vsel %vm171, %v973, 0
      %v1025 = vsel %vm171, %v974, 0
      %v1028 = vsel %vm171, %v975, 0
      %v1031 = vsel %vm171, %v976, 0
      %v1034 = vsel %vm171, %v977, 0
      %v1037 = vsel %vm171, %v978, 0
      %v1040 = vsel %vm171, %v979, 0
      %v1043 = vsel %vm171, %v980, 0
      %v1046 = vsel %vm171, %v981, 0
      %v1049 = vsel %vm171, %v982, 0
      %v1052 = vsel %vm171, %v983, 0
      %v1055 = vsel %vm171, %v984, 0
      %v1058 = vsel %vm171, %v985, 0
      %v1061 = vsel %vm171, %v986, 0
      %v1064 = vsel %vm171, %v987, 0
      %v1067 = vsel %vm171, %v988, 0
      %v1070 = vsel %vm171, %v989, 0
      %v1073 = vsel %vm171, %v990, 0
      %v1076 = vsel %vm171, %v991, 0
      %v1079 = vsel %vm171, %v992, 0
      %v1082 = vsel %vm171, %v993, 0
      %v1085 = vsel %vm171, %v994, 0
      %v1088 = vsel %vm171, %v995, 0
      %v1091 = vsel %vm171, %v996, 0
      %v1094 = vsel %vm171, %v997, 0
      %v1097 = vsel %vm413, %v999, 0
      %1099 = vmatprep.subr.mxu0 0.0
      %1100 = vmatpush1.msra.mxu0 0.0
      %1101 = vmatprep.subr.mxu0 0.0
      %1102 = vmatpush1.msra.mxu0 0.0
      %1103 = vmatprep.subr.mxu0 0.0
      %1104 = vmatpush1.msra.mxu0 0.0
      %1105 = vmatprep.subr.mxu0 0.0
      %1106 = vmatpush1.msra.mxu0 0.0
      %1107 = vmatprep.subr.mxu0 0.0
      %1108 = vmatpush1.msra.mxu0 0.0
      %1109 = vmatprep.subr.mxu0 0.0
      %1110 = vmatpush1.msra.mxu0 0.0
      %1111 = vmatprep.subr.mxu0 0.0
      %1112 = vmatpush1.msra.mxu0 0.0
      %1113 = vmatprep.subr.mxu0 0.0
      %1114 = vmatpush1.msra.mxu0 0.0
      %1115 = vmatprep.subr.mxu0 0.0
      %1116 = vmatpush1.msra.mxu0 0.0
      %1117 = vmatprep.subr.mxu0 0.0
      %1118 = vmatpush1.msra.mxu0 0.0
      %1119 = vmatprep.subr.mxu0 0.0
      %1120 = vmatpush1.msra.mxu0 0.0
      %1121 = vmatprep.subr.mxu0 0.0
      %1122 = vmatpush1.msra.mxu0 0.0
      %1123 = vmatprep.subr.mxu0 0.0
      %1124 = vmatpush1.msra.mxu0 0.0
      %1125 = vmatprep.subr.mxu0 0.0
      %1126 = vmatpush1.msra.mxu0 0.0
      %1127 = vmatprep.subr.mxu0 0.0
      %1128 = vmatpush1.msra.mxu0 0.0
      %1129 = vmatprep.subr.mxu0 0.0
      %1130 = vmatpush1.msra.mxu0 %v1097
      %1131 = vmatprep.subr.mxu0 0.0
      %1132 = vmatpush2.msra.mxu0 0.0
      %1133 = vmatprep.subr.mxu0 0.0
      %1134 = vmatpush2.msra.mxu0 0.0
      %1135 = vmatprep.subr.mxu0 0.0
      %1136 = vmatpush2.msra.mxu0 0.0
      %1137 = vmatprep.subr.mxu0 0.0
      %1138 = vmatpush2.msra.mxu0 0.0
      %1139 = vmatprep.subr.mxu0 0.0
      %1140 = vmatpush2.msra.mxu0 0.0
      %1141 = vmatprep.subr.mxu0 0.0
      %1142 = vmatpush2.msra.mxu0 0.0
      %1143 = vmatprep.subr.mxu0 0.0
      %1144 = vmatpush2.msra.mxu0 0.0
      %1145 = vmatprep.subr.mxu0 0.0
      %1146 = vmatpush2.msra.mxu0 0.0
      %1147 = vmatprep.subr.mxu0 0.0
      %1148 = vmatpush2.msra.mxu0 0.0
      %1149 = vmatprep.subr.mxu0 0.0
      %1150 = vmatpush2.msra.mxu0 0.0
      %1151 = vmatprep.subr.mxu0 0.0
      %1152 = vmatpush2.msra.mxu0 0.0
      %1153 = vmatprep.subr.mxu0 0.0
      %1154 = vmatpush2.msra.mxu0 0.0
      %1155 = vmatprep.subr.mxu0 0.0
      %1156 = vmatpush2.msra.mxu0 0.0
      %1157 = vmatprep.subr.mxu0 0.0
      %1158 = vmatpush2.msra.mxu0 0.0
      %1159 = vmatprep.subr.mxu0 0.0
      %1160 = vmatpush2.msra.mxu0 0.0
      %1161 = vmatprep.subr.mxu0 0.0
      %1162 = vmatpush2.msra.mxu0 0.0
      %1163 = vmatprep.mubr.f32.mxu0 0.0
      %1164 = vmatmul.mubr.f32.gmra.mxu0 %v1001
      %v1165 = vpop.f32.mrf.mxu0
      %v1166 = vadd.f32 0.0, %v1165
      %v1167 = vpop.f32.mrf.mxu0
      %1168 = vmatprep.mubr.f32.mxu0 0.0
      %1169 = vmatmul.mubr.f32.gmra.mxu0 %v1004
      %v1170 = vpop.f32.mrf.mxu0
      %v1171 = vadd.f32 0.0, %v1170
      %v1172 = vpop.f32.mrf.mxu0
      %1173 = vmatprep.mubr.f32.mxu0 0.0
      %1174 = vmatmul.mubr.f32.gmra.mxu0 %v1007
      %v1175 = vpop.f32.mrf.mxu0
      %v1176 = vadd.f32 0.0, %v1175
      %v1177 = vpop.f32.mrf.mxu0
      %1178 = vmatprep.mubr.f32.mxu0 0.0
      %1179 = vmatmul.mubr.f32.gmra.mxu0 %v1010
      %v1180 = vpop.f32.mrf.mxu0
      %v1181 = vadd.f32 0.0, %v1180
      %v1182 = vpop.f32.mrf.mxu0
      %1183 = vmatprep.mubr.f32.mxu0 0.0
      %1184 = vmatmul.mubr.f32.gmra.mxu0 %v1013
      %v1185 = vpop.f32.mrf.mxu0
      %v1186 = vadd.f32 0.0, %v1185
      %v1187 = vpop.f32.mrf.mxu0
      %1188 = vmatprep.mubr.f32.mxu0 0.0
      %1189 = vmatmul.mubr.f32.gmra.mxu0 %v1016
      %v1190 = vpop.f32.mrf.mxu0
      %v1191 = vadd.f32 0.0, %v1190
      %v1192 = vpop.f32.mrf.mxu0
      %1193 = vmatprep.mubr.f32.mxu0 0.0
      %1194 = vmatmul.mubr.f32.gmra.mxu0 %v1019
      %v1195 = vpop.f32.mrf.mxu0
      %v1196 = vadd.f32 0.0, %v1195
      %v1197 = vpop.f32.mrf.mxu0
      %1198 = vmatprep.mubr.f32.mxu0 0.0
      %1199 = vmatmul.mubr.f32.gmra.mxu0 %v1022
      %v1200 = vpop.f32.mrf.mxu0
      %v1201 = vadd.f32 0.0, %v1200
      %v1202 = vpop.f32.mrf.mxu0
      %1203 = vmatprep.mubr.f32.mxu0 0.0
      %1204 = vmatmul.mubr.f32.gmra.mxu0 %v1025
      %v1205 = vpop.f32.mrf.mxu0
      %v1206 = vadd.f32 0.0, %v1205
      %v1207 = vpop.f32.mrf.mxu0
      %1208 = vmatprep.mubr.f32.mxu0 0.0
      %1209 = vmatmul.mubr.f32.gmra.mxu0 %v1028
      %v1210 = vpop.f32.mrf.mxu0
      %v1211 = vadd.f32 0.0, %v1210
      %v1212 = vpop.f32.mrf.mxu0
      %1213 = vmatprep.mubr.f32.mxu0 0.0
      %1214 = vmatmul.mubr.f32.gmra.mxu0 %v1031
      %v1215 = vpop.f32.mrf.mxu0
      %v1216 = vadd.f32 0.0, %v1215
      %v1217 = vpop.f32.mrf.mxu0
      %1218 = vmatprep.mubr.f32.mxu0 0.0
      %1219 = vmatmul.mubr.f32.gmra.mxu0 %v1034
      %v1220 = vpop.f32.mrf.mxu0
      %v1221 = vadd.f32 0.0, %v1220
      %v1222 = vpop.f32.mrf.mxu0
      %1223 = vmatprep.mubr.f32.mxu0 0.0
      %1224 = vmatmul.mubr.f32.gmra.mxu0 %v1037
      %v1225 = vpop.f32.mrf.mxu0
      %v1226 = vadd.f32 0.0, %v1225
      %v1227 = vpop.f32.mrf.mxu0
      %1228 = vmatprep.mubr.f32.mxu0 0.0
      %1229 = vmatmul.mubr.f32.gmra.mxu0 %v1040
      %v1230 = vpop.f32.mrf.mxu0
      %v1231 = vadd.f32 0.0, %v1230
      %v1232 = vpop.f32.mrf.mxu0
      %1233 = vmatprep.mubr.f32.mxu0 0.0
      %1234 = vmatmul.mubr.f32.gmra.mxu0 %v1043
      %v1235 = vpop.f32.mrf.mxu0
      %v1236 = vadd.f32 0.0, %v1235
      %v1237 = vpop.f32.mrf.mxu0
      %1238 = vmatprep.mubr.f32.mxu0 0.0
      %1239 = vmatmul.mubr.f32.gmra.mxu0 %v1046
      %v1240 = vpop.f32.mrf.mxu0
      %v1241 = vadd.f32 0.0, %v1240
      %v1242 = vpop.f32.mrf.mxu0
      %1243 = vmatprep.mubr.f32.mxu0 0.0
      %1244 = vmatmul.mubr.f32.gmra.mxu0 %v1049
      %v1245 = vpop.f32.mrf.mxu0
      %v1246 = vadd.f32 0.0, %v1245
      %v1247 = vpop.f32.mrf.mxu0
      %1248 = vmatprep.mubr.f32.mxu0 0.0
      %1249 = vmatmul.mubr.f32.gmra.mxu0 %v1052
      %v1250 = vpop.f32.mrf.mxu0
      %v1251 = vadd.f32 0.0, %v1250
      %v1252 = vpop.f32.mrf.mxu0
      %1253 = vmatprep.mubr.f32.mxu0 0.0
      %1254 = vmatmul.mubr.f32.gmra.mxu0 %v1055
      %v1255 = vpop.f32.mrf.mxu0
      %v1256 = vadd.f32 0.0, %v1255
      %v1257 = vpop.f32.mrf.mxu0
      %1258 = vmatprep.mubr.f32.mxu0 0.0
      %1259 = vmatmul.mubr.f32.gmra.mxu0 %v1058
      %v1260 = vpop.f32.mrf.mxu0
      %v1261 = vadd.f32 0.0, %v1260
      %v1262 = vpop.f32.mrf.mxu0
      %1263 = vmatprep.mubr.f32.mxu0 0.0
      %1264 = vmatmul.mubr.f32.gmra.mxu0 %v1061
      %v1265 = vpop.f32.mrf.mxu0
      %v1266 = vadd.f32 0.0, %v1265
      %v1267 = vpop.f32.mrf.mxu0
      %1268 = vmatprep.mubr.f32.mxu0 0.0
      %1269 = vmatmul.mubr.f32.gmra.mxu0 %v1064
      %v1270 = vpop.f32.mrf.mxu0
      %v1271 = vadd.f32 0.0, %v1270
      %v1272 = vpop.f32.mrf.mxu0
      %1273 = vmatprep.mubr.f32.mxu0 0.0
      %1274 = vmatmul.mubr.f32.gmra.mxu0 %v1067
      %v1275 = vpop.f32.mrf.mxu0
      %v1276 = vadd.f32 0.0, %v1275
      %v1277 = vpop.f32.mrf.mxu0
      %1278 = vmatprep.mubr.f32.mxu0 0.0
      %1279 = vmatmul.mubr.f32.gmra.mxu0 %v1070
      %v1280 = vpop.f32.mrf.mxu0
      %v1281 = vadd.f32 0.0, %v1280
      %v1282 = vpop.f32.mrf.mxu0
      %1283 = vmatprep.mubr.f32.mxu0 0.0
      %1284 = vmatmul.mubr.f32.gmra.mxu0 %v1073
      %v1285 = vpop.f32.mrf.mxu0
      %v1286 = vadd.f32 0.0, %v1285
      %v1287 = vpop.f32.mrf.mxu0
      %1288 = vmatprep.mubr.f32.mxu0 0.0
      %1289 = vmatmul.mubr.f32.gmra.mxu0 %v1076
      %v1290 = vpop.f32.mrf.mxu0
      %v1291 = vadd.f32 0.0, %v1290
      %v1292 = vpop.f32.mrf.mxu0
      %1293 = vmatprep.mubr.f32.mxu0 0.0
      %1294 = vmatmul.mubr.f32.gmra.mxu0 %v1079
      %v1295 = vpop.f32.mrf.mxu0
      %v1296 = vadd.f32 0.0, %v1295
      %v1297 = vpop.f32.mrf.mxu0
      %1298 = vmatprep.mubr.f32.mxu0 0.0
      %1299 = vmatmul.mubr.f32.gmra.mxu0 %v1082
      %v1300 = vpop.f32.mrf.mxu0
      %v1301 = vadd.f32 0.0, %v1300
      %v1302 = vpop.f32.mrf.mxu0
      %1303 = vmatprep.mubr.f32.mxu0 0.0
      %1304 = vmatmul.mubr.f32.gmra.mxu0 %v1085
      %v1305 = vpop.f32.mrf.mxu0
      %v1306 = vadd.f32 0.0, %v1305
      %v1307 = vpop.f32.mrf.mxu0
      %1308 = vmatprep.mubr.f32.mxu0 0.0
      %1309 = vmatmul.mubr.f32.gmra.mxu0 %v1088
      %v1310 = vpop.f32.mrf.mxu0
      %v1311 = vadd.f32 0.0, %v1310
      %v1312 = vpop.f32.mrf.mxu0
      %1313 = vmatprep.mubr.f32.mxu0 0.0
      %1314 = vmatmul.mubr.f32.gmra.mxu0 %v1091
      %v1315 = vpop.f32.mrf.mxu0
      %v1316 = vadd.f32 0.0, %v1315
      %v1317 = vpop.f32.mrf.mxu0
      %1318 = vmatprep.mubr.f32.mxu0 0.0
      %1319 = vmatmul.mubr.f32.gmra.mxu0 %v1094
      %v1320 = vpop.f32.mrf.mxu0
      %v1321 = vadd.f32 0.0, %v1320
      %v1322 = vpop.f32.mrf.mxu0
      %1323 = vdwg.mxu0
      %v1324 = vadd.f32 %v808, %v1166
      %v1325 = vadd.f32 %v813, %v1171
      %v1326 = vadd.f32 %v818, %v1176
      %v1327 = vadd.f32 %v823, %v1181
      %v1328 = vadd.f32 %v828, %v1186
      %v1329 = vadd.f32 %v833, %v1191
      %v1330 = vadd.f32 %v838, %v1196
      %v1331 = vadd.f32 %v843, %v1201
      %v1332 = vadd.f32 %v848, %v1206
      %v1333 = vadd.f32 %v853, %v1211
      %v1334 = vadd.f32 %v858, %v1216
      %v1335 = vadd.f32 %v863, %v1221
      %v1336 = vadd.f32 %v868, %v1226
      %v1337 = vadd.f32 %v873, %v1231
      %v1338 = vadd.f32 %v878, %v1236
      %v1339 = vadd.f32 %v883, %v1241
      %v1340 = vadd.f32 %v888, %v1246
      %v1341 = vadd.f32 %v893, %v1251
      %v1342 = vadd.f32 %v898, %v1256
      %v1343 = vadd.f32 %v903, %v1261
      %v1344 = vadd.f32 %v908, %v1266
      %v1345 = vadd.f32 %v913, %v1271
      %v1346 = vadd.f32 %v918, %v1276
      %v1347 = vadd.f32 %v923, %v1281
      %v1348 = vadd.f32 %v928, %v1286
      %v1349 = vadd.f32 %v933, %v1291
      %v1350 = vadd.f32 %v938, %v1296
      %v1351 = vadd.f32 %v943, %v1301
      %v1352 = vadd.f32 %v948, %v1306
      %v1353 = vadd.f32 %v953, %v1311
      %v1354 = vadd.f32 %v958, %v1316
      %v1355 = vadd.f32 %v963, %v1321
      %v1356 = vld [vmem:[%s217] sm:$0xff]
      %v1357 = vld [vmem:[%s217 + $0x8] sm:$0xff]
      %v1358 = vld [vmem:[%s217 + $0x18] sm:$0xff]
      %v1359 = vld [vmem:[%s217 + $0x20] sm:$0xff]
      %v1360 = vld [vmem:[%s217 + $0x30] sm:$0xff]
      %v1361 = vld [vmem:[%s217 + $0x38] sm:$0xff]
      %v1362 = vld [vmem:[%s217 + $0x48] sm:$0xff]
      %v1363 = vld [vmem:[%s217 + $0x50] sm:$0xff]
      %v1364 = vld [vmem:[%s217 + $0x60] sm:$0xff]
      %v1365 = vld [vmem:[%s217 + $0x68] sm:$0xff]
      %v1366 = vld [vmem:[%s217 + $0x78] sm:$0xff]
      %v1367 = vld [vmem:[%s217 + $0x80] sm:$0xff]
      %v1368 = vld [vmem:[%s217 + $0x90] sm:$0xff]
      %v1369 = vld [vmem:[%s217 + $0x98] sm:$0xff]
      %v1370 = vld [vmem:[%s217 + $0xa8] sm:$0xff]
      %v1371 = vld [vmem:[%s217 + $0xb0] sm:$0xff]
      %v1372 = vld [vmem:[%s217 + $0xc0] sm:$0xff]
      %v1373 = vld [vmem:[%s217 + $0xc8] sm:$0xff]
      %v1374 = vld [vmem:[%s217 + $0xd8] sm:$0xff]
      %v1375 = vld [vmem:[%s217 + $0xe0] sm:$0xff]
      %v1376 = vld [vmem:[%s217 + $0xf0] sm:$0xff]
      %v1377 = vld [vmem:[%s217 + $0xf8] sm:$0xff]
      %v1378 = vld [vmem:[%s217 + $0x108] sm:$0xff]
      %v1379 = vld [vmem:[%s217 + $0x110] sm:$0xff]
      %v1380 = vld [vmem:[%s217 + $0x120] sm:$0xff]
      %v1381 = vld [vmem:[%s217 + $0x128] sm:$0xff]
      %v1382 = vld [vmem:[%s217 + $0x138] sm:$0xff]
      %v1383 = vld [vmem:[%s217 + $0x140] sm:$0xff]
      %v1384 = vld [vmem:[%s217 + $0x150] sm:$0xff]
      %v1385 = vld [vmem:[%s217 + $0x158] sm:$0xff]
      %v1386 = vld [vmem:[%s217 + $0x168] sm:$0xff]
      %v1387 = vld [vmem:[%s217 + $0x170] sm:$0xff]
      %s1388 = scalar_lea.vmem %s1, 12
      %v1389 = vld [vmem:[%s1388] sm:$0xf]
      %v1391 = vsel %vm171, %v1356, 0
      %v1394 = vsel %vm171, %v1357, 0
      %v1397 = vsel %vm171, %v1358, 0
      %v1400 = vsel %vm171, %v1359, 0
      %v1403 = vsel %vm171, %v1360, 0
      %v1406 = vsel %vm171, %v1361, 0
      %v1409 = vsel %vm171, %v1362, 0
      %v1412 = vsel %vm171, %v1363, 0
      %v1415 = vsel %vm171, %v1364, 0
      %v1418 = vsel %vm171, %v1365, 0
      %v1421 = vsel %vm171, %v1366, 0
      %v1424 = vsel %vm171, %v1367, 0
      %v1427 = vsel %vm171, %v1368, 0
      %v1430 = vsel %vm171, %v1369, 0
      %v1433 = vsel %vm171, %v1370, 0
      %v1436 = vsel %vm171, %v1371, 0
      %v1439 = vsel %vm171, %v1372, 0
      %v1442 = vsel %vm171, %v1373, 0
      %v1445 = vsel %vm171, %v1374, 0
      %v1448 = vsel %vm171, %v1375, 0
      %v1451 = vsel %vm171, %v1376, 0
      %v1454 = vsel %vm171, %v1377, 0
      %v1457 = vsel %vm171, %v1378, 0
      %v1460 = vsel %vm171, %v1379, 0
      %v1463 = vsel %vm171, %v1380, 0
      %v1466 = vsel %vm171, %v1381, 0
      %v1469 = vsel %vm171, %v1382, 0
      %v1472 = vsel %vm171, %v1383, 0
      %v1475 = vsel %vm171, %v1384, 0
      %v1478 = vsel %vm171, %v1385, 0
      %v1481 = vsel %vm171, %v1386, 0
      %v1484 = vsel %vm171, %v1387, 0
      %v1487 = vsel %vm413, %v1389, 0
      %1489 = vmatprep.subr.mxu0 0.0
      %1490 = vmatpush1.msra.mxu0 0.0
      %1491 = vmatprep.subr.mxu0 0.0
      %1492 = vmatpush1.msra.mxu0 0.0
      %1493 = vmatprep.subr.mxu0 0.0
      %1494 = vmatpush1.msra.mxu0 0.0
      %1495 = vmatprep.subr.mxu0 0.0
      %1496 = vmatpush1.msra.mxu0 0.0
      %1497 = vmatprep.subr.mxu0 0.0
      %1498 = vmatpush1.msra.mxu0 0.0
      %1499 = vmatprep.subr.mxu0 0.0
      %1500 = vmatpush1.msra.mxu0 0.0
      %1501 = vmatprep.subr.mxu0 0.0
      %1502 = vmatpush1.msra.mxu0 0.0
      %1503 = vmatprep.subr.mxu0 0.0
      %1504 = vmatpush1.msra.mxu0 0.0
      %1505 = vmatprep.subr.mxu0 0.0
      %1506 = vmatpush1.msra.mxu0 0.0
      %1507 = vmatprep.subr.mxu0 0.0
      %1508 = vmatpush1.msra.mxu0 0.0
      %1509 = vmatprep.subr.mxu0 0.0
      %1510 = vmatpush1.msra.mxu0 0.0
      %1511 = vmatprep.subr.mxu0 0.0
      %1512 = vmatpush1.msra.mxu0 0.0
      %1513 = vmatprep.subr.mxu0 0.0
      %1514 = vmatpush1.msra.mxu0 0.0
      %1515 = vmatprep.subr.mxu0 0.0
      %1516 = vmatpush1.msra.mxu0 0.0
      %1517 = vmatprep.subr.mxu0 0.0
      %1518 = vmatpush1.msra.mxu0 0.0
      %1519 = vmatprep.subr.mxu0 0.0
      %1520 = vmatpush1.msra.mxu0 %v1487
      %1521 = vmatprep.subr.mxu0 0.0
      %1522 = vmatpush2.msra.mxu0 0.0
      %1523 = vmatprep.subr.mxu0 0.0
      %1524 = vmatpush2.msra.mxu0 0.0
      %1525 = vmatprep.subr.mxu0 0.0
      %1526 = vmatpush2.msra.mxu0 0.0
      %1527 = vmatprep.subr.mxu0 0.0
      %1528 = vmatpush2.msra.mxu0 0.0
      %1529 = vmatprep.subr.mxu0 0.0
      %1530 = vmatpush2.msra.mxu0 0.0
      %1531 = vmatprep.subr.mxu0 0.0
      %1532 = vmatpush2.msra.mxu0 0.0
      %1533 = vmatprep.subr.mxu0 0.0
      %1534 = vmatpush2.msra.mxu0 0.0
      %1535 = vmatprep.subr.mxu0 0.0
      %1536 = vmatpush2.msra.mxu0 0.0
      %1537 = vmatprep.subr.mxu0 0.0
      %1538 = vmatpush2.msra.mxu0 0.0
      %1539 = vmatprep.subr.mxu0 0.0
      %1540 = vmatpush2.msra.mxu0 0.0
      %1541 = vmatprep.subr.mxu0 0.0
      %1542 = vmatpush2.msra.mxu0 0.0
      %1543 = vmatprep.subr.mxu0 0.0
      %1544 = vmatpush2.msra.mxu0 0.0
      %1545 = vmatprep.subr.mxu0 0.0
      %1546 = vmatpush2.msra.mxu0 0.0
      %1547 = vmatprep.subr.mxu0 0.0
      %1548 = vmatpush2.msra.mxu0 0.0
      %1549 = vmatprep.subr.mxu0 0.0
      %1550 = vmatpush2.msra.mxu0 0.0
      %1551 = vmatprep.subr.mxu0 0.0
      %1552 = vmatpush2.msra.mxu0 0.0
      %1553 = vmatprep.mubr.f32.mxu0 0.0
      %1554 = vmatmul.mubr.f32.gmra.mxu0 %v1391
      %v1555 = vpop.f32.mrf.mxu0
      %v1556 = vadd.f32 0.0, %v1555
      %v1557 = vpop.f32.mrf.mxu0
      %1558 = vmatprep.mubr.f32.mxu0 0.0
      %1559 = vmatmul.mubr.f32.gmra.mxu0 %v1394
      %v1560 = vpop.f32.mrf.mxu0
      %v1561 = vadd.f32 0.0, %v1560
      %v1562 = vpop.f32.mrf.mxu0
      %1563 = vmatprep.mubr.f32.mxu0 0.0
      %1564 = vmatmul.mubr.f32.gmra.mxu0 %v1397
      %v1565 = vpop.f32.mrf.mxu0
      %v1566 = vadd.f32 0.0, %v1565
      %v1567 = vpop.f32.mrf.mxu0
      %1568 = vmatprep.mubr.f32.mxu0 0.0
      %1569 = vmatmul.mubr.f32.gmra.mxu0 %v1400
      %v1570 = vpop.f32.mrf.mxu0
      %v1571 = vadd.f32 0.0, %v1570
      %v1572 = vpop.f32.mrf.mxu0
      %1573 = vmatprep.mubr.f32.mxu0 0.0
      %1574 = vmatmul.mubr.f32.gmra.mxu0 %v1403
      %v1575 = vpop.f32.mrf.mxu0
      %v1576 = vadd.f32 0.0, %v1575
      %v1577 = vpop.f32.mrf.mxu0
      %1578 = vmatprep.mubr.f32.mxu0 0.0
      %1579 = vmatmul.mubr.f32.gmra.mxu0 %v1406
      %v1580 = vpop.f32.mrf.mxu0
      %v1581 = vadd.f32 0.0, %v1580
      %v1582 = vpop.f32.mrf.mxu0
      %1583 = vmatprep.mubr.f32.mxu0 0.0
      %1584 = vmatmul.mubr.f32.gmra.mxu0 %v1409
      %v1585 = vpop.f32.mrf.mxu0
      %v1586 = vadd.f32 0.0, %v1585
      %v1587 = vpop.f32.mrf.mxu0
      %1588 = vmatprep.mubr.f32.mxu0 0.0
      %1589 = vmatmul.mubr.f32.gmra.mxu0 %v1412
      %v1590 = vpop.f32.mrf.mxu0
      %v1591 = vadd.f32 0.0, %v1590
      %v1592 = vpop.f32.mrf.mxu0
      %1593 = vmatprep.mubr.f32.mxu0 0.0
      %1594 = vmatmul.mubr.f32.gmra.mxu0 %v1415
      %v1595 = vpop.f32.mrf.mxu0
      %v1596 = vadd.f32 0.0, %v1595
      %v1597 = vpop.f32.mrf.mxu0
      %1598 = vmatprep.mubr.f32.mxu0 0.0
      %1599 = vmatmul.mubr.f32.gmra.mxu0 %v1418
      %v1600 = vpop.f32.mrf.mxu0
      %v1601 = vadd.f32 0.0, %v1600
      %v1602 = vpop.f32.mrf.mxu0
      %1603 = vmatprep.mubr.f32.mxu0 0.0
      %1604 = vmatmul.mubr.f32.gmra.mxu0 %v1421
      %v1605 = vpop.f32.mrf.mxu0
      %v1606 = vadd.f32 0.0, %v1605
      %v1607 = vpop.f32.mrf.mxu0
      %1608 = vmatprep.mubr.f32.mxu0 0.0
      %1609 = vmatmul.mubr.f32.gmra.mxu0 %v1424
      %v1610 = vpop.f32.mrf.mxu0
      %v1611 = vadd.f32 0.0, %v1610
      %v1612 = vpop.f32.mrf.mxu0
      %1613 = vmatprep.mubr.f32.mxu0 0.0
      %1614 = vmatmul.mubr.f32.gmra.mxu0 %v1427
      %v1615 = vpop.f32.mrf.mxu0
      %v1616 = vadd.f32 0.0, %v1615
      %v1617 = vpop.f32.mrf.mxu0
      %1618 = vmatprep.mubr.f32.mxu0 0.0
      %1619 = vmatmul.mubr.f32.gmra.mxu0 %v1430
      %v1620 = vpop.f32.mrf.mxu0
      %v1621 = vadd.f32 0.0, %v1620
      %v1622 = vpop.f32.mrf.mxu0
      %1623 = vmatprep.mubr.f32.mxu0 0.0
      %1624 = vmatmul.mubr.f32.gmra.mxu0 %v1433
      %v1625 = vpop.f32.mrf.mxu0
      %v1626 = vadd.f32 0.0, %v1625
      %v1627 = vpop.f32.mrf.mxu0
      %1628 = vmatprep.mubr.f32.mxu0 0.0
      %1629 = vmatmul.mubr.f32.gmra.mxu0 %v1436
      %v1630 = vpop.f32.mrf.mxu0
      %v1631 = vadd.f32 0.0, %v1630
      %v1632 = vpop.f32.mrf.mxu0
      %1633 = vmatprep.mubr.f32.mxu0 0.0
      %1634 = vmatmul.mubr.f32.gmra.mxu0 %v1439
      %v1635 = vpop.f32.mrf.mxu0
      %v1636 = vadd.f32 0.0, %v1635
      %v1637 = vpop.f32.mrf.mxu0
      %1638 = vmatprep.mubr.f32.mxu0 0.0
      %1639 = vmatmul.mubr.f32.gmra.mxu0 %v1442
      %v1640 = vpop.f32.mrf.mxu0
      %v1641 = vadd.f32 0.0, %v1640
      %v1642 = vpop.f32.mrf.mxu0
      %1643 = vmatprep.mubr.f32.mxu0 0.0
      %1644 = vmatmul.mubr.f32.gmra.mxu0 %v1445
      %v1645 = vpop.f32.mrf.mxu0
      %v1646 = vadd.f32 0.0, %v1645
      %v1647 = vpop.f32.mrf.mxu0
      %1648 = vmatprep.mubr.f32.mxu0 0.0
      %1649 = vmatmul.mubr.f32.gmra.mxu0 %v1448
      %v1650 = vpop.f32.mrf.mxu0
      %v1651 = vadd.f32 0.0, %v1650
      %v1652 = vpop.f32.mrf.mxu0
      %1653 = vmatprep.mubr.f32.mxu0 0.0
      %1654 = vmatmul.mubr.f32.gmra.mxu0 %v1451
      %v1655 = vpop.f32.mrf.mxu0
      %v1656 = vadd.f32 0.0, %v1655
      %v1657 = vpop.f32.mrf.mxu0
      %1658 = vmatprep.mubr.f32.mxu0 0.0
      %1659 = vmatmul.mubr.f32.gmra.mxu0 %v1454
      %v1660 = vpop.f32.mrf.mxu0
      %v1661 = vadd.f32 0.0, %v1660
      %v1662 = vpop.f32.mrf.mxu0
      %1663 = vmatprep.mubr.f32.mxu0 0.0
      %1664 = vmatmul.mubr.f32.gmra.mxu0 %v1457
      %v1665 = vpop.f32.mrf.mxu0
      %v1666 = vadd.f32 0.0, %v1665
      %v1667 = vpop.f32.mrf.mxu0
      %1668 = vmatprep.mubr.f32.mxu0 0.0
      %1669 = vmatmul.mubr.f32.gmra.mxu0 %v1460
      %v1670 = vpop.f32.mrf.mxu0
      %v1671 = vadd.f32 0.0, %v1670
      %v1672 = vpop.f32.mrf.mxu0
      %1673 = vmatprep.mubr.f32.mxu0 0.0
      %1674 = vmatmul.mubr.f32.gmra.mxu0 %v1463
      %v1675 = vpop.f32.mrf.mxu0
      %v1676 = vadd.f32 0.0, %v1675
      %v1677 = vpop.f32.mrf.mxu0
      %1678 = vmatprep.mubr.f32.mxu0 0.0
      %1679 = vmatmul.mubr.f32.gmra.mxu0 %v1466
      %v1680 = vpop.f32.mrf.mxu0
      %v1681 = vadd.f32 0.0, %v1680
      %v1682 = vpop.f32.mrf.mxu0
      %1683 = vmatprep.mubr.f32.mxu0 0.0
      %1684 = vmatmul.mubr.f32.gmra.mxu0 %v1469
      %v1685 = vpop.f32.mrf.mxu0
      %v1686 = vadd.f32 0.0, %v1685
      %v1687 = vpop.f32.mrf.mxu0
      %1688 = vmatprep.mubr.f32.mxu0 0.0
      %1689 = vmatmul.mubr.f32.gmra.mxu0 %v1472
      %v1690 = vpop.f32.mrf.mxu0
      %v1691 = vadd.f32 0.0, %v1690
      %v1692 = vpop.f32.mrf.mxu0
      %1693 = vmatprep.mubr.f32.mxu0 0.0
      %1694 = vmatmul.mubr.f32.gmra.mxu0 %v1475
      %v1695 = vpop.f32.mrf.mxu0
      %v1696 = vadd.f32 0.0, %v1695
      %v1697 = vpop.f32.mrf.mxu0
      %1698 = vmatprep.mubr.f32.mxu0 0.0
      %1699 = vmatmul.mubr.f32.gmra.mxu0 %v1478
      %v1700 = vpop.f32.mrf.mxu0
      %v1701 = vadd.f32 0.0, %v1700
      %v1702 = vpop.f32.mrf.mxu0
      %1703 = vmatprep.mubr.f32.mxu0 0.0
      %1704 = vmatmul.mubr.f32.gmra.mxu0 %v1481
      %v1705 = vpop.f32.mrf.mxu0
      %v1706 = vadd.f32 0.0, %v1705
      %v1707 = vpop.f32.mrf.mxu0
      %1708 = vmatprep.mubr.f32.mxu0 0.0
      %1709 = vmatmul.mubr.f32.gmra.mxu0 %v1484
      %v1710 = vpop.f32.mrf.mxu0
      %v1711 = vadd.f32 0.0, %v1710
      %v1712 = vpop.f32.mrf.mxu0
      %1713 = vdwg.mxu0
      %v1714 = vadd.f32 %v1324, %v1556
      %v1715 = vadd.f32 %v1325, %v1561
      %v1716 = vadd.f32 %v1326, %v1566
      %v1717 = vadd.f32 %v1327, %v1571
      %v1718 = vadd.f32 %v1328, %v1576
      %v1719 = vadd.f32 %v1329, %v1581
      %v1720 = vadd.f32 %v1330, %v1586
      %v1721 = vadd.f32 %v1331, %v1591
      %v1722 = vadd.f32 %v1332, %v1596
      %v1723 = vadd.f32 %v1333, %v1601
      %v1724 = vadd.f32 %v1334, %v1606
      %v1725 = vadd.f32 %v1335, %v1611
      %v1726 = vadd.f32 %v1336, %v1616
      %v1727 = vadd.f32 %v1337, %v1621
      %v1728 = vadd.f32 %v1338, %v1626
      %v1729 = vadd.f32 %v1339, %v1631
      %v1730 = vadd.f32 %v1340, %v1636
      %v1731 = vadd.f32 %v1341, %v1641
      %v1732 = vadd.f32 %v1342, %v1646
      %v1733 = vadd.f32 %v1343, %v1651
      %v1734 = vadd.f32 %v1344, %v1656
      %v1735 = vadd.f32 %v1345, %v1661
      %v1736 = vadd.f32 %v1346, %v1666
      %v1737 = vadd.f32 %v1347, %v1671
      %v1738 = vadd.f32 %v1348, %v1676
      %v1739 = vadd.f32 %v1349, %v1681
      %v1740 = vadd.f32 %v1350, %v1686
      %v1741 = vadd.f32 %v1351, %v1691
      %v1742 = vadd.f32 %v1352, %v1696
      %v1743 = vadd.f32 %v1353, %v1701
      %v1744 = vadd.f32 %v1354, %v1706
      %v1745 = vadd.f32 %v1355, %v1711
      %s1746 = scalar_lea.vmem %s1, 16
      %v1747 = vld [vmem:[%s1746] sm:$0xf]
      %v1749 = vsel %vm171, %v218, 0
      %v1752 = vsel %vm171, %v219, 0
      %v1755 = vsel %vm171, %v220, 0
      %v1758 = vsel %vm171, %v221, 0
      %v1761 = vsel %vm171, %v222, 0
      %v1764 = vsel %vm171, %v223, 0
      %v1767 = vsel %vm171, %v224, 0
      %v1770 = vsel %vm171, %v225, 0
      %v1773 = vsel %vm171, %v226, 0
      %v1776 = vsel %vm171, %v227, 0
      %v1779 = vsel %vm171, %v228, 0
      %v1782 = vsel %vm171, %v229, 0
      %v1785 = vsel %vm171, %v230, 0
      %v1788 = vsel %vm171, %v231, 0
      %v1791 = vsel %vm171, %v232, 0
      %v1794 = vsel %vm171, %v233, 0
      %v1797 = vsel %vm171, %v234, 0
      %v1800 = vsel %vm171, %v235, 0
      %v1803 = vsel %vm171, %v236, 0
      %v1806 = vsel %vm171, %v237, 0
      %v1809 = vsel %vm171, %v238, 0
      %v1812 = vsel %vm171, %v239, 0
      %v1815 = vsel %vm171, %v240, 0
      %v1818 = vsel %vm171, %v241, 0
      %v1821 = vsel %vm171, %v242, 0
      %v1824 = vsel %vm171, %v243, 0
      %v1827 = vsel %vm171, %v244, 0
      %v1830 = vsel %vm171, %v245, 0
      %v1833 = vsel %vm171, %v246, 0
      %v1836 = vsel %vm171, %v247, 0
      %v1839 = vsel %vm171, %v248, 0
      %v1842 = vsel %vm171, %v249, 0
      %v1845 = vsel %vm413, %v1747, 0
      %1847 = vmatprep.subr.mxu0 0.0
      %1848 = vmatpush1.msra.mxu0 0.0
      %1849 = vmatprep.subr.mxu0 0.0
      %1850 = vmatpush1.msra.mxu0 0.0
      %1851 = vmatprep.subr.mxu0 0.0
      %1852 = vmatpush1.msra.mxu0 0.0
      %1853 = vmatprep.subr.mxu0 0.0
      %1854 = vmatpush1.msra.mxu0 0.0
      %1855 = vmatprep.subr.mxu0 0.0
      %1856 = vmatpush1.msra.mxu0 0.0
      %1857 = vmatprep.subr.mxu0 0.0
      %1858 = vmatpush1.msra.mxu0 0.0
      %1859 = vmatprep.subr.mxu0 0.0
      %1860 = vmatpush1.msra.mxu0 0.0
      %1861 = vmatprep.subr.mxu0 0.0
      %1862 = vmatpush1.msra.mxu0 0.0
      %1863 = vmatprep.subr.mxu0 0.0
      %1864 = vmatpush1.msra.mxu0 0.0
      %1865 = vmatprep.subr.mxu0 0.0
      %1866 = vmatpush1.msra.mxu0 0.0
      %1867 = vmatprep.subr.mxu0 0.0
      %1868 = vmatpush1.msra.mxu0 0.0
      %1869 = vmatprep.subr.mxu0 0.0
      %1870 = vmatpush1.msra.mxu0 0.0
      %1871 = vmatprep.subr.mxu0 0.0
      %1872 = vmatpush1.msra.mxu0 0.0
      %1873 = vmatprep.subr.mxu0 0.0
      %1874 = vmatpush1.msra.mxu0 0.0
      %1875 = vmatprep.subr.mxu0 0.0
      %1876 = vmatpush1.msra.mxu0 0.0
      %1877 = vmatprep.subr.mxu0 0.0
      %1878 = vmatpush1.msra.mxu0 %v1845
      %1879 = vmatprep.subr.mxu0 0.0
      %1880 = vmatpush2.msra.mxu0 0.0
      %1881 = vmatprep.subr.mxu0 0.0
      %1882 = vmatpush2.msra.mxu0 0.0
      %1883 = vmatprep.subr.mxu0 0.0
      %1884 = vmatpush2.msra.mxu0 0.0
      %1885 = vmatprep.subr.mxu0 0.0
      %1886 = vmatpush2.msra.mxu0 0.0
      %1887 = vmatprep.subr.mxu0 0.0
      %1888 = vmatpush2.msra.mxu0 0.0
      %1889 = vmatprep.subr.mxu0 0.0
      %1890 = vmatpush2.msra.mxu0 0.0
      %1891 = vmatprep.subr.mxu0 0.0
      %1892 = vmatpush2.msra.mxu0 0.0
      %1893 = vmatprep.subr.mxu0 0.0
      %1894 = vmatpush2.msra.mxu0 0.0
      %1895 = vmatprep.subr.mxu0 0.0
      %1896 = vmatpush2.msra.mxu0 0.0
      %1897 = vmatprep.subr.mxu0 0.0
      %1898 = vmatpush2.msra.mxu0 0.0
      %1899 = vmatprep.subr.mxu0 0.0
      %1900 = vmatpush2.msra.mxu0 0.0
      %1901 = vmatprep.subr.mxu0 0.0
      %1902 = vmatpush2.msra.mxu0 0.0
      %1903 = vmatprep.subr.mxu0 0.0
      %1904 = vmatpush2.msra.mxu0 0.0
      %1905 = vmatprep.subr.mxu0 0.0
      %1906 = vmatpush2.msra.mxu0 0.0
      %1907 = vmatprep.subr.mxu0 0.0
      %1908 = vmatpush2.msra.mxu0 0.0
      %1909 = vmatprep.subr.mxu0 0.0
      %1910 = vmatpush2.msra.mxu0 0.0
      %1911 = vmatprep.mubr.f32.mxu0 0.0
      %1912 = vmatmul.mubr.f32.gmra.mxu0 %v1749
      %v1913 = vpop.f32.mrf.mxu0
      %v1914 = vadd.f32 0.0, %v1913
      %v1915 = vpop.f32.mrf.mxu0
      %1916 = vmatprep.mubr.f32.mxu0 0.0
      %1917 = vmatmul.mubr.f32.gmra.mxu0 %v1752
      %v1918 = vpop.f32.mrf.mxu0
      %v1919 = vadd.f32 0.0, %v1918
      %v1920 = vpop.f32.mrf.mxu0
      %1921 = vmatprep.mubr.f32.mxu0 0.0
      %1922 = vmatmul.mubr.f32.gmra.mxu0 %v1755
      %v1923 = vpop.f32.mrf.mxu0
      %v1924 = vadd.f32 0.0, %v1923
      %v1925 = vpop.f32.mrf.mxu0
      %1926 = vmatprep.mubr.f32.mxu0 0.0
      %1927 = vmatmul.mubr.f32.gmra.mxu0 %v1758
      %v1928 = vpop.f32.mrf.mxu0
      %v1929 = vadd.f32 0.0, %v1928
      %v1930 = vpop.f32.mrf.mxu0
      %1931 = vmatprep.mubr.f32.mxu0 0.0
      %1932 = vmatmul.mubr.f32.gmra.mxu0 %v1761
      %v1933 = vpop.f32.mrf.mxu0
      %v1934 = vadd.f32 0.0, %v1933
      %v1935 = vpop.f32.mrf.mxu0
      %1936 = vmatprep.mubr.f32.mxu0 0.0
      %1937 = vmatmul.mubr.f32.gmra.mxu0 %v1764
      %v1938 = vpop.f32.mrf.mxu0
      %v1939 = vadd.f32 0.0, %v1938
      %v1940 = vpop.f32.mrf.mxu0
      %1941 = vmatprep.mubr.f32.mxu0 0.0
      %1942 = vmatmul.mubr.f32.gmra.mxu0 %v1767
      %v1943 = vpop.f32.mrf.mxu0
      %v1944 = vadd.f32 0.0, %v1943
      %v1945 = vpop.f32.mrf.mxu0
      %1946 = vmatprep.mubr.f32.mxu0 0.0
      %1947 = vmatmul.mubr.f32.gmra.mxu0 %v1770
      %v1948 = vpop.f32.mrf.mxu0
      %v1949 = vadd.f32 0.0, %v1948
      %v1950 = vpop.f32.mrf.mxu0
      %1951 = vmatprep.mubr.f32.mxu0 0.0
      %1952 = vmatmul.mubr.f32.gmra.mxu0 %v1773
      %v1953 = vpop.f32.mrf.mxu0
      %v1954 = vadd.f32 0.0, %v1953
      %v1955 = vpop.f32.mrf.mxu0
      %1956 = vmatprep.mubr.f32.mxu0 0.0
      %1957 = vmatmul.mubr.f32.gmra.mxu0 %v1776
      %v1958 = vpop.f32.mrf.mxu0
      %v1959 = vadd.f32 0.0, %v1958
      %v1960 = vpop.f32.mrf.mxu0
      %1961 = vmatprep.mubr.f32.mxu0 0.0
      %1962 = vmatmul.mubr.f32.gmra.mxu0 %v1779
      %v1963 = vpop.f32.mrf.mxu0
      %v1964 = vadd.f32 0.0, %v1963
      %v1965 = vpop.f32.mrf.mxu0
      %1966 = vmatprep.mubr.f32.mxu0 0.0
      %1967 = vmatmul.mubr.f32.gmra.mxu0 %v1782
      %v1968 = vpop.f32.mrf.mxu0
      %v1969 = vadd.f32 0.0, %v1968
      %v1970 = vpop.f32.mrf.mxu0
      %1971 = vmatprep.mubr.f32.mxu0 0.0
      %1972 = vmatmul.mubr.f32.gmra.mxu0 %v1785
      %v1973 = vpop.f32.mrf.mxu0
      %v1974 = vadd.f32 0.0, %v1973
      %v1975 = vpop.f32.mrf.mxu0
      %1976 = vmatprep.mubr.f32.mxu0 0.0
      %1977 = vmatmul.mubr.f32.gmra.mxu0 %v1788
      %v1978 = vpop.f32.mrf.mxu0
      %v1979 = vadd.f32 0.0, %v1978
      %v1980 = vpop.f32.mrf.mxu0
      %1981 = vmatprep.mubr.f32.mxu0 0.0
      %1982 = vmatmul.mubr.f32.gmra.mxu0 %v1791
      %v1983 = vpop.f32.mrf.mxu0
      %v1984 = vadd.f32 0.0, %v1983
      %v1985 = vpop.f32.mrf.mxu0
      %1986 = vmatprep.mubr.f32.mxu0 0.0
      %1987 = vmatmul.mubr.f32.gmra.mxu0 %v1794
      %v1988 = vpop.f32.mrf.mxu0
      %v1989 = vadd.f32 0.0, %v1988
      %v1990 = vpop.f32.mrf.mxu0
      %1991 = vmatprep.mubr.f32.mxu0 0.0
      %1992 = vmatmul.mubr.f32.gmra.mxu0 %v1797
      %v1993 = vpop.f32.mrf.mxu0
      %v1994 = vadd.f32 0.0, %v1993
      %v1995 = vpop.f32.mrf.mxu0
      %1996 = vmatprep.mubr.f32.mxu0 0.0
      %1997 = vmatmul.mubr.f32.gmra.mxu0 %v1800
      %v1998 = vpop.f32.mrf.mxu0
      %v1999 = vadd.f32 0.0, %v1998
      %v2000 = vpop.f32.mrf.mxu0
      %2001 = vmatprep.mubr.f32.mxu0 0.0
      %2002 = vmatmul.mubr.f32.gmra.mxu0 %v1803
      %v2003 = vpop.f32.mrf.mxu0
      %v2004 = vadd.f32 0.0, %v2003
      %v2005 = vpop.f32.mrf.mxu0
      %2006 = vmatprep.mubr.f32.mxu0 0.0
      %2007 = vmatmul.mubr.f32.gmra.mxu0 %v1806
      %v2008 = vpop.f32.mrf.mxu0
      %v2009 = vadd.f32 0.0, %v2008
      %v2010 = vpop.f32.mrf.mxu0
      %2011 = vmatprep.mubr.f32.mxu0 0.0
      %2012 = vmatmul.mubr.f32.gmra.mxu0 %v1809
      %v2013 = vpop.f32.mrf.mxu0
      %v2014 = vadd.f32 0.0, %v2013
      %v2015 = vpop.f32.mrf.mxu0
      %2016 = vmatprep.mubr.f32.mxu0 0.0
      %2017 = vmatmul.mubr.f32.gmra.mxu0 %v1812
      %v2018 = vpop.f32.mrf.mxu0
      %v2019 = vadd.f32 0.0, %v2018
      %v2020 = vpop.f32.mrf.mxu0
      %2021 = vmatprep.mubr.f32.mxu0 0.0
      %2022 = vmatmul.mubr.f32.gmra.mxu0 %v1815
      %v2023 = vpop.f32.mrf.mxu0
      %v2024 = vadd.f32 0.0, %v2023
      %v2025 = vpop.f32.mrf.mxu0
      %2026 = vmatprep.mubr.f32.mxu0 0.0
      %2027 = vmatmul.mubr.f32.gmra.mxu0 %v1818
      %v2028 = vpop.f32.mrf.mxu0
      %v2029 = vadd.f32 0.0, %v2028
      %v2030 = vpop.f32.mrf.mxu0
      %2031 = vmatprep.mubr.f32.mxu0 0.0
      %2032 = vmatmul.mubr.f32.gmra.mxu0 %v1821
      %v2033 = vpop.f32.mrf.mxu0
      %v2034 = vadd.f32 0.0, %v2033
      %v2035 = vpop.f32.mrf.mxu0
      %2036 = vmatprep.mubr.f32.mxu0 0.0
      %2037 = vmatmul.mubr.f32.gmra.mxu0 %v1824
      %v2038 = vpop.f32.mrf.mxu0
      %v2039 = vadd.f32 0.0, %v2038
      %v2040 = vpop.f32.mrf.mxu0
      %2041 = vmatprep.mubr.f32.mxu0 0.0
      %2042 = vmatmul.mubr.f32.gmra.mxu0 %v1827
      %v2043 = vpop.f32.mrf.mxu0
      %v2044 = vadd.f32 0.0, %v2043
      %v2045 = vpop.f32.mrf.mxu0
      %2046 = vmatprep.mubr.f32.mxu0 0.0
      %2047 = vmatmul.mubr.f32.gmra.mxu0 %v1830
      %v2048 = vpop.f32.mrf.mxu0
      %v2049 = vadd.f32 0.0, %v2048
      %v2050 = vpop.f32.mrf.mxu0
      %2051 = vmatprep.mubr.f32.mxu0 0.0
      %2052 = vmatmul.mubr.f32.gmra.mxu0 %v1833
      %v2053 = vpop.f32.mrf.mxu0
      %v2054 = vadd.f32 0.0, %v2053
      %v2055 = vpop.f32.mrf.mxu0
      %2056 = vmatprep.mubr.f32.mxu0 0.0
      %2057 = vmatmul.mubr.f32.gmra.mxu0 %v1836
      %v2058 = vpop.f32.mrf.mxu0
      %v2059 = vadd.f32 0.0, %v2058
      %v2060 = vpop.f32.mrf.mxu0
      %2061 = vmatprep.mubr.f32.mxu0 0.0
      %2062 = vmatmul.mubr.f32.gmra.mxu0 %v1839
      %v2063 = vpop.f32.mrf.mxu0
      %v2064 = vadd.f32 0.0, %v2063
      %v2065 = vpop.f32.mrf.mxu0
      %2066 = vmatprep.mubr.f32.mxu0 0.0
      %2067 = vmatmul.mubr.f32.gmra.mxu0 %v1842
      %v2068 = vpop.f32.mrf.mxu0
      %v2069 = vadd.f32 0.0, %v2068
      %v2070 = vpop.f32.mrf.mxu0
      %2071 = vdwg.mxu0
      %v2072 = vadd.f32 %v1714, %v1914
      %v2073 = vadd.f32 %v1715, %v1919
      %v2074 = vadd.f32 %v1716, %v1924
      %v2075 = vadd.f32 %v1717, %v1929
      %v2076 = vadd.f32 %v1718, %v1934
      %v2077 = vadd.f32 %v1719, %v1939
      %v2078 = vadd.f32 %v1720, %v1944
      %v2079 = vadd.f32 %v1721, %v1949
      %v2080 = vadd.f32 %v1722, %v1954
      %v2081 = vadd.f32 %v1723, %v1959
      %v2082 = vadd.f32 %v1724, %v1964
      %v2083 = vadd.f32 %v1725, %v1969
      %v2084 = vadd.f32 %v1726, %v1974
      %v2085 = vadd.f32 %v1727, %v1979
      %v2086 = vadd.f32 %v1728, %v1984
      %v2087 = vadd.f32 %v1729, %v1989
      %v2088 = vadd.f32 %v1730, %v1994
      %v2089 = vadd.f32 %v1731, %v1999
      %v2090 = vadd.f32 %v1732, %v2004
      %v2091 = vadd.f32 %v1733, %v2009
      %v2092 = vadd.f32 %v1734, %v2014
      %v2093 = vadd.f32 %v1735, %v2019
      %v2094 = vadd.f32 %v1736, %v2024
      %v2095 = vadd.f32 %v1737, %v2029
      %v2096 = vadd.f32 %v1738, %v2034
      %v2097 = vadd.f32 %v1739, %v2039
      %v2098 = vadd.f32 %v1740, %v2044
      %v2099 = vadd.f32 %v1741, %v2049
      %v2100 = vadd.f32 %v1742, %v2054
      %v2101 = vadd.f32 %v1743, %v2059
      %v2102 = vadd.f32 %v1744, %v2064
      %v2103 = vadd.f32 %v1745, %v2069
      %v2104 = vld [vmem:[%s217 + $0x2] sm:$0xff]
      %v2105 = vld [vmem:[%s217 + $0xa] sm:$0xff]
      %v2106 = vld [vmem:[%s217 + $0x1a] sm:$0xff]
      %v2107 = vld [vmem:[%s217 + $0x22] sm:$0xff]
      %v2108 = vld [vmem:[%s217 + $0x32] sm:$0xff]
      %v2109 = vld [vmem:[%s217 + $0x3a] sm:$0xff]
      %v2110 = vld [vmem:[%s217 + $0x4a] sm:$0xff]
      %v2111 = vld [vmem:[%s217 + $0x52] sm:$0xff]
      %v2112 = vld [vmem:[%s217 + $0x62] sm:$0xff]
      %v2113 = vld [vmem:[%s217 + $0x6a] sm:$0xff]
      %v2114 = vld [vmem:[%s217 + $0x7a] sm:$0xff]
      %v2115 = vld [vmem:[%s217 + $0x82] sm:$0xff]
      %v2116 = vld [vmem:[%s217 + $0x92] sm:$0xff]
      %v2117 = vld [vmem:[%s217 + $0x9a] sm:$0xff]
      %v2118 = vld [vmem:[%s217 + $0xaa] sm:$0xff]
      %v2119 = vld [vmem:[%s217 + $0xb2] sm:$0xff]
      %v2120 = vld [vmem:[%s217 + $0xc2] sm:$0xff]
      %v2121 = vld [vmem:[%s217 + $0xca] sm:$0xff]
      %v2122 = vld [vmem:[%s217 + $0xda] sm:$0xff]
      %v2123 = vld [vmem:[%s217 + $0xe2] sm:$0xff]
      %v2124 = vld [vmem:[%s217 + $0xf2] sm:$0xff]
      %v2125 = vld [vmem:[%s217 + $0xfa] sm:$0xff]
      %v2126 = vld [vmem:[%s217 + $0x10a] sm:$0xff]
      %v2127 = vld [vmem:[%s217 + $0x112] sm:$0xff]
      %v2128 = vld [vmem:[%s217 + $0x122] sm:$0xff]
      %v2129 = vld [vmem:[%s217 + $0x12a] sm:$0xff]
      %v2130 = vld [vmem:[%s217 + $0x13a] sm:$0xff]
      %v2131 = vld [vmem:[%s217 + $0x142] sm:$0xff]
      %v2132 = vld [vmem:[%s217 + $0x152] sm:$0xff]
      %v2133 = vld [vmem:[%s217 + $0x15a] sm:$0xff]
      %v2134 = vld [vmem:[%s217 + $0x16a] sm:$0xff]
      %v2135 = vld [vmem:[%s217 + $0x172] sm:$0xff]
      %s2136 = scalar_lea.vmem %s1, 20
      %v2137 = vld [vmem:[%s2136] sm:$0xf]
      %v2139 = vsel %vm171, %v2104, 0
      %v2142 = vsel %vm171, %v2105, 0
      %v2145 = vsel %vm171, %v2106, 0
      %v2148 = vsel %vm171, %v2107, 0
      %v2151 = vsel %vm171, %v2108, 0
      %v2154 = vsel %vm171, %v2109, 0
      %v2157 = vsel %vm171, %v2110, 0
      %v2160 = vsel %vm171, %v2111, 0
      %v2163 = vsel %vm171, %v2112, 0
      %v2166 = vsel %vm171, %v2113, 0
      %v2169 = vsel %vm171, %v2114, 0
      %v2172 = vsel %vm171, %v2115, 0
      %v2175 = vsel %vm171, %v2116, 0
      %v2178 = vsel %vm171, %v2117, 0
      %v2181 = vsel %vm171, %v2118, 0
      %v2184 = vsel %vm171, %v2119, 0
      %v2187 = vsel %vm171, %v2120, 0
      %v2190 = vsel %vm171, %v2121, 0
      %v2193 = vsel %vm171, %v2122, 0
      %v2196 = vsel %vm171, %v2123, 0
      %v2199 = vsel %vm171, %v2124, 0
      %v2202 = vsel %vm171, %v2125, 0
      %v2205 = vsel %vm171, %v2126, 0
      %v2208 = vsel %vm171, %v2127, 0
      %v2211 = vsel %vm171, %v2128, 0
      %v2214 = vsel %vm171, %v2129, 0
      %v2217 = vsel %vm171, %v2130, 0
      %v2220 = vsel %vm171, %v2131, 0
      %v2223 = vsel %vm171, %v2132, 0
      %v2226 = vsel %vm171, %v2133, 0
      %v2229 = vsel %vm171, %v2134, 0
      %v2232 = vsel %vm171, %v2135, 0
      %v2235 = vsel %vm413, %v2137, 0
      %2237 = vmatprep.subr.mxu0 0.0
      %2238 = vmatpush1.msra.mxu0 0.0
      %2239 = vmatprep.subr.mxu0 0.0
      %2240 = vmatpush1.msra.mxu0 0.0
      %2241 = vmatprep.subr.mxu0 0.0
      %2242 = vmatpush1.msra.mxu0 0.0
      %2243 = vmatprep.subr.mxu0 0.0
      %2244 = vmatpush1.msra.mxu0 0.0
      %2245 = vmatprep.subr.mxu0 0.0
      %2246 = vmatpush1.msra.mxu0 0.0
      %2247 = vmatprep.subr.mxu0 0.0
      %2248 = vmatpush1.msra.mxu0 0.0
      %2249 = vmatprep.subr.mxu0 0.0
      %2250 = vmatpush1.msra.mxu0 0.0
      %2251 = vmatprep.subr.mxu0 0.0
      %2252 = vmatpush1.msra.mxu0 0.0
      %2253 = vmatprep.subr.mxu0 0.0
      %2254 = vmatpush1.msra.mxu0 0.0
      %2255 = vmatprep.subr.mxu0 0.0
      %2256 = vmatpush1.msra.mxu0 0.0
      %2257 = vmatprep.subr.mxu0 0.0
      %2258 = vmatpush1.msra.mxu0 0.0
      %2259 = vmatprep.subr.mxu0 0.0
      %2260 = vmatpush1.msra.mxu0 0.0
      %2261 = vmatprep.subr.mxu0 0.0
      %2262 = vmatpush1.msra.mxu0 0.0
      %2263 = vmatprep.subr.mxu0 0.0
      %2264 = vmatpush1.msra.mxu0 0.0
      %2265 = vmatprep.subr.mxu0 0.0
      %2266 = vmatpush1.msra.mxu0 0.0
      %2267 = vmatprep.subr.mxu0 0.0
      %2268 = vmatpush1.msra.mxu0 %v2235
      %2269 = vmatprep.subr.mxu0 0.0
      %2270 = vmatpush2.msra.mxu0 0.0
      %2271 = vmatprep.subr.mxu0 0.0
      %2272 = vmatpush2.msra.mxu0 0.0
      %2273 = vmatprep.subr.mxu0 0.0
      %2274 = vmatpush2.msra.mxu0 0.0
      %2275 = vmatprep.subr.mxu0 0.0
      %2276 = vmatpush2.msra.mxu0 0.0
      %2277 = vmatprep.subr.mxu0 0.0
      %2278 = vmatpush2.msra.mxu0 0.0
      %2279 = vmatprep.subr.mxu0 0.0
      %2280 = vmatpush2.msra.mxu0 0.0
      %2281 = vmatprep.subr.mxu0 0.0
      %2282 = vmatpush2.msra.mxu0 0.0
      %2283 = vmatprep.subr.mxu0 0.0
      %2284 = vmatpush2.msra.mxu0 0.0
      %2285 = vmatprep.subr.mxu0 0.0
      %2286 = vmatpush2.msra.mxu0 0.0
      %2287 = vmatprep.subr.mxu0 0.0
      %2288 = vmatpush2.msra.mxu0 0.0
      %2289 = vmatprep.subr.mxu0 0.0
      %2290 = vmatpush2.msra.mxu0 0.0
      %2291 = vmatprep.subr.mxu0 0.0
      %2292 = vmatpush2.msra.mxu0 0.0
      %2293 = vmatprep.subr.mxu0 0.0
      %2294 = vmatpush2.msra.mxu0 0.0
      %2295 = vmatprep.subr.mxu0 0.0
      %2296 = vmatpush2.msra.mxu0 0.0
      %2297 = vmatprep.subr.mxu0 0.0
      %2298 = vmatpush2.msra.mxu0 0.0
      %2299 = vmatprep.subr.mxu0 0.0
      %2300 = vmatpush2.msra.mxu0 0.0
      %2301 = vmatprep.mubr.f32.mxu0 0.0
      %2302 = vmatmul.mubr.f32.gmra.mxu0 %v2139
      %v2303 = vpop.f32.mrf.mxu0
      %v2304 = vadd.f32 0.0, %v2303
      %v2305 = vpop.f32.mrf.mxu0
      %2306 = vmatprep.mubr.f32.mxu0 0.0
      %2307 = vmatmul.mubr.f32.gmra.mxu0 %v2142
      %v2308 = vpop.f32.mrf.mxu0
      %v2309 = vadd.f32 0.0, %v2308
      %v2310 = vpop.f32.mrf.mxu0
      %2311 = vmatprep.mubr.f32.mxu0 0.0
      %2312 = vmatmul.mubr.f32.gmra.mxu0 %v2145
      %v2313 = vpop.f32.mrf.mxu0
      %v2314 = vadd.f32 0.0, %v2313
      %v2315 = vpop.f32.mrf.mxu0
      %2316 = vmatprep.mubr.f32.mxu0 0.0
      %2317 = vmatmul.mubr.f32.gmra.mxu0 %v2148
      %v2318 = vpop.f32.mrf.mxu0
      %v2319 = vadd.f32 0.0, %v2318
      %v2320 = vpop.f32.mrf.mxu0
      %2321 = vmatprep.mubr.f32.mxu0 0.0
      %2322 = vmatmul.mubr.f32.gmra.mxu0 %v2151
      %v2323 = vpop.f32.mrf.mxu0
      %v2324 = vadd.f32 0.0, %v2323
      %v2325 = vpop.f32.mrf.mxu0
      %2326 = vmatprep.mubr.f32.mxu0 0.0
      %2327 = vmatmul.mubr.f32.gmra.mxu0 %v2154
      %v2328 = vpop.f32.mrf.mxu0
      %v2329 = vadd.f32 0.0, %v2328
      %v2330 = vpop.f32.mrf.mxu0
      %2331 = vmatprep.mubr.f32.mxu0 0.0
      %2332 = vmatmul.mubr.f32.gmra.mxu0 %v2157
      %v2333 = vpop.f32.mrf.mxu0
      %v2334 = vadd.f32 0.0, %v2333
      %v2335 = vpop.f32.mrf.mxu0
      %2336 = vmatprep.mubr.f32.mxu0 0.0
      %2337 = vmatmul.mubr.f32.gmra.mxu0 %v2160
      %v2338 = vpop.f32.mrf.mxu0
      %v2339 = vadd.f32 0.0, %v2338
      %v2340 = vpop.f32.mrf.mxu0
      %2341 = vmatprep.mubr.f32.mxu0 0.0
      %2342 = vmatmul.mubr.f32.gmra.mxu0 %v2163
      %v2343 = vpop.f32.mrf.mxu0
      %v2344 = vadd.f32 0.0, %v2343
      %v2345 = vpop.f32.mrf.mxu0
      %2346 = vmatprep.mubr.f32.mxu0 0.0
      %2347 = vmatmul.mubr.f32.gmra.mxu0 %v2166
      %v2348 = vpop.f32.mrf.mxu0
      %v2349 = vadd.f32 0.0, %v2348
      %v2350 = vpop.f32.mrf.mxu0
      %2351 = vmatprep.mubr.f32.mxu0 0.0
      %2352 = vmatmul.mubr.f32.gmra.mxu0 %v2169
      %v2353 = vpop.f32.mrf.mxu0
      %v2354 = vadd.f32 0.0, %v2353
      %v2355 = vpop.f32.mrf.mxu0
      %2356 = vmatprep.mubr.f32.mxu0 0.0
      %2357 = vmatmul.mubr.f32.gmra.mxu0 %v2172
      %v2358 = vpop.f32.mrf.mxu0
      %v2359 = vadd.f32 0.0, %v2358
      %v2360 = vpop.f32.mrf.mxu0
      %2361 = vmatprep.mubr.f32.mxu0 0.0
      %2362 = vmatmul.mubr.f32.gmra.mxu0 %v2175
      %v2363 = vpop.f32.mrf.mxu0
      %v2364 = vadd.f32 0.0, %v2363
      %v2365 = vpop.f32.mrf.mxu0
      %2366 = vmatprep.mubr.f32.mxu0 0.0
      %2367 = vmatmul.mubr.f32.gmra.mxu0 %v2178
      %v2368 = vpop.f32.mrf.mxu0
      %v2369 = vadd.f32 0.0, %v2368
      %v2370 = vpop.f32.mrf.mxu0
      %2371 = vmatprep.mubr.f32.mxu0 0.0
      %2372 = vmatmul.mubr.f32.gmra.mxu0 %v2181
      %v2373 = vpop.f32.mrf.mxu0
      %v2374 = vadd.f32 0.0, %v2373
      %v2375 = vpop.f32.mrf.mxu0
      %2376 = vmatprep.mubr.f32.mxu0 0.0
      %2377 = vmatmul.mubr.f32.gmra.mxu0 %v2184
      %v2378 = vpop.f32.mrf.mxu0
      %v2379 = vadd.f32 0.0, %v2378
      %v2380 = vpop.f32.mrf.mxu0
      %2381 = vmatprep.mubr.f32.mxu0 0.0
      %2382 = vmatmul.mubr.f32.gmra.mxu0 %v2187
      %v2383 = vpop.f32.mrf.mxu0
      %v2384 = vadd.f32 0.0, %v2383
      %v2385 = vpop.f32.mrf.mxu0
      %2386 = vmatprep.mubr.f32.mxu0 0.0
      %2387 = vmatmul.mubr.f32.gmra.mxu0 %v2190
      %v2388 = vpop.f32.mrf.mxu0
      %v2389 = vadd.f32 0.0, %v2388
      %v2390 = vpop.f32.mrf.mxu0
      %2391 = vmatprep.mubr.f32.mxu0 0.0
      %2392 = vmatmul.mubr.f32.gmra.mxu0 %v2193
      %v2393 = vpop.f32.mrf.mxu0
      %v2394 = vadd.f32 0.0, %v2393
      %v2395 = vpop.f32.mrf.mxu0
      %2396 = vmatprep.mubr.f32.mxu0 0.0
      %2397 = vmatmul.mubr.f32.gmra.mxu0 %v2196
      %v2398 = vpop.f32.mrf.mxu0
      %v2399 = vadd.f32 0.0, %v2398
      %v2400 = vpop.f32.mrf.mxu0
      %2401 = vmatprep.mubr.f32.mxu0 0.0
      %2402 = vmatmul.mubr.f32.gmra.mxu0 %v2199
      %v2403 = vpop.f32.mrf.mxu0
      %v2404 = vadd.f32 0.0, %v2403
      %v2405 = vpop.f32.mrf.mxu0
      %2406 = vmatprep.mubr.f32.mxu0 0.0
      %2407 = vmatmul.mubr.f32.gmra.mxu0 %v2202
      %v2408 = vpop.f32.mrf.mxu0
      %v2409 = vadd.f32 0.0, %v2408
      %v2410 = vpop.f32.mrf.mxu0
      %2411 = vmatprep.mubr.f32.mxu0 0.0
      %2412 = vmatmul.mubr.f32.gmra.mxu0 %v2205
      %v2413 = vpop.f32.mrf.mxu0
      %v2414 = vadd.f32 0.0, %v2413
      %v2415 = vpop.f32.mrf.mxu0
      %2416 = vmatprep.mubr.f32.mxu0 0.0
      %2417 = vmatmul.mubr.f32.gmra.mxu0 %v2208
      %v2418 = vpop.f32.mrf.mxu0
      %v2419 = vadd.f32 0.0, %v2418
      %v2420 = vpop.f32.mrf.mxu0
      %2421 = vmatprep.mubr.f32.mxu0 0.0
      %2422 = vmatmul.mubr.f32.gmra.mxu0 %v2211
      %v2423 = vpop.f32.mrf.mxu0
      %v2424 = vadd.f32 0.0, %v2423
      %v2425 = vpop.f32.mrf.mxu0
      %2426 = vmatprep.mubr.f32.mxu0 0.0
      %2427 = vmatmul.mubr.f32.gmra.mxu0 %v2214
      %v2428 = vpop.f32.mrf.mxu0
      %v2429 = vadd.f32 0.0, %v2428
      %v2430 = vpop.f32.mrf.mxu0
      %2431 = vmatprep.mubr.f32.mxu0 0.0
      %2432 = vmatmul.mubr.f32.gmra.mxu0 %v2217
      %v2433 = vpop.f32.mrf.mxu0
      %v2434 = vadd.f32 0.0, %v2433
      %v2435 = vpop.f32.mrf.mxu0
      %2436 = vmatprep.mubr.f32.mxu0 0.0
      %2437 = vmatmul.mubr.f32.gmra.mxu0 %v2220
      %v2438 = vpop.f32.mrf.mxu0
      %v2439 = vadd.f32 0.0, %v2438
      %v2440 = vpop.f32.mrf.mxu0
      %2441 = vmatprep.mubr.f32.mxu0 0.0
      %2442 = vmatmul.mubr.f32.gmra.mxu0 %v2223
      %v2443 = vpop.f32.mrf.mxu0
      %v2444 = vadd.f32 0.0, %v2443
      %v2445 = vpop.f32.mrf.mxu0
      %2446 = vmatprep.mubr.f32.mxu0 0.0
      %2447 = vmatmul.mubr.f32.gmra.mxu0 %v2226
      %v2448 = vpop.f32.mrf.mxu0
      %v2449 = vadd.f32 0.0, %v2448
      %v2450 = vpop.f32.mrf.mxu0
      %2451 = vmatprep.mubr.f32.mxu0 0.0
      %2452 = vmatmul.mubr.f32.gmra.mxu0 %v2229
      %v2453 = vpop.f32.mrf.mxu0
      %v2454 = vadd.f32 0.0, %v2453
      %v2455 = vpop.f32.mrf.mxu0
      %2456 = vmatprep.mubr.f32.mxu0 0.0
      %2457 = vmatmul.mubr.f32.gmra.mxu0 %v2232
      %v2458 = vpop.f32.mrf.mxu0
      %v2459 = vadd.f32 0.0, %v2458
      %v2460 = vpop.f32.mrf.mxu0
      %2461 = vdwg.mxu0
      %v2462 = vadd.f32 %v2072, %v2304
      %v2463 = vadd.f32 %v2073, %v2309
      %v2464 = vadd.f32 %v2074, %v2314
      %v2465 = vadd.f32 %v2075, %v2319
      %v2466 = vadd.f32 %v2076, %v2324
      %v2467 = vadd.f32 %v2077, %v2329
      %v2468 = vadd.f32 %v2078, %v2334
      %v2469 = vadd.f32 %v2079, %v2339
      %v2470 = vadd.f32 %v2080, %v2344
      %v2471 = vadd.f32 %v2081, %v2349
      %v2472 = vadd.f32 %v2082, %v2354
      %v2473 = vadd.f32 %v2083, %v2359
      %v2474 = vadd.f32 %v2084, %v2364
      %v2475 = vadd.f32 %v2085, %v2369
      %v2476 = vadd.f32 %v2086, %v2374
      %v2477 = vadd.f32 %v2087, %v2379
      %v2478 = vadd.f32 %v2088, %v2384
      %v2479 = vadd.f32 %v2089, %v2389
      %v2480 = vadd.f32 %v2090, %v2394
      %v2481 = vadd.f32 %v2091, %v2399
      %v2482 = vadd.f32 %v2092, %v2404
      %v2483 = vadd.f32 %v2093, %v2409
      %v2484 = vadd.f32 %v2094, %v2414
      %v2485 = vadd.f32 %v2095, %v2419
      %v2486 = vadd.f32 %v2096, %v2424
      %v2487 = vadd.f32 %v2097, %v2429
      %v2488 = vadd.f32 %v2098, %v2434
      %v2489 = vadd.f32 %v2099, %v2439
      %v2490 = vadd.f32 %v2100, %v2444
      %v2491 = vadd.f32 %v2101, %v2449
      %v2492 = vadd.f32 %v2102, %v2454
      %v2493 = vadd.f32 %v2103, %v2459
      %s2494 = scalar_lea.vmem %s165, 48
      %v2495 = vld [vmem:[%s2494] sm:$0xff]
      %v2496 = vld [vmem:[%s2494 + $0x8] sm:$0xff]
      %v2497 = vld [vmem:[%s2494 + $0x18] sm:$0xff]
      %v2498 = vld [vmem:[%s2494 + $0x20] sm:$0xff]
      %v2499 = vld [vmem:[%s2494 + $0x30] sm:$0xff]
      %v2500 = vld [vmem:[%s2494 + $0x38] sm:$0xff]
      %v2501 = vld [vmem:[%s2494 + $0x48] sm:$0xff]
      %v2502 = vld [vmem:[%s2494 + $0x50] sm:$0xff]
      %v2503 = vld [vmem:[%s2494 + $0x60] sm:$0xff]
      %v2504 = vld [vmem:[%s2494 + $0x68] sm:$0xff]
      %v2505 = vld [vmem:[%s2494 + $0x78] sm:$0xff]
      %v2506 = vld [vmem:[%s2494 + $0x80] sm:$0xff]
      %v2507 = vld [vmem:[%s2494 + $0x90] sm:$0xff]
      %v2508 = vld [vmem:[%s2494 + $0x98] sm:$0xff]
      %v2509 = vld [vmem:[%s2494 + $0xa8] sm:$0xff]
      %v2510 = vld [vmem:[%s2494 + $0xb0] sm:$0xff]
      %v2511 = vld [vmem:[%s2494 + $0xc0] sm:$0xff]
      %v2512 = vld [vmem:[%s2494 + $0xc8] sm:$0xff]
      %v2513 = vld [vmem:[%s2494 + $0xd8] sm:$0xff]
      %v2514 = vld [vmem:[%s2494 + $0xe0] sm:$0xff]
      %v2515 = vld [vmem:[%s2494 + $0xf0] sm:$0xff]
      %v2516 = vld [vmem:[%s2494 + $0xf8] sm:$0xff]
      %v2517 = vld [vmem:[%s2494 + $0x108] sm:$0xff]
      %v2518 = vld [vmem:[%s2494 + $0x110] sm:$0xff]
      %v2519 = vld [vmem:[%s2494 + $0x120] sm:$0xff]
      %v2520 = vld [vmem:[%s2494 + $0x128] sm:$0xff]
      %v2521 = vld [vmem:[%s2494 + $0x138] sm:$0xff]
      %v2522 = vld [vmem:[%s2494 + $0x140] sm:$0xff]
      %v2523 = vld [vmem:[%s2494 + $0x150] sm:$0xff]
      %v2524 = vld [vmem:[%s2494 + $0x158] sm:$0xff]
      %v2525 = vld [vmem:[%s2494 + $0x168] sm:$0xff]
      %v2526 = vld [vmem:[%s2494 + $0x170] sm:$0xff]
      %s2527 = scalar_lea.vmem %s1, 24
      %v2528 = vld [vmem:[%s2527] sm:$0xf]
      %v2530 = vsel %vm171, %v2495, 0
      %v2533 = vsel %vm171, %v2496, 0
      %v2536 = vsel %vm171, %v2497, 0
      %v2539 = vsel %vm171, %v2498, 0
      %v2542 = vsel %vm171, %v2499, 0
      %v2545 = vsel %vm171, %v2500, 0
      %v2548 = vsel %vm171, %v2501, 0
      %v2551 = vsel %vm171, %v2502, 0
      %v2554 = vsel %vm171, %v2503, 0
      %v2557 = vsel %vm171, %v2504, 0
      %v2560 = vsel %vm171, %v2505, 0
      %v2563 = vsel %vm171, %v2506, 0
      %v2566 = vsel %vm171, %v2507, 0
      %v2569 = vsel %vm171, %v2508, 0
      %v2572 = vsel %vm171, %v2509, 0
      %v2575 = vsel %vm171, %v2510, 0
      %v2578 = vsel %vm171, %v2511, 0
      %v2581 = vsel %vm171, %v2512, 0
      %v2584 = vsel %vm171, %v2513, 0
      %v2587 = vsel %vm171, %v2514, 0
      %v2590 = vsel %vm171, %v2515, 0
      %v2593 = vsel %vm171, %v2516, 0
      %v2596 = vsel %vm171, %v2517, 0
      %v2599 = vsel %vm171, %v2518, 0
      %v2602 = vsel %vm171, %v2519, 0
      %v2605 = vsel %vm171, %v2520, 0
      %v2608 = vsel %vm171, %v2521, 0
      %v2611 = vsel %vm171, %v2522, 0
      %v2614 = vsel %vm171, %v2523, 0
      %v2617 = vsel %vm171, %v2524, 0
      %v2620 = vsel %vm171, %v2525, 0
      %v2623 = vsel %vm171, %v2526, 0
      %v2626 = vsel %vm413, %v2528, 0
      %2628 = vmatprep.subr.mxu0 0.0
      %2629 = vmatpush1.msra.mxu0 0.0
      %2630 = vmatprep.subr.mxu0 0.0
      %2631 = vmatpush1.msra.mxu0 0.0
      %2632 = vmatprep.subr.mxu0 0.0
      %2633 = vmatpush1.msra.mxu0 0.0
      %2634 = vmatprep.subr.mxu0 0.0
      %2635 = vmatpush1.msra.mxu0 0.0
      %2636 = vmatprep.subr.mxu0 0.0
      %2637 = vmatpush1.msra.mxu0 0.0
      %2638 = vmatprep.subr.mxu0 0.0
      %2639 = vmatpush1.msra.mxu0 0.0
      %2640 = vmatprep.subr.mxu0 0.0
      %2641 = vmatpush1.msra.mxu0 0.0
      %2642 = vmatprep.subr.mxu0 0.0
      %2643 = vmatpush1.msra.mxu0 0.0
      %2644 = vmatprep.subr.mxu0 0.0
      %2645 = vmatpush1.msra.mxu0 0.0
      %2646 = vmatprep.subr.mxu0 0.0
      %2647 = vmatpush1.msra.mxu0 0.0
      %2648 = vmatprep.subr.mxu0 0.0
      %2649 = vmatpush1.msra.mxu0 0.0
      %2650 = vmatprep.subr.mxu0 0.0
      %2651 = vmatpush1.msra.mxu0 0.0
      %2652 = vmatprep.subr.mxu0 0.0
      %2653 = vmatpush1.msra.mxu0 0.0
      %2654 = vmatprep.subr.mxu0 0.0
      %2655 = vmatpush1.msra.mxu0 0.0
      %2656 = vmatprep.subr.mxu0 0.0
      %2657 = vmatpush1.msra.mxu0 0.0
      %2658 = vmatprep.subr.mxu0 0.0
      %2659 = vmatpush1.msra.mxu0 %v2626
      %2660 = vmatprep.subr.mxu0 0.0
      %2661 = vmatpush2.msra.mxu0 0.0
      %2662 = vmatprep.subr.mxu0 0.0
      %2663 = vmatpush2.msra.mxu0 0.0
      %2664 = vmatprep.subr.mxu0 0.0
      %2665 = vmatpush2.msra.mxu0 0.0
      %2666 = vmatprep.subr.mxu0 0.0
      %2667 = vmatpush2.msra.mxu0 0.0
      %2668 = vmatprep.subr.mxu0 0.0
      %2669 = vmatpush2.msra.mxu0 0.0
      %2670 = vmatprep.subr.mxu0 0.0
      %2671 = vmatpush2.msra.mxu0 0.0
      %2672 = vmatprep.subr.mxu0 0.0
      %2673 = vmatpush2.msra.mxu0 0.0
      %2674 = vmatprep.subr.mxu0 0.0
      %2675 = vmatpush2.msra.mxu0 0.0
      %2676 = vmatprep.subr.mxu0 0.0
      %2677 = vmatpush2.msra.mxu0 0.0
      %2678 = vmatprep.subr.mxu0 0.0
      %2679 = vmatpush2.msra.mxu0 0.0
      %2680 = vmatprep.subr.mxu0 0.0
      %2681 = vmatpush2.msra.mxu0 0.0
      %2682 = vmatprep.subr.mxu0 0.0
      %2683 = vmatpush2.msra.mxu0 0.0
      %2684 = vmatprep.subr.mxu0 0.0
      %2685 = vmatpush2.msra.mxu0 0.0
      %2686 = vmatprep.subr.mxu0 0.0
      %2687 = vmatpush2.msra.mxu0 0.0
      %2688 = vmatprep.subr.mxu0 0.0
      %2689 = vmatpush2.msra.mxu0 0.0
      %2690 = vmatprep.subr.mxu0 0.0
      %2691 = vmatpush2.msra.mxu0 0.0
      %2692 = vmatprep.mubr.f32.mxu0 0.0
      %2693 = vmatmul.mubr.f32.gmra.mxu0 %v2530
      %v2694 = vpop.f32.mrf.mxu0
      %v2695 = vadd.f32 0.0, %v2694
      %v2696 = vpop.f32.mrf.mxu0
      %2697 = vmatprep.mubr.f32.mxu0 0.0
      %2698 = vmatmul.mubr.f32.gmra.mxu0 %v2533
      %v2699 = vpop.f32.mrf.mxu0
      %v2700 = vadd.f32 0.0, %v2699
      %v2701 = vpop.f32.mrf.mxu0
      %2702 = vmatprep.mubr.f32.mxu0 0.0
      %2703 = vmatmul.mubr.f32.gmra.mxu0 %v2536
      %v2704 = vpop.f32.mrf.mxu0
      %v2705 = vadd.f32 0.0, %v2704
      %v2706 = vpop.f32.mrf.mxu0
      %2707 = vmatprep.mubr.f32.mxu0 0.0
      %2708 = vmatmul.mubr.f32.gmra.mxu0 %v2539
      %v2709 = vpop.f32.mrf.mxu0
      %v2710 = vadd.f32 0.0, %v2709
      %v2711 = vpop.f32.mrf.mxu0
      %2712 = vmatprep.mubr.f32.mxu0 0.0
      %2713 = vmatmul.mubr.f32.gmra.mxu0 %v2542
      %v2714 = vpop.f32.mrf.mxu0
      %v2715 = vadd.f32 0.0, %v2714
      %v2716 = vpop.f32.mrf.mxu0
      %2717 = vmatprep.mubr.f32.mxu0 0.0
      %2718 = vmatmul.mubr.f32.gmra.mxu0 %v2545
      %v2719 = vpop.f32.mrf.mxu0
      %v2720 = vadd.f32 0.0, %v2719
      %v2721 = vpop.f32.mrf.mxu0
      %2722 = vmatprep.mubr.f32.mxu0 0.0
      %2723 = vmatmul.mubr.f32.gmra.mxu0 %v2548
      %v2724 = vpop.f32.mrf.mxu0
      %v2725 = vadd.f32 0.0, %v2724
      %v2726 = vpop.f32.mrf.mxu0
      %2727 = vmatprep.mubr.f32.mxu0 0.0
      %2728 = vmatmul.mubr.f32.gmra.mxu0 %v2551
      %v2729 = vpop.f32.mrf.mxu0
      %v2730 = vadd.f32 0.0, %v2729
      %v2731 = vpop.f32.mrf.mxu0
      %2732 = vmatprep.mubr.f32.mxu0 0.0
      %2733 = vmatmul.mubr.f32.gmra.mxu0 %v2554
      %v2734 = vpop.f32.mrf.mxu0
      %v2735 = vadd.f32 0.0, %v2734
      %v2736 = vpop.f32.mrf.mxu0
      %2737 = vmatprep.mubr.f32.mxu0 0.0
      %2738 = vmatmul.mubr.f32.gmra.mxu0 %v2557
      %v2739 = vpop.f32.mrf.mxu0
      %v2740 = vadd.f32 0.0, %v2739
      %v2741 = vpop.f32.mrf.mxu0
      %2742 = vmatprep.mubr.f32.mxu0 0.0
      %2743 = vmatmul.mubr.f32.gmra.mxu0 %v2560
      %v2744 = vpop.f32.mrf.mxu0
      %v2745 = vadd.f32 0.0, %v2744
      %v2746 = vpop.f32.mrf.mxu0
      %2747 = vmatprep.mubr.f32.mxu0 0.0
      %2748 = vmatmul.mubr.f32.gmra.mxu0 %v2563
      %v2749 = vpop.f32.mrf.mxu0
      %v2750 = vadd.f32 0.0, %v2749
      %v2751 = vpop.f32.mrf.mxu0
      %2752 = vmatprep.mubr.f32.mxu0 0.0
      %2753 = vmatmul.mubr.f32.gmra.mxu0 %v2566
      %v2754 = vpop.f32.mrf.mxu0
      %v2755 = vadd.f32 0.0, %v2754
      %v2756 = vpop.f32.mrf.mxu0
      %2757 = vmatprep.mubr.f32.mxu0 0.0
      %2758 = vmatmul.mubr.f32.gmra.mxu0 %v2569
      %v2759 = vpop.f32.mrf.mxu0
      %v2760 = vadd.f32 0.0, %v2759
      %v2761 = vpop.f32.mrf.mxu0
      %2762 = vmatprep.mubr.f32.mxu0 0.0
      %2763 = vmatmul.mubr.f32.gmra.mxu0 %v2572
      %v2764 = vpop.f32.mrf.mxu0
      %v2765 = vadd.f32 0.0, %v2764
      %v2766 = vpop.f32.mrf.mxu0
      %2767 = vmatprep.mubr.f32.mxu0 0.0
      %2768 = vmatmul.mubr.f32.gmra.mxu0 %v2575
      %v2769 = vpop.f32.mrf.mxu0
      %v2770 = vadd.f32 0.0, %v2769
      %v2771 = vpop.f32.mrf.mxu0
      %2772 = vmatprep.mubr.f32.mxu0 0.0
      %2773 = vmatmul.mubr.f32.gmra.mxu0 %v2578
      %v2774 = vpop.f32.mrf.mxu0
      %v2775 = vadd.f32 0.0, %v2774
      %v2776 = vpop.f32.mrf.mxu0
      %2777 = vmatprep.mubr.f32.mxu0 0.0
      %2778 = vmatmul.mubr.f32.gmra.mxu0 %v2581
      %v2779 = vpop.f32.mrf.mxu0
      %v2780 = vadd.f32 0.0, %v2779
      %v2781 = vpop.f32.mrf.mxu0
      %2782 = vmatprep.mubr.f32.mxu0 0.0
      %2783 = vmatmul.mubr.f32.gmra.mxu0 %v2584
      %v2784 = vpop.f32.mrf.mxu0
      %v2785 = vadd.f32 0.0, %v2784
      %v2786 = vpop.f32.mrf.mxu0
      %2787 = vmatprep.mubr.f32.mxu0 0.0
      %2788 = vmatmul.mubr.f32.gmra.mxu0 %v2587
      %v2789 = vpop.f32.mrf.mxu0
      %v2790 = vadd.f32 0.0, %v2789
      %v2791 = vpop.f32.mrf.mxu0
      %2792 = vmatprep.mubr.f32.mxu0 0.0
      %2793 = vmatmul.mubr.f32.gmra.mxu0 %v2590
      %v2794 = vpop.f32.mrf.mxu0
      %v2795 = vadd.f32 0.0, %v2794
      %v2796 = vpop.f32.mrf.mxu0
      %2797 = vmatprep.mubr.f32.mxu0 0.0
      %2798 = vmatmul.mubr.f32.gmra.mxu0 %v2593
      %v2799 = vpop.f32.mrf.mxu0
      %v2800 = vadd.f32 0.0, %v2799
      %v2801 = vpop.f32.mrf.mxu0
      %2802 = vmatprep.mubr.f32.mxu0 0.0
      %2803 = vmatmul.mubr.f32.gmra.mxu0 %v2596
      %v2804 = vpop.f32.mrf.mxu0
      %v2805 = vadd.f32 0.0, %v2804
      %v2806 = vpop.f32.mrf.mxu0
      %2807 = vmatprep.mubr.f32.mxu0 0.0
      %2808 = vmatmul.mubr.f32.gmra.mxu0 %v2599
      %v2809 = vpop.f32.mrf.mxu0
      %v2810 = vadd.f32 0.0, %v2809
      %v2811 = vpop.f32.mrf.mxu0
      %2812 = vmatprep.mubr.f32.mxu0 0.0
      %2813 = vmatmul.mubr.f32.gmra.mxu0 %v2602
      %v2814 = vpop.f32.mrf.mxu0
      %v2815 = vadd.f32 0.0, %v2814
      %v2816 = vpop.f32.mrf.mxu0
      %2817 = vmatprep.mubr.f32.mxu0 0.0
      %2818 = vmatmul.mubr.f32.gmra.mxu0 %v2605
      %v2819 = vpop.f32.mrf.mxu0
      %v2820 = vadd.f32 0.0, %v2819
      %v2821 = vpop.f32.mrf.mxu0
      %2822 = vmatprep.mubr.f32.mxu0 0.0
      %2823 = vmatmul.mubr.f32.gmra.mxu0 %v2608
      %v2824 = vpop.f32.mrf.mxu0
      %v2825 = vadd.f32 0.0, %v2824
      %v2826 = vpop.f32.mrf.mxu0
      %2827 = vmatprep.mubr.f32.mxu0 0.0
      %2828 = vmatmul.mubr.f32.gmra.mxu0 %v2611
      %v2829 = vpop.f32.mrf.mxu0
      %v2830 = vadd.f32 0.0, %v2829
      %v2831 = vpop.f32.mrf.mxu0
      %2832 = vmatprep.mubr.f32.mxu0 0.0
      %2833 = vmatmul.mubr.f32.gmra.mxu0 %v2614
      %v2834 = vpop.f32.mrf.mxu0
      %v2835 = vadd.f32 0.0, %v2834
      %v2836 = vpop.f32.mrf.mxu0
      %2837 = vmatprep.mubr.f32.mxu0 0.0
      %2838 = vmatmul.mubr.f32.gmra.mxu0 %v2617
      %v2839 = vpop.f32.mrf.mxu0
      %v2840 = vadd.f32 0.0, %v2839
      %v2841 = vpop.f32.mrf.mxu0
      %2842 = vmatprep.mubr.f32.mxu0 0.0
      %2843 = vmatmul.mubr.f32.gmra.mxu0 %v2620
      %v2844 = vpop.f32.mrf.mxu0
      %v2845 = vadd.f32 0.0, %v2844
      %v2846 = vpop.f32.mrf.mxu0
      %2847 = vmatprep.mubr.f32.mxu0 0.0
      %2848 = vmatmul.mubr.f32.gmra.mxu0 %v2623
      %v2849 = vpop.f32.mrf.mxu0
      %v2850 = vadd.f32 0.0, %v2849
      %v2851 = vpop.f32.mrf.mxu0
      %2852 = vdwg.mxu0
      %v2853 = vadd.f32 %v2462, %v2695
      %v2854 = vadd.f32 %v2463, %v2700
      %v2855 = vadd.f32 %v2464, %v2705
      %v2856 = vadd.f32 %v2465, %v2710
      %v2857 = vadd.f32 %v2466, %v2715
      %v2858 = vadd.f32 %v2467, %v2720
      %v2859 = vadd.f32 %v2468, %v2725
      %v2860 = vadd.f32 %v2469, %v2730
      %v2861 = vadd.f32 %v2470, %v2735
      %v2862 = vadd.f32 %v2471, %v2740
      %v2863 = vadd.f32 %v2472, %v2745
      %v2864 = vadd.f32 %v2473, %v2750
      %v2865 = vadd.f32 %v2474, %v2755
      %v2866 = vadd.f32 %v2475, %v2760
      %v2867 = vadd.f32 %v2476, %v2765
      %v2868 = vadd.f32 %v2477, %v2770
      %v2869 = vadd.f32 %v2478, %v2775
      %v2870 = vadd.f32 %v2479, %v2780
      %v2871 = vadd.f32 %v2480, %v2785
      %v2872 = vadd.f32 %v2481, %v2790
      %v2873 = vadd.f32 %v2482, %v2795
      %v2874 = vadd.f32 %v2483, %v2800
      %v2875 = vadd.f32 %v2484, %v2805
      %v2876 = vadd.f32 %v2485, %v2810
      %v2877 = vadd.f32 %v2486, %v2815
      %v2878 = vadd.f32 %v2487, %v2820
      %v2879 = vadd.f32 %v2488, %v2825
      %v2880 = vadd.f32 %v2489, %v2830
      %v2881 = vadd.f32 %v2490, %v2835
      %v2882 = vadd.f32 %v2491, %v2840
      %v2883 = vadd.f32 %v2492, %v2845
      %v2884 = vadd.f32 %v2493, %v2850
      %v2885 = vld [vmem:[%s2494 + $0x1] sm:$0xff]
      %v2886 = vld [vmem:[%s2494 + $0x9] sm:$0xff]
      %v2887 = vld [vmem:[%s2494 + $0x19] sm:$0xff]
      %v2888 = vld [vmem:[%s2494 + $0x21] sm:$0xff]
      %v2889 = vld [vmem:[%s2494 + $0x31] sm:$0xff]
      %v2890 = vld [vmem:[%s2494 + $0x39] sm:$0xff]
      %v2891 = vld [vmem:[%s2494 + $0x49] sm:$0xff]
      %v2892 = vld [vmem:[%s2494 + $0x51] sm:$0xff]
      %v2893 = vld [vmem:[%s2494 + $0x61] sm:$0xff]
      %v2894 = vld [vmem:[%s2494 + $0x69] sm:$0xff]
      %v2895 = vld [vmem:[%s2494 + $0x79] sm:$0xff]
      %v2896 = vld [vmem:[%s2494 + $0x81] sm:$0xff]
      %v2897 = vld [vmem:[%s2494 + $0x91] sm:$0xff]
      %v2898 = vld [vmem:[%s2494 + $0x99] sm:$0xff]
      %v2899 = vld [vmem:[%s2494 + $0xa9] sm:$0xff]
      %v2900 = vld [vmem:[%s2494 + $0xb1] sm:$0xff]
      %v2901 = vld [vmem:[%s2494 + $0xc1] sm:$0xff]
      %v2902 = vld [vmem:[%s2494 + $0xc9] sm:$0xff]
      %v2903 = vld [vmem:[%s2494 + $0xd9] sm:$0xff]
      %v2904 = vld [vmem:[%s2494 + $0xe1] sm:$0xff]
      %v2905 = vld [vmem:[%s2494 + $0xf1] sm:$0xff]
      %v2906 = vld [vmem:[%s2494 + $0xf9] sm:$0xff]
      %v2907 = vld [vmem:[%s2494 + $0x109] sm:$0xff]
      %v2908 = vld [vmem:[%s2494 + $0x111] sm:$0xff]
      %v2909 = vld [vmem:[%s2494 + $0x121] sm:$0xff]
      %v2910 = vld [vmem:[%s2494 + $0x129] sm:$0xff]
      %v2911 = vld [vmem:[%s2494 + $0x139] sm:$0xff]
      %v2912 = vld [vmem:[%s2494 + $0x141] sm:$0xff]
      %v2913 = vld [vmem:[%s2494 + $0x151] sm:$0xff]
      %v2914 = vld [vmem:[%s2494 + $0x159] sm:$0xff]
      %v2915 = vld [vmem:[%s2494 + $0x169] sm:$0xff]
      %v2916 = vld [vmem:[%s2494 + $0x171] sm:$0xff]
      %s2917 = scalar_lea.vmem %s1, 28
      %v2918 = vld [vmem:[%s2917] sm:$0xf]
      %v2920 = vsel %vm171, %v2885, 0
      %v2923 = vsel %vm171, %v2886, 0
      %v2926 = vsel %vm171, %v2887, 0
      %v2929 = vsel %vm171, %v2888, 0
      %v2932 = vsel %vm171, %v2889, 0
      %v2935 = vsel %vm171, %v2890, 0
      %v2938 = vsel %vm171, %v2891, 0
      %v2941 = vsel %vm171, %v2892, 0
      %v2944 = vsel %vm171, %v2893, 0
      %v2947 = vsel %vm171, %v2894, 0
      %v2950 = vsel %vm171, %v2895, 0
      %v2953 = vsel %vm171, %v2896, 0
      %v2956 = vsel %vm171, %v2897, 0
      %v2959 = vsel %vm171, %v2898, 0
      %v2962 = vsel %vm171, %v2899, 0
      %v2965 = vsel %vm171, %v2900, 0
      %v2968 = vsel %vm171, %v2901, 0
      %v2971 = vsel %vm171, %v2902, 0
      %v2974 = vsel %vm171, %v2903, 0
      %v2977 = vsel %vm171, %v2904, 0
      %v2980 = vsel %vm171, %v2905, 0
      %v2983 = vsel %vm171, %v2906, 0
      %v2986 = vsel %vm171, %v2907, 0
      %v2989 = vsel %vm171, %v2908, 0
      %v2992 = vsel %vm171, %v2909, 0
      %v2995 = vsel %vm171, %v2910, 0
      %v2998 = vsel %vm171, %v2911, 0
      %v3001 = vsel %vm171, %v2912, 0
      %v3004 = vsel %vm171, %v2913, 0
      %v3007 = vsel %vm171, %v2914, 0
      %v3010 = vsel %vm171, %v2915, 0
      %v3013 = vsel %vm171, %v2916, 0
      %v3016 = vsel %vm413, %v2918, 0
      %3018 = vmatprep.subr.mxu0 0.0
      %3019 = vmatpush1.msra.mxu0 0.0
      %3020 = vmatprep.subr.mxu0 0.0
      %3021 = vmatpush1.msra.mxu0 0.0
      %3022 = vmatprep.subr.mxu0 0.0
      %3023 = vmatpush1.msra.mxu0 0.0
      %3024 = vmatprep.subr.mxu0 0.0
      %3025 = vmatpush1.msra.mxu0 0.0
      %3026 = vmatprep.subr.mxu0 0.0
      %3027 = vmatpush1.msra.mxu0 0.0
      %3028 = vmatprep.subr.mxu0 0.0
      %3029 = vmatpush1.msra.mxu0 0.0
      %3030 = vmatprep.subr.mxu0 0.0
      %3031 = vmatpush1.msra.mxu0 0.0
      %3032 = vmatprep.subr.mxu0 0.0
      %3033 = vmatpush1.msra.mxu0 0.0
      %3034 = vmatprep.subr.mxu0 0.0
      %3035 = vmatpush1.msra.mxu0 0.0
      %3036 = vmatprep.subr.mxu0 0.0
      %3037 = vmatpush1.msra.mxu0 0.0
      %3038 = vmatprep.subr.mxu0 0.0
      %3039 = vmatpush1.msra.mxu0 0.0
      %3040 = vmatprep.subr.mxu0 0.0
      %3041 = vmatpush1.msra.mxu0 0.0
      %3042 = vmatprep.subr.mxu0 0.0
      %3043 = vmatpush1.msra.mxu0 0.0
      %3044 = vmatprep.subr.mxu0 0.0
      %3045 = vmatpush1.msra.mxu0 0.0
      %3046 = vmatprep.subr.mxu0 0.0
      %3047 = vmatpush1.msra.mxu0 0.0
      %3048 = vmatprep.subr.mxu0 0.0
      %3049 = vmatpush1.msra.mxu0 %v3016
      %3050 = vmatprep.subr.mxu0 0.0
      %3051 = vmatpush2.msra.mxu0 0.0
      %3052 = vmatprep.subr.mxu0 0.0
      %3053 = vmatpush2.msra.mxu0 0.0
      %3054 = vmatprep.subr.mxu0 0.0
      %3055 = vmatpush2.msra.mxu0 0.0
      %3056 = vmatprep.subr.mxu0 0.0
      %3057 = vmatpush2.msra.mxu0 0.0
      %3058 = vmatprep.subr.mxu0 0.0
      %3059 = vmatpush2.msra.mxu0 0.0
      %3060 = vmatprep.subr.mxu0 0.0
      %3061 = vmatpush2.msra.mxu0 0.0
      %3062 = vmatprep.subr.mxu0 0.0
      %3063 = vmatpush2.msra.mxu0 0.0
      %3064 = vmatprep.subr.mxu0 0.0
      %3065 = vmatpush2.msra.mxu0 0.0
      %3066 = vmatprep.subr.mxu0 0.0
      %3067 = vmatpush2.msra.mxu0 0.0
      %3068 = vmatprep.subr.mxu0 0.0
      %3069 = vmatpush2.msra.mxu0 0.0
      %3070 = vmatprep.subr.mxu0 0.0
      %3071 = vmatpush2.msra.mxu0 0.0
      %3072 = vmatprep.subr.mxu0 0.0
      %3073 = vmatpush2.msra.mxu0 0.0
      %3074 = vmatprep.subr.mxu0 0.0
      %3075 = vmatpush2.msra.mxu0 0.0
      %3076 = vmatprep.subr.mxu0 0.0
      %3077 = vmatpush2.msra.mxu0 0.0
      %3078 = vmatprep.subr.mxu0 0.0
      %3079 = vmatpush2.msra.mxu0 0.0
      %3080 = vmatprep.subr.mxu0 0.0
      %3081 = vmatpush2.msra.mxu0 0.0
      %3082 = vmatprep.mubr.f32.mxu0 0.0
      %3083 = vmatmul.mubr.f32.gmra.mxu0 %v2920
      %v3084 = vpop.f32.mrf.mxu0
      %v3085 = vadd.f32 0.0, %v3084
      %v3086 = vpop.f32.mrf.mxu0
      %3087 = vmatprep.mubr.f32.mxu0 0.0
      %3088 = vmatmul.mubr.f32.gmra.mxu0 %v2923
      %v3089 = vpop.f32.mrf.mxu0
      %v3090 = vadd.f32 0.0, %v3089
      %v3091 = vpop.f32.mrf.mxu0
      %3092 = vmatprep.mubr.f32.mxu0 0.0
      %3093 = vmatmul.mubr.f32.gmra.mxu0 %v2926
      %v3094 = vpop.f32.mrf.mxu0
      %v3095 = vadd.f32 0.0, %v3094
      %v3096 = vpop.f32.mrf.mxu0
      %3097 = vmatprep.mubr.f32.mxu0 0.0
      %3098 = vmatmul.mubr.f32.gmra.mxu0 %v2929
      %v3099 = vpop.f32.mrf.mxu0
      %v3100 = vadd.f32 0.0, %v3099
      %v3101 = vpop.f32.mrf.mxu0
      %3102 = vmatprep.mubr.f32.mxu0 0.0
      %3103 = vmatmul.mubr.f32.gmra.mxu0 %v2932
      %v3104 = vpop.f32.mrf.mxu0
      %v3105 = vadd.f32 0.0, %v3104
      %v3106 = vpop.f32.mrf.mxu0
      %3107 = vmatprep.mubr.f32.mxu0 0.0
      %3108 = vmatmul.mubr.f32.gmra.mxu0 %v2935
      %v3109 = vpop.f32.mrf.mxu0
      %v3110 = vadd.f32 0.0, %v3109
      %v3111 = vpop.f32.mrf.mxu0
      %3112 = vmatprep.mubr.f32.mxu0 0.0
      %3113 = vmatmul.mubr.f32.gmra.mxu0 %v2938
      %v3114 = vpop.f32.mrf.mxu0
      %v3115 = vadd.f32 0.0, %v3114
      %v3116 = vpop.f32.mrf.mxu0
      %3117 = vmatprep.mubr.f32.mxu0 0.0
      %3118 = vmatmul.mubr.f32.gmra.mxu0 %v2941
      %v3119 = vpop.f32.mrf.mxu0
      %v3120 = vadd.f32 0.0, %v3119
      %v3121 = vpop.f32.mrf.mxu0
      %3122 = vmatprep.mubr.f32.mxu0 0.0
      %3123 = vmatmul.mubr.f32.gmra.mxu0 %v2944
      %v3124 = vpop.f32.mrf.mxu0
      %v3125 = vadd.f32 0.0, %v3124
      %v3126 = vpop.f32.mrf.mxu0
      %3127 = vmatprep.mubr.f32.mxu0 0.0
      %3128 = vmatmul.mubr.f32.gmra.mxu0 %v2947
      %v3129 = vpop.f32.mrf.mxu0
      %v3130 = vadd.f32 0.0, %v3129
      %v3131 = vpop.f32.mrf.mxu0
      %3132 = vmatprep.mubr.f32.mxu0 0.0
      %3133 = vmatmul.mubr.f32.gmra.mxu0 %v2950
      %v3134 = vpop.f32.mrf.mxu0
      %v3135 = vadd.f32 0.0, %v3134
      %v3136 = vpop.f32.mrf.mxu0
      %3137 = vmatprep.mubr.f32.mxu0 0.0
      %3138 = vmatmul.mubr.f32.gmra.mxu0 %v2953
      %v3139 = vpop.f32.mrf.mxu0
      %v3140 = vadd.f32 0.0, %v3139
      %v3141 = vpop.f32.mrf.mxu0
      %3142 = vmatprep.mubr.f32.mxu0 0.0
      %3143 = vmatmul.mubr.f32.gmra.mxu0 %v2956
      %v3144 = vpop.f32.mrf.mxu0
      %v3145 = vadd.f32 0.0, %v3144
      %v3146 = vpop.f32.mrf.mxu0
      %3147 = vmatprep.mubr.f32.mxu0 0.0
      %3148 = vmatmul.mubr.f32.gmra.mxu0 %v2959
      %v3149 = vpop.f32.mrf.mxu0
      %v3150 = vadd.f32 0.0, %v3149
      %v3151 = vpop.f32.mrf.mxu0
      %3152 = vmatprep.mubr.f32.mxu0 0.0
      %3153 = vmatmul.mubr.f32.gmra.mxu0 %v2962
      %v3154 = vpop.f32.mrf.mxu0
      %v3155 = vadd.f32 0.0, %v3154
      %v3156 = vpop.f32.mrf.mxu0
      %3157 = vmatprep.mubr.f32.mxu0 0.0
      %3158 = vmatmul.mubr.f32.gmra.mxu0 %v2965
      %v3159 = vpop.f32.mrf.mxu0
      %v3160 = vadd.f32 0.0, %v3159
      %v3161 = vpop.f32.mrf.mxu0
      %3162 = vmatprep.mubr.f32.mxu0 0.0
      %3163 = vmatmul.mubr.f32.gmra.mxu0 %v2968
      %v3164 = vpop.f32.mrf.mxu0
      %v3165 = vadd.f32 0.0, %v3164
      %v3166 = vpop.f32.mrf.mxu0
      %3167 = vmatprep.mubr.f32.mxu0 0.0
      %3168 = vmatmul.mubr.f32.gmra.mxu0 %v2971
      %v3169 = vpop.f32.mrf.mxu0
      %v3170 = vadd.f32 0.0, %v3169
      %v3171 = vpop.f32.mrf.mxu0
      %3172 = vmatprep.mubr.f32.mxu0 0.0
      %3173 = vmatmul.mubr.f32.gmra.mxu0 %v2974
      %v3174 = vpop.f32.mrf.mxu0
      %v3175 = vadd.f32 0.0, %v3174
      %v3176 = vpop.f32.mrf.mxu0
      %3177 = vmatprep.mubr.f32.mxu0 0.0
      %3178 = vmatmul.mubr.f32.gmra.mxu0 %v2977
      %v3179 = vpop.f32.mrf.mxu0
      %v3180 = vadd.f32 0.0, %v3179
      %v3181 = vpop.f32.mrf.mxu0
      %3182 = vmatprep.mubr.f32.mxu0 0.0
      %3183 = vmatmul.mubr.f32.gmra.mxu0 %v2980
      %v3184 = vpop.f32.mrf.mxu0
      %v3185 = vadd.f32 0.0, %v3184
      %v3186 = vpop.f32.mrf.mxu0
      %3187 = vmatprep.mubr.f32.mxu0 0.0
      %3188 = vmatmul.mubr.f32.gmra.mxu0 %v2983
      %v3189 = vpop.f32.mrf.mxu0
      %v3190 = vadd.f32 0.0, %v3189
      %v3191 = vpop.f32.mrf.mxu0
      %3192 = vmatprep.mubr.f32.mxu0 0.0
      %3193 = vmatmul.mubr.f32.gmra.mxu0 %v2986
      %v3194 = vpop.f32.mrf.mxu0
      %v3195 = vadd.f32 0.0, %v3194
      %v3196 = vpop.f32.mrf.mxu0
      %3197 = vmatprep.mubr.f32.mxu0 0.0
      %3198 = vmatmul.mubr.f32.gmra.mxu0 %v2989
      %v3199 = vpop.f32.mrf.mxu0
      %v3200 = vadd.f32 0.0, %v3199
      %v3201 = vpop.f32.mrf.mxu0
      %3202 = vmatprep.mubr.f32.mxu0 0.0
      %3203 = vmatmul.mubr.f32.gmra.mxu0 %v2992
      %v3204 = vpop.f32.mrf.mxu0
      %v3205 = vadd.f32 0.0, %v3204
      %v3206 = vpop.f32.mrf.mxu0
      %3207 = vmatprep.mubr.f32.mxu0 0.0
      %3208 = vmatmul.mubr.f32.gmra.mxu0 %v2995
      %v3209 = vpop.f32.mrf.mxu0
      %v3210 = vadd.f32 0.0, %v3209
      %v3211 = vpop.f32.mrf.mxu0
      %3212 = vmatprep.mubr.f32.mxu0 0.0
      %3213 = vmatmul.mubr.f32.gmra.mxu0 %v2998
      %v3214 = vpop.f32.mrf.mxu0
      %v3215 = vadd.f32 0.0, %v3214
      %v3216 = vpop.f32.mrf.mxu0
      %3217 = vmatprep.mubr.f32.mxu0 0.0
      %3218 = vmatmul.mubr.f32.gmra.mxu0 %v3001
      %v3219 = vpop.f32.mrf.mxu0
      %v3220 = vadd.f32 0.0, %v3219
      %v3221 = vpop.f32.mrf.mxu0
      %3222 = vmatprep.mubr.f32.mxu0 0.0
      %3223 = vmatmul.mubr.f32.gmra.mxu0 %v3004
      %v3224 = vpop.f32.mrf.mxu0
      %v3225 = vadd.f32 0.0, %v3224
      %v3226 = vpop.f32.mrf.mxu0
      %3227 = vmatprep.mubr.f32.mxu0 0.0
      %3228 = vmatmul.mubr.f32.gmra.mxu0 %v3007
      %v3229 = vpop.f32.mrf.mxu0
      %v3230 = vadd.f32 0.0, %v3229
      %v3231 = vpop.f32.mrf.mxu0
      %3232 = vmatprep.mubr.f32.mxu0 0.0
      %3233 = vmatmul.mubr.f32.gmra.mxu0 %v3010
      %v3234 = vpop.f32.mrf.mxu0
      %v3235 = vadd.f32 0.0, %v3234
      %v3236 = vpop.f32.mrf.mxu0
      %3237 = vmatprep.mubr.f32.mxu0 0.0
      %3238 = vmatmul.mubr.f32.gmra.mxu0 %v3013
      %v3239 = vpop.f32.mrf.mxu0
      %v3240 = vadd.f32 0.0, %v3239
      %v3241 = vpop.f32.mrf.mxu0
      %3242 = vdwg.mxu0
      %v3243 = vadd.f32 %v2853, %v3085
      %v3244 = vadd.f32 %v2854, %v3090
      %v3245 = vadd.f32 %v2855, %v3095
      %v3246 = vadd.f32 %v2856, %v3100
      %v3247 = vadd.f32 %v2857, %v3105
      %v3248 = vadd.f32 %v2858, %v3110
      %v3249 = vadd.f32 %v2859, %v3115
      %v3250 = vadd.f32 %v2860, %v3120
      %v3251 = vadd.f32 %v2861, %v3125
      %v3252 = vadd.f32 %v2862, %v3130
      %v3253 = vadd.f32 %v2863, %v3135
      %v3254 = vadd.f32 %v2864, %v3140
      %v3255 = vadd.f32 %v2865, %v3145
      %v3256 = vadd.f32 %v2866, %v3150
      %v3257 = vadd.f32 %v2867, %v3155
      %v3258 = vadd.f32 %v2868, %v3160
      %v3259 = vadd.f32 %v2869, %v3165
      %v3260 = vadd.f32 %v2870, %v3170
      %v3261 = vadd.f32 %v2871, %v3175
      %v3262 = vadd.f32 %v2872, %v3180
      %v3263 = vadd.f32 %v2873, %v3185
      %v3264 = vadd.f32 %v2874, %v3190
      %v3265 = vadd.f32 %v2875, %v3195
      %v3266 = vadd.f32 %v2876, %v3200
      %v3267 = vadd.f32 %v2877, %v3205
      %v3268 = vadd.f32 %v2878, %v3210
      %v3269 = vadd.f32 %v2879, %v3215
      %v3270 = vadd.f32 %v2880, %v3220
      %v3271 = vadd.f32 %v2881, %v3225
      %v3272 = vadd.f32 %v2882, %v3230
      %v3273 = vadd.f32 %v2883, %v3235
      %v3274 = vadd.f32 %v2884, %v3240
      %v3275 = vld [vmem:[%s2494 + $0x2] sm:$0xff]
      %v3276 = vld [vmem:[%s2494 + $0xa] sm:$0xff]
      %v3277 = vld [vmem:[%s2494 + $0x1a] sm:$0xff]
      %v3278 = vld [vmem:[%s2494 + $0x22] sm:$0xff]
      %v3279 = vld [vmem:[%s2494 + $0x32] sm:$0xff]
      %v3280 = vld [vmem:[%s2494 + $0x3a] sm:$0xff]
      %v3281 = vld [vmem:[%s2494 + $0x4a] sm:$0xff]
      %v3282 = vld [vmem:[%s2494 + $0x52] sm:$0xff]
      %v3283 = vld [vmem:[%s2494 + $0x62] sm:$0xff]
      %v3284 = vld [vmem:[%s2494 + $0x6a] sm:$0xff]
      %v3285 = vld [vmem:[%s2494 + $0x7a] sm:$0xff]
      %v3286 = vld [vmem:[%s2494 + $0x82] sm:$0xff]
      %v3287 = vld [vmem:[%s2494 + $0x92] sm:$0xff]
      %v3288 = vld [vmem:[%s2494 + $0x9a] sm:$0xff]
      %v3289 = vld [vmem:[%s2494 + $0xaa] sm:$0xff]
      %v3290 = vld [vmem:[%s2494 + $0xb2] sm:$0xff]
      %v3291 = vld [vmem:[%s2494 + $0xc2] sm:$0xff]
      %v3292 = vld [vmem:[%s2494 + $0xca] sm:$0xff]
      %v3293 = vld [vmem:[%s2494 + $0xda] sm:$0xff]
      %v3294 = vld [vmem:[%s2494 + $0xe2] sm:$0xff]
      %v3295 = vld [vmem:[%s2494 + $0xf2] sm:$0xff]
      %v3296 = vld [vmem:[%s2494 + $0xfa] sm:$0xff]
      %v3297 = vld [vmem:[%s2494 + $0x10a] sm:$0xff]
      %v3298 = vld [vmem:[%s2494 + $0x112] sm:$0xff]
      %v3299 = vld [vmem:[%s2494 + $0x122] sm:$0xff]
      %v3300 = vld [vmem:[%s2494 + $0x12a] sm:$0xff]
      %v3301 = vld [vmem:[%s2494 + $0x13a] sm:$0xff]
      %v3302 = vld [vmem:[%s2494 + $0x142] sm:$0xff]
      %v3303 = vld [vmem:[%s2494 + $0x152] sm:$0xff]
      %v3304 = vld [vmem:[%s2494 + $0x15a] sm:$0xff]
      %v3305 = vld [vmem:[%s2494 + $0x16a] sm:$0xff]
      %v3306 = vld [vmem:[%s2494 + $0x172] sm:$0xff]
      %s3307 = scalar_lea.vmem %s1, 32
      %v3308 = vld [vmem:[%s3307] sm:$0xf]
      %v3310 = vsel %vm171, %v3275, 0
      %v3313 = vsel %vm171, %v3276, 0
      %v3316 = vsel %vm171, %v3277, 0
      %v3319 = vsel %vm171, %v3278, 0
      %v3322 = vsel %vm171, %v3279, 0
      %v3325 = vsel %vm171, %v3280, 0
      %v3328 = vsel %vm171, %v3281, 0
      %v3331 = vsel %vm171, %v3282, 0
      %v3334 = vsel %vm171, %v3283, 0
      %v3337 = vsel %vm171, %v3284, 0
      %v3340 = vsel %vm171, %v3285, 0
      %v3343 = vsel %vm171, %v3286, 0
      %v3346 = vsel %vm171, %v3287, 0
      %v3349 = vsel %vm171, %v3288, 0
      %v3352 = vsel %vm171, %v3289, 0
      %v3355 = vsel %vm171, %v3290, 0
      %v3358 = vsel %vm171, %v3291, 0
      %v3361 = vsel %vm171, %v3292, 0
      %v3364 = vsel %vm171, %v3293, 0
      %v3367 = vsel %vm171, %v3294, 0
      %v3370 = vsel %vm171, %v3295, 0
      %v3373 = vsel %vm171, %v3296, 0
      %v3376 = vsel %vm171, %v3297, 0
      %v3379 = vsel %vm171, %v3298, 0
      %v3382 = vsel %vm171, %v3299, 0
      %v3385 = vsel %vm171, %v3300, 0
      %v3388 = vsel %vm171, %v3301, 0
      %v3391 = vsel %vm171, %v3302, 0
      %v3394 = vsel %vm171, %v3303, 0
      %v3397 = vsel %vm171, %v3304, 0
      %v3400 = vsel %vm171, %v3305, 0
      %v3403 = vsel %vm171, %v3306, 0
      %v3406 = vsel %vm413, %v3308, 0
      %3408 = vmatprep.subr.mxu0 0.0
      %3409 = vmatpush1.msra.mxu0 0.0
      %3410 = vmatprep.subr.mxu0 0.0
      %3411 = vmatpush1.msra.mxu0 0.0
      %3412 = vmatprep.subr.mxu0 0.0
      %3413 = vmatpush1.msra.mxu0 0.0
      %3414 = vmatprep.subr.mxu0 0.0
      %3415 = vmatpush1.msra.mxu0 0.0
      %3416 = vmatprep.subr.mxu0 0.0
      %3417 = vmatpush1.msra.mxu0 0.0
      %3418 = vmatprep.subr.mxu0 0.0
      %3419 = vmatpush1.msra.mxu0 0.0
      %3420 = vmatprep.subr.mxu0 0.0
      %3421 = vmatpush1.msra.mxu0 0.0
      %3422 = vmatprep.subr.mxu0 0.0
      %3423 = vmatpush1.msra.mxu0 0.0
      %3424 = vmatprep.subr.mxu0 0.0
      %3425 = vmatpush1.msra.mxu0 0.0
      %3426 = vmatprep.subr.mxu0 0.0
      %3427 = vmatpush1.msra.mxu0 0.0
      %3428 = vmatprep.subr.mxu0 0.0
      %3429 = vmatpush1.msra.mxu0 0.0
      %3430 = vmatprep.subr.mxu0 0.0
      %3431 = vmatpush1.msra.mxu0 0.0
      %3432 = vmatprep.subr.mxu0 0.0
      %3433 = vmatpush1.msra.mxu0 0.0
      %3434 = vmatprep.subr.mxu0 0.0
      %3435 = vmatpush1.msra.mxu0 0.0
      %3436 = vmatprep.subr.mxu0 0.0
      %3437 = vmatpush1.msra.mxu0 0.0
      %3438 = vmatprep.subr.mxu0 0.0
      %3439 = vmatpush1.msra.mxu0 %v3406
      %3440 = vmatprep.subr.mxu0 0.0
      %3441 = vmatpush2.msra.mxu0 0.0
      %3442 = vmatprep.subr.mxu0 0.0
      %3443 = vmatpush2.msra.mxu0 0.0
      %3444 = vmatprep.subr.mxu0 0.0
      %3445 = vmatpush2.msra.mxu0 0.0
      %3446 = vmatprep.subr.mxu0 0.0
      %3447 = vmatpush2.msra.mxu0 0.0
      %3448 = vmatprep.subr.mxu0 0.0
      %3449 = vmatpush2.msra.mxu0 0.0
      %3450 = vmatprep.subr.mxu0 0.0
      %3451 = vmatpush2.msra.mxu0 0.0
      %3452 = vmatprep.subr.mxu0 0.0
      %3453 = vmatpush2.msra.mxu0 0.0
      %3454 = vmatprep.subr.mxu0 0.0
      %3455 = vmatpush2.msra.mxu0 0.0
      %3456 = vmatprep.subr.mxu0 0.0
      %3457 = vmatpush2.msra.mxu0 0.0
      %3458 = vmatprep.subr.mxu0 0.0
      %3459 = vmatpush2.msra.mxu0 0.0
      %3460 = vmatprep.subr.mxu0 0.0
      %3461 = vmatpush2.msra.mxu0 0.0
      %3462 = vmatprep.subr.mxu0 0.0
      %3463 = vmatpush2.msra.mxu0 0.0
      %3464 = vmatprep.subr.mxu0 0.0
      %3465 = vmatpush2.msra.mxu0 0.0
      %3466 = vmatprep.subr.mxu0 0.0
      %3467 = vmatpush2.msra.mxu0 0.0
      %3468 = vmatprep.subr.mxu0 0.0
      %3469 = vmatpush2.msra.mxu0 0.0
      %3470 = vmatprep.subr.mxu0 0.0
      %3471 = vmatpush2.msra.mxu0 0.0
      %3472 = vmatprep.mubr.f32.mxu0 0.0
      %3473 = vmatmul.mubr.f32.gmra.mxu0 %v3310
      %v3474 = vpop.f32.mrf.mxu0
      %v3475 = vadd.f32 0.0, %v3474
      %v3476 = vpop.f32.mrf.mxu0
      %3477 = vmatprep.mubr.f32.mxu0 0.0
      %3478 = vmatmul.mubr.f32.gmra.mxu0 %v3313
      %v3479 = vpop.f32.mrf.mxu0
      %v3480 = vadd.f32 0.0, %v3479
      %v3481 = vpop.f32.mrf.mxu0
      %3482 = vmatprep.mubr.f32.mxu0 0.0
      %3483 = vmatmul.mubr.f32.gmra.mxu0 %v3316
      %v3484 = vpop.f32.mrf.mxu0
      %v3485 = vadd.f32 0.0, %v3484
      %v3486 = vpop.f32.mrf.mxu0
      %3487 = vmatprep.mubr.f32.mxu0 0.0
      %3488 = vmatmul.mubr.f32.gmra.mxu0 %v3319
      %v3489 = vpop.f32.mrf.mxu0
      %v3490 = vadd.f32 0.0, %v3489
      %v3491 = vpop.f32.mrf.mxu0
      %3492 = vmatprep.mubr.f32.mxu0 0.0
      %3493 = vmatmul.mubr.f32.gmra.mxu0 %v3322
      %v3494 = vpop.f32.mrf.mxu0
      %v3495 = vadd.f32 0.0, %v3494
      %v3496 = vpop.f32.mrf.mxu0
      %3497 = vmatprep.mubr.f32.mxu0 0.0
      %3498 = vmatmul.mubr.f32.gmra.mxu0 %v3325
      %v3499 = vpop.f32.mrf.mxu0
      %v3500 = vadd.f32 0.0, %v3499
      %v3501 = vpop.f32.mrf.mxu0
      %3502 = vmatprep.mubr.f32.mxu0 0.0
      %3503 = vmatmul.mubr.f32.gmra.mxu0 %v3328
      %v3504 = vpop.f32.mrf.mxu0
      %v3505 = vadd.f32 0.0, %v3504
      %v3506 = vpop.f32.mrf.mxu0
      %3507 = vmatprep.mubr.f32.mxu0 0.0
      %3508 = vmatmul.mubr.f32.gmra.mxu0 %v3331
      %v3509 = vpop.f32.mrf.mxu0
      %v3510 = vadd.f32 0.0, %v3509
      %v3511 = vpop.f32.mrf.mxu0
      %3512 = vmatprep.mubr.f32.mxu0 0.0
      %3513 = vmatmul.mubr.f32.gmra.mxu0 %v3334
      %v3514 = vpop.f32.mrf.mxu0
      %v3515 = vadd.f32 0.0, %v3514
      %v3516 = vpop.f32.mrf.mxu0
      %3517 = vmatprep.mubr.f32.mxu0 0.0
      %3518 = vmatmul.mubr.f32.gmra.mxu0 %v3337
      %v3519 = vpop.f32.mrf.mxu0
      %v3520 = vadd.f32 0.0, %v3519
      %v3521 = vpop.f32.mrf.mxu0
      %3522 = vmatprep.mubr.f32.mxu0 0.0
      %3523 = vmatmul.mubr.f32.gmra.mxu0 %v3340
      %v3524 = vpop.f32.mrf.mxu0
      %v3525 = vadd.f32 0.0, %v3524
      %v3526 = vpop.f32.mrf.mxu0
      %3527 = vmatprep.mubr.f32.mxu0 0.0
      %3528 = vmatmul.mubr.f32.gmra.mxu0 %v3343
      %v3529 = vpop.f32.mrf.mxu0
      %v3530 = vadd.f32 0.0, %v3529
      %v3531 = vpop.f32.mrf.mxu0
      %3532 = vmatprep.mubr.f32.mxu0 0.0
      %3533 = vmatmul.mubr.f32.gmra.mxu0 %v3346
      %v3534 = vpop.f32.mrf.mxu0
      %v3535 = vadd.f32 0.0, %v3534
      %v3536 = vpop.f32.mrf.mxu0
      %3537 = vmatprep.mubr.f32.mxu0 0.0
      %3538 = vmatmul.mubr.f32.gmra.mxu0 %v3349
      %v3539 = vpop.f32.mrf.mxu0
      %v3540 = vadd.f32 0.0, %v3539
      %v3541 = vpop.f32.mrf.mxu0
      %3542 = vmatprep.mubr.f32.mxu0 0.0
      %3543 = vmatmul.mubr.f32.gmra.mxu0 %v3352
      %v3544 = vpop.f32.mrf.mxu0
      %v3545 = vadd.f32 0.0, %v3544
      %v3546 = vpop.f32.mrf.mxu0
      %3547 = vmatprep.mubr.f32.mxu0 0.0
      %3548 = vmatmul.mubr.f32.gmra.mxu0 %v3355
      %v3549 = vpop.f32.mrf.mxu0
      %v3550 = vadd.f32 0.0, %v3549
      %v3551 = vpop.f32.mrf.mxu0
      %3552 = vmatprep.mubr.f32.mxu0 0.0
      %3553 = vmatmul.mubr.f32.gmra.mxu0 %v3358
      %v3554 = vpop.f32.mrf.mxu0
      %v3555 = vadd.f32 0.0, %v3554
      %v3556 = vpop.f32.mrf.mxu0
      %3557 = vmatprep.mubr.f32.mxu0 0.0
      %3558 = vmatmul.mubr.f32.gmra.mxu0 %v3361
      %v3559 = vpop.f32.mrf.mxu0
      %v3560 = vadd.f32 0.0, %v3559
      %v3561 = vpop.f32.mrf.mxu0
      %3562 = vmatprep.mubr.f32.mxu0 0.0
      %3563 = vmatmul.mubr.f32.gmra.mxu0 %v3364
      %v3564 = vpop.f32.mrf.mxu0
      %v3565 = vadd.f32 0.0, %v3564
      %v3566 = vpop.f32.mrf.mxu0
      %3567 = vmatprep.mubr.f32.mxu0 0.0
      %3568 = vmatmul.mubr.f32.gmra.mxu0 %v3367
      %v3569 = vpop.f32.mrf.mxu0
      %v3570 = vadd.f32 0.0, %v3569
      %v3571 = vpop.f32.mrf.mxu0
      %3572 = vmatprep.mubr.f32.mxu0 0.0
      %3573 = vmatmul.mubr.f32.gmra.mxu0 %v3370
      %v3574 = vpop.f32.mrf.mxu0
      %v3575 = vadd.f32 0.0, %v3574
      %v3576 = vpop.f32.mrf.mxu0
      %3577 = vmatprep.mubr.f32.mxu0 0.0
      %3578 = vmatmul.mubr.f32.gmra.mxu0 %v3373
      %v3579 = vpop.f32.mrf.mxu0
      %v3580 = vadd.f32 0.0, %v3579
      %v3581 = vpop.f32.mrf.mxu0
      %3582 = vmatprep.mubr.f32.mxu0 0.0
      %3583 = vmatmul.mubr.f32.gmra.mxu0 %v3376
      %v3584 = vpop.f32.mrf.mxu0
      %v3585 = vadd.f32 0.0, %v3584
      %v3586 = vpop.f32.mrf.mxu0
      %3587 = vmatprep.mubr.f32.mxu0 0.0
      %3588 = vmatmul.mubr.f32.gmra.mxu0 %v3379
      %v3589 = vpop.f32.mrf.mxu0
      %v3590 = vadd.f32 0.0, %v3589
      %v3591 = vpop.f32.mrf.mxu0
      %3592 = vmatprep.mubr.f32.mxu0 0.0
      %3593 = vmatmul.mubr.f32.gmra.mxu0 %v3382
      %v3594 = vpop.f32.mrf.mxu0
      %v3595 = vadd.f32 0.0, %v3594
      %v3596 = vpop.f32.mrf.mxu0
      %3597 = vmatprep.mubr.f32.mxu0 0.0
      %3598 = vmatmul.mubr.f32.gmra.mxu0 %v3385
      %v3599 = vpop.f32.mrf.mxu0
      %v3600 = vadd.f32 0.0, %v3599
      %v3601 = vpop.f32.mrf.mxu0
      %3602 = vmatprep.mubr.f32.mxu0 0.0
      %3603 = vmatmul.mubr.f32.gmra.mxu0 %v3388
      %v3604 = vpop.f32.mrf.mxu0
      %v3605 = vadd.f32 0.0, %v3604
      %v3606 = vpop.f32.mrf.mxu0
      %3607 = vmatprep.mubr.f32.mxu0 0.0
      %3608 = vmatmul.mubr.f32.gmra.mxu0 %v3391
      %v3609 = vpop.f32.mrf.mxu0
      %v3610 = vadd.f32 0.0, %v3609
      %v3611 = vpop.f32.mrf.mxu0
      %3612 = vmatprep.mubr.f32.mxu0 0.0
      %3613 = vmatmul.mubr.f32.gmra.mxu0 %v3394
      %v3614 = vpop.f32.mrf.mxu0
      %v3615 = vadd.f32 0.0, %v3614
      %v3616 = vpop.f32.mrf.mxu0
      %3617 = vmatprep.mubr.f32.mxu0 0.0
      %3618 = vmatmul.mubr.f32.gmra.mxu0 %v3397
      %v3619 = vpop.f32.mrf.mxu0
      %v3620 = vadd.f32 0.0, %v3619
      %v3621 = vpop.f32.mrf.mxu0
      %3622 = vmatprep.mubr.f32.mxu0 0.0
      %3623 = vmatmul.mubr.f32.gmra.mxu0 %v3400
      %v3624 = vpop.f32.mrf.mxu0
      %v3625 = vadd.f32 0.0, %v3624
      %v3626 = vpop.f32.mrf.mxu0
      %3627 = vmatprep.mubr.f32.mxu0 0.0
      %3628 = vmatmul.mubr.f32.gmra.mxu0 %v3403
      %v3629 = vpop.f32.mrf.mxu0
      %v3630 = vadd.f32 0.0, %v3629
      %v3631 = vpop.f32.mrf.mxu0
      %3632 = vdwg.mxu0
      %v3633 = vadd.f32 %v3243, %v3475
      %v3634 = vadd.f32 %v3244, %v3480
      %v3635 = vadd.f32 %v3245, %v3485
      %v3636 = vadd.f32 %v3246, %v3490
      %v3637 = vadd.f32 %v3247, %v3495
      %v3638 = vadd.f32 %v3248, %v3500
      %v3639 = vadd.f32 %v3249, %v3505
      %v3640 = vadd.f32 %v3250, %v3510
      %v3641 = vadd.f32 %v3251, %v3515
      %v3642 = vadd.f32 %v3252, %v3520
      %v3643 = vadd.f32 %v3253, %v3525
      %v3644 = vadd.f32 %v3254, %v3530
      %v3645 = vadd.f32 %v3255, %v3535
      %v3646 = vadd.f32 %v3256, %v3540
      %v3647 = vadd.f32 %v3257, %v3545
      %v3648 = vadd.f32 %v3258, %v3550
      %v3649 = vadd.f32 %v3259, %v3555
      %v3650 = vadd.f32 %v3260, %v3560
      %v3651 = vadd.f32 %v3261, %v3565
      %v3652 = vadd.f32 %v3262, %v3570
      %v3653 = vadd.f32 %v3263, %v3575
      %v3654 = vadd.f32 %v3264, %v3580
      %v3655 = vadd.f32 %v3265, %v3585
      %v3656 = vadd.f32 %v3266, %v3590
      %v3657 = vadd.f32 %v3267, %v3595
      %v3658 = vadd.f32 %v3268, %v3600
      %v3659 = vadd.f32 %v3269, %v3605
      %v3660 = vadd.f32 %v3270, %v3610
      %v3661 = vadd.f32 %v3271, %v3615
      %v3662 = vadd.f32 %v3272, %v3620
      %v3663 = vadd.f32 %v3273, %v3625
      %v3664 = vadd.f32 %v3274, %v3630
      %v3665 = vsel %vm171, %v3633, 0.0
      %v3666 = vsel %vm171, %v3634, 0.0
      %v3667 = vadd.f32 %v3665, %v3666
      %v3668 = vsel %vm171, %v3635, 0.0
      %v3669 = vadd.f32 %v3667, %v3668
      %v3670 = vsel %vm171, %v3636, 0.0
      %v3671 = vadd.f32 %v3669, %v3670
      %v3672 = vsel %vm171, %v3637, 0.0
      %v3673 = vadd.f32 %v3671, %v3672
      %v3674 = vsel %vm171, %v3638, 0.0
      %v3675 = vadd.f32 %v3673, %v3674
      %v3676 = vsel %vm171, %v3639, 0.0
      %v3677 = vadd.f32 %v3675, %v3676
      %v3678 = vsel %vm171, %v3640, 0.0
      %v3679 = vadd.f32 %v3677, %v3678
      %v3680 = vsel %vm171, %v3641, 0.0
      %v3681 = vadd.f32 %v3679, %v3680
      %v3682 = vsel %vm171, %v3642, 0.0
      %v3683 = vadd.f32 %v3681, %v3682
      %v3684 = vsel %vm171, %v3643, 0.0
      %v3685 = vadd.f32 %v3683, %v3684
      %v3686 = vsel %vm171, %v3644, 0.0
      %v3687 = vadd.f32 %v3685, %v3686
      %v3688 = vsel %vm171, %v3645, 0.0
      %v3689 = vadd.f32 %v3687, %v3688
      %v3690 = vsel %vm171, %v3646, 0.0
      %v3691 = vadd.f32 %v3689, %v3690
      %v3692 = vsel %vm171, %v3647, 0.0
      %v3693 = vadd.f32 %v3691, %v3692
      %v3694 = vsel %vm171, %v3648, 0.0
      %v3695 = vadd.f32 %v3693, %v3694
      %v3696 = vsel %vm171, %v3649, 0.0
      %v3697 = vadd.f32 %v3695, %v3696
      %v3698 = vsel %vm171, %v3650, 0.0
      %v3699 = vadd.f32 %v3697, %v3698
      %v3700 = vsel %vm171, %v3651, 0.0
      %v3701 = vadd.f32 %v3699, %v3700
      %v3702 = vsel %vm171, %v3652, 0.0
      %v3703 = vadd.f32 %v3701, %v3702
      %v3704 = vsel %vm171, %v3653, 0.0
      %v3705 = vadd.f32 %v3703, %v3704
      %v3706 = vsel %vm171, %v3654, 0.0
      %v3707 = vadd.f32 %v3705, %v3706
      %v3708 = vsel %vm171, %v3655, 0.0
      %v3709 = vadd.f32 %v3707, %v3708
      %v3710 = vsel %vm171, %v3656, 0.0
      %v3711 = vadd.f32 %v3709, %v3710
      %v3712 = vsel %vm171, %v3657, 0.0
      %v3713 = vadd.f32 %v3711, %v3712
      %v3714 = vsel %vm171, %v3658, 0.0
      %v3715 = vadd.f32 %v3713, %v3714
      %v3716 = vsel %vm171, %v3659, 0.0
      %v3717 = vadd.f32 %v3715, %v3716
      %v3718 = vsel %vm171, %v3660, 0.0
      %v3719 = vadd.f32 %v3717, %v3718
      %v3720 = vsel %vm171, %v3661, 0.0
      %v3721 = vadd.f32 %v3719, %v3720
      %v3722 = vsel %vm171, %v3662, 0.0
      %v3723 = vadd.f32 %v3721, %v3722
      %v3724 = vsel %vm171, %v3663, 0.0
      %v3725 = vadd.f32 %v3723, %v3724
      %v3726 = vsel %vm171, %v3664, 0.0
      %v3727 = vadd.f32 %v3725, %v3726
      %v3728 = vrot.slane %v3727, 4
      %v3729 = vadd.f32 %v3727, %v3728
      %v3730 = vrot.slane %v3729, 2
      %v3731 = vadd.f32 %v3729, %v3730
      %v3732 = vrot.slane %v3731, 1
      %v3733 = vadd.f32 %v3731, %v3732
      %v3734 = vmul.f32 %v3733, 0.00390625
      %v3735 = vsub.f32 %v3633, %v3734
      %v3736 = vsub.f32 %v3634, %v3734
      %v3737 = vsub.f32 %v3635, %v3734
      %v3738 = vsub.f32 %v3636, %v3734
      %v3739 = vsub.f32 %v3637, %v3734
      %v3740 = vsub.f32 %v3638, %v3734
      %v3741 = vsub.f32 %v3639, %v3734
      %v3742 = vsub.f32 %v3640, %v3734
      %v3743 = vsub.f32 %v3641, %v3734
      %v3744 = vsub.f32 %v3642, %v3734
      %v3745 = vsub.f32 %v3643, %v3734
      %v3746 = vsub.f32 %v3644, %v3734
      %v3747 = vsub.f32 %v3645, %v3734
      %v3748 = vsub.f32 %v3646, %v3734
      %v3749 = vsub.f32 %v3647, %v3734
      %v3750 = vsub.f32 %v3648, %v3734
      %v3751 = vsub.f32 %v3649, %v3734
      %v3752 = vsub.f32 %v3650, %v3734
      %v3753 = vsub.f32 %v3651, %v3734
      %v3754 = vsub.f32 %v3652, %v3734
      %v3755 = vsub.f32 %v3653, %v3734
      %v3756 = vsub.f32 %v3654, %v3734
      %v3757 = vsub.f32 %v3655, %v3734
      %v3758 = vsub.f32 %v3656, %v3734
      %v3759 = vsub.f32 %v3657, %v3734
      %v3760 = vsub.f32 %v3658, %v3734
      %v3761 = vsub.f32 %v3659, %v3734
      %v3762 = vsub.f32 %v3660, %v3734
      %v3763 = vsub.f32 %v3661, %v3734
      %v3764 = vsub.f32 %v3662, %v3734
      %v3765 = vsub.f32 %v3663, %v3734
      %v3766 = vsub.f32 %v3664, %v3734
      %v3767 = vmul.f32 %v3735, %v3735
      %v3768 = vmul.f32 %v3736, %v3736
      %v3769 = vmul.f32 %v3737, %v3737
      %v3770 = vmul.f32 %v3738, %v3738
      %v3771 = vmul.f32 %v3739, %v3739
      %v3772 = vmul.f32 %v3740, %v3740
      %v3773 = vmul.f32 %v3741, %v3741
      %v3774 = vmul.f32 %v3742, %v3742
      %v3775 = vmul.f32 %v3743, %v3743
      %v3776 = vmul.f32 %v3744, %v3744
      %v3777 = vmul.f32 %v3745, %v3745
      %v3778 = vmul.f32 %v3746, %v3746
      %v3779 = vmul.f32 %v3747, %v3747
      %v3780 = vmul.f32 %v3748, %v3748
      %v3781 = vmul.f32 %v3749, %v3749
      %v3782 = vmul.f32 %v3750, %v3750
      %v3783 = vmul.f32 %v3751, %v3751
      %v3784 = vmul.f32 %v3752, %v3752
      %v3785 = vmul.f32 %v3753, %v3753
      %v3786 = vmul.f32 %v3754, %v3754
      %v3787 = vmul.f32 %v3755, %v3755
      %v3788 = vmul.f32 %v3756, %v3756
      %v3789 = vmul.f32 %v3757, %v3757
      %v3790 = vmul.f32 %v3758, %v3758
      %v3791 = vmul.f32 %v3759, %v3759
      %v3792 = vmul.f32 %v3760, %v3760
      %v3793 = vmul.f32 %v3761, %v3761
      %v3794 = vmul.f32 %v3762, %v3762
      %v3795 = vmul.f32 %v3763, %v3763
      %v3796 = vmul.f32 %v3764, %v3764
      %v3797 = vmul.f32 %v3765, %v3765
      %v3798 = vmul.f32 %v3766, %v3766
      %v3799 = vsel %vm171, %v3767, 0.0
      %v3800 = vsel %vm171, %v3768, 0.0
      %v3801 = vadd.f32 %v3799, %v3800
      %v3802 = vsel %vm171, %v3769, 0.0
      %v3803 = vadd.f32 %v3801, %v3802
      %v3804 = vsel %vm171, %v3770, 0.0
      %v3805 = vadd.f32 %v3803, %v3804
      %v3806 = vsel %vm171, %v3771, 0.0
      %v3807 = vadd.f32 %v3805, %v3806
      %v3808 = vsel %vm171, %v3772, 0.0
      %v3809 = vadd.f32 %v3807, %v3808
      %v3810 = vsel %vm171, %v3773, 0.0
      %v3811 = vadd.f32 %v3809, %v3810
      %v3812 = vsel %vm171, %v3774, 0.0
      %v3813 = vadd.f32 %v3811, %v3812
      %v3814 = vsel %vm171, %v3775, 0.0
      %v3815 = vadd.f32 %v3813, %v3814
      %v3816 = vsel %vm171, %v3776, 0.0
      %v3817 = vadd.f32 %v3815, %v3816
      %v3818 = vsel %vm171, %v3777, 0.0
      %v3819 = vadd.f32 %v3817, %v3818
      %v3820 = vsel %vm171, %v3778, 0.0
      %v3821 = vadd.f32 %v3819, %v3820
      %v3822 = vsel %vm171, %v3779, 0.0
      %v3823 = vadd.f32 %v3821, %v3822
      %v3824 = vsel %vm171, %v3780, 0.0
      %v3825 = vadd.f32 %v3823, %v3824
      %v3826 = vsel %vm171, %v3781, 0.0
      %v3827 = vadd.f32 %v3825, %v3826
      %v3828 = vsel %vm171, %v3782, 0.0
      %v3829 = vadd.f32 %v3827, %v3828
      %v3830 = vsel %vm171, %v3783, 0.0
      %v3831 = vadd.f32 %v3829, %v3830
      %v3832 = vsel %vm171, %v3784, 0.0
      %v3833 = vadd.f32 %v3831, %v3832
      %v3834 = vsel %vm171, %v3785, 0.0
      %v3835 = vadd.f32 %v3833, %v3834
      %v3836 = vsel %vm171, %v3786, 0.0
      %v3837 = vadd.f32 %v3835, %v3836
      %v3838 = vsel %vm171, %v3787, 0.0
      %v3839 = vadd.f32 %v3837, %v3838
      %v3840 = vsel %vm171, %v3788, 0.0
      %v3841 = vadd.f32 %v3839, %v3840
      %v3842 = vsel %vm171, %v3789, 0.0
      %v3843 = vadd.f32 %v3841, %v3842
      %v3844 = vsel %vm171, %v3790, 0.0
      %v3845 = vadd.f32 %v3843, %v3844
      %v3846 = vsel %vm171, %v3791, 0.0
      %v3847 = vadd.f32 %v3845, %v3846
      %v3848 = vsel %vm171, %v3792, 0.0
      %v3849 = vadd.f32 %v3847, %v3848
      %v3850 = vsel %vm171, %v3793, 0.0
      %v3851 = vadd.f32 %v3849, %v3850
      %v3852 = vsel %vm171, %v3794, 0.0
      %v3853 = vadd.f32 %v3851, %v3852
      %v3854 = vsel %vm171, %v3795, 0.0
      %v3855 = vadd.f32 %v3853, %v3854
      %v3856 = vsel %vm171, %v3796, 0.0
      %v3857 = vadd.f32 %v3855, %v3856
      %v3858 = vsel %vm171, %v3797, 0.0
      %v3859 = vadd.f32 %v3857, %v3858
      %v3860 = vsel %vm171, %v3798, 0.0
      %v3861 = vadd.f32 %v3859, %v3860
      %v3862 = vrot.slane %v3861, 4
      %v3863 = vadd.f32 %v3861, %v3862
      %v3864 = vrot.slane %v3863, 2
      %v3865 = vadd.f32 %v3863, %v3864
      %v3866 = vrot.slane %v3865, 1
      %v3867 = vadd.f32 %v3865, %v3866
      %v3868 = vmul.f32 %v3867, 0.00390625
      %v3869 = vadd.f32 %v3868, 1e-05
      %v3870 = vrsqrt.pop %v3869
      %v3871 = vmul.f32 %v3735, %v3870
      %v3872 = vmul.f32 %v3736, %v3870
      %v3873 = vmul.f32 %v3737, %v3870
      %v3874 = vmul.f32 %v3738, %v3870
      %v3875 = vmul.f32 %v3739, %v3870
      %v3876 = vmul.f32 %v3740, %v3870
      %v3877 = vmul.f32 %v3741, %v3870
      %v3878 = vmul.f32 %v3742, %v3870
      %v3879 = vmul.f32 %v3743, %v3870
      %v3880 = vmul.f32 %v3744, %v3870
      %v3881 = vmul.f32 %v3745, %v3870
      %v3882 = vmul.f32 %v3746, %v3870
      %v3883 = vmul.f32 %v3747, %v3870
      %v3884 = vmul.f32 %v3748, %v3870
      %v3885 = vmul.f32 %v3749, %v3870
      %v3886 = vmul.f32 %v3750, %v3870
      %v3887 = vmul.f32 %v3751, %v3870
      %v3888 = vmul.f32 %v3752, %v3870
      %v3889 = vmul.f32 %v3753, %v3870
      %v3890 = vmul.f32 %v3754, %v3870
      %v3891 = vmul.f32 %v3755, %v3870
      %v3892 = vmul.f32 %v3756, %v3870
      %v3893 = vmul.f32 %v3757, %v3870
      %v3894 = vmul.f32 %v3758, %v3870
      %v3895 = vmul.f32 %v3759, %v3870
      %v3896 = vmul.f32 %v3760, %v3870
      %v3897 = vmul.f32 %v3761, %v3870
      %v3898 = vmul.f32 %v3762, %v3870
      %v3899 = vmul.f32 %v3763, %v3870
      %v3900 = vmul.f32 %v3764, %v3870
      %v3901 = vmul.f32 %v3765, %v3870
      %v3902 = vmul.f32 %v3766, %v3870
      %v3903 = vmax.f32 %v3871, 0.0
      %v3904 = vmax.f32 %v3872, 0.0
      %v3905 = vmax.f32 %v3873, 0.0
      %v3906 = vmax.f32 %v3874, 0.0
      %v3907 = vmax.f32 %v3875, 0.0
      %v3908 = vmax.f32 %v3876, 0.0
      %v3909 = vmax.f32 %v3877, 0.0
      %v3910 = vmax.f32 %v3878, 0.0
      %v3911 = vmax.f32 %v3879, 0.0
      %v3912 = vmax.f32 %v3880, 0.0
      %v3913 = vmax.f32 %v3881, 0.0
      %v3914 = vmax.f32 %v3882, 0.0
      %v3915 = vmax.f32 %v3883, 0.0
      %v3916 = vmax.f32 %v3884, 0.0
      %v3917 = vmax.f32 %v3885, 0.0
      %v3918 = vmax.f32 %v3886, 0.0
      %v3919 = vmax.f32 %v3887, 0.0
      %v3920 = vmax.f32 %v3888, 0.0
      %v3921 = vmax.f32 %v3889, 0.0
      %v3922 = vmax.f32 %v3890, 0.0
      %v3923 = vmax.f32 %v3891, 0.0
      %v3924 = vmax.f32 %v3892, 0.0
      %v3925 = vmax.f32 %v3893, 0.0
      %v3926 = vmax.f32 %v3894, 0.0
      %v3927 = vmax.f32 %v3895, 0.0
      %v3928 = vmax.f32 %v3896, 0.0
      %v3929 = vmax.f32 %v3897, 0.0
      %v3930 = vmax.f32 %v3898, 0.0
      %v3931 = vmax.f32 %v3899, 0.0
      %v3932 = vmax.f32 %v3900, 0.0
      %v3933 = vmax.f32 %v3901, 0.0
      %v3934 = vmax.f32 %v3902, 0.0
      %s3935 = scalar_lea.vmem [#allocation2], 24
      %3936 = vst.msk [vmem:[%s3935 + $0x1] sm:$0xff] %vm171, %v3903
      %3937 = vst.msk [vmem:[%s3935 + $0x9] sm:$0xff] %vm171, %v3904
      %3938 = vst.msk [vmem:[%s3935 + $0x19] sm:$0xff] %vm171, %v3905
      %3939 = vst.msk [vmem:[%s3935 + $0x21] sm:$0xff] %vm171, %v3906
      %3940 = vst.msk [vmem:[%s3935 + $0x31] sm:$0xff] %vm171, %v3907
      %3941 = vst.msk [vmem:[%s3935 + $0x39] sm:$0xff] %vm171, %v3908
      %3942 = vst.msk [vmem:[%s3935 + $0x49] sm:$0xff] %vm171, %v3909
      %3943 = vst.msk [vmem:[%s3935 + $0x51] sm:$0xff] %vm171, %v3910
      %3944 = vst.msk [vmem:[%s3935 + $0x61] sm:$0xff] %vm171, %v3911
      %3945 = vst.msk [vmem:[%s3935 + $0x69] sm:$0xff] %vm171, %v3912
      %3946 = vst.msk [vmem:[%s3935 + $0x79] sm:$0xff] %vm171, %v3913
      %3947 = vst.msk [vmem:[%s3935 + $0x81] sm:$0xff] %vm171, %v3914
      %3948 = vst.msk [vmem:[%s3935 + $0x91] sm:$0xff] %vm171, %v3915
      %3949 = vst.msk [vmem:[%s3935 + $0x99] sm:$0xff] %vm171, %v3916
      %3950 = vst.msk [vmem:[%s3935 + $0xa9] sm:$0xff] %vm171, %v3917
      %3951 = vst.msk [vmem:[%s3935 + $0xb1] sm:$0xff] %vm171, %v3918
      %3952 = vst.msk [vmem:[%s3935 + $0xc1] sm:$0xff] %vm171, %v3919
      %3953 = vst.msk [vmem:[%s3935 + $0xc9] sm:$0xff] %vm171, %v3920
      %3954 = vst.msk [vmem:[%s3935 + $0xd9] sm:$0xff] %vm171, %v3921
      %3955 = vst.msk [vmem:[%s3935 + $0xe1] sm:$0xff] %vm171, %v3922
      %3956 = vst.msk [vmem:[%s3935 + $0xf1] sm:$0xff] %vm171, %v3923
      %3957 = vst.msk [vmem:[%s3935 + $0xf9] sm:$0xff] %vm171, %v3924
      %3958 = vst.msk [vmem:[%s3935 + $0x109] sm:$0xff] %vm171, %v3925
      %3959 = vst.msk [vmem:[%s3935 + $0x111] sm:$0xff] %vm171, %v3926
      %3960 = vst.msk [vmem:[%s3935 + $0x121] sm:$0xff] %vm171, %v3927
      %3961 = vst.msk [vmem:[%s3935 + $0x129] sm:$0xff] %vm171, %v3928
      %3962 = vst.msk [vmem:[%s3935 + $0x139] sm:$0xff] %vm171, %v3929
      %3963 = vst.msk [vmem:[%s3935 + $0x141] sm:$0xff] %vm171, %v3930
      %3964 = vst.msk [vmem:[%s3935 + $0x151] sm:$0xff] %vm171, %v3931
      %3965 = vst.msk [vmem:[%s3935 + $0x159] sm:$0xff] %vm171, %v3932
      %3966 = vst.msk [vmem:[%s3935 + $0x169] sm:$0xff] %vm171, %v3933
      %3967 = vst.msk [vmem:[%s3935 + $0x171] sm:$0xff] %vm171, %v3934
      %v3968 = vld [vmem:[#allocation2] sm:$0xff]
      %v3969 = vld [vmem:[#allocation2 + $0x8] sm:$0xff]
      %v3970 = vld [vmem:[#allocation2 + $0x18] sm:$0xff]
      %v3971 = vld [vmem:[#allocation2 + $0x20] sm:$0xff]
      %v3972 = vld [vmem:[#allocation2 + $0x30] sm:$0xff]
      %v3973 = vld [vmem:[#allocation2 + $0x38] sm:$0xff]
      %v3974 = vld [vmem:[#allocation2 + $0x48] sm:$0xff]
      %v3975 = vld [vmem:[#allocation2 + $0x50] sm:$0xff]
      %v3976 = vld [vmem:[#allocation2 + $0x60] sm:$0xff]
      %v3977 = vld [vmem:[#allocation2 + $0x68] sm:$0xff]
      %v3978 = vld [vmem:[#allocation2 + $0x78] sm:$0xff]
      %v3979 = vld [vmem:[#allocation2 + $0x80] sm:$0xff]
      %v3980 = vld [vmem:[#allocation2 + $0x90] sm:$0xff]
      %v3981 = vld [vmem:[#allocation2 + $0x98] sm:$0xff]
      %v3982 = vld [vmem:[#allocation2 + $0xa8] sm:$0xff]
      %v3983 = vld [vmem:[#allocation2 + $0xb0] sm:$0xff]
      %v3984 = vld [vmem:[#allocation2 + $0xc0] sm:$0xff]
      %v3985 = vld [vmem:[#allocation2 + $0xc8] sm:$0xff]
      %v3986 = vld [vmem:[#allocation2 + $0xd8] sm:$0xff]
      %v3987 = vld [vmem:[#allocation2 + $0xe0] sm:$0xff]
      %v3988 = vld [vmem:[#allocation2 + $0xf0] sm:$0xff]
      %v3989 = vld [vmem:[#allocation2 + $0xf8] sm:$0xff]
      %v3990 = vld [vmem:[#allocation2 + $0x108] sm:$0xff]
      %v3991 = vld [vmem:[#allocation2 + $0x110] sm:$0xff]
      %v3992 = vld [vmem:[#allocation2 + $0x120] sm:$0xff]
      %v3993 = vld [vmem:[#allocation2 + $0x128] sm:$0xff]
      %v3994 = vld [vmem:[#allocation2 + $0x138] sm:$0xff]
      %v3995 = vld [vmem:[#allocation2 + $0x140] sm:$0xff]
      %v3996 = vld [vmem:[#allocation2 + $0x150] sm:$0xff]
      %v3997 = vld [vmem:[#allocation2 + $0x158] sm:$0xff]
      %v3998 = vld [vmem:[#allocation2 + $0x168] sm:$0xff]
      %v3999 = vld [vmem:[#allocation2 + $0x170] sm:$0xff]
      %v4000 = vld [vmem:[%s2] sm:$0xf]
      %v4001 = vld [vmem:[#allocation2 + $0x1] sm:$0xff]
      %v4002 = vld [vmem:[#allocation2 + $0x9] sm:$0xff]
      %v4003 = vld [vmem:[#allocation2 + $0x19] sm:$0xff]
      %v4004 = vld [vmem:[#allocation2 + $0x21] sm:$0xff]
      %v4005 = vld [vmem:[#allocation2 + $0x31] sm:$0xff]
      %v4006 = vld [vmem:[#allocation2 + $0x39] sm:$0xff]
      %v4007 = vld [vmem:[#allocation2 + $0x49] sm:$0xff]
      %v4008 = vld [vmem:[#allocation2 + $0x51] sm:$0xff]
      %v4009 = vld [vmem:[#allocation2 + $0x61] sm:$0xff]
      %v4010 = vld [vmem:[#allocation2 + $0x69] sm:$0xff]
      %v4011 = vld [vmem:[#allocation2 + $0x79] sm:$0xff]
      %v4012 = vld [vmem:[#allocation2 + $0x81] sm:$0xff]
      %v4013 = vld [vmem:[#allocation2 + $0x91] sm:$0xff]
      %v4014 = vld [vmem:[#allocation2 + $0x99] sm:$0xff]
      %v4015 = vld [vmem:[#allocation2 + $0xa9] sm:$0xff]
      %v4016 = vld [vmem:[#allocation2 + $0xb1] sm:$0xff]
      %v4017 = vld [vmem:[#allocation2 + $0xc1] sm:$0xff]
      %v4018 = vld [vmem:[#allocation2 + $0xc9] sm:$0xff]
      %v4019 = vld [vmem:[#allocation2 + $0xd9] sm:$0xff]
      %v4020 = vld [vmem:[#allocation2 + $0xe1] sm:$0xff]
      %v4021 = vld [vmem:[#allocation2 + $0xf1] sm:$0xff]
      %v4022 = vld [vmem:[#allocation2 + $0xf9] sm:$0xff]
      %v4023 = vld [vmem:[#allocation2 + $0x109] sm:$0xff]
      %v4024 = vld [vmem:[#allocation2 + $0x111] sm:$0xff]
      %v4025 = vld [vmem:[#allocation2 + $0x121] sm:$0xff]
      %v4026 = vld [vmem:[#allocation2 + $0x129] sm:$0xff]
      %v4027 = vld [vmem:[#allocation2 + $0x139] sm:$0xff]
      %v4028 = vld [vmem:[#allocation2 + $0x141] sm:$0xff]
      %v4029 = vld [vmem:[#allocation2 + $0x151] sm:$0xff]
      %v4030 = vld [vmem:[#allocation2 + $0x159] sm:$0xff]
      %v4031 = vld [vmem:[#allocation2 + $0x169] sm:$0xff]
      %v4032 = vld [vmem:[#allocation2 + $0x171] sm:$0xff]
      %s4033 = scalar_lea.vmem %s2, 4
      %v4034 = vld [vmem:[%s4033] sm:$0xf]
      %v4036 = vsel %vm171, %v4001, 0
      %v4039 = vsel %vm171, %v4002, 0
      %v4042 = vsel %vm171, %v4003, 0
      %v4045 = vsel %vm171, %v4004, 0
      %v4048 = vsel %vm171, %v4005, 0
      %v4051 = vsel %vm171, %v4006, 0
      %v4054 = vsel %vm171, %v4007, 0
      %v4057 = vsel %vm171, %v4008, 0
      %v4060 = vsel %vm171, %v4009, 0
      %v4063 = vsel %vm171, %v4010, 0
      %v4066 = vsel %vm171, %v4011, 0
      %v4069 = vsel %vm171, %v4012, 0
      %v4072 = vsel %vm171, %v4013, 0
      %v4075 = vsel %vm171, %v4014, 0
      %v4078 = vsel %vm171, %v4015, 0
      %v4081 = vsel %vm171, %v4016, 0
      %v4084 = vsel %vm171, %v4017, 0
      %v4087 = vsel %vm171, %v4018, 0
      %v4090 = vsel %vm171, %v4019, 0
      %v4093 = vsel %vm171, %v4020, 0
      %v4096 = vsel %vm171, %v4021, 0
      %v4099 = vsel %vm171, %v4022, 0
      %v4102 = vsel %vm171, %v4023, 0
      %v4105 = vsel %vm171, %v4024, 0
      %v4108 = vsel %vm171, %v4025, 0
      %v4111 = vsel %vm171, %v4026, 0
      %v4114 = vsel %vm171, %v4027, 0
      %v4117 = vsel %vm171, %v4028, 0
      %v4120 = vsel %vm171, %v4029, 0
      %v4123 = vsel %vm171, %v4030, 0
      %v4126 = vsel %vm171, %v4031, 0
      %v4129 = vsel %vm171, %v4032, 0
      %v4132 = vsel %vm413, %v4034, 0
      %4134 = vmatprep.subr.mxu0 0.0
      %4135 = vmatpush1.msra.mxu0 0.0
      %4136 = vmatprep.subr.mxu0 0.0
      %4137 = vmatpush1.msra.mxu0 0.0
      %4138 = vmatprep.subr.mxu0 0.0
      %4139 = vmatpush1.msra.mxu0 0.0
      %4140 = vmatprep.subr.mxu0 0.0
      %4141 = vmatpush1.msra.mxu0 0.0
      %4142 = vmatprep.subr.mxu0 0.0
      %4143 = vmatpush1.msra.mxu0 0.0
      %4144 = vmatprep.subr.mxu0 0.0
      %4145 = vmatpush1.msra.mxu0 0.0
      %4146 = vmatprep.subr.mxu0 0.0
      %4147 = vmatpush1.msra.mxu0 0.0
      %4148 = vmatprep.subr.mxu0 0.0
      %4149 = vmatpush1.msra.mxu0 0.0
      %4150 = vmatprep.subr.mxu0 0.0
      %4151 = vmatpush1.msra.mxu0 0.0
      %4152 = vmatprep.subr.mxu0 0.0
      %4153 = vmatpush1.msra.mxu0 0.0
      %4154 = vmatprep.subr.mxu0 0.0
      %4155 = vmatpush1.msra.mxu0 0.0
      %4156 = vmatprep.subr.mxu0 0.0
      %4157 = vmatpush1.msra.mxu0 0.0
      %4158 = vmatprep.subr.mxu0 0.0
      %4159 = vmatpush1.msra.mxu0 0.0
      %4160 = vmatprep.subr.mxu0 0.0
      %4161 = vmatpush1.msra.mxu0 0.0
      %4162 = vmatprep.subr.mxu0 0.0
      %4163 = vmatpush1.msra.mxu0 0.0
      %4164 = vmatprep.subr.mxu0 0.0
      %4165 = vmatpush1.msra.mxu0 %v4132
      %4166 = vmatprep.subr.mxu0 0.0
      %4167 = vmatpush2.msra.mxu0 0.0
      %4168 = vmatprep.subr.mxu0 0.0
      %4169 = vmatpush2.msra.mxu0 0.0
      %4170 = vmatprep.subr.mxu0 0.0
      %4171 = vmatpush2.msra.mxu0 0.0
      %4172 = vmatprep.subr.mxu0 0.0
      %4173 = vmatpush2.msra.mxu0 0.0
      %4174 = vmatprep.subr.mxu0 0.0
      %4175 = vmatpush2.msra.mxu0 0.0
      %4176 = vmatprep.subr.mxu0 0.0
      %4177 = vmatpush2.msra.mxu0 0.0
      %4178 = vmatprep.subr.mxu0 0.0
      %4179 = vmatpush2.msra.mxu0 0.0
      %4180 = vmatprep.subr.mxu0 0.0
      %4181 = vmatpush2.msra.mxu0 0.0
      %4182 = vmatprep.subr.mxu0 0.0
      %4183 = vmatpush2.msra.mxu0 0.0
      %4184 = vmatprep.subr.mxu0 0.0
      %4185 = vmatpush2.msra.mxu0 0.0
      %4186 = vmatprep.subr.mxu0 0.0
      %4187 = vmatpush2.msra.mxu0 0.0
      %4188 = vmatprep.subr.mxu0 0.0
      %4189 = vmatpush2.msra.mxu0 0.0
      %4190 = vmatprep.subr.mxu0 0.0
      %4191 = vmatpush2.msra.mxu0 0.0
      %4192 = vmatprep.subr.mxu0 0.0
      %4193 = vmatpush2.msra.mxu0 0.0
      %4194 = vmatprep.subr.mxu0 0.0
      %4195 = vmatpush2.msra.mxu0 0.0
      %4196 = vmatprep.subr.mxu0 0.0
      %4197 = vmatpush2.msra.mxu0 0.0
      %4198 = vmatprep.mubr.f32.mxu0 0.0
      %4199 = vmatmul.mubr.f32.gmra.mxu0 %v4036
      %v4200 = vpop.f32.mrf.mxu0
      %v4201 = vadd.f32 0.0, %v4200
      %v4202 = vpop.f32.mrf.mxu0
      %4203 = vmatprep.mubr.f32.mxu0 0.0
      %4204 = vmatmul.mubr.f32.gmra.mxu0 %v4039
      %v4205 = vpop.f32.mrf.mxu0
      %v4206 = vadd.f32 0.0, %v4205
      %v4207 = vpop.f32.mrf.mxu0
      %4208 = vmatprep.mubr.f32.mxu0 0.0
      %4209 = vmatmul.mubr.f32.gmra.mxu0 %v4042
      %v4210 = vpop.f32.mrf.mxu0
      %v4211 = vadd.f32 0.0, %v4210
      %v4212 = vpop.f32.mrf.mxu0
      %4213 = vmatprep.mubr.f32.mxu0 0.0
      %4214 = vmatmul.mubr.f32.gmra.mxu0 %v4045
      %v4215 = vpop.f32.mrf.mxu0
      %v4216 = vadd.f32 0.0, %v4215
      %v4217 = vpop.f32.mrf.mxu0
      %4218 = vmatprep.mubr.f32.mxu0 0.0
      %4219 = vmatmul.mubr.f32.gmra.mxu0 %v4048
      %v4220 = vpop.f32.mrf.mxu0
      %v4221 = vadd.f32 0.0, %v4220
      %v4222 = vpop.f32.mrf.mxu0
      %4223 = vmatprep.mubr.f32.mxu0 0.0
      %4224 = vmatmul.mubr.f32.gmra.mxu0 %v4051
      %v4225 = vpop.f32.mrf.mxu0
      %v4226 = vadd.f32 0.0, %v4225
      %v4227 = vpop.f32.mrf.mxu0
      %4228 = vmatprep.mubr.f32.mxu0 0.0
      %4229 = vmatmul.mubr.f32.gmra.mxu0 %v4054
      %v4230 = vpop.f32.mrf.mxu0
      %v4231 = vadd.f32 0.0, %v4230
      %v4232 = vpop.f32.mrf.mxu0
      %4233 = vmatprep.mubr.f32.mxu0 0.0
      %4234 = vmatmul.mubr.f32.gmra.mxu0 %v4057
      %v4235 = vpop.f32.mrf.mxu0
      %v4236 = vadd.f32 0.0, %v4235
      %v4237 = vpop.f32.mrf.mxu0
      %4238 = vmatprep.mubr.f32.mxu0 0.0
      %4239 = vmatmul.mubr.f32.gmra.mxu0 %v4060
      %v4240 = vpop.f32.mrf.mxu0
      %v4241 = vadd.f32 0.0, %v4240
      %v4242 = vpop.f32.mrf.mxu0
      %4243 = vmatprep.mubr.f32.mxu0 0.0
      %4244 = vmatmul.mubr.f32.gmra.mxu0 %v4063
      %v4245 = vpop.f32.mrf.mxu0
      %v4246 = vadd.f32 0.0, %v4245
      %v4247 = vpop.f32.mrf.mxu0
      %4248 = vmatprep.mubr.f32.mxu0 0.0
      %4249 = vmatmul.mubr.f32.gmra.mxu0 %v4066
      %v4250 = vpop.f32.mrf.mxu0
      %v4251 = vadd.f32 0.0, %v4250
      %v4252 = vpop.f32.mrf.mxu0
      %4253 = vmatprep.mubr.f32.mxu0 0.0
      %4254 = vmatmul.mubr.f32.gmra.mxu0 %v4069
      %v4255 = vpop.f32.mrf.mxu0
      %v4256 = vadd.f32 0.0, %v4255
      %v4257 = vpop.f32.mrf.mxu0
      %4258 = vmatprep.mubr.f32.mxu0 0.0
      %4259 = vmatmul.mubr.f32.gmra.mxu0 %v4072
      %v4260 = vpop.f32.mrf.mxu0
      %v4261 = vadd.f32 0.0, %v4260
      %v4262 = vpop.f32.mrf.mxu0
      %4263 = vmatprep.mubr.f32.mxu0 0.0
      %4264 = vmatmul.mubr.f32.gmra.mxu0 %v4075
      %v4265 = vpop.f32.mrf.mxu0
      %v4266 = vadd.f32 0.0, %v4265
      %v4267 = vpop.f32.mrf.mxu0
      %4268 = vmatprep.mubr.f32.mxu0 0.0
      %4269 = vmatmul.mubr.f32.gmra.mxu0 %v4078
      %v4270 = vpop.f32.mrf.mxu0
      %v4271 = vadd.f32 0.0, %v4270
      %v4272 = vpop.f32.mrf.mxu0
      %4273 = vmatprep.mubr.f32.mxu0 0.0
      %4274 = vmatmul.mubr.f32.gmra.mxu0 %v4081
      %v4275 = vpop.f32.mrf.mxu0
      %v4276 = vadd.f32 0.0, %v4275
      %v4277 = vpop.f32.mrf.mxu0
      %4278 = vmatprep.mubr.f32.mxu0 0.0
      %4279 = vmatmul.mubr.f32.gmra.mxu0 %v4084
      %v4280 = vpop.f32.mrf.mxu0
      %v4281 = vadd.f32 0.0, %v4280
      %v4282 = vpop.f32.mrf.mxu0
      %4283 = vmatprep.mubr.f32.mxu0 0.0
      %4284 = vmatmul.mubr.f32.gmra.mxu0 %v4087
      %v4285 = vpop.f32.mrf.mxu0
      %v4286 = vadd.f32 0.0, %v4285
      %v4287 = vpop.f32.mrf.mxu0
      %4288 = vmatprep.mubr.f32.mxu0 0.0
      %4289 = vmatmul.mubr.f32.gmra.mxu0 %v4090
      %v4290 = vpop.f32.mrf.mxu0
      %v4291 = vadd.f32 0.0, %v4290
      %v4292 = vpop.f32.mrf.mxu0
      %4293 = vmatprep.mubr.f32.mxu0 0.0
      %4294 = vmatmul.mubr.f32.gmra.mxu0 %v4093
      %v4295 = vpop.f32.mrf.mxu0
      %v4296 = vadd.f32 0.0, %v4295
      %v4297 = vpop.f32.mrf.mxu0
      %4298 = vmatprep.mubr.f32.mxu0 0.0
      %4299 = vmatmul.mubr.f32.gmra.mxu0 %v4096
      %v4300 = vpop.f32.mrf.mxu0
      %v4301 = vadd.f32 0.0, %v4300
      %v4302 = vpop.f32.mrf.mxu0
      %4303 = vmatprep.mubr.f32.mxu0 0.0
      %4304 = vmatmul.mubr.f32.gmra.mxu0 %v4099
      %v4305 = vpop.f32.mrf.mxu0
      %v4306 = vadd.f32 0.0, %v4305
      %v4307 = vpop.f32.mrf.mxu0
      %4308 = vmatprep.mubr.f32.mxu0 0.0
      %4309 = vmatmul.mubr.f32.gmra.mxu0 %v4102
      %v4310 = vpop.f32.mrf.mxu0
      %v4311 = vadd.f32 0.0, %v4310
      %v4312 = vpop.f32.mrf.mxu0
      %4313 = vmatprep.mubr.f32.mxu0 0.0
      %4314 = vmatmul.mubr.f32.gmra.mxu0 %v4105
      %v4315 = vpop.f32.mrf.mxu0
      %v4316 = vadd.f32 0.0, %v4315
      %v4317 = vpop.f32.mrf.mxu0
      %4318 = vmatprep.mubr.f32.mxu0 0.0
      %4319 = vmatmul.mubr.f32.gmra.mxu0 %v4108
      %v4320 = vpop.f32.mrf.mxu0
      %v4321 = vadd.f32 0.0, %v4320
      %v4322 = vpop.f32.mrf.mxu0
      %4323 = vmatprep.mubr.f32.mxu0 0.0
      %4324 = vmatmul.mubr.f32.gmra.mxu0 %v4111
      %v4325 = vpop.f32.mrf.mxu0
      %v4326 = vadd.f32 0.0, %v4325
      %v4327 = vpop.f32.mrf.mxu0
      %4328 = vmatprep.mubr.f32.mxu0 0.0
      %4329 = vmatmul.mubr.f32.gmra.mxu0 %v4114
      %v4330 = vpop.f32.mrf.mxu0
      %v4331 = vadd.f32 0.0, %v4330
      %v4332 = vpop.f32.mrf.mxu0
      %4333 = vmatprep.mubr.f32.mxu0 0.0
      %4334 = vmatmul.mubr.f32.gmra.mxu0 %v4117
      %v4335 = vpop.f32.mrf.mxu0
      %v4336 = vadd.f32 0.0, %v4335
      %v4337 = vpop.f32.mrf.mxu0
      %4338 = vmatprep.mubr.f32.mxu0 0.0
      %4339 = vmatmul.mubr.f32.gmra.mxu0 %v4120
      %v4340 = vpop.f32.mrf.mxu0
      %v4341 = vadd.f32 0.0, %v4340
      %v4342 = vpop.f32.mrf.mxu0
      %4343 = vmatprep.mubr.f32.mxu0 0.0
      %4344 = vmatmul.mubr.f32.gmra.mxu0 %v4123
      %v4345 = vpop.f32.mrf.mxu0
      %v4346 = vadd.f32 0.0, %v4345
      %v4347 = vpop.f32.mrf.mxu0
      %4348 = vmatprep.mubr.f32.mxu0 0.0
      %4349 = vmatmul.mubr.f32.gmra.mxu0 %v4126
      %v4350 = vpop.f32.mrf.mxu0
      %v4351 = vadd.f32 0.0, %v4350
      %v4352 = vpop.f32.mrf.mxu0
      %4353 = vmatprep.mubr.f32.mxu0 0.0
      %4354 = vmatmul.mubr.f32.gmra.mxu0 %v4129
      %v4355 = vpop.f32.mrf.mxu0
      %v4356 = vadd.f32 0.0, %v4355
      %v4357 = vpop.f32.mrf.mxu0
      %4358 = vdwg.mxu0
      %v4360 = vsel %vm171, %v3968, 0
      %v4363 = vsel %vm171, %v3969, 0
      %v4366 = vsel %vm171, %v3970, 0
      %v4369 = vsel %vm171, %v3971, 0
      %v4372 = vsel %vm171, %v3972, 0
      %v4375 = vsel %vm171, %v3973, 0
      %v4378 = vsel %vm171, %v3974, 0
      %v4381 = vsel %vm171, %v3975, 0
      %v4384 = vsel %vm171, %v3976, 0
      %v4387 = vsel %vm171, %v3977, 0
      %v4390 = vsel %vm171, %v3978, 0
      %v4393 = vsel %vm171, %v3979, 0
      %v4396 = vsel %vm171, %v3980, 0
      %v4399 = vsel %vm171, %v3981, 0
      %v4402 = vsel %vm171, %v3982, 0
      %v4405 = vsel %vm171, %v3983, 0
      %v4408 = vsel %vm171, %v3984, 0
      %v4411 = vsel %vm171, %v3985, 0
      %v4414 = vsel %vm171, %v3986, 0
      %v4417 = vsel %vm171, %v3987, 0
      %v4420 = vsel %vm171, %v3988, 0
      %v4423 = vsel %vm171, %v3989, 0
      %v4426 = vsel %vm171, %v3990, 0
      %v4429 = vsel %vm171, %v3991, 0
      %v4432 = vsel %vm171, %v3992, 0
      %v4435 = vsel %vm171, %v3993, 0
      %v4438 = vsel %vm171, %v3994, 0
      %v4441 = vsel %vm171, %v3995, 0
      %v4444 = vsel %vm171, %v3996, 0
      %v4447 = vsel %vm171, %v3997, 0
      %v4450 = vsel %vm171, %v3998, 0
      %v4453 = vsel %vm171, %v3999, 0
      %v4456 = vsel %vm413, %v4000, 0
      %4458 = vmatprep.subr.mxu0 0.0
      %4459 = vmatpush1.msra.mxu0 0.0
      %4460 = vmatprep.subr.mxu0 0.0
      %4461 = vmatpush1.msra.mxu0 0.0
      %4462 = vmatprep.subr.mxu0 0.0
      %4463 = vmatpush1.msra.mxu0 0.0
      %4464 = vmatprep.subr.mxu0 0.0
      %4465 = vmatpush1.msra.mxu0 0.0
      %4466 = vmatprep.subr.mxu0 0.0
      %4467 = vmatpush1.msra.mxu0 0.0
      %4468 = vmatprep.subr.mxu0 0.0
      %4469 = vmatpush1.msra.mxu0 0.0
      %4470 = vmatprep.subr.mxu0 0.0
      %4471 = vmatpush1.msra.mxu0 0.0
      %4472 = vmatprep.subr.mxu0 0.0
      %4473 = vmatpush1.msra.mxu0 0.0
      %4474 = vmatprep.subr.mxu0 0.0
      %4475 = vmatpush1.msra.mxu0 0.0
      %4476 = vmatprep.subr.mxu0 0.0
      %4477 = vmatpush1.msra.mxu0 0.0
      %4478 = vmatprep.subr.mxu0 0.0
      %4479 = vmatpush1.msra.mxu0 0.0
      %4480 = vmatprep.subr.mxu0 0.0
      %4481 = vmatpush1.msra.mxu0 0.0
      %4482 = vmatprep.subr.mxu0 0.0
      %4483 = vmatpush1.msra.mxu0 0.0
      %4484 = vmatprep.subr.mxu0 0.0
      %4485 = vmatpush1.msra.mxu0 0.0
      %4486 = vmatprep.subr.mxu0 0.0
      %4487 = vmatpush1.msra.mxu0 0.0
      %4488 = vmatprep.subr.mxu0 0.0
      %4489 = vmatpush1.msra.mxu0 %v4456
      %4490 = vmatprep.subr.mxu0 0.0
      %4491 = vmatpush2.msra.mxu0 0.0
      %4492 = vmatprep.subr.mxu0 0.0
      %4493 = vmatpush2.msra.mxu0 0.0
      %4494 = vmatprep.subr.mxu0 0.0
      %4495 = vmatpush2.msra.mxu0 0.0
      %4496 = vmatprep.subr.mxu0 0.0
      %4497 = vmatpush2.msra.mxu0 0.0
      %4498 = vmatprep.subr.mxu0 0.0
      %4499 = vmatpush2.msra.mxu0 0.0
      %4500 = vmatprep.subr.mxu0 0.0
      %4501 = vmatpush2.msra.mxu0 0.0
      %4502 = vmatprep.subr.mxu0 0.0
      %4503 = vmatpush2.msra.mxu0 0.0
      %4504 = vmatprep.subr.mxu0 0.0
      %4505 = vmatpush2.msra.mxu0 0.0
      %4506 = vmatprep.subr.mxu0 0.0
      %4507 = vmatpush2.msra.mxu0 0.0
      %4508 = vmatprep.subr.mxu0 0.0
      %4509 = vmatpush2.msra.mxu0 0.0
      %4510 = vmatprep.subr.mxu0 0.0
      %4511 = vmatpush2.msra.mxu0 0.0
      %4512 = vmatprep.subr.mxu0 0.0
      %4513 = vmatpush2.msra.mxu0 0.0
      %4514 = vmatprep.subr.mxu0 0.0
      %4515 = vmatpush2.msra.mxu0 0.0
      %4516 = vmatprep.subr.mxu0 0.0
      %4517 = vmatpush2.msra.mxu0 0.0
      %4518 = vmatprep.subr.mxu0 0.0
      %4519 = vmatpush2.msra.mxu0 0.0
      %4520 = vmatprep.subr.mxu0 0.0
      %4521 = vmatpush2.msra.mxu0 0.0
      %4522 = vmatprep.mubr.f32.mxu0 0.0
      %4523 = vmatmul.mubr.f32.gmra.mxu0 %v4360
      %v4524 = vpop.f32.mrf.mxu0
      %v4525 = vadd.f32 %v4201, %v4524
      %v4526 = vpop.f32.mrf.mxu0
      %4527 = vmatprep.mubr.f32.mxu0 0.0
      %4528 = vmatmul.mubr.f32.gmra.mxu0 %v4363
      %v4529 = vpop.f32.mrf.mxu0
      %v4530 = vadd.f32 %v4206, %v4529
      %v4531 = vpop.f32.mrf.mxu0
      %4532 = vmatprep.mubr.f32.mxu0 0.0
      %4533 = vmatmul.mubr.f32.gmra.mxu0 %v4366
      %v4534 = vpop.f32.mrf.mxu0
      %v4535 = vadd.f32 %v4211, %v4534
      %v4536 = vpop.f32.mrf.mxu0
      %4537 = vmatprep.mubr.f32.mxu0 0.0
      %4538 = vmatmul.mubr.f32.gmra.mxu0 %v4369
      %v4539 = vpop.f32.mrf.mxu0
      %v4540 = vadd.f32 %v4216, %v4539
      %v4541 = vpop.f32.mrf.mxu0
      %4542 = vmatprep.mubr.f32.mxu0 0.0
      %4543 = vmatmul.mubr.f32.gmra.mxu0 %v4372
      %v4544 = vpop.f32.mrf.mxu0
      %v4545 = vadd.f32 %v4221, %v4544
      %v4546 = vpop.f32.mrf.mxu0
      %4547 = vmatprep.mubr.f32.mxu0 0.0
      %4548 = vmatmul.mubr.f32.gmra.mxu0 %v4375
      %v4549 = vpop.f32.mrf.mxu0
      %v4550 = vadd.f32 %v4226, %v4549
      %v4551 = vpop.f32.mrf.mxu0
      %4552 = vmatprep.mubr.f32.mxu0 0.0
      %4553 = vmatmul.mubr.f32.gmra.mxu0 %v4378
      %v4554 = vpop.f32.mrf.mxu0
      %v4555 = vadd.f32 %v4231, %v4554
      %v4556 = vpop.f32.mrf.mxu0
      %4557 = vmatprep.mubr.f32.mxu0 0.0
      %4558 = vmatmul.mubr.f32.gmra.mxu0 %v4381
      %v4559 = vpop.f32.mrf.mxu0
      %v4560 = vadd.f32 %v4236, %v4559
      %v4561 = vpop.f32.mrf.mxu0
      %4562 = vmatprep.mubr.f32.mxu0 0.0
      %4563 = vmatmul.mubr.f32.gmra.mxu0 %v4384
      %v4564 = vpop.f32.mrf.mxu0
      %v4565 = vadd.f32 %v4241, %v4564
      %v4566 = vpop.f32.mrf.mxu0
      %4567 = vmatprep.mubr.f32.mxu0 0.0
      %4568 = vmatmul.mubr.f32.gmra.mxu0 %v4387
      %v4569 = vpop.f32.mrf.mxu0
      %v4570 = vadd.f32 %v4246, %v4569
      %v4571 = vpop.f32.mrf.mxu0
      %4572 = vmatprep.mubr.f32.mxu0 0.0
      %4573 = vmatmul.mubr.f32.gmra.mxu0 %v4390
      %v4574 = vpop.f32.mrf.mxu0
      %v4575 = vadd.f32 %v4251, %v4574
      %v4576 = vpop.f32.mrf.mxu0
      %4577 = vmatprep.mubr.f32.mxu0 0.0
      %4578 = vmatmul.mubr.f32.gmra.mxu0 %v4393
      %v4579 = vpop.f32.mrf.mxu0
      %v4580 = vadd.f32 %v4256, %v4579
      %v4581 = vpop.f32.mrf.mxu0
      %4582 = vmatprep.mubr.f32.mxu0 0.0
      %4583 = vmatmul.mubr.f32.gmra.mxu0 %v4396
      %v4584 = vpop.f32.mrf.mxu0
      %v4585 = vadd.f32 %v4261, %v4584
      %v4586 = vpop.f32.mrf.mxu0
      %4587 = vmatprep.mubr.f32.mxu0 0.0
      %4588 = vmatmul.mubr.f32.gmra.mxu0 %v4399
      %v4589 = vpop.f32.mrf.mxu0
      %v4590 = vadd.f32 %v4266, %v4589
      %v4591 = vpop.f32.mrf.mxu0
      %4592 = vmatprep.mubr.f32.mxu0 0.0
      %4593 = vmatmul.mubr.f32.gmra.mxu0 %v4402
      %v4594 = vpop.f32.mrf.mxu0
      %v4595 = vadd.f32 %v4271, %v4594
      %v4596 = vpop.f32.mrf.mxu0
      %4597 = vmatprep.mubr.f32.mxu0 0.0
      %4598 = vmatmul.mubr.f32.gmra.mxu0 %v4405
      %v4599 = vpop.f32.mrf.mxu0
      %v4600 = vadd.f32 %v4276, %v4599
      %v4601 = vpop.f32.mrf.mxu0
      %4602 = vmatprep.mubr.f32.mxu0 0.0
      %4603 = vmatmul.mubr.f32.gmra.mxu0 %v4408
      %v4604 = vpop.f32.mrf.mxu0
      %v4605 = vadd.f32 %v4281, %v4604
      %v4606 = vpop.f32.mrf.mxu0
      %4607 = vmatprep.mubr.f32.mxu0 0.0
      %4608 = vmatmul.mubr.f32.gmra.mxu0 %v4411
      %v4609 = vpop.f32.mrf.mxu0
      %v4610 = vadd.f32 %v4286, %v4609
      %v4611 = vpop.f32.mrf.mxu0
      %4612 = vmatprep.mubr.f32.mxu0 0.0
      %4613 = vmatmul.mubr.f32.gmra.mxu0 %v4414
      %v4614 = vpop.f32.mrf.mxu0
      %v4615 = vadd.f32 %v4291, %v4614
      %v4616 = vpop.f32.mrf.mxu0
      %4617 = vmatprep.mubr.f32.mxu0 0.0
      %4618 = vmatmul.mubr.f32.gmra.mxu0 %v4417
      %v4619 = vpop.f32.mrf.mxu0
      %v4620 = vadd.f32 %v4296, %v4619
      %v4621 = vpop.f32.mrf.mxu0
      %4622 = vmatprep.mubr.f32.mxu0 0.0
      %4623 = vmatmul.mubr.f32.gmra.mxu0 %v4420
      %v4624 = vpop.f32.mrf.mxu0
      %v4625 = vadd.f32 %v4301, %v4624
      %v4626 = vpop.f32.mrf.mxu0
      %4627 = vmatprep.mubr.f32.mxu0 0.0
      %4628 = vmatmul.mubr.f32.gmra.mxu0 %v4423
      %v4629 = vpop.f32.mrf.mxu0
      %v4630 = vadd.f32 %v4306, %v4629
      %v4631 = vpop.f32.mrf.mxu0
      %4632 = vmatprep.mubr.f32.mxu0 0.0
      %4633 = vmatmul.mubr.f32.gmra.mxu0 %v4426
      %v4634 = vpop.f32.mrf.mxu0
      %v4635 = vadd.f32 %v4311, %v4634
      %v4636 = vpop.f32.mrf.mxu0
      %4637 = vmatprep.mubr.f32.mxu0 0.0
      %4638 = vmatmul.mubr.f32.gmra.mxu0 %v4429
      %v4639 = vpop.f32.mrf.mxu0
      %v4640 = vadd.f32 %v4316, %v4639
      %v4641 = vpop.f32.mrf.mxu0
      %4642 = vmatprep.mubr.f32.mxu0 0.0
      %4643 = vmatmul.mubr.f32.gmra.mxu0 %v4432
      %v4644 = vpop.f32.mrf.mxu0
      %v4645 = vadd.f32 %v4321, %v4644
      %v4646 = vpop.f32.mrf.mxu0
      %4647 = vmatprep.mubr.f32.mxu0 0.0
      %4648 = vmatmul.mubr.f32.gmra.mxu0 %v4435
      %v4649 = vpop.f32.mrf.mxu0
      %v4650 = vadd.f32 %v4326, %v4649
      %v4651 = vpop.f32.mrf.mxu0
      %4652 = vmatprep.mubr.f32.mxu0 0.0
      %4653 = vmatmul.mubr.f32.gmra.mxu0 %v4438
      %v4654 = vpop.f32.mrf.mxu0
      %v4655 = vadd.f32 %v4331, %v4654
      %v4656 = vpop.f32.mrf.mxu0
      %4657 = vmatprep.mubr.f32.mxu0 0.0
      %4658 = vmatmul.mubr.f32.gmra.mxu0 %v4441
      %v4659 = vpop.f32.mrf.mxu0
      %v4660 = vadd.f32 %v4336, %v4659
      %v4661 = vpop.f32.mrf.mxu0
      %4662 = vmatprep.mubr.f32.mxu0 0.0
      %4663 = vmatmul.mubr.f32.gmra.mxu0 %v4444
      %v4664 = vpop.f32.mrf.mxu0
      %v4665 = vadd.f32 %v4341, %v4664
      %v4666 = vpop.f32.mrf.mxu0
      %4667 = vmatprep.mubr.f32.mxu0 0.0
      %4668 = vmatmul.mubr.f32.gmra.mxu0 %v4447
      %v4669 = vpop.f32.mrf.mxu0
      %v4670 = vadd.f32 %v4346, %v4669
      %v4671 = vpop.f32.mrf.mxu0
      %4672 = vmatprep.mubr.f32.mxu0 0.0
      %4673 = vmatmul.mubr.f32.gmra.mxu0 %v4450
      %v4674 = vpop.f32.mrf.mxu0
      %v4675 = vadd.f32 %v4351, %v4674
      %v4676 = vpop.f32.mrf.mxu0
      %4677 = vmatprep.mubr.f32.mxu0 0.0
      %4678 = vmatmul.mubr.f32.gmra.mxu0 %v4453
      %v4679 = vpop.f32.mrf.mxu0
      %v4680 = vadd.f32 %v4356, %v4679
      %v4681 = vpop.f32.mrf.mxu0
      %4682 = vdwg.mxu0
      %v4683 = vld [vmem:[#allocation2 + $0x2] sm:$0xff]
      %v4684 = vld [vmem:[#allocation2 + $0xa] sm:$0xff]
      %v4685 = vld [vmem:[#allocation2 + $0x1a] sm:$0xff]
      %v4686 = vld [vmem:[#allocation2 + $0x22] sm:$0xff]
      %v4687 = vld [vmem:[#allocation2 + $0x32] sm:$0xff]
      %v4688 = vld [vmem:[#allocation2 + $0x3a] sm:$0xff]
      %v4689 = vld [vmem:[#allocation2 + $0x4a] sm:$0xff]
      %v4690 = vld [vmem:[#allocation2 + $0x52] sm:$0xff]
      %v4691 = vld [vmem:[#allocation2 + $0x62] sm:$0xff]
      %v4692 = vld [vmem:[#allocation2 + $0x6a] sm:$0xff]
      %v4693 = vld [vmem:[#allocation2 + $0x7a] sm:$0xff]
      %v4694 = vld [vmem:[#allocation2 + $0x82] sm:$0xff]
      %v4695 = vld [vmem:[#allocation2 + $0x92] sm:$0xff]
      %v4696 = vld [vmem:[#allocation2 + $0x9a] sm:$0xff]
      %v4697 = vld [vmem:[#allocation2 + $0xaa] sm:$0xff]
      %v4698 = vld [vmem:[#allocation2 + $0xb2] sm:$0xff]
      %v4699 = vld [vmem:[#allocation2 + $0xc2] sm:$0xff]
      %v4700 = vld [vmem:[#allocation2 + $0xca] sm:$0xff]
      %v4701 = vld [vmem:[#allocation2 + $0xda] sm:$0xff]
      %v4702 = vld [vmem:[#allocation2 + $0xe2] sm:$0xff]
      %v4703 = vld [vmem:[#allocation2 + $0xf2] sm:$0xff]
      %v4704 = vld [vmem:[#allocation2 + $0xfa] sm:$0xff]
      %v4705 = vld [vmem:[#allocation2 + $0x10a] sm:$0xff]
      %v4706 = vld [vmem:[#allocation2 + $0x112] sm:$0xff]
      %v4707 = vld [vmem:[#allocation2 + $0x122] sm:$0xff]
      %v4708 = vld [vmem:[#allocation2 + $0x12a] sm:$0xff]
      %v4709 = vld [vmem:[#allocation2 + $0x13a] sm:$0xff]
      %v4710 = vld [vmem:[#allocation2 + $0x142] sm:$0xff]
      %v4711 = vld [vmem:[#allocation2 + $0x152] sm:$0xff]
      %v4712 = vld [vmem:[#allocation2 + $0x15a] sm:$0xff]
      %v4713 = vld [vmem:[#allocation2 + $0x16a] sm:$0xff]
      %v4714 = vld [vmem:[#allocation2 + $0x172] sm:$0xff]
      %s4715 = scalar_lea.vmem %s2, 8
      %v4716 = vld [vmem:[%s4715] sm:$0xf]
      %v4718 = vsel %vm171, %v4683, 0
      %v4721 = vsel %vm171, %v4684, 0
      %v4724 = vsel %vm171, %v4685, 0
      %v4727 = vsel %vm171, %v4686, 0
      %v4730 = vsel %vm171, %v4687, 0
      %v4733 = vsel %vm171, %v4688, 0
      %v4736 = vsel %vm171, %v4689, 0
      %v4739 = vsel %vm171, %v4690, 0
      %v4742 = vsel %vm171, %v4691, 0
      %v4745 = vsel %vm171, %v4692, 0
      %v4748 = vsel %vm171, %v4693, 0
      %v4751 = vsel %vm171, %v4694, 0
      %v4754 = vsel %vm171, %v4695, 0
      %v4757 = vsel %vm171, %v4696, 0
      %v4760 = vsel %vm171, %v4697, 0
      %v4763 = vsel %vm171, %v4698, 0
      %v4766 = vsel %vm171, %v4699, 0
      %v4769 = vsel %vm171, %v4700, 0
      %v4772 = vsel %vm171, %v4701, 0
      %v4775 = vsel %vm171, %v4702, 0
      %v4778 = vsel %vm171, %v4703, 0
      %v4781 = vsel %vm171, %v4704, 0
      %v4784 = vsel %vm171, %v4705, 0
      %v4787 = vsel %vm171, %v4706, 0
      %v4790 = vsel %vm171, %v4707, 0
      %v4793 = vsel %vm171, %v4708, 0
      %v4796 = vsel %vm171, %v4709, 0
      %v4799 = vsel %vm171, %v4710, 0
      %v4802 = vsel %vm171, %v4711, 0
      %v4805 = vsel %vm171, %v4712, 0
      %v4808 = vsel %vm171, %v4713, 0
      %v4811 = vsel %vm171, %v4714, 0
      %v4814 = vsel %vm413, %v4716, 0
      %4816 = vmatprep.subr.mxu0 0.0
      %4817 = vmatpush1.msra.mxu0 0.0
      %4818 = vmatprep.subr.mxu0 0.0
      %4819 = vmatpush1.msra.mxu0 0.0
      %4820 = vmatprep.subr.mxu0 0.0
      %4821 = vmatpush1.msra.mxu0 0.0
      %4822 = vmatprep.subr.mxu0 0.0
      %4823 = vmatpush1.msra.mxu0 0.0
      %4824 = vmatprep.subr.mxu0 0.0
      %4825 = vmatpush1.msra.mxu0 0.0
      %4826 = vmatprep.subr.mxu0 0.0
      %4827 = vmatpush1.msra.mxu0 0.0
      %4828 = vmatprep.subr.mxu0 0.0
      %4829 = vmatpush1.msra.mxu0 0.0
      %4830 = vmatprep.subr.mxu0 0.0
      %4831 = vmatpush1.msra.mxu0 0.0
      %4832 = vmatprep.subr.mxu0 0.0
      %4833 = vmatpush1.msra.mxu0 0.0
      %4834 = vmatprep.subr.mxu0 0.0
      %4835 = vmatpush1.msra.mxu0 0.0
      %4836 = vmatprep.subr.mxu0 0.0
      %4837 = vmatpush1.msra.mxu0 0.0
      %4838 = vmatprep.subr.mxu0 0.0
      %4839 = vmatpush1.msra.mxu0 0.0
      %4840 = vmatprep.subr.mxu0 0.0
      %4841 = vmatpush1.msra.mxu0 0.0
      %4842 = vmatprep.subr.mxu0 0.0
      %4843 = vmatpush1.msra.mxu0 0.0
      %4844 = vmatprep.subr.mxu0 0.0
      %4845 = vmatpush1.msra.mxu0 0.0
      %4846 = vmatprep.subr.mxu0 0.0
      %4847 = vmatpush1.msra.mxu0 %v4814
      %4848 = vmatprep.subr.mxu0 0.0
      %4849 = vmatpush2.msra.mxu0 0.0
      %4850 = vmatprep.subr.mxu0 0.0
      %4851 = vmatpush2.msra.mxu0 0.0
      %4852 = vmatprep.subr.mxu0 0.0
      %4853 = vmatpush2.msra.mxu0 0.0
      %4854 = vmatprep.subr.mxu0 0.0
      %4855 = vmatpush2.msra.mxu0 0.0
      %4856 = vmatprep.subr.mxu0 0.0
      %4857 = vmatpush2.msra.mxu0 0.0
      %4858 = vmatprep.subr.mxu0 0.0
      %4859 = vmatpush2.msra.mxu0 0.0
      %4860 = vmatprep.subr.mxu0 0.0
      %4861 = vmatpush2.msra.mxu0 0.0
      %4862 = vmatprep.subr.mxu0 0.0
      %4863 = vmatpush2.msra.mxu0 0.0
      %4864 = vmatprep.subr.mxu0 0.0
      %4865 = vmatpush2.msra.mxu0 0.0
      %4866 = vmatprep.subr.mxu0 0.0
      %4867 = vmatpush2.msra.mxu0 0.0
      %4868 = vmatprep.subr.mxu0 0.0
      %4869 = vmatpush2.msra.mxu0 0.0
      %4870 = vmatprep.subr.mxu0 0.0
      %4871 = vmatpush2.msra.mxu0 0.0
      %4872 = vmatprep.subr.mxu0 0.0
      %4873 = vmatpush2.msra.mxu0 0.0
      %4874 = vmatprep.subr.mxu0 0.0
      %4875 = vmatpush2.msra.mxu0 0.0
      %4876 = vmatprep.subr.mxu0 0.0
      %4877 = vmatpush2.msra.mxu0 0.0
      %4878 = vmatprep.subr.mxu0 0.0
      %4879 = vmatpush2.msra.mxu0 0.0
      %4880 = vmatprep.mubr.f32.mxu0 0.0
      %4881 = vmatmul.mubr.f32.gmra.mxu0 %v4718
      %v4882 = vpop.f32.mrf.mxu0
      %v4883 = vadd.f32 0.0, %v4882
      %v4884 = vpop.f32.mrf.mxu0
      %4885 = vmatprep.mubr.f32.mxu0 0.0
      %4886 = vmatmul.mubr.f32.gmra.mxu0 %v4721
      %v4887 = vpop.f32.mrf.mxu0
      %v4888 = vadd.f32 0.0, %v4887
      %v4889 = vpop.f32.mrf.mxu0
      %4890 = vmatprep.mubr.f32.mxu0 0.0
      %4891 = vmatmul.mubr.f32.gmra.mxu0 %v4724
      %v4892 = vpop.f32.mrf.mxu0
      %v4893 = vadd.f32 0.0, %v4892
      %v4894 = vpop.f32.mrf.mxu0
      %4895 = vmatprep.mubr.f32.mxu0 0.0
      %4896 = vmatmul.mubr.f32.gmra.mxu0 %v4727
      %v4897 = vpop.f32.mrf.mxu0
      %v4898 = vadd.f32 0.0, %v4897
      %v4899 = vpop.f32.mrf.mxu0
      %4900 = vmatprep.mubr.f32.mxu0 0.0
      %4901 = vmatmul.mubr.f32.gmra.mxu0 %v4730
      %v4902 = vpop.f32.mrf.mxu0
      %v4903 = vadd.f32 0.0, %v4902
      %v4904 = vpop.f32.mrf.mxu0
      %4905 = vmatprep.mubr.f32.mxu0 0.0
      %4906 = vmatmul.mubr.f32.gmra.mxu0 %v4733
      %v4907 = vpop.f32.mrf.mxu0
      %v4908 = vadd.f32 0.0, %v4907
      %v4909 = vpop.f32.mrf.mxu0
      %4910 = vmatprep.mubr.f32.mxu0 0.0
      %4911 = vmatmul.mubr.f32.gmra.mxu0 %v4736
      %v4912 = vpop.f32.mrf.mxu0
      %v4913 = vadd.f32 0.0, %v4912
      %v4914 = vpop.f32.mrf.mxu0
      %4915 = vmatprep.mubr.f32.mxu0 0.0
      %4916 = vmatmul.mubr.f32.gmra.mxu0 %v4739
      %v4917 = vpop.f32.mrf.mxu0
      %v4918 = vadd.f32 0.0, %v4917
      %v4919 = vpop.f32.mrf.mxu0
      %4920 = vmatprep.mubr.f32.mxu0 0.0
      %4921 = vmatmul.mubr.f32.gmra.mxu0 %v4742
      %v4922 = vpop.f32.mrf.mxu0
      %v4923 = vadd.f32 0.0, %v4922
      %v4924 = vpop.f32.mrf.mxu0
      %4925 = vmatprep.mubr.f32.mxu0 0.0
      %4926 = vmatmul.mubr.f32.gmra.mxu0 %v4745
      %v4927 = vpop.f32.mrf.mxu0
      %v4928 = vadd.f32 0.0, %v4927
      %v4929 = vpop.f32.mrf.mxu0
      %4930 = vmatprep.mubr.f32.mxu0 0.0
      %4931 = vmatmul.mubr.f32.gmra.mxu0 %v4748
      %v4932 = vpop.f32.mrf.mxu0
      %v4933 = vadd.f32 0.0, %v4932
      %v4934 = vpop.f32.mrf.mxu0
      %4935 = vmatprep.mubr.f32.mxu0 0.0
      %4936 = vmatmul.mubr.f32.gmra.mxu0 %v4751
      %v4937 = vpop.f32.mrf.mxu0
      %v4938 = vadd.f32 0.0, %v4937
      %v4939 = vpop.f32.mrf.mxu0
      %4940 = vmatprep.mubr.f32.mxu0 0.0
      %4941 = vmatmul.mubr.f32.gmra.mxu0 %v4754
      %v4942 = vpop.f32.mrf.mxu0
      %v4943 = vadd.f32 0.0, %v4942
      %v4944 = vpop.f32.mrf.mxu0
      %4945 = vmatprep.mubr.f32.mxu0 0.0
      %4946 = vmatmul.mubr.f32.gmra.mxu0 %v4757
      %v4947 = vpop.f32.mrf.mxu0
      %v4948 = vadd.f32 0.0, %v4947
      %v4949 = vpop.f32.mrf.mxu0
      %4950 = vmatprep.mubr.f32.mxu0 0.0
      %4951 = vmatmul.mubr.f32.gmra.mxu0 %v4760
      %v4952 = vpop.f32.mrf.mxu0
      %v4953 = vadd.f32 0.0, %v4952
      %v4954 = vpop.f32.mrf.mxu0
      %4955 = vmatprep.mubr.f32.mxu0 0.0
      %4956 = vmatmul.mubr.f32.gmra.mxu0 %v4763
      %v4957 = vpop.f32.mrf.mxu0
      %v4958 = vadd.f32 0.0, %v4957
      %v4959 = vpop.f32.mrf.mxu0
      %4960 = vmatprep.mubr.f32.mxu0 0.0
      %4961 = vmatmul.mubr.f32.gmra.mxu0 %v4766
      %v4962 = vpop.f32.mrf.mxu0
      %v4963 = vadd.f32 0.0, %v4962
      %v4964 = vpop.f32.mrf.mxu0
      %4965 = vmatprep.mubr.f32.mxu0 0.0
      %4966 = vmatmul.mubr.f32.gmra.mxu0 %v4769
      %v4967 = vpop.f32.mrf.mxu0
      %v4968 = vadd.f32 0.0, %v4967
      %v4969 = vpop.f32.mrf.mxu0
      %4970 = vmatprep.mubr.f32.mxu0 0.0
      %4971 = vmatmul.mubr.f32.gmra.mxu0 %v4772
      %v4972 = vpop.f32.mrf.mxu0
      %v4973 = vadd.f32 0.0, %v4972
      %v4974 = vpop.f32.mrf.mxu0
      %4975 = vmatprep.mubr.f32.mxu0 0.0
      %4976 = vmatmul.mubr.f32.gmra.mxu0 %v4775
      %v4977 = vpop.f32.mrf.mxu0
      %v4978 = vadd.f32 0.0, %v4977
      %v4979 = vpop.f32.mrf.mxu0
      %4980 = vmatprep.mubr.f32.mxu0 0.0
      %4981 = vmatmul.mubr.f32.gmra.mxu0 %v4778
      %v4982 = vpop.f32.mrf.mxu0
      %v4983 = vadd.f32 0.0, %v4982
      %v4984 = vpop.f32.mrf.mxu0
      %4985 = vmatprep.mubr.f32.mxu0 0.0
      %4986 = vmatmul.mubr.f32.gmra.mxu0 %v4781
      %v4987 = vpop.f32.mrf.mxu0
      %v4988 = vadd.f32 0.0, %v4987
      %v4989 = vpop.f32.mrf.mxu0
      %4990 = vmatprep.mubr.f32.mxu0 0.0
      %4991 = vmatmul.mubr.f32.gmra.mxu0 %v4784
      %v4992 = vpop.f32.mrf.mxu0
      %v4993 = vadd.f32 0.0, %v4992
      %v4994 = vpop.f32.mrf.mxu0
      %4995 = vmatprep.mubr.f32.mxu0 0.0
      %4996 = vmatmul.mubr.f32.gmra.mxu0 %v4787
      %v4997 = vpop.f32.mrf.mxu0
      %v4998 = vadd.f32 0.0, %v4997
      %v4999 = vpop.f32.mrf.mxu0
      %5000 = vmatprep.mubr.f32.mxu0 0.0
      %5001 = vmatmul.mubr.f32.gmra.mxu0 %v4790
      %v5002 = vpop.f32.mrf.mxu0
      %v5003 = vadd.f32 0.0, %v5002
      %v5004 = vpop.f32.mrf.mxu0
      %5005 = vmatprep.mubr.f32.mxu0 0.0
      %5006 = vmatmul.mubr.f32.gmra.mxu0 %v4793
      %v5007 = vpop.f32.mrf.mxu0
      %v5008 = vadd.f32 0.0, %v5007
      %v5009 = vpop.f32.mrf.mxu0
      %5010 = vmatprep.mubr.f32.mxu0 0.0
      %5011 = vmatmul.mubr.f32.gmra.mxu0 %v4796
      %v5012 = vpop.f32.mrf.mxu0
      %v5013 = vadd.f32 0.0, %v5012
      %v5014 = vpop.f32.mrf.mxu0
      %5015 = vmatprep.mubr.f32.mxu0 0.0
      %5016 = vmatmul.mubr.f32.gmra.mxu0 %v4799
      %v5017 = vpop.f32.mrf.mxu0
      %v5018 = vadd.f32 0.0, %v5017
      %v5019 = vpop.f32.mrf.mxu0
      %5020 = vmatprep.mubr.f32.mxu0 0.0
      %5021 = vmatmul.mubr.f32.gmra.mxu0 %v4802
      %v5022 = vpop.f32.mrf.mxu0
      %v5023 = vadd.f32 0.0, %v5022
      %v5024 = vpop.f32.mrf.mxu0
      %5025 = vmatprep.mubr.f32.mxu0 0.0
      %5026 = vmatmul.mubr.f32.gmra.mxu0 %v4805
      %v5027 = vpop.f32.mrf.mxu0
      %v5028 = vadd.f32 0.0, %v5027
      %v5029 = vpop.f32.mrf.mxu0
      %5030 = vmatprep.mubr.f32.mxu0 0.0
      %5031 = vmatmul.mubr.f32.gmra.mxu0 %v4808
      %v5032 = vpop.f32.mrf.mxu0
      %v5033 = vadd.f32 0.0, %v5032
      %v5034 = vpop.f32.mrf.mxu0
      %5035 = vmatprep.mubr.f32.mxu0 0.0
      %5036 = vmatmul.mubr.f32.gmra.mxu0 %v4811
      %v5037 = vpop.f32.mrf.mxu0
      %v5038 = vadd.f32 0.0, %v5037
      %v5039 = vpop.f32.mrf.mxu0
      %5040 = vdwg.mxu0
      %v5041 = vadd.f32 %v4525, %v4883
      %v5042 = vadd.f32 %v4530, %v4888
      %v5043 = vadd.f32 %v4535, %v4893
      %v5044 = vadd.f32 %v4540, %v4898
      %v5045 = vadd.f32 %v4545, %v4903
      %v5046 = vadd.f32 %v4550, %v4908
      %v5047 = vadd.f32 %v4555, %v4913
      %v5048 = vadd.f32 %v4560, %v4918
      %v5049 = vadd.f32 %v4565, %v4923
      %v5050 = vadd.f32 %v4570, %v4928
      %v5051 = vadd.f32 %v4575, %v4933
      %v5052 = vadd.f32 %v4580, %v4938
      %v5053 = vadd.f32 %v4585, %v4943
      %v5054 = vadd.f32 %v4590, %v4948
      %v5055 = vadd.f32 %v4595, %v4953
      %v5056 = vadd.f32 %v4600, %v4958
      %v5057 = vadd.f32 %v4605, %v4963
      %v5058 = vadd.f32 %v4610, %v4968
      %v5059 = vadd.f32 %v4615, %v4973
      %v5060 = vadd.f32 %v4620, %v4978
      %v5061 = vadd.f32 %v4625, %v4983
      %v5062 = vadd.f32 %v4630, %v4988
      %v5063 = vadd.f32 %v4635, %v4993
      %v5064 = vadd.f32 %v4640, %v4998
      %v5065 = vadd.f32 %v4645, %v5003
      %v5066 = vadd.f32 %v4650, %v5008
      %v5067 = vadd.f32 %v4655, %v5013
      %v5068 = vadd.f32 %v4660, %v5018
      %v5069 = vadd.f32 %v4665, %v5023
      %v5070 = vadd.f32 %v4670, %v5028
      %v5071 = vadd.f32 %v4675, %v5033
      %v5072 = vadd.f32 %v4680, %v5038
      %v5073 = vld [vmem:[%s3935] sm:$0xff]
      %v5074 = vld [vmem:[%s3935 + $0x8] sm:$0xff]
      %v5075 = vld [vmem:[%s3935 + $0x18] sm:$0xff]
      %v5076 = vld [vmem:[%s3935 + $0x20] sm:$0xff]
      %v5077 = vld [vmem:[%s3935 + $0x30] sm:$0xff]
      %v5078 = vld [vmem:[%s3935 + $0x38] sm:$0xff]
      %v5079 = vld [vmem:[%s3935 + $0x48] sm:$0xff]
      %v5080 = vld [vmem:[%s3935 + $0x50] sm:$0xff]
      %v5081 = vld [vmem:[%s3935 + $0x60] sm:$0xff]
      %v5082 = vld [vmem:[%s3935 + $0x68] sm:$0xff]
      %v5083 = vld [vmem:[%s3935 + $0x78] sm:$0xff]
      %v5084 = vld [vmem:[%s3935 + $0x80] sm:$0xff]
      %v5085 = vld [vmem:[%s3935 + $0x90] sm:$0xff]
      %v5086 = vld [vmem:[%s3935 + $0x98] sm:$0xff]
      %v5087 = vld [vmem:[%s3935 + $0xa8] sm:$0xff]
      %v5088 = vld [vmem:[%s3935 + $0xb0] sm:$0xff]
      %v5089 = vld [vmem:[%s3935 + $0xc0] sm:$0xff]
      %v5090 = vld [vmem:[%s3935 + $0xc8] sm:$0xff]
      %v5091 = vld [vmem:[%s3935 + $0xd8] sm:$0xff]
      %v5092 = vld [vmem:[%s3935 + $0xe0] sm:$0xff]
      %v5093 = vld [vmem:[%s3935 + $0xf0] sm:$0xff]
      %v5094 = vld [vmem:[%s3935 + $0xf8] sm:$0xff]
      %v5095 = vld [vmem:[%s3935 + $0x108] sm:$0xff]
      %v5096 = vld [vmem:[%s3935 + $0x110] sm:$0xff]
      %v5097 = vld [vmem:[%s3935 + $0x120] sm:$0xff]
      %v5098 = vld [vmem:[%s3935 + $0x128] sm:$0xff]
      %v5099 = vld [vmem:[%s3935 + $0x138] sm:$0xff]
      %v5100 = vld [vmem:[%s3935 + $0x140] sm:$0xff]
      %v5101 = vld [vmem:[%s3935 + $0x150] sm:$0xff]
      %v5102 = vld [vmem:[%s3935 + $0x158] sm:$0xff]
      %v5103 = vld [vmem:[%s3935 + $0x168] sm:$0xff]
      %v5104 = vld [vmem:[%s3935 + $0x170] sm:$0xff]
      %s5105 = scalar_lea.vmem %s2, 12
      %v5106 = vld [vmem:[%s5105] sm:$0xf]
      %v5108 = vsel %vm171, %v5073, 0
      %v5111 = vsel %vm171, %v5074, 0
      %v5114 = vsel %vm171, %v5075, 0
      %v5117 = vsel %vm171, %v5076, 0
      %v5120 = vsel %vm171, %v5077, 0
      %v5123 = vsel %vm171, %v5078, 0
      %v5126 = vsel %vm171, %v5079, 0
      %v5129 = vsel %vm171, %v5080, 0
      %v5132 = vsel %vm171, %v5081, 0
      %v5135 = vsel %vm171, %v5082, 0
      %v5138 = vsel %vm171, %v5083, 0
      %v5141 = vsel %vm171, %v5084, 0
      %v5144 = vsel %vm171, %v5085, 0
      %v5147 = vsel %vm171, %v5086, 0
      %v5150 = vsel %vm171, %v5087, 0
      %v5153 = vsel %vm171, %v5088, 0
      %v5156 = vsel %vm171, %v5089, 0
      %v5159 = vsel %vm171, %v5090, 0
      %v5162 = vsel %vm171, %v5091, 0
      %v5165 = vsel %vm171, %v5092, 0
      %v5168 = vsel %vm171, %v5093, 0
      %v5171 = vsel %vm171, %v5094, 0
      %v5174 = vsel %vm171, %v5095, 0
      %v5177 = vsel %vm171, %v5096, 0
      %v5180 = vsel %vm171, %v5097, 0
      %v5183 = vsel %vm171, %v5098, 0
      %v5186 = vsel %vm171, %v5099, 0
      %v5189 = vsel %vm171, %v5100, 0
      %v5192 = vsel %vm171, %v5101, 0
      %v5195 = vsel %vm171, %v5102, 0
      %v5198 = vsel %vm171, %v5103, 0
      %v5201 = vsel %vm171, %v5104, 0
      %v5204 = vsel %vm413, %v5106, 0
      %5206 = vmatprep.subr.mxu0 0.0
      %5207 = vmatpush1.msra.mxu0 0.0
      %5208 = vmatprep.subr.mxu0 0.0
      %5209 = vmatpush1.msra.mxu0 0.0
      %5210 = vmatprep.subr.mxu0 0.0
      %5211 = vmatpush1.msra.mxu0 0.0
      %5212 = vmatprep.subr.mxu0 0.0
      %5213 = vmatpush1.msra.mxu0 0.0
      %5214 = vmatprep.subr.mxu0 0.0
      %5215 = vmatpush1.msra.mxu0 0.0
      %5216 = vmatprep.subr.mxu0 0.0
      %5217 = vmatpush1.msra.mxu0 0.0
      %5218 = vmatprep.subr.mxu0 0.0
      %5219 = vmatpush1.msra.mxu0 0.0
      %5220 = vmatprep.subr.mxu0 0.0
      %5221 = vmatpush1.msra.mxu0 0.0
      %5222 = vmatprep.subr.mxu0 0.0
      %5223 = vmatpush1.msra.mxu0 0.0
      %5224 = vmatprep.subr.mxu0 0.0
      %5225 = vmatpush1.msra.mxu0 0.0
      %5226 = vmatprep.subr.mxu0 0.0
      %5227 = vmatpush1.msra.mxu0 0.0
      %5228 = vmatprep.subr.mxu0 0.0
      %5229 = vmatpush1.msra.mxu0 0.0
      %5230 = vmatprep.subr.mxu0 0.0
      %5231 = vmatpush1.msra.mxu0 0.0
      %5232 = vmatprep.subr.mxu0 0.0
      %5233 = vmatpush1.msra.mxu0 0.0
      %5234 = vmatprep.subr.mxu0 0.0
      %5235 = vmatpush1.msra.mxu0 0.0
      %5236 = vmatprep.subr.mxu0 0.0
      %5237 = vmatpush1.msra.mxu0 %v5204
      %5238 = vmatprep.subr.mxu0 0.0
      %5239 = vmatpush2.msra.mxu0 0.0
      %5240 = vmatprep.subr.mxu0 0.0
      %5241 = vmatpush2.msra.mxu0 0.0
      %5242 = vmatprep.subr.mxu0 0.0
      %5243 = vmatpush2.msra.mxu0 0.0
      %5244 = vmatprep.subr.mxu0 0.0
      %5245 = vmatpush2.msra.mxu0 0.0
      %5246 = vmatprep.subr.mxu0 0.0
      %5247 = vmatpush2.msra.mxu0 0.0
      %5248 = vmatprep.subr.mxu0 0.0
      %5249 = vmatpush2.msra.mxu0 0.0
      %5250 = vmatprep.subr.mxu0 0.0
      %5251 = vmatpush2.msra.mxu0 0.0
      %5252 = vmatprep.subr.mxu0 0.0
      %5253 = vmatpush2.msra.mxu0 0.0
      %5254 = vmatprep.subr.mxu0 0.0
      %5255 = vmatpush2.msra.mxu0 0.0
      %5256 = vmatprep.subr.mxu0 0.0
      %5257 = vmatpush2.msra.mxu0 0.0
      %5258 = vmatprep.subr.mxu0 0.0
      %5259 = vmatpush2.msra.mxu0 0.0
      %5260 = vmatprep.subr.mxu0 0.0
      %5261 = vmatpush2.msra.mxu0 0.0
      %5262 = vmatprep.subr.mxu0 0.0
      %5263 = vmatpush2.msra.mxu0 0.0
      %5264 = vmatprep.subr.mxu0 0.0
      %5265 = vmatpush2.msra.mxu0 0.0
      %5266 = vmatprep.subr.mxu0 0.0
      %5267 = vmatpush2.msra.mxu0 0.0
      %5268 = vmatprep.subr.mxu0 0.0
      %5269 = vmatpush2.msra.mxu0 0.0
      %5270 = vmatprep.mubr.f32.mxu0 0.0
      %5271 = vmatmul.mubr.f32.gmra.mxu0 %v5108
      %v5272 = vpop.f32.mrf.mxu0
      %v5273 = vadd.f32 0.0, %v5272
      %v5274 = vpop.f32.mrf.mxu0
      %5275 = vmatprep.mubr.f32.mxu0 0.0
      %5276 = vmatmul.mubr.f32.gmra.mxu0 %v5111
      %v5277 = vpop.f32.mrf.mxu0
      %v5278 = vadd.f32 0.0, %v5277
      %v5279 = vpop.f32.mrf.mxu0
      %5280 = vmatprep.mubr.f32.mxu0 0.0
      %5281 = vmatmul.mubr.f32.gmra.mxu0 %v5114
      %v5282 = vpop.f32.mrf.mxu0
      %v5283 = vadd.f32 0.0, %v5282
      %v5284 = vpop.f32.mrf.mxu0
      %5285 = vmatprep.mubr.f32.mxu0 0.0
      %5286 = vmatmul.mubr.f32.gmra.mxu0 %v5117
      %v5287 = vpop.f32.mrf.mxu0
      %v5288 = vadd.f32 0.0, %v5287
      %v5289 = vpop.f32.mrf.mxu0
      %5290 = vmatprep.mubr.f32.mxu0 0.0
      %5291 = vmatmul.mubr.f32.gmra.mxu0 %v5120
      %v5292 = vpop.f32.mrf.mxu0
      %v5293 = vadd.f32 0.0, %v5292
      %v5294 = vpop.f32.mrf.mxu0
      %5295 = vmatprep.mubr.f32.mxu0 0.0
      %5296 = vmatmul.mubr.f32.gmra.mxu0 %v5123
      %v5297 = vpop.f32.mrf.mxu0
      %v5298 = vadd.f32 0.0, %v5297
      %v5299 = vpop.f32.mrf.mxu0
      %5300 = vmatprep.mubr.f32.mxu0 0.0
      %5301 = vmatmul.mubr.f32.gmra.mxu0 %v5126
      %v5302 = vpop.f32.mrf.mxu0
      %v5303 = vadd.f32 0.0, %v5302
      %v5304 = vpop.f32.mrf.mxu0
      %5305 = vmatprep.mubr.f32.mxu0 0.0
      %5306 = vmatmul.mubr.f32.gmra.mxu0 %v5129
      %v5307 = vpop.f32.mrf.mxu0
      %v5308 = vadd.f32 0.0, %v5307
      %v5309 = vpop.f32.mrf.mxu0
      %5310 = vmatprep.mubr.f32.mxu0 0.0
      %5311 = vmatmul.mubr.f32.gmra.mxu0 %v5132
      %v5312 = vpop.f32.mrf.mxu0
      %v5313 = vadd.f32 0.0, %v5312
      %v5314 = vpop.f32.mrf.mxu0
      %5315 = vmatprep.mubr.f32.mxu0 0.0
      %5316 = vmatmul.mubr.f32.gmra.mxu0 %v5135
      %v5317 = vpop.f32.mrf.mxu0
      %v5318 = vadd.f32 0.0, %v5317
      %v5319 = vpop.f32.mrf.mxu0
      %5320 = vmatprep.mubr.f32.mxu0 0.0
      %5321 = vmatmul.mubr.f32.gmra.mxu0 %v5138
      %v5322 = vpop.f32.mrf.mxu0
      %v5323 = vadd.f32 0.0, %v5322
      %v5324 = vpop.f32.mrf.mxu0
      %5325 = vmatprep.mubr.f32.mxu0 0.0
      %5326 = vmatmul.mubr.f32.gmra.mxu0 %v5141
      %v5327 = vpop.f32.mrf.mxu0
      %v5328 = vadd.f32 0.0, %v5327
      %v5329 = vpop.f32.mrf.mxu0
      %5330 = vmatprep.mubr.f32.mxu0 0.0
      %5331 = vmatmul.mubr.f32.gmra.mxu0 %v5144
      %v5332 = vpop.f32.mrf.mxu0
      %v5333 = vadd.f32 0.0, %v5332
      %v5334 = vpop.f32.mrf.mxu0
      %5335 = vmatprep.mubr.f32.mxu0 0.0
      %5336 = vmatmul.mubr.f32.gmra.mxu0 %v5147
      %v5337 = vpop.f32.mrf.mxu0
      %v5338 = vadd.f32 0.0, %v5337
      %v5339 = vpop.f32.mrf.mxu0
      %5340 = vmatprep.mubr.f32.mxu0 0.0
      %5341 = vmatmul.mubr.f32.gmra.mxu0 %v5150
      %v5342 = vpop.f32.mrf.mxu0
      %v5343 = vadd.f32 0.0, %v5342
      %v5344 = vpop.f32.mrf.mxu0
      %5345 = vmatprep.mubr.f32.mxu0 0.0
      %5346 = vmatmul.mubr.f32.gmra.mxu0 %v5153
      %v5347 = vpop.f32.mrf.mxu0
      %v5348 = vadd.f32 0.0, %v5347
      %v5349 = vpop.f32.mrf.mxu0
      %5350 = vmatprep.mubr.f32.mxu0 0.0
      %5351 = vmatmul.mubr.f32.gmra.mxu0 %v5156
      %v5352 = vpop.f32.mrf.mxu0
      %v5353 = vadd.f32 0.0, %v5352
      %v5354 = vpop.f32.mrf.mxu0
      %5355 = vmatprep.mubr.f32.mxu0 0.0
      %5356 = vmatmul.mubr.f32.gmra.mxu0 %v5159
      %v5357 = vpop.f32.mrf.mxu0
      %v5358 = vadd.f32 0.0, %v5357
      %v5359 = vpop.f32.mrf.mxu0
      %5360 = vmatprep.mubr.f32.mxu0 0.0
      %5361 = vmatmul.mubr.f32.gmra.mxu0 %v5162
      %v5362 = vpop.f32.mrf.mxu0
      %v5363 = vadd.f32 0.0, %v5362
      %v5364 = vpop.f32.mrf.mxu0
      %5365 = vmatprep.mubr.f32.mxu0 0.0
      %5366 = vmatmul.mubr.f32.gmra.mxu0 %v5165
      %v5367 = vpop.f32.mrf.mxu0
      %v5368 = vadd.f32 0.0, %v5367
      %v5369 = vpop.f32.mrf.mxu0
      %5370 = vmatprep.mubr.f32.mxu0 0.0
      %5371 = vmatmul.mubr.f32.gmra.mxu0 %v5168
      %v5372 = vpop.f32.mrf.mxu0
      %v5373 = vadd.f32 0.0, %v5372
      %v5374 = vpop.f32.mrf.mxu0
      %5375 = vmatprep.mubr.f32.mxu0 0.0
      %5376 = vmatmul.mubr.f32.gmra.mxu0 %v5171
      %v5377 = vpop.f32.mrf.mxu0
      %v5378 = vadd.f32 0.0, %v5377
      %v5379 = vpop.f32.mrf.mxu0
      %5380 = vmatprep.mubr.f32.mxu0 0.0
      %5381 = vmatmul.mubr.f32.gmra.mxu0 %v5174
      %v5382 = vpop.f32.mrf.mxu0
      %v5383 = vadd.f32 0.0, %v5382
      %v5384 = vpop.f32.mrf.mxu0
      %5385 = vmatprep.mubr.f32.mxu0 0.0
      %5386 = vmatmul.mubr.f32.gmra.mxu0 %v5177
      %v5387 = vpop.f32.mrf.mxu0
      %v5388 = vadd.f32 0.0, %v5387
      %v5389 = vpop.f32.mrf.mxu0
      %5390 = vmatprep.mubr.f32.mxu0 0.0
      %5391 = vmatmul.mubr.f32.gmra.mxu0 %v5180
      %v5392 = vpop.f32.mrf.mxu0
      %v5393 = vadd.f32 0.0, %v5392
      %v5394 = vpop.f32.mrf.mxu0
      %5395 = vmatprep.mubr.f32.mxu0 0.0
      %5396 = vmatmul.mubr.f32.gmra.mxu0 %v5183
      %v5397 = vpop.f32.mrf.mxu0
      %v5398 = vadd.f32 0.0, %v5397
      %v5399 = vpop.f32.mrf.mxu0
      %5400 = vmatprep.mubr.f32.mxu0 0.0
      %5401 = vmatmul.mubr.f32.gmra.mxu0 %v5186
      %v5402 = vpop.f32.mrf.mxu0
      %v5403 = vadd.f32 0.0, %v5402
      %v5404 = vpop.f32.mrf.mxu0
      %5405 = vmatprep.mubr.f32.mxu0 0.0
      %5406 = vmatmul.mubr.f32.gmra.mxu0 %v5189
      %v5407 = vpop.f32.mrf.mxu0
      %v5408 = vadd.f32 0.0, %v5407
      %v5409 = vpop.f32.mrf.mxu0
      %5410 = vmatprep.mubr.f32.mxu0 0.0
      %5411 = vmatmul.mubr.f32.gmra.mxu0 %v5192
      %v5412 = vpop.f32.mrf.mxu0
      %v5413 = vadd.f32 0.0, %v5412
      %v5414 = vpop.f32.mrf.mxu0
      %5415 = vmatprep.mubr.f32.mxu0 0.0
      %5416 = vmatmul.mubr.f32.gmra.mxu0 %v5195
      %v5417 = vpop.f32.mrf.mxu0
      %v5418 = vadd.f32 0.0, %v5417
      %v5419 = vpop.f32.mrf.mxu0
      %5420 = vmatprep.mubr.f32.mxu0 0.0
      %5421 = vmatmul.mubr.f32.gmra.mxu0 %v5198
      %v5422 = vpop.f32.mrf.mxu0
      %v5423 = vadd.f32 0.0, %v5422
      %v5424 = vpop.f32.mrf.mxu0
      %5425 = vmatprep.mubr.f32.mxu0 0.0
      %5426 = vmatmul.mubr.f32.gmra.mxu0 %v5201
      %v5427 = vpop.f32.mrf.mxu0
      %v5428 = vadd.f32 0.0, %v5427
      %v5429 = vpop.f32.mrf.mxu0
      %5430 = vdwg.mxu0
      %v5431 = vadd.f32 %v5041, %v5273
      %v5432 = vadd.f32 %v5042, %v5278
      %v5433 = vadd.f32 %v5043, %v5283
      %v5434 = vadd.f32 %v5044, %v5288
      %v5435 = vadd.f32 %v5045, %v5293
      %v5436 = vadd.f32 %v5046, %v5298
      %v5437 = vadd.f32 %v5047, %v5303
      %v5438 = vadd.f32 %v5048, %v5308
      %v5439 = vadd.f32 %v5049, %v5313
      %v5440 = vadd.f32 %v5050, %v5318
      %v5441 = vadd.f32 %v5051, %v5323
      %v5442 = vadd.f32 %v5052, %v5328
      %v5443 = vadd.f32 %v5053, %v5333
      %v5444 = vadd.f32 %v5054, %v5338
      %v5445 = vadd.f32 %v5055, %v5343
      %v5446 = vadd.f32 %v5056, %v5348
      %v5447 = vadd.f32 %v5057, %v5353
      %v5448 = vadd.f32 %v5058, %v5358
      %v5449 = vadd.f32 %v5059, %v5363
      %v5450 = vadd.f32 %v5060, %v5368
      %v5451 = vadd.f32 %v5061, %v5373
      %v5452 = vadd.f32 %v5062, %v5378
      %v5453 = vadd.f32 %v5063, %v5383
      %v5454 = vadd.f32 %v5064, %v5388
      %v5455 = vadd.f32 %v5065, %v5393
      %v5456 = vadd.f32 %v5066, %v5398
      %v5457 = vadd.f32 %v5067, %v5403
      %v5458 = vadd.f32 %v5068, %v5408
      %v5459 = vadd.f32 %v5069, %v5413
      %v5460 = vadd.f32 %v5070, %v5418
      %v5461 = vadd.f32 %v5071, %v5423
      %v5462 = vadd.f32 %v5072, %v5428
      %v5463 = vld [vmem:[%s3935 + $0x1] sm:$0xff]
      %v5464 = vld [vmem:[%s3935 + $0x9] sm:$0xff]
      %v5465 = vld [vmem:[%s3935 + $0x19] sm:$0xff]
      %v5466 = vld [vmem:[%s3935 + $0x21] sm:$0xff]
      %v5467 = vld [vmem:[%s3935 + $0x31] sm:$0xff]
      %v5468 = vld [vmem:[%s3935 + $0x39] sm:$0xff]
      %v5469 = vld [vmem:[%s3935 + $0x49] sm:$0xff]
      %v5470 = vld [vmem:[%s3935 + $0x51] sm:$0xff]
      %v5471 = vld [vmem:[%s3935 + $0x61] sm:$0xff]
      %v5472 = vld [vmem:[%s3935 + $0x69] sm:$0xff]
      %v5473 = vld [vmem:[%s3935 + $0x79] sm:$0xff]
      %v5474 = vld [vmem:[%s3935 + $0x81] sm:$0xff]
      %v5475 = vld [vmem:[%s3935 + $0x91] sm:$0xff]
      %v5476 = vld [vmem:[%s3935 + $0x99] sm:$0xff]
      %v5477 = vld [vmem:[%s3935 + $0xa9] sm:$0xff]
      %v5478 = vld [vmem:[%s3935 + $0xb1] sm:$0xff]
      %v5479 = vld [vmem:[%s3935 + $0xc1] sm:$0xff]
      %v5480 = vld [vmem:[%s3935 + $0xc9] sm:$0xff]
      %v5481 = vld [vmem:[%s3935 + $0xd9] sm:$0xff]
      %v5482 = vld [vmem:[%s3935 + $0xe1] sm:$0xff]
      %v5483 = vld [vmem:[%s3935 + $0xf1] sm:$0xff]
      %v5484 = vld [vmem:[%s3935 + $0xf9] sm:$0xff]
      %v5485 = vld [vmem:[%s3935 + $0x109] sm:$0xff]
      %v5486 = vld [vmem:[%s3935 + $0x111] sm:$0xff]
      %v5487 = vld [vmem:[%s3935 + $0x121] sm:$0xff]
      %v5488 = vld [vmem:[%s3935 + $0x129] sm:$0xff]
      %v5489 = vld [vmem:[%s3935 + $0x139] sm:$0xff]
      %v5490 = vld [vmem:[%s3935 + $0x141] sm:$0xff]
      %v5491 = vld [vmem:[%s3935 + $0x151] sm:$0xff]
      %v5492 = vld [vmem:[%s3935 + $0x159] sm:$0xff]
      %v5493 = vld [vmem:[%s3935 + $0x169] sm:$0xff]
      %v5494 = vld [vmem:[%s3935 + $0x171] sm:$0xff]
      %s5495 = scalar_lea.vmem %s2, 16
      %v5496 = vld [vmem:[%s5495] sm:$0xf]
      %v5498 = vsel %vm171, %v5463, 0
      %v5501 = vsel %vm171, %v5464, 0
      %v5504 = vsel %vm171, %v5465, 0
      %v5507 = vsel %vm171, %v5466, 0
      %v5510 = vsel %vm171, %v5467, 0
      %v5513 = vsel %vm171, %v5468, 0
      %v5516 = vsel %vm171, %v5469, 0
      %v5519 = vsel %vm171, %v5470, 0
      %v5522 = vsel %vm171, %v5471, 0
      %v5525 = vsel %vm171, %v5472, 0
      %v5528 = vsel %vm171, %v5473, 0
      %v5531 = vsel %vm171, %v5474, 0
      %v5534 = vsel %vm171, %v5475, 0
      %v5537 = vsel %vm171, %v5476, 0
      %v5540 = vsel %vm171, %v5477, 0
      %v5543 = vsel %vm171, %v5478, 0
      %v5546 = vsel %vm171, %v5479, 0
      %v5549 = vsel %vm171, %v5480, 0
      %v5552 = vsel %vm171, %v5481, 0
      %v5555 = vsel %vm171, %v5482, 0
      %v5558 = vsel %vm171, %v5483, 0
      %v5561 = vsel %vm171, %v5484, 0
      %v5564 = vsel %vm171, %v5485, 0
      %v5567 = vsel %vm171, %v5486, 0
      %v5570 = vsel %vm171, %v5487, 0
      %v5573 = vsel %vm171, %v5488, 0
      %v5576 = vsel %vm171, %v5489, 0
      %v5579 = vsel %vm171, %v5490, 0
      %v5582 = vsel %vm171, %v5491, 0
      %v5585 = vsel %vm171, %v5492, 0
      %v5588 = vsel %vm171, %v5493, 0
      %v5591 = vsel %vm171, %v5494, 0
      %v5594 = vsel %vm413, %v5496, 0
      %5596 = vmatprep.subr.mxu0 0.0
      %5597 = vmatpush1.msra.mxu0 0.0
      %5598 = vmatprep.subr.mxu0 0.0
      %5599 = vmatpush1.msra.mxu0 0.0
      %5600 = vmatprep.subr.mxu0 0.0
      %5601 = vmatpush1.msra.mxu0 0.0
      %5602 = vmatprep.subr.mxu0 0.0
      %5603 = vmatpush1.msra.mxu0 0.0
      %5604 = vmatprep.subr.mxu0 0.0
      %5605 = vmatpush1.msra.mxu0 0.0
      %5606 = vmatprep.subr.mxu0 0.0
      %5607 = vmatpush1.msra.mxu0 0.0
      %5608 = vmatprep.subr.mxu0 0.0
      %5609 = vmatpush1.msra.mxu0 0.0
      %5610 = vmatprep.subr.mxu0 0.0
      %5611 = vmatpush1.msra.mxu0 0.0
      %5612 = vmatprep.subr.mxu0 0.0
      %5613 = vmatpush1.msra.mxu0 0.0
      %5614 = vmatprep.subr.mxu0 0.0
      %5615 = vmatpush1.msra.mxu0 0.0
      %5616 = vmatprep.subr.mxu0 0.0
      %5617 = vmatpush1.msra.mxu0 0.0
      %5618 = vmatprep.subr.mxu0 0.0
      %5619 = vmatpush1.msra.mxu0 0.0
      %5620 = vmatprep.subr.mxu0 0.0
      %5621 = vmatpush1.msra.mxu0 0.0
      %5622 = vmatprep.subr.mxu0 0.0
      %5623 = vmatpush1.msra.mxu0 0.0
      %5624 = vmatprep.subr.mxu0 0.0
      %5625 = vmatpush1.msra.mxu0 0.0
      %5626 = vmatprep.subr.mxu0 0.0
      %5627 = vmatpush1.msra.mxu0 %v5594
      %5628 = vmatprep.subr.mxu0 0.0
      %5629 = vmatpush2.msra.mxu0 0.0
      %5630 = vmatprep.subr.mxu0 0.0
      %5631 = vmatpush2.msra.mxu0 0.0
      %5632 = vmatprep.subr.mxu0 0.0
      %5633 = vmatpush2.msra.mxu0 0.0
      %5634 = vmatprep.subr.mxu0 0.0
      %5635 = vmatpush2.msra.mxu0 0.0
      %5636 = vmatprep.subr.mxu0 0.0
      %5637 = vmatpush2.msra.mxu0 0.0
      %5638 = vmatprep.subr.mxu0 0.0
      %5639 = vmatpush2.msra.mxu0 0.0
      %5640 = vmatprep.subr.mxu0 0.0
      %5641 = vmatpush2.msra.mxu0 0.0
      %5642 = vmatprep.subr.mxu0 0.0
      %5643 = vmatpush2.msra.mxu0 0.0
      %5644 = vmatprep.subr.mxu0 0.0
      %5645 = vmatpush2.msra.mxu0 0.0
      %5646 = vmatprep.subr.mxu0 0.0
      %5647 = vmatpush2.msra.mxu0 0.0
      %5648 = vmatprep.subr.mxu0 0.0
      %5649 = vmatpush2.msra.mxu0 0.0
      %5650 = vmatprep.subr.mxu0 0.0
      %5651 = vmatpush2.msra.mxu0 0.0
      %5652 = vmatprep.subr.mxu0 0.0
      %5653 = vmatpush2.msra.mxu0 0.0
      %5654 = vmatprep.subr.mxu0 0.0
      %5655 = vmatpush2.msra.mxu0 0.0
      %5656 = vmatprep.subr.mxu0 0.0
      %5657 = vmatpush2.msra.mxu0 0.0
      %5658 = vmatprep.subr.mxu0 0.0
      %5659 = vmatpush2.msra.mxu0 0.0
      %5660 = vmatprep.mubr.f32.mxu0 0.0
      %5661 = vmatmul.mubr.f32.gmra.mxu0 %v5498
      %v5662 = vpop.f32.mrf.mxu0
      %v5663 = vadd.f32 0.0, %v5662
      %v5664 = vpop.f32.mrf.mxu0
      %5665 = vmatprep.mubr.f32.mxu0 0.0
      %5666 = vmatmul.mubr.f32.gmra.mxu0 %v5501
      %v5667 = vpop.f32.mrf.mxu0
      %v5668 = vadd.f32 0.0, %v5667
      %v5669 = vpop.f32.mrf.mxu0
      %5670 = vmatprep.mubr.f32.mxu0 0.0
      %5671 = vmatmul.mubr.f32.gmra.mxu0 %v5504
      %v5672 = vpop.f32.mrf.mxu0
      %v5673 = vadd.f32 0.0, %v5672
      %v5674 = vpop.f32.mrf.mxu0
      %5675 = vmatprep.mubr.f32.mxu0 0.0
      %5676 = vmatmul.mubr.f32.gmra.mxu0 %v5507
      %v5677 = vpop.f32.mrf.mxu0
      %v5678 = vadd.f32 0.0, %v5677
      %v5679 = vpop.f32.mrf.mxu0
      %5680 = vmatprep.mubr.f32.mxu0 0.0
      %5681 = vmatmul.mubr.f32.gmra.mxu0 %v5510
      %v5682 = vpop.f32.mrf.mxu0
      %v5683 = vadd.f32 0.0, %v5682
      %v5684 = vpop.f32.mrf.mxu0
      %5685 = vmatprep.mubr.f32.mxu0 0.0
      %5686 = vmatmul.mubr.f32.gmra.mxu0 %v5513
      %v5687 = vpop.f32.mrf.mxu0
      %v5688 = vadd.f32 0.0, %v5687
      %v5689 = vpop.f32.mrf.mxu0
      %5690 = vmatprep.mubr.f32.mxu0 0.0
      %5691 = vmatmul.mubr.f32.gmra.mxu0 %v5516
      %v5692 = vpop.f32.mrf.mxu0
      %v5693 = vadd.f32 0.0, %v5692
      %v5694 = vpop.f32.mrf.mxu0
      %5695 = vmatprep.mubr.f32.mxu0 0.0
      %5696 = vmatmul.mubr.f32.gmra.mxu0 %v5519
      %v5697 = vpop.f32.mrf.mxu0
      %v5698 = vadd.f32 0.0, %v5697
      %v5699 = vpop.f32.mrf.mxu0
      %5700 = vmatprep.mubr.f32.mxu0 0.0
      %5701 = vmatmul.mubr.f32.gmra.mxu0 %v5522
      %v5702 = vpop.f32.mrf.mxu0
      %v5703 = vadd.f32 0.0, %v5702
      %v5704 = vpop.f32.mrf.mxu0
      %5705 = vmatprep.mubr.f32.mxu0 0.0
      %5706 = vmatmul.mubr.f32.gmra.mxu0 %v5525
      %v5707 = vpop.f32.mrf.mxu0
      %v5708 = vadd.f32 0.0, %v5707
      %v5709 = vpop.f32.mrf.mxu0
      %5710 = vmatprep.mubr.f32.mxu0 0.0
      %5711 = vmatmul.mubr.f32.gmra.mxu0 %v5528
      %v5712 = vpop.f32.mrf.mxu0
      %v5713 = vadd.f32 0.0, %v5712
      %v5714 = vpop.f32.mrf.mxu0
      %5715 = vmatprep.mubr.f32.mxu0 0.0
      %5716 = vmatmul.mubr.f32.gmra.mxu0 %v5531
      %v5717 = vpop.f32.mrf.mxu0
      %v5718 = vadd.f32 0.0, %v5717
      %v5719 = vpop.f32.mrf.mxu0
      %5720 = vmatprep.mubr.f32.mxu0 0.0
      %5721 = vmatmul.mubr.f32.gmra.mxu0 %v5534
      %v5722 = vpop.f32.mrf.mxu0
      %v5723 = vadd.f32 0.0, %v5722
      %v5724 = vpop.f32.mrf.mxu0
      %5725 = vmatprep.mubr.f32.mxu0 0.0
      %5726 = vmatmul.mubr.f32.gmra.mxu0 %v5537
      %v5727 = vpop.f32.mrf.mxu0
      %v5728 = vadd.f32 0.0, %v5727
      %v5729 = vpop.f32.mrf.mxu0
      %5730 = vmatprep.mubr.f32.mxu0 0.0
      %5731 = vmatmul.mubr.f32.gmra.mxu0 %v5540
      %v5732 = vpop.f32.mrf.mxu0
      %v5733 = vadd.f32 0.0, %v5732
      %v5734 = vpop.f32.mrf.mxu0
      %5735 = vmatprep.mubr.f32.mxu0 0.0
      %5736 = vmatmul.mubr.f32.gmra.mxu0 %v5543
      %v5737 = vpop.f32.mrf.mxu0
      %v5738 = vadd.f32 0.0, %v5737
      %v5739 = vpop.f32.mrf.mxu0
      %5740 = vmatprep.mubr.f32.mxu0 0.0
      %5741 = vmatmul.mubr.f32.gmra.mxu0 %v5546
      %v5742 = vpop.f32.mrf.mxu0
      %v5743 = vadd.f32 0.0, %v5742
      %v5744 = vpop.f32.mrf.mxu0
      %5745 = vmatprep.mubr.f32.mxu0 0.0
      %5746 = vmatmul.mubr.f32.gmra.mxu0 %v5549
      %v5747 = vpop.f32.mrf.mxu0
      %v5748 = vadd.f32 0.0, %v5747
      %v5749 = vpop.f32.mrf.mxu0
      %5750 = vmatprep.mubr.f32.mxu0 0.0
      %5751 = vmatmul.mubr.f32.gmra.mxu0 %v5552
      %v5752 = vpop.f32.mrf.mxu0
      %v5753 = vadd.f32 0.0, %v5752
      %v5754 = vpop.f32.mrf.mxu0
      %5755 = vmatprep.mubr.f32.mxu0 0.0
      %5756 = vmatmul.mubr.f32.gmra.mxu0 %v5555
      %v5757 = vpop.f32.mrf.mxu0
      %v5758 = vadd.f32 0.0, %v5757
      %v5759 = vpop.f32.mrf.mxu0
      %5760 = vmatprep.mubr.f32.mxu0 0.0
      %5761 = vmatmul.mubr.f32.gmra.mxu0 %v5558
      %v5762 = vpop.f32.mrf.mxu0
      %v5763 = vadd.f32 0.0, %v5762
      %v5764 = vpop.f32.mrf.mxu0
      %5765 = vmatprep.mubr.f32.mxu0 0.0
      %5766 = vmatmul.mubr.f32.gmra.mxu0 %v5561
      %v5767 = vpop.f32.mrf.mxu0
      %v5768 = vadd.f32 0.0, %v5767
      %v5769 = vpop.f32.mrf.mxu0
      %5770 = vmatprep.mubr.f32.mxu0 0.0
      %5771 = vmatmul.mubr.f32.gmra.mxu0 %v5564
      %v5772 = vpop.f32.mrf.mxu0
      %v5773 = vadd.f32 0.0, %v5772
      %v5774 = vpop.f32.mrf.mxu0
      %5775 = vmatprep.mubr.f32.mxu0 0.0
      %5776 = vmatmul.mubr.f32.gmra.mxu0 %v5567
      %v5777 = vpop.f32.mrf.mxu0
      %v5778 = vadd.f32 0.0, %v5777
      %v5779 = vpop.f32.mrf.mxu0
      %5780 = vmatprep.mubr.f32.mxu0 0.0
      %5781 = vmatmul.mubr.f32.gmra.mxu0 %v5570
      %v5782 = vpop.f32.mrf.mxu0
      %v5783 = vadd.f32 0.0, %v5782
      %v5784 = vpop.f32.mrf.mxu0
      %5785 = vmatprep.mubr.f32.mxu0 0.0
      %5786 = vmatmul.mubr.f32.gmra.mxu0 %v5573
      %v5787 = vpop.f32.mrf.mxu0
      %v5788 = vadd.f32 0.0, %v5787
      %v5789 = vpop.f32.mrf.mxu0
      %5790 = vmatprep.mubr.f32.mxu0 0.0
      %5791 = vmatmul.mubr.f32.gmra.mxu0 %v5576
      %v5792 = vpop.f32.mrf.mxu0
      %v5793 = vadd.f32 0.0, %v5792
      %v5794 = vpop.f32.mrf.mxu0
      %5795 = vmatprep.mubr.f32.mxu0 0.0
      %5796 = vmatmul.mubr.f32.gmra.mxu0 %v5579
      %v5797 = vpop.f32.mrf.mxu0
      %v5798 = vadd.f32 0.0, %v5797
      %v5799 = vpop.f32.mrf.mxu0
      %5800 = vmatprep.mubr.f32.mxu0 0.0
      %5801 = vmatmul.mubr.f32.gmra.mxu0 %v5582
      %v5802 = vpop.f32.mrf.mxu0
      %v5803 = vadd.f32 0.0, %v5802
      %v5804 = vpop.f32.mrf.mxu0
      %5805 = vmatprep.mubr.f32.mxu0 0.0
      %5806 = vmatmul.mubr.f32.gmra.mxu0 %v5585
      %v5807 = vpop.f32.mrf.mxu0
      %v5808 = vadd.f32 0.0, %v5807
      %v5809 = vpop.f32.mrf.mxu0
      %5810 = vmatprep.mubr.f32.mxu0 0.0
      %5811 = vmatmul.mubr.f32.gmra.mxu0 %v5588
      %v5812 = vpop.f32.mrf.mxu0
      %v5813 = vadd.f32 0.0, %v5812
      %v5814 = vpop.f32.mrf.mxu0
      %5815 = vmatprep.mubr.f32.mxu0 0.0
      %5816 = vmatmul.mubr.f32.gmra.mxu0 %v5591
      %v5817 = vpop.f32.mrf.mxu0
      %v5818 = vadd.f32 0.0, %v5817
      %v5819 = vpop.f32.mrf.mxu0
      %5820 = vdwg.mxu0
      %v5821 = vadd.f32 %v5431, %v5663
      %v5822 = vadd.f32 %v5432, %v5668
      %v5823 = vadd.f32 %v5433, %v5673
      %v5824 = vadd.f32 %v5434, %v5678
      %v5825 = vadd.f32 %v5435, %v5683
      %v5826 = vadd.f32 %v5436, %v5688
      %v5827 = vadd.f32 %v5437, %v5693
      %v5828 = vadd.f32 %v5438, %v5698
      %v5829 = vadd.f32 %v5439, %v5703
      %v5830 = vadd.f32 %v5440, %v5708
      %v5831 = vadd.f32 %v5441, %v5713
      %v5832 = vadd.f32 %v5442, %v5718
      %v5833 = vadd.f32 %v5443, %v5723
      %v5834 = vadd.f32 %v5444, %v5728
      %v5835 = vadd.f32 %v5445, %v5733
      %v5836 = vadd.f32 %v5446, %v5738
      %v5837 = vadd.f32 %v5447, %v5743
      %v5838 = vadd.f32 %v5448, %v5748
      %v5839 = vadd.f32 %v5449, %v5753
      %v5840 = vadd.f32 %v5450, %v5758
      %v5841 = vadd.f32 %v5451, %v5763
      %v5842 = vadd.f32 %v5452, %v5768
      %v5843 = vadd.f32 %v5453, %v5773
      %v5844 = vadd.f32 %v5454, %v5778
      %v5845 = vadd.f32 %v5455, %v5783
      %v5846 = vadd.f32 %v5456, %v5788
      %v5847 = vadd.f32 %v5457, %v5793
      %v5848 = vadd.f32 %v5458, %v5798
      %v5849 = vadd.f32 %v5459, %v5803
      %v5850 = vadd.f32 %v5460, %v5808
      %v5851 = vadd.f32 %v5461, %v5813
      %v5852 = vadd.f32 %v5462, %v5818
      %v5853 = vld [vmem:[%s3935 + $0x2] sm:$0xff]
      %v5854 = vld [vmem:[%s3935 + $0xa] sm:$0xff]
      %v5855 = vld [vmem:[%s3935 + $0x1a] sm:$0xff]
      %v5856 = vld [vmem:[%s3935 + $0x22] sm:$0xff]
      %v5857 = vld [vmem:[%s3935 + $0x32] sm:$0xff]
      %v5858 = vld [vmem:[%s3935 + $0x3a] sm:$0xff]
      %v5859 = vld [vmem:[%s3935 + $0x4a] sm:$0xff]
      %v5860 = vld [vmem:[%s3935 + $0x52] sm:$0xff]
      %v5861 = vld [vmem:[%s3935 + $0x62] sm:$0xff]
      %v5862 = vld [vmem:[%s3935 + $0x6a] sm:$0xff]
      %v5863 = vld [vmem:[%s3935 + $0x7a] sm:$0xff]
      %v5864 = vld [vmem:[%s3935 + $0x82] sm:$0xff]
      %v5865 = vld [vmem:[%s3935 + $0x92] sm:$0xff]
      %v5866 = vld [vmem:[%s3935 + $0x9a] sm:$0xff]
      %v5867 = vld [vmem:[%s3935 + $0xaa] sm:$0xff]
      %v5868 = vld [vmem:[%s3935 + $0xb2] sm:$0xff]
      %v5869 = vld [vmem:[%s3935 + $0xc2] sm:$0xff]
      %v5870 = vld [vmem:[%s3935 + $0xca] sm:$0xff]
      %v5871 = vld [vmem:[%s3935 + $0xda] sm:$0xff]
      %v5872 = vld [vmem:[%s3935 + $0xe2] sm:$0xff]
      %v5873 = vld [vmem:[%s3935 + $0xf2] sm:$0xff]
      %v5874 = vld [vmem:[%s3935 + $0xfa] sm:$0xff]
      %v5875 = vld [vmem:[%s3935 + $0x10a] sm:$0xff]
      %v5876 = vld [vmem:[%s3935 + $0x112] sm:$0xff]
      %v5877 = vld [vmem:[%s3935 + $0x122] sm:$0xff]
      %v5878 = vld [vmem:[%s3935 + $0x12a] sm:$0xff]
      %v5879 = vld [vmem:[%s3935 + $0x13a] sm:$0xff]
      %v5880 = vld [vmem:[%s3935 + $0x142] sm:$0xff]
      %v5881 = vld [vmem:[%s3935 + $0x152] sm:$0xff]
      %v5882 = vld [vmem:[%s3935 + $0x15a] sm:$0xff]
      %v5883 = vld [vmem:[%s3935 + $0x16a] sm:$0xff]
      %v5884 = vld [vmem:[%s3935 + $0x172] sm:$0xff]
      %s5885 = scalar_lea.vmem %s2, 20
      %v5886 = vld [vmem:[%s5885] sm:$0xf]
      %v5888 = vsel %vm171, %v5853, 0
      %v5891 = vsel %vm171, %v5854, 0
      %v5894 = vsel %vm171, %v5855, 0
      %v5897 = vsel %vm171, %v5856, 0
      %v5900 = vsel %vm171, %v5857, 0
      %v5903 = vsel %vm171, %v5858, 0
      %v5906 = vsel %vm171, %v5859, 0
      %v5909 = vsel %vm171, %v5860, 0
      %v5912 = vsel %vm171, %v5861, 0
      %v5915 = vsel %vm171, %v5862, 0
      %v5918 = vsel %vm171, %v5863, 0
      %v5921 = vsel %vm171, %v5864, 0
      %v5924 = vsel %vm171, %v5865, 0
      %v5927 = vsel %vm171, %v5866, 0
      %v5930 = vsel %vm171, %v5867, 0
      %v5933 = vsel %vm171, %v5868, 0
      %v5936 = vsel %vm171, %v5869, 0
      %v5939 = vsel %vm171, %v5870, 0
      %v5942 = vsel %vm171, %v5871, 0
      %v5945 = vsel %vm171, %v5872, 0
      %v5948 = vsel %vm171, %v5873, 0
      %v5951 = vsel %vm171, %v5874, 0
      %v5954 = vsel %vm171, %v5875, 0
      %v5957 = vsel %vm171, %v5876, 0
      %v5960 = vsel %vm171, %v5877, 0
      %v5963 = vsel %vm171, %v5878, 0
      %v5966 = vsel %vm171, %v5879, 0
      %v5969 = vsel %vm171, %v5880, 0
      %v5972 = vsel %vm171, %v5881, 0
      %v5975 = vsel %vm171, %v5882, 0
      %v5978 = vsel %vm171, %v5883, 0
      %v5981 = vsel %vm171, %v5884, 0
      %v5984 = vsel %vm413, %v5886, 0
      %5986 = vmatprep.subr.mxu0 0.0
      %5987 = vmatpush1.msra.mxu0 0.0
      %5988 = vmatprep.subr.mxu0 0.0
      %5989 = vmatpush1.msra.mxu0 0.0
      %5990 = vmatprep.subr.mxu0 0.0
      %5991 = vmatpush1.msra.mxu0 0.0
      %5992 = vmatprep.subr.mxu0 0.0
      %5993 = vmatpush1.msra.mxu0 0.0
      %5994 = vmatprep.subr.mxu0 0.0
      %5995 = vmatpush1.msra.mxu0 0.0
      %5996 = vmatprep.subr.mxu0 0.0
      %5997 = vmatpush1.msra.mxu0 0.0
      %5998 = vmatprep.subr.mxu0 0.0
      %5999 = vmatpush1.msra.mxu0 0.0
      %6000 = vmatprep.subr.mxu0 0.0
      %6001 = vmatpush1.msra.mxu0 0.0
      %6002 = vmatprep.subr.mxu0 0.0
      %6003 = vmatpush1.msra.mxu0 0.0
      %6004 = vmatprep.subr.mxu0 0.0
      %6005 = vmatpush1.msra.mxu0 0.0
      %6006 = vmatprep.subr.mxu0 0.0
      %6007 = vmatpush1.msra.mxu0 0.0
      %6008 = vmatprep.subr.mxu0 0.0
      %6009 = vmatpush1.msra.mxu0 0.0
      %6010 = vmatprep.subr.mxu0 0.0
      %6011 = vmatpush1.msra.mxu0 0.0
      %6012 = vmatprep.subr.mxu0 0.0
      %6013 = vmatpush1.msra.mxu0 0.0
      %6014 = vmatprep.subr.mxu0 0.0
      %6015 = vmatpush1.msra.mxu0 0.0
      %6016 = vmatprep.subr.mxu0 0.0
      %6017 = vmatpush1.msra.mxu0 %v5984
      %6018 = vmatprep.subr.mxu0 0.0
      %6019 = vmatpush2.msra.mxu0 0.0
      %6020 = vmatprep.subr.mxu0 0.0
      %6021 = vmatpush2.msra.mxu0 0.0
      %6022 = vmatprep.subr.mxu0 0.0
      %6023 = vmatpush2.msra.mxu0 0.0
      %6024 = vmatprep.subr.mxu0 0.0
      %6025 = vmatpush2.msra.mxu0 0.0
      %6026 = vmatprep.subr.mxu0 0.0
      %6027 = vmatpush2.msra.mxu0 0.0
      %6028 = vmatprep.subr.mxu0 0.0
      %6029 = vmatpush2.msra.mxu0 0.0
      %6030 = vmatprep.subr.mxu0 0.0
      %6031 = vmatpush2.msra.mxu0 0.0
      %6032 = vmatprep.subr.mxu0 0.0
      %6033 = vmatpush2.msra.mxu0 0.0
      %6034 = vmatprep.subr.mxu0 0.0
      %6035 = vmatpush2.msra.mxu0 0.0
      %6036 = vmatprep.subr.mxu0 0.0
      %6037 = vmatpush2.msra.mxu0 0.0
      %6038 = vmatprep.subr.mxu0 0.0
      %6039 = vmatpush2.msra.mxu0 0.0
      %6040 = vmatprep.subr.mxu0 0.0
      %6041 = vmatpush2.msra.mxu0 0.0
      %6042 = vmatprep.subr.mxu0 0.0
      %6043 = vmatpush2.msra.mxu0 0.0
      %6044 = vmatprep.subr.mxu0 0.0
      %6045 = vmatpush2.msra.mxu0 0.0
      %6046 = vmatprep.subr.mxu0 0.0
      %6047 = vmatpush2.msra.mxu0 0.0
      %6048 = vmatprep.subr.mxu0 0.0
      %6049 = vmatpush2.msra.mxu0 0.0
      %6050 = vmatprep.mubr.f32.mxu0 0.0
      %6051 = vmatmul.mubr.f32.gmra.mxu0 %v5888
      %v6052 = vpop.f32.mrf.mxu0
      %v6053 = vadd.f32 0.0, %v6052
      %v6054 = vpop.f32.mrf.mxu0
      %6055 = vmatprep.mubr.f32.mxu0 0.0
      %6056 = vmatmul.mubr.f32.gmra.mxu0 %v5891
      %v6057 = vpop.f32.mrf.mxu0
      %v6058 = vadd.f32 0.0, %v6057
      %v6059 = vpop.f32.mrf.mxu0
      %6060 = vmatprep.mubr.f32.mxu0 0.0
      %6061 = vmatmul.mubr.f32.gmra.mxu0 %v5894
      %v6062 = vpop.f32.mrf.mxu0
      %v6063 = vadd.f32 0.0, %v6062
      %v6064 = vpop.f32.mrf.mxu0
      %6065 = vmatprep.mubr.f32.mxu0 0.0
      %6066 = vmatmul.mubr.f32.gmra.mxu0 %v5897
      %v6067 = vpop.f32.mrf.mxu0
      %v6068 = vadd.f32 0.0, %v6067
      %v6069 = vpop.f32.mrf.mxu0
      %6070 = vmatprep.mubr.f32.mxu0 0.0
      %6071 = vmatmul.mubr.f32.gmra.mxu0 %v5900
      %v6072 = vpop.f32.mrf.mxu0
      %v6073 = vadd.f32 0.0, %v6072
      %v6074 = vpop.f32.mrf.mxu0
      %6075 = vmatprep.mubr.f32.mxu0 0.0
      %6076 = vmatmul.mubr.f32.gmra.mxu0 %v5903
      %v6077 = vpop.f32.mrf.mxu0
      %v6078 = vadd.f32 0.0, %v6077
      %v6079 = vpop.f32.mrf.mxu0
      %6080 = vmatprep.mubr.f32.mxu0 0.0
      %6081 = vmatmul.mubr.f32.gmra.mxu0 %v5906
      %v6082 = vpop.f32.mrf.mxu0
      %v6083 = vadd.f32 0.0, %v6082
      %v6084 = vpop.f32.mrf.mxu0
      %6085 = vmatprep.mubr.f32.mxu0 0.0
      %6086 = vmatmul.mubr.f32.gmra.mxu0 %v5909
      %v6087 = vpop.f32.mrf.mxu0
      %v6088 = vadd.f32 0.0, %v6087
      %v6089 = vpop.f32.mrf.mxu0
      %6090 = vmatprep.mubr.f32.mxu0 0.0
      %6091 = vmatmul.mubr.f32.gmra.mxu0 %v5912
      %v6092 = vpop.f32.mrf.mxu0
      %v6093 = vadd.f32 0.0, %v6092
      %v6094 = vpop.f32.mrf.mxu0
      %6095 = vmatprep.mubr.f32.mxu0 0.0
      %6096 = vmatmul.mubr.f32.gmra.mxu0 %v5915
      %v6097 = vpop.f32.mrf.mxu0
      %v6098 = vadd.f32 0.0, %v6097
      %v6099 = vpop.f32.mrf.mxu0
      %6100 = vmatprep.mubr.f32.mxu0 0.0
      %6101 = vmatmul.mubr.f32.gmra.mxu0 %v5918
      %v6102 = vpop.f32.mrf.mxu0
      %v6103 = vadd.f32 0.0, %v6102
      %v6104 = vpop.f32.mrf.mxu0
      %6105 = vmatprep.mubr.f32.mxu0 0.0
      %6106 = vmatmul.mubr.f32.gmra.mxu0 %v5921
      %v6107 = vpop.f32.mrf.mxu0
      %v6108 = vadd.f32 0.0, %v6107
      %v6109 = vpop.f32.mrf.mxu0
      %6110 = vmatprep.mubr.f32.mxu0 0.0
      %6111 = vmatmul.mubr.f32.gmra.mxu0 %v5924
      %v6112 = vpop.f32.mrf.mxu0
      %v6113 = vadd.f32 0.0, %v6112
      %v6114 = vpop.f32.mrf.mxu0
      %6115 = vmatprep.mubr.f32.mxu0 0.0
      %6116 = vmatmul.mubr.f32.gmra.mxu0 %v5927
      %v6117 = vpop.f32.mrf.mxu0
      %v6118 = vadd.f32 0.0, %v6117
      %v6119 = vpop.f32.mrf.mxu0
      %6120 = vmatprep.mubr.f32.mxu0 0.0
      %6121 = vmatmul.mubr.f32.gmra.mxu0 %v5930
      %v6122 = vpop.f32.mrf.mxu0
      %v6123 = vadd.f32 0.0, %v6122
      %v6124 = vpop.f32.mrf.mxu0
      %6125 = vmatprep.mubr.f32.mxu0 0.0
      %6126 = vmatmul.mubr.f32.gmra.mxu0 %v5933
      %v6127 = vpop.f32.mrf.mxu0
      %v6128 = vadd.f32 0.0, %v6127
      %v6129 = vpop.f32.mrf.mxu0
      %6130 = vmatprep.mubr.f32.mxu0 0.0
      %6131 = vmatmul.mubr.f32.gmra.mxu0 %v5936
      %v6132 = vpop.f32.mrf.mxu0
      %v6133 = vadd.f32 0.0, %v6132
      %v6134 = vpop.f32.mrf.mxu0
      %6135 = vmatprep.mubr.f32.mxu0 0.0
      %6136 = vmatmul.mubr.f32.gmra.mxu0 %v5939
      %v6137 = vpop.f32.mrf.mxu0
      %v6138 = vadd.f32 0.0, %v6137
      %v6139 = vpop.f32.mrf.mxu0
      %6140 = vmatprep.mubr.f32.mxu0 0.0
      %6141 = vmatmul.mubr.f32.gmra.mxu0 %v5942
      %v6142 = vpop.f32.mrf.mxu0
      %v6143 = vadd.f32 0.0, %v6142
      %v6144 = vpop.f32.mrf.mxu0
      %6145 = vmatprep.mubr.f32.mxu0 0.0
      %6146 = vmatmul.mubr.f32.gmra.mxu0 %v5945
      %v6147 = vpop.f32.mrf.mxu0
      %v6148 = vadd.f32 0.0, %v6147
      %v6149 = vpop.f32.mrf.mxu0
      %6150 = vmatprep.mubr.f32.mxu0 0.0
      %6151 = vmatmul.mubr.f32.gmra.mxu0 %v5948
      %v6152 = vpop.f32.mrf.mxu0
      %v6153 = vadd.f32 0.0, %v6152
      %v6154 = vpop.f32.mrf.mxu0
      %6155 = vmatprep.mubr.f32.mxu0 0.0
      %6156 = vmatmul.mubr.f32.gmra.mxu0 %v5951
      %v6157 = vpop.f32.mrf.mxu0
      %v6158 = vadd.f32 0.0, %v6157
      %v6159 = vpop.f32.mrf.mxu0
      %6160 = vmatprep.mubr.f32.mxu0 0.0
      %6161 = vmatmul.mubr.f32.gmra.mxu0 %v5954
      %v6162 = vpop.f32.mrf.mxu0
      %v6163 = vadd.f32 0.0, %v6162
      %v6164 = vpop.f32.mrf.mxu0
      %6165 = vmatprep.mubr.f32.mxu0 0.0
      %6166 = vmatmul.mubr.f32.gmra.mxu0 %v5957
      %v6167 = vpop.f32.mrf.mxu0
      %v6168 = vadd.f32 0.0, %v6167
      %v6169 = vpop.f32.mrf.mxu0
      %6170 = vmatprep.mubr.f32.mxu0 0.0
      %6171 = vmatmul.mubr.f32.gmra.mxu0 %v5960
      %v6172 = vpop.f32.mrf.mxu0
      %v6173 = vadd.f32 0.0, %v6172
      %v6174 = vpop.f32.mrf.mxu0
      %6175 = vmatprep.mubr.f32.mxu0 0.0
      %6176 = vmatmul.mubr.f32.gmra.mxu0 %v5963
      %v6177 = vpop.f32.mrf.mxu0
      %v6178 = vadd.f32 0.0, %v6177
      %v6179 = vpop.f32.mrf.mxu0
      %6180 = vmatprep.mubr.f32.mxu0 0.0
      %6181 = vmatmul.mubr.f32.gmra.mxu0 %v5966
      %v6182 = vpop.f32.mrf.mxu0
      %v6183 = vadd.f32 0.0, %v6182
      %v6184 = vpop.f32.mrf.mxu0
      %6185 = vmatprep.mubr.f32.mxu0 0.0
      %6186 = vmatmul.mubr.f32.gmra.mxu0 %v5969
      %v6187 = vpop.f32.mrf.mxu0
      %v6188 = vadd.f32 0.0, %v6187
      %v6189 = vpop.f32.mrf.mxu0
      %6190 = vmatprep.mubr.f32.mxu0 0.0
      %6191 = vmatmul.mubr.f32.gmra.mxu0 %v5972
      %v6192 = vpop.f32.mrf.mxu0
      %v6193 = vadd.f32 0.0, %v6192
      %v6194 = vpop.f32.mrf.mxu0
      %6195 = vmatprep.mubr.f32.mxu0 0.0
      %6196 = vmatmul.mubr.f32.gmra.mxu0 %v5975
      %v6197 = vpop.f32.mrf.mxu0
      %v6198 = vadd.f32 0.0, %v6197
      %v6199 = vpop.f32.mrf.mxu0
      %6200 = vmatprep.mubr.f32.mxu0 0.0
      %6201 = vmatmul.mubr.f32.gmra.mxu0 %v5978
      %v6202 = vpop.f32.mrf.mxu0
      %v6203 = vadd.f32 0.0, %v6202
      %v6204 = vpop.f32.mrf.mxu0
      %6205 = vmatprep.mubr.f32.mxu0 0.0
      %6206 = vmatmul.mubr.f32.gmra.mxu0 %v5981
      %v6207 = vpop.f32.mrf.mxu0
      %v6208 = vadd.f32 0.0, %v6207
      %v6209 = vpop.f32.mrf.mxu0
      %6210 = vdwg.mxu0
      %v6211 = vadd.f32 %v5821, %v6053
      %v6212 = vadd.f32 %v5822, %v6058
      %v6213 = vadd.f32 %v5823, %v6063
      %v6214 = vadd.f32 %v5824, %v6068
      %v6215 = vadd.f32 %v5825, %v6073
      %v6216 = vadd.f32 %v5826, %v6078
      %v6217 = vadd.f32 %v5827, %v6083
      %v6218 = vadd.f32 %v5828, %v6088
      %v6219 = vadd.f32 %v5829, %v6093
      %v6220 = vadd.f32 %v5830, %v6098
      %v6221 = vadd.f32 %v5831, %v6103
      %v6222 = vadd.f32 %v5832, %v6108
      %v6223 = vadd.f32 %v5833, %v6113
      %v6224 = vadd.f32 %v5834, %v6118
      %v6225 = vadd.f32 %v5835, %v6123
      %v6226 = vadd.f32 %v5836, %v6128
      %v6227 = vadd.f32 %v5837, %v6133
      %v6228 = vadd.f32 %v5838, %v6138
      %v6229 = vadd.f32 %v5839, %v6143
      %v6230 = vadd.f32 %v5840, %v6148
      %v6231 = vadd.f32 %v5841, %v6153
      %v6232 = vadd.f32 %v5842, %v6158
      %v6233 = vadd.f32 %v5843, %v6163
      %v6234 = vadd.f32 %v5844, %v6168
      %v6235 = vadd.f32 %v5845, %v6173
      %v6236 = vadd.f32 %v5846, %v6178
      %v6237 = vadd.f32 %v5847, %v6183
      %v6238 = vadd.f32 %v5848, %v6188
      %v6239 = vadd.f32 %v5849, %v6193
      %v6240 = vadd.f32 %v5850, %v6198
      %v6241 = vadd.f32 %v5851, %v6203
      %v6242 = vadd.f32 %v5852, %v6208
      %s6243 = scalar_lea.vmem [#allocation2], 48
      %v6244 = vld [vmem:[%s6243] sm:$0xff]
      %v6245 = vld [vmem:[%s6243 + $0x8] sm:$0xff]
      %v6246 = vld [vmem:[%s6243 + $0x18] sm:$0xff]
      %v6247 = vld [vmem:[%s6243 + $0x20] sm:$0xff]
      %v6248 = vld [vmem:[%s6243 + $0x30] sm:$0xff]
      %v6249 = vld [vmem:[%s6243 + $0x38] sm:$0xff]
      %v6250 = vld [vmem:[%s6243 + $0x48] sm:$0xff]
      %v6251 = vld [vmem:[%s6243 + $0x50] sm:$0xff]
      %v6252 = vld [vmem:[%s6243 + $0x60] sm:$0xff]
      %v6253 = vld [vmem:[%s6243 + $0x68] sm:$0xff]
      %v6254 = vld [vmem:[%s6243 + $0x78] sm:$0xff]
      %v6255 = vld [vmem:[%s6243 + $0x80] sm:$0xff]
      %v6256 = vld [vmem:[%s6243 + $0x90] sm:$0xff]
      %v6257 = vld [vmem:[%s6243 + $0x98] sm:$0xff]
      %v6258 = vld [vmem:[%s6243 + $0xa8] sm:$0xff]
      %v6259 = vld [vmem:[%s6243 + $0xb0] sm:$0xff]
      %v6260 = vld [vmem:[%s6243 + $0xc0] sm:$0xff]
      %v6261 = vld [vmem:[%s6243 + $0xc8] sm:$0xff]
      %v6262 = vld [vmem:[%s6243 + $0xd8] sm:$0xff]
      %v6263 = vld [vmem:[%s6243 + $0xe0] sm:$0xff]
      %v6264 = vld [vmem:[%s6243 + $0xf0] sm:$0xff]
      %v6265 = vld [vmem:[%s6243 + $0xf8] sm:$0xff]
      %v6266 = vld [vmem:[%s6243 + $0x108] sm:$0xff]
      %v6267 = vld [vmem:[%s6243 + $0x110] sm:$0xff]
      %v6268 = vld [vmem:[%s6243 + $0x120] sm:$0xff]
      %v6269 = vld [vmem:[%s6243 + $0x128] sm:$0xff]
      %v6270 = vld [vmem:[%s6243 + $0x138] sm:$0xff]
      %v6271 = vld [vmem:[%s6243 + $0x140] sm:$0xff]
      %v6272 = vld [vmem:[%s6243 + $0x150] sm:$0xff]
      %v6273 = vld [vmem:[%s6243 + $0x158] sm:$0xff]
      %v6274 = vld [vmem:[%s6243 + $0x168] sm:$0xff]
      %v6275 = vld [vmem:[%s6243 + $0x170] sm:$0xff]
      %s6276 = scalar_lea.vmem %s2, 24
      %v6277 = vld [vmem:[%s6276] sm:$0xf]
      %v6279 = vsel %vm171, %v6244, 0
      %v6282 = vsel %vm171, %v6245, 0
      %v6285 = vsel %vm171, %v6246, 0
      %v6288 = vsel %vm171, %v6247, 0
      %v6291 = vsel %vm171, %v6248, 0
      %v6294 = vsel %vm171, %v6249, 0
      %v6297 = vsel %vm171, %v6250, 0
      %v6300 = vsel %vm171, %v6251, 0
      %v6303 = vsel %vm171, %v6252, 0
      %v6306 = vsel %vm171, %v6253, 0
      %v6309 = vsel %vm171, %v6254, 0
      %v6312 = vsel %vm171, %v6255, 0
      %v6315 = vsel %vm171, %v6256, 0
      %v6318 = vsel %vm171, %v6257, 0
      %v6321 = vsel %vm171, %v6258, 0
      %v6324 = vsel %vm171, %v6259, 0
      %v6327 = vsel %vm171, %v6260, 0
      %v6330 = vsel %vm171, %v6261, 0
      %v6333 = vsel %vm171, %v6262, 0
      %v6336 = vsel %vm171, %v6263, 0
      %v6339 = vsel %vm171, %v6264, 0
      %v6342 = vsel %vm171, %v6265, 0
      %v6345 = vsel %vm171, %v6266, 0
      %v6348 = vsel %vm171, %v6267, 0
      %v6351 = vsel %vm171, %v6268, 0
      %v6354 = vsel %vm171, %v6269, 0
      %v6357 = vsel %vm171, %v6270, 0
      %v6360 = vsel %vm171, %v6271, 0
      %v6363 = vsel %vm171, %v6272, 0
      %v6366 = vsel %vm171, %v6273, 0
      %v6369 = vsel %vm171, %v6274, 0
      %v6372 = vsel %vm171, %v6275, 0
      %v6375 = vsel %vm413, %v6277, 0
      %6377 = vmatprep.subr.mxu0 0.0
      %6378 = vmatpush1.msra.mxu0 0.0
      %6379 = vmatprep.subr.mxu0 0.0
      %6380 = vmatpush1.msra.mxu0 0.0
      %6381 = vmatprep.subr.mxu0 0.0
      %6382 = vmatpush1.msra.mxu0 0.0
      %6383 = vmatprep.subr.mxu0 0.0
      %6384 = vmatpush1.msra.mxu0 0.0
      %6385 = vmatprep.subr.mxu0 0.0
      %6386 = vmatpush1.msra.mxu0 0.0
      %6387 = vmatprep.subr.mxu0 0.0
      %6388 = vmatpush1.msra.mxu0 0.0
      %6389 = vmatprep.subr.mxu0 0.0
      %6390 = vmatpush1.msra.mxu0 0.0
      %6391 = vmatprep.subr.mxu0 0.0
      %6392 = vmatpush1.msra.mxu0 0.0
      %6393 = vmatprep.subr.mxu0 0.0
      %6394 = vmatpush1.msra.mxu0 0.0
      %6395 = vmatprep.subr.mxu0 0.0
      %6396 = vmatpush1.msra.mxu0 0.0
      %6397 = vmatprep.subr.mxu0 0.0
      %6398 = vmatpush1.msra.mxu0 0.0
      %6399 = vmatprep.subr.mxu0 0.0
      %6400 = vmatpush1.msra.mxu0 0.0
      %6401 = vmatprep.subr.mxu0 0.0
      %6402 = vmatpush1.msra.mxu0 0.0
      %6403 = vmatprep.subr.mxu0 0.0
      %6404 = vmatpush1.msra.mxu0 0.0
      %6405 = vmatprep.subr.mxu0 0.0
      %6406 = vmatpush1.msra.mxu0 0.0
      %6407 = vmatprep.subr.mxu0 0.0
      %6408 = vmatpush1.msra.mxu0 %v6375
      %6409 = vmatprep.subr.mxu0 0.0
      %6410 = vmatpush2.msra.mxu0 0.0
      %6411 = vmatprep.subr.mxu0 0.0
      %6412 = vmatpush2.msra.mxu0 0.0
      %6413 = vmatprep.subr.mxu0 0.0
      %6414 = vmatpush2.msra.mxu0 0.0
      %6415 = vmatprep.subr.mxu0 0.0
      %6416 = vmatpush2.msra.mxu0 0.0
      %6417 = vmatprep.subr.mxu0 0.0
      %6418 = vmatpush2.msra.mxu0 0.0
      %6419 = vmatprep.subr.mxu0 0.0
      %6420 = vmatpush2.msra.mxu0 0.0
      %6421 = vmatprep.subr.mxu0 0.0
      %6422 = vmatpush2.msra.mxu0 0.0
      %6423 = vmatprep.subr.mxu0 0.0
      %6424 = vmatpush2.msra.mxu0 0.0
      %6425 = vmatprep.subr.mxu0 0.0
      %6426 = vmatpush2.msra.mxu0 0.0
      %6427 = vmatprep.subr.mxu0 0.0
      %6428 = vmatpush2.msra.mxu0 0.0
      %6429 = vmatprep.subr.mxu0 0.0
      %6430 = vmatpush2.msra.mxu0 0.0
      %6431 = vmatprep.subr.mxu0 0.0
      %6432 = vmatpush2.msra.mxu0 0.0
      %6433 = vmatprep.subr.mxu0 0.0
      %6434 = vmatpush2.msra.mxu0 0.0
      %6435 = vmatprep.subr.mxu0 0.0
      %6436 = vmatpush2.msra.mxu0 0.0
      %6437 = vmatprep.subr.mxu0 0.0
      %6438 = vmatpush2.msra.mxu0 0.0
      %6439 = vmatprep.subr.mxu0 0.0
      %6440 = vmatpush2.msra.mxu0 0.0
      %6441 = vmatprep.mubr.f32.mxu0 0.0
      %6442 = vmatmul.mubr.f32.gmra.mxu0 %v6279
      %v6443 = vpop.f32.mrf.mxu0
      %v6444 = vadd.f32 0.0, %v6443
      %v6445 = vpop.f32.mrf.mxu0
      %6446 = vmatprep.mubr.f32.mxu0 0.0
      %6447 = vmatmul.mubr.f32.gmra.mxu0 %v6282
      %v6448 = vpop.f32.mrf.mxu0
      %v6449 = vadd.f32 0.0, %v6448
      %v6450 = vpop.f32.mrf.mxu0
      %6451 = vmatprep.mubr.f32.mxu0 0.0
      %6452 = vmatmul.mubr.f32.gmra.mxu0 %v6285
      %v6453 = vpop.f32.mrf.mxu0
      %v6454 = vadd.f32 0.0, %v6453
      %v6455 = vpop.f32.mrf.mxu0
      %6456 = vmatprep.mubr.f32.mxu0 0.0
      %6457 = vmatmul.mubr.f32.gmra.mxu0 %v6288
      %v6458 = vpop.f32.mrf.mxu0
      %v6459 = vadd.f32 0.0, %v6458
      %v6460 = vpop.f32.mrf.mxu0
      %6461 = vmatprep.mubr.f32.mxu0 0.0
      %6462 = vmatmul.mubr.f32.gmra.mxu0 %v6291
      %v6463 = vpop.f32.mrf.mxu0
      %v6464 = vadd.f32 0.0, %v6463
      %v6465 = vpop.f32.mrf.mxu0
      %6466 = vmatprep.mubr.f32.mxu0 0.0
      %6467 = vmatmul.mubr.f32.gmra.mxu0 %v6294
      %v6468 = vpop.f32.mrf.mxu0
      %v6469 = vadd.f32 0.0, %v6468
      %v6470 = vpop.f32.mrf.mxu0
      %6471 = vmatprep.mubr.f32.mxu0 0.0
      %6472 = vmatmul.mubr.f32.gmra.mxu0 %v6297
      %v6473 = vpop.f32.mrf.mxu0
      %v6474 = vadd.f32 0.0, %v6473
      %v6475 = vpop.f32.mrf.mxu0
      %6476 = vmatprep.mubr.f32.mxu0 0.0
      %6477 = vmatmul.mubr.f32.gmra.mxu0 %v6300
      %v6478 = vpop.f32.mrf.mxu0
      %v6479 = vadd.f32 0.0, %v6478
      %v6480 = vpop.f32.mrf.mxu0
      %6481 = vmatprep.mubr.f32.mxu0 0.0
      %6482 = vmatmul.mubr.f32.gmra.mxu0 %v6303
      %v6483 = vpop.f32.mrf.mxu0
      %v6484 = vadd.f32 0.0, %v6483
      %v6485 = vpop.f32.mrf.mxu0
      %6486 = vmatprep.mubr.f32.mxu0 0.0
      %6487 = vmatmul.mubr.f32.gmra.mxu0 %v6306
      %v6488 = vpop.f32.mrf.mxu0
      %v6489 = vadd.f32 0.0, %v6488
      %v6490 = vpop.f32.mrf.mxu0
      %6491 = vmatprep.mubr.f32.mxu0 0.0
      %6492 = vmatmul.mubr.f32.gmra.mxu0 %v6309
      %v6493 = vpop.f32.mrf.mxu0
      %v6494 = vadd.f32 0.0, %v6493
      %v6495 = vpop.f32.mrf.mxu0
      %6496 = vmatprep.mubr.f32.mxu0 0.0
      %6497 = vmatmul.mubr.f32.gmra.mxu0 %v6312
      %v6498 = vpop.f32.mrf.mxu0
      %v6499 = vadd.f32 0.0, %v6498
      %v6500 = vpop.f32.mrf.mxu0
      %6501 = vmatprep.mubr.f32.mxu0 0.0
      %6502 = vmatmul.mubr.f32.gmra.mxu0 %v6315
      %v6503 = vpop.f32.mrf.mxu0
      %v6504 = vadd.f32 0.0, %v6503
      %v6505 = vpop.f32.mrf.mxu0
      %6506 = vmatprep.mubr.f32.mxu0 0.0
      %6507 = vmatmul.mubr.f32.gmra.mxu0 %v6318
      %v6508 = vpop.f32.mrf.mxu0
      %v6509 = vadd.f32 0.0, %v6508
      %v6510 = vpop.f32.mrf.mxu0
      %6511 = vmatprep.mubr.f32.mxu0 0.0
      %6512 = vmatmul.mubr.f32.gmra.mxu0 %v6321
      %v6513 = vpop.f32.mrf.mxu0
      %v6514 = vadd.f32 0.0, %v6513
      %v6515 = vpop.f32.mrf.mxu0
      %6516 = vmatprep.mubr.f32.mxu0 0.0
      %6517 = vmatmul.mubr.f32.gmra.mxu0 %v6324
      %v6518 = vpop.f32.mrf.mxu0
      %v6519 = vadd.f32 0.0, %v6518
      %v6520 = vpop.f32.mrf.mxu0
      %6521 = vmatprep.mubr.f32.mxu0 0.0
      %6522 = vmatmul.mubr.f32.gmra.mxu0 %v6327
      %v6523 = vpop.f32.mrf.mxu0
      %v6524 = vadd.f32 0.0, %v6523
      %v6525 = vpop.f32.mrf.mxu0
      %6526 = vmatprep.mubr.f32.mxu0 0.0
      %6527 = vmatmul.mubr.f32.gmra.mxu0 %v6330
      %v6528 = vpop.f32.mrf.mxu0
      %v6529 = vadd.f32 0.0, %v6528
      %v6530 = vpop.f32.mrf.mxu0
      %6531 = vmatprep.mubr.f32.mxu0 0.0
      %6532 = vmatmul.mubr.f32.gmra.mxu0 %v6333
      %v6533 = vpop.f32.mrf.mxu0
      %v6534 = vadd.f32 0.0, %v6533
      %v6535 = vpop.f32.mrf.mxu0
      %6536 = vmatprep.mubr.f32.mxu0 0.0
      %6537 = vmatmul.mubr.f32.gmra.mxu0 %v6336
      %v6538 = vpop.f32.mrf.mxu0
      %v6539 = vadd.f32 0.0, %v6538
      %v6540 = vpop.f32.mrf.mxu0
      %6541 = vmatprep.mubr.f32.mxu0 0.0
      %6542 = vmatmul.mubr.f32.gmra.mxu0 %v6339
      %v6543 = vpop.f32.mrf.mxu0
      %v6544 = vadd.f32 0.0, %v6543
      %v6545 = vpop.f32.mrf.mxu0
      %6546 = vmatprep.mubr.f32.mxu0 0.0
      %6547 = vmatmul.mubr.f32.gmra.mxu0 %v6342
      %v6548 = vpop.f32.mrf.mxu0
      %v6549 = vadd.f32 0.0, %v6548
      %v6550 = vpop.f32.mrf.mxu0
      %6551 = vmatprep.mubr.f32.mxu0 0.0
      %6552 = vmatmul.mubr.f32.gmra.mxu0 %v6345
      %v6553 = vpop.f32.mrf.mxu0
      %v6554 = vadd.f32 0.0, %v6553
      %v6555 = vpop.f32.mrf.mxu0
      %6556 = vmatprep.mubr.f32.mxu0 0.0
      %6557 = vmatmul.mubr.f32.gmra.mxu0 %v6348
      %v6558 = vpop.f32.mrf.mxu0
      %v6559 = vadd.f32 0.0, %v6558
      %v6560 = vpop.f32.mrf.mxu0
      %6561 = vmatprep.mubr.f32.mxu0 0.0
      %6562 = vmatmul.mubr.f32.gmra.mxu0 %v6351
      %v6563 = vpop.f32.mrf.mxu0
      %v6564 = vadd.f32 0.0, %v6563
      %v6565 = vpop.f32.mrf.mxu0
      %6566 = vmatprep.mubr.f32.mxu0 0.0
      %6567 = vmatmul.mubr.f32.gmra.mxu0 %v6354
      %v6568 = vpop.f32.mrf.mxu0
      %v6569 = vadd.f32 0.0, %v6568
      %v6570 = vpop.f32.mrf.mxu0
      %6571 = vmatprep.mubr.f32.mxu0 0.0
      %6572 = vmatmul.mubr.f32.gmra.mxu0 %v6357
      %v6573 = vpop.f32.mrf.mxu0
      %v6574 = vadd.f32 0.0, %v6573
      %v6575 = vpop.f32.mrf.mxu0
      %6576 = vmatprep.mubr.f32.mxu0 0.0
      %6577 = vmatmul.mubr.f32.gmra.mxu0 %v6360
      %v6578 = vpop.f32.mrf.mxu0
      %v6579 = vadd.f32 0.0, %v6578
      %v6580 = vpop.f32.mrf.mxu0
      %6581 = vmatprep.mubr.f32.mxu0 0.0
      %6582 = vmatmul.mubr.f32.gmra.mxu0 %v6363
      %v6583 = vpop.f32.mrf.mxu0
      %v6584 = vadd.f32 0.0, %v6583
      %v6585 = vpop.f32.mrf.mxu0
      %6586 = vmatprep.mubr.f32.mxu0 0.0
      %6587 = vmatmul.mubr.f32.gmra.mxu0 %v6366
      %v6588 = vpop.f32.mrf.mxu0
      %v6589 = vadd.f32 0.0, %v6588
      %v6590 = vpop.f32.mrf.mxu0
      %6591 = vmatprep.mubr.f32.mxu0 0.0
      %6592 = vmatmul.mubr.f32.gmra.mxu0 %v6369
      %v6593 = vpop.f32.mrf.mxu0
      %v6594 = vadd.f32 0.0, %v6593
      %v6595 = vpop.f32.mrf.mxu0
      %6596 = vmatprep.mubr.f32.mxu0 0.0
      %6597 = vmatmul.mubr.f32.gmra.mxu0 %v6372
      %v6598 = vpop.f32.mrf.mxu0
      %v6599 = vadd.f32 0.0, %v6598
      %v6600 = vpop.f32.mrf.mxu0
      %6601 = vdwg.mxu0
      %v6602 = vadd.f32 %v6211, %v6444
      %v6603 = vadd.f32 %v6212, %v6449
      %v6604 = vadd.f32 %v6213, %v6454
      %v6605 = vadd.f32 %v6214, %v6459
      %v6606 = vadd.f32 %v6215, %v6464
      %v6607 = vadd.f32 %v6216, %v6469
      %v6608 = vadd.f32 %v6217, %v6474
      %v6609 = vadd.f32 %v6218, %v6479
      %v6610 = vadd.f32 %v6219, %v6484
      %v6611 = vadd.f32 %v6220, %v6489
      %v6612 = vadd.f32 %v6221, %v6494
      %v6613 = vadd.f32 %v6222, %v6499
      %v6614 = vadd.f32 %v6223, %v6504
      %v6615 = vadd.f32 %v6224, %v6509
      %v6616 = vadd.f32 %v6225, %v6514
      %v6617 = vadd.f32 %v6226, %v6519
      %v6618 = vadd.f32 %v6227, %v6524
      %v6619 = vadd.f32 %v6228, %v6529
      %v6620 = vadd.f32 %v6229, %v6534
      %v6621 = vadd.f32 %v6230, %v6539
      %v6622 = vadd.f32 %v6231, %v6544
      %v6623 = vadd.f32 %v6232, %v6549
      %v6624 = vadd.f32 %v6233, %v6554
      %v6625 = vadd.f32 %v6234, %v6559
      %v6626 = vadd.f32 %v6235, %v6564
      %v6627 = vadd.f32 %v6236, %v6569
      %v6628 = vadd.f32 %v6237, %v6574
      %v6629 = vadd.f32 %v6238, %v6579
      %v6630 = vadd.f32 %v6239, %v6584
      %v6631 = vadd.f32 %v6240, %v6589
      %v6632 = vadd.f32 %v6241, %v6594
      %v6633 = vadd.f32 %v6242, %v6599
      %v6634 = vld [vmem:[%s6243 + $0x1] sm:$0xff]
      %v6635 = vld [vmem:[%s6243 + $0x9] sm:$0xff]
      %v6636 = vld [vmem:[%s6243 + $0x19] sm:$0xff]
      %v6637 = vld [vmem:[%s6243 + $0x21] sm:$0xff]
      %v6638 = vld [vmem:[%s6243 + $0x31] sm:$0xff]
      %v6639 = vld [vmem:[%s6243 + $0x39] sm:$0xff]
      %v6640 = vld [vmem:[%s6243 + $0x49] sm:$0xff]
      %v6641 = vld [vmem:[%s6243 + $0x51] sm:$0xff]
      %v6642 = vld [vmem:[%s6243 + $0x61] sm:$0xff]
      %v6643 = vld [vmem:[%s6243 + $0x69] sm:$0xff]
      %v6644 = vld [vmem:[%s6243 + $0x79] sm:$0xff]
      %v6645 = vld [vmem:[%s6243 + $0x81] sm:$0xff]
      %v6646 = vld [vmem:[%s6243 + $0x91] sm:$0xff]
      %v6647 = vld [vmem:[%s6243 + $0x99] sm:$0xff]
      %v6648 = vld [vmem:[%s6243 + $0xa9] sm:$0xff]
      %v6649 = vld [vmem:[%s6243 + $0xb1] sm:$0xff]
      %v6650 = vld [vmem:[%s6243 + $0xc1] sm:$0xff]
      %v6651 = vld [vmem:[%s6243 + $0xc9] sm:$0xff]
      %v6652 = vld [vmem:[%s6243 + $0xd9] sm:$0xff]
      %v6653 = vld [vmem:[%s6243 + $0xe1] sm:$0xff]
      %v6654 = vld [vmem:[%s6243 + $0xf1] sm:$0xff]
      %v6655 = vld [vmem:[%s6243 + $0xf9] sm:$0xff]
      %v6656 = vld [vmem:[%s6243 + $0x109] sm:$0xff]
      %v6657 = vld [vmem:[%s6243 + $0x111] sm:$0xff]
      %v6658 = vld [vmem:[%s6243 + $0x121] sm:$0xff]
      %v6659 = vld [vmem:[%s6243 + $0x129] sm:$0xff]
      %v6660 = vld [vmem:[%s6243 + $0x139] sm:$0xff]
      %v6661 = vld [vmem:[%s6243 + $0x141] sm:$0xff]
      %v6662 = vld [vmem:[%s6243 + $0x151] sm:$0xff]
      %v6663 = vld [vmem:[%s6243 + $0x159] sm:$0xff]
      %v6664 = vld [vmem:[%s6243 + $0x169] sm:$0xff]
      %v6665 = vld [vmem:[%s6243 + $0x171] sm:$0xff]
      %s6666 = scalar_lea.vmem %s2, 28
      %v6667 = vld [vmem:[%s6666] sm:$0xf]
      %v6669 = vsel %vm171, %v6634, 0
      %v6672 = vsel %vm171, %v6635, 0
      %v6675 = vsel %vm171, %v6636, 0
      %v6678 = vsel %vm171, %v6637, 0
      %v6681 = vsel %vm171, %v6638, 0
      %v6684 = vsel %vm171, %v6639, 0
      %v6687 = vsel %vm171, %v6640, 0
      %v6690 = vsel %vm171, %v6641, 0
      %v6693 = vsel %vm171, %v6642, 0
      %v6696 = vsel %vm171, %v6643, 0
      %v6699 = vsel %vm171, %v6644, 0
      %v6702 = vsel %vm171, %v6645, 0
      %v6705 = vsel %vm171, %v6646, 0
      %v6708 = vsel %vm171, %v6647, 0
      %v6711 = vsel %vm171, %v6648, 0
      %v6714 = vsel %vm171, %v6649, 0
      %v6717 = vsel %vm171, %v6650, 0
      %v6720 = vsel %vm171, %v6651, 0
      %v6723 = vsel %vm171, %v6652, 0
      %v6726 = vsel %vm171, %v6653, 0
      %v6729 = vsel %vm171, %v6654, 0
      %v6732 = vsel %vm171, %v6655, 0
      %v6735 = vsel %vm171, %v6656, 0
      %v6738 = vsel %vm171, %v6657, 0
      %v6741 = vsel %vm171, %v6658, 0
      %v6744 = vsel %vm171, %v6659, 0
      %v6747 = vsel %vm171, %v6660, 0
      %v6750 = vsel %vm171, %v6661, 0
      %v6753 = vsel %vm171, %v6662, 0
      %v6756 = vsel %vm171, %v6663, 0
      %v6759 = vsel %vm171, %v6664, 0
      %v6762 = vsel %vm171, %v6665, 0
      %v6765 = vsel %vm413, %v6667, 0
      %6767 = vmatprep.subr.mxu0 0.0
      %6768 = vmatpush1.msra.mxu0 0.0
      %6769 = vmatprep.subr.mxu0 0.0
      %6770 = vmatpush1.msra.mxu0 0.0
      %6771 = vmatprep.subr.mxu0 0.0
      %6772 = vmatpush1.msra.mxu0 0.0
      %6773 = vmatprep.subr.mxu0 0.0
      %6774 = vmatpush1.msra.mxu0 0.0
      %6775 = vmatprep.subr.mxu0 0.0
      %6776 = vmatpush1.msra.mxu0 0.0
      %6777 = vmatprep.subr.mxu0 0.0
      %6778 = vmatpush1.msra.mxu0 0.0
      %6779 = vmatprep.subr.mxu0 0.0
      %6780 = vmatpush1.msra.mxu0 0.0
      %6781 = vmatprep.subr.mxu0 0.0
      %6782 = vmatpush1.msra.mxu0 0.0
      %6783 = vmatprep.subr.mxu0 0.0
      %6784 = vmatpush1.msra.mxu0 0.0
      %6785 = vmatprep.subr.mxu0 0.0
      %6786 = vmatpush1.msra.mxu0 0.0
      %6787 = vmatprep.subr.mxu0 0.0
      %6788 = vmatpush1.msra.mxu0 0.0
      %6789 = vmatprep.subr.mxu0 0.0
      %6790 = vmatpush1.msra.mxu0 0.0
      %6791 = vmatprep.subr.mxu0 0.0
      %6792 = vmatpush1.msra.mxu0 0.0
      %6793 = vmatprep.subr.mxu0 0.0
      %6794 = vmatpush1.msra.mxu0 0.0
      %6795 = vmatprep.subr.mxu0 0.0
      %6796 = vmatpush1.msra.mxu0 0.0
      %6797 = vmatprep.subr.mxu0 0.0
      %6798 = vmatpush1.msra.mxu0 %v6765
      %6799 = vmatprep.subr.mxu0 0.0
      %6800 = vmatpush2.msra.mxu0 0.0
      %6801 = vmatprep.subr.mxu0 0.0
      %6802 = vmatpush2.msra.mxu0 0.0
      %6803 = vmatprep.subr.mxu0 0.0
      %6804 = vmatpush2.msra.mxu0 0.0
      %6805 = vmatprep.subr.mxu0 0.0
      %6806 = vmatpush2.msra.mxu0 0.0
      %6807 = vmatprep.subr.mxu0 0.0
      %6808 = vmatpush2.msra.mxu0 0.0
      %6809 = vmatprep.subr.mxu0 0.0
      %6810 = vmatpush2.msra.mxu0 0.0
      %6811 = vmatprep.subr.mxu0 0.0
      %6812 = vmatpush2.msra.mxu0 0.0
      %6813 = vmatprep.subr.mxu0 0.0
      %6814 = vmatpush2.msra.mxu0 0.0
      %6815 = vmatprep.subr.mxu0 0.0
      %6816 = vmatpush2.msra.mxu0 0.0
      %6817 = vmatprep.subr.mxu0 0.0
      %6818 = vmatpush2.msra.mxu0 0.0
      %6819 = vmatprep.subr.mxu0 0.0
      %6820 = vmatpush2.msra.mxu0 0.0
      %6821 = vmatprep.subr.mxu0 0.0
      %6822 = vmatpush2.msra.mxu0 0.0
      %6823 = vmatprep.subr.mxu0 0.0
      %6824 = vmatpush2.msra.mxu0 0.0
      %6825 = vmatprep.subr.mxu0 0.0
      %6826 = vmatpush2.msra.mxu0 0.0
      %6827 = vmatprep.subr.mxu0 0.0
      %6828 = vmatpush2.msra.mxu0 0.0
      %6829 = vmatprep.subr.mxu0 0.0
      %6830 = vmatpush2.msra.mxu0 0.0
      %6831 = vmatprep.mubr.f32.mxu0 0.0
      %6832 = vmatmul.mubr.f32.gmra.mxu0 %v6669
      %v6833 = vpop.f32.mrf.mxu0
      %v6834 = vadd.f32 0.0, %v6833
      %v6835 = vpop.f32.mrf.mxu0
      %6836 = vmatprep.mubr.f32.mxu0 0.0
      %6837 = vmatmul.mubr.f32.gmra.mxu0 %v6672
      %v6838 = vpop.f32.mrf.mxu0
      %v6839 = vadd.f32 0.0, %v6838
      %v6840 = vpop.f32.mrf.mxu0
      %6841 = vmatprep.mubr.f32.mxu0 0.0
      %6842 = vmatmul.mubr.f32.gmra.mxu0 %v6675
      %v6843 = vpop.f32.mrf.mxu0
      %v6844 = vadd.f32 0.0, %v6843
      %v6845 = vpop.f32.mrf.mxu0
      %6846 = vmatprep.mubr.f32.mxu0 0.0
      %6847 = vmatmul.mubr.f32.gmra.mxu0 %v6678
      %v6848 = vpop.f32.mrf.mxu0
      %v6849 = vadd.f32 0.0, %v6848
      %v6850 = vpop.f32.mrf.mxu0
      %6851 = vmatprep.mubr.f32.mxu0 0.0
      %6852 = vmatmul.mubr.f32.gmra.mxu0 %v6681
      %v6853 = vpop.f32.mrf.mxu0
      %v6854 = vadd.f32 0.0, %v6853
      %v6855 = vpop.f32.mrf.mxu0
      %6856 = vmatprep.mubr.f32.mxu0 0.0
      %6857 = vmatmul.mubr.f32.gmra.mxu0 %v6684
      %v6858 = vpop.f32.mrf.mxu0
      %v6859 = vadd.f32 0.0, %v6858
      %v6860 = vpop.f32.mrf.mxu0
      %6861 = vmatprep.mubr.f32.mxu0 0.0
      %6862 = vmatmul.mubr.f32.gmra.mxu0 %v6687
      %v6863 = vpop.f32.mrf.mxu0
      %v6864 = vadd.f32 0.0, %v6863
      %v6865 = vpop.f32.mrf.mxu0
      %6866 = vmatprep.mubr.f32.mxu0 0.0
      %6867 = vmatmul.mubr.f32.gmra.mxu0 %v6690
      %v6868 = vpop.f32.mrf.mxu0
      %v6869 = vadd.f32 0.0, %v6868
      %v6870 = vpop.f32.mrf.mxu0
      %6871 = vmatprep.mubr.f32.mxu0 0.0
      %6872 = vmatmul.mubr.f32.gmra.mxu0 %v6693
      %v6873 = vpop.f32.mrf.mxu0
      %v6874 = vadd.f32 0.0, %v6873
      %v6875 = vpop.f32.mrf.mxu0
      %6876 = vmatprep.mubr.f32.mxu0 0.0
      %6877 = vmatmul.mubr.f32.gmra.mxu0 %v6696
      %v6878 = vpop.f32.mrf.mxu0
      %v6879 = vadd.f32 0.0, %v6878
      %v6880 = vpop.f32.mrf.mxu0
      %6881 = vmatprep.mubr.f32.mxu0 0.0
      %6882 = vmatmul.mubr.f32.gmra.mxu0 %v6699
      %v6883 = vpop.f32.mrf.mxu0
      %v6884 = vadd.f32 0.0, %v6883
      %v6885 = vpop.f32.mrf.mxu0
      %6886 = vmatprep.mubr.f32.mxu0 0.0
      %6887 = vmatmul.mubr.f32.gmra.mxu0 %v6702
      %v6888 = vpop.f32.mrf.mxu0
      %v6889 = vadd.f32 0.0, %v6888
      %v6890 = vpop.f32.mrf.mxu0
      %6891 = vmatprep.mubr.f32.mxu0 0.0
      %6892 = vmatmul.mubr.f32.gmra.mxu0 %v6705
      %v6893 = vpop.f32.mrf.mxu0
      %v6894 = vadd.f32 0.0, %v6893
      %v6895 = vpop.f32.mrf.mxu0
      %6896 = vmatprep.mubr.f32.mxu0 0.0
      %6897 = vmatmul.mubr.f32.gmra.mxu0 %v6708
      %v6898 = vpop.f32.mrf.mxu0
      %v6899 = vadd.f32 0.0, %v6898
      %v6900 = vpop.f32.mrf.mxu0
      %6901 = vmatprep.mubr.f32.mxu0 0.0
      %6902 = vmatmul.mubr.f32.gmra.mxu0 %v6711
      %v6903 = vpop.f32.mrf.mxu0
      %v6904 = vadd.f32 0.0, %v6903
      %v6905 = vpop.f32.mrf.mxu0
      %6906 = vmatprep.mubr.f32.mxu0 0.0
      %6907 = vmatmul.mubr.f32.gmra.mxu0 %v6714
      %v6908 = vpop.f32.mrf.mxu0
      %v6909 = vadd.f32 0.0, %v6908
      %v6910 = vpop.f32.mrf.mxu0
      %6911 = vmatprep.mubr.f32.mxu0 0.0
      %6912 = vmatmul.mubr.f32.gmra.mxu0 %v6717
      %v6913 = vpop.f32.mrf.mxu0
      %v6914 = vadd.f32 0.0, %v6913
      %v6915 = vpop.f32.mrf.mxu0
      %6916 = vmatprep.mubr.f32.mxu0 0.0
      %6917 = vmatmul.mubr.f32.gmra.mxu0 %v6720
      %v6918 = vpop.f32.mrf.mxu0
      %v6919 = vadd.f32 0.0, %v6918
      %v6920 = vpop.f32.mrf.mxu0
      %6921 = vmatprep.mubr.f32.mxu0 0.0
      %6922 = vmatmul.mubr.f32.gmra.mxu0 %v6723
      %v6923 = vpop.f32.mrf.mxu0
      %v6924 = vadd.f32 0.0, %v6923
      %v6925 = vpop.f32.mrf.mxu0
      %6926 = vmatprep.mubr.f32.mxu0 0.0
      %6927 = vmatmul.mubr.f32.gmra.mxu0 %v6726
      %v6928 = vpop.f32.mrf.mxu0
      %v6929 = vadd.f32 0.0, %v6928
      %v6930 = vpop.f32.mrf.mxu0
      %6931 = vmatprep.mubr.f32.mxu0 0.0
      %6932 = vmatmul.mubr.f32.gmra.mxu0 %v6729
      %v6933 = vpop.f32.mrf.mxu0
      %v6934 = vadd.f32 0.0, %v6933
      %v6935 = vpop.f32.mrf.mxu0
      %6936 = vmatprep.mubr.f32.mxu0 0.0
      %6937 = vmatmul.mubr.f32.gmra.mxu0 %v6732
      %v6938 = vpop.f32.mrf.mxu0
      %v6939 = vadd.f32 0.0, %v6938
      %v6940 = vpop.f32.mrf.mxu0
      %6941 = vmatprep.mubr.f32.mxu0 0.0
      %6942 = vmatmul.mubr.f32.gmra.mxu0 %v6735
      %v6943 = vpop.f32.mrf.mxu0
      %v6944 = vadd.f32 0.0, %v6943
      %v6945 = vpop.f32.mrf.mxu0
      %6946 = vmatprep.mubr.f32.mxu0 0.0
      %6947 = vmatmul.mubr.f32.gmra.mxu0 %v6738
      %v6948 = vpop.f32.mrf.mxu0
      %v6949 = vadd.f32 0.0, %v6948
      %v6950 = vpop.f32.mrf.mxu0
      %6951 = vmatprep.mubr.f32.mxu0 0.0
      %6952 = vmatmul.mubr.f32.gmra.mxu0 %v6741
      %v6953 = vpop.f32.mrf.mxu0
      %v6954 = vadd.f32 0.0, %v6953
      %v6955 = vpop.f32.mrf.mxu0
      %6956 = vmatprep.mubr.f32.mxu0 0.0
      %6957 = vmatmul.mubr.f32.gmra.mxu0 %v6744
      %v6958 = vpop.f32.mrf.mxu0
      %v6959 = vadd.f32 0.0, %v6958
      %v6960 = vpop.f32.mrf.mxu0
      %6961 = vmatprep.mubr.f32.mxu0 0.0
      %6962 = vmatmul.mubr.f32.gmra.mxu0 %v6747
      %v6963 = vpop.f32.mrf.mxu0
      %v6964 = vadd.f32 0.0, %v6963
      %v6965 = vpop.f32.mrf.mxu0
      %6966 = vmatprep.mubr.f32.mxu0 0.0
      %6967 = vmatmul.mubr.f32.gmra.mxu0 %v6750
      %v6968 = vpop.f32.mrf.mxu0
      %v6969 = vadd.f32 0.0, %v6968
      %v6970 = vpop.f32.mrf.mxu0
      %6971 = vmatprep.mubr.f32.mxu0 0.0
      %6972 = vmatmul.mubr.f32.gmra.mxu0 %v6753
      %v6973 = vpop.f32.mrf.mxu0
      %v6974 = vadd.f32 0.0, %v6973
      %v6975 = vpop.f32.mrf.mxu0
      %6976 = vmatprep.mubr.f32.mxu0 0.0
      %6977 = vmatmul.mubr.f32.gmra.mxu0 %v6756
      %v6978 = vpop.f32.mrf.mxu0
      %v6979 = vadd.f32 0.0, %v6978
      %v6980 = vpop.f32.mrf.mxu0
      %6981 = vmatprep.mubr.f32.mxu0 0.0
      %6982 = vmatmul.mubr.f32.gmra.mxu0 %v6759
      %v6983 = vpop.f32.mrf.mxu0
      %v6984 = vadd.f32 0.0, %v6983
      %v6985 = vpop.f32.mrf.mxu0
      %6986 = vmatprep.mubr.f32.mxu0 0.0
      %6987 = vmatmul.mubr.f32.gmra.mxu0 %v6762
      %v6988 = vpop.f32.mrf.mxu0
      %v6989 = vadd.f32 0.0, %v6988
      %v6990 = vpop.f32.mrf.mxu0
      %6991 = vdwg.mxu0
      %v6992 = vadd.f32 %v6602, %v6834
      %v6993 = vadd.f32 %v6603, %v6839
      %v6994 = vadd.f32 %v6604, %v6844
      %v6995 = vadd.f32 %v6605, %v6849
      %v6996 = vadd.f32 %v6606, %v6854
      %v6997 = vadd.f32 %v6607, %v6859
      %v6998 = vadd.f32 %v6608, %v6864
      %v6999 = vadd.f32 %v6609, %v6869
      %v7000 = vadd.f32 %v6610, %v6874
      %v7001 = vadd.f32 %v6611, %v6879
      %v7002 = vadd.f32 %v6612, %v6884
      %v7003 = vadd.f32 %v6613, %v6889
      %v7004 = vadd.f32 %v6614, %v6894
      %v7005 = vadd.f32 %v6615, %v6899
      %v7006 = vadd.f32 %v6616, %v6904
      %v7007 = vadd.f32 %v6617, %v6909
      %v7008 = vadd.f32 %v6618, %v6914
      %v7009 = vadd.f32 %v6619, %v6919
      %v7010 = vadd.f32 %v6620, %v6924
      %v7011 = vadd.f32 %v6621, %v6929
      %v7012 = vadd.f32 %v6622, %v6934
      %v7013 = vadd.f32 %v6623, %v6939
      %v7014 = vadd.f32 %v6624, %v6944
      %v7015 = vadd.f32 %v6625, %v6949
      %v7016 = vadd.f32 %v6626, %v6954
      %v7017 = vadd.f32 %v6627, %v6959
      %v7018 = vadd.f32 %v6628, %v6964
      %v7019 = vadd.f32 %v6629, %v6969
      %v7020 = vadd.f32 %v6630, %v6974
      %v7021 = vadd.f32 %v6631, %v6979
      %v7022 = vadd.f32 %v6632, %v6984
      %v7023 = vadd.f32 %v6633, %v6989
      %v7024 = vld [vmem:[%s6243 + $0x2] sm:$0xff]
      %v7025 = vld [vmem:[%s6243 + $0xa] sm:$0xff]
      %v7026 = vld [vmem:[%s6243 + $0x1a] sm:$0xff]
      %v7027 = vld [vmem:[%s6243 + $0x22] sm:$0xff]
      %v7028 = vld [vmem:[%s6243 + $0x32] sm:$0xff]
      %v7029 = vld [vmem:[%s6243 + $0x3a] sm:$0xff]
      %v7030 = vld [vmem:[%s6243 + $0x4a] sm:$0xff]
      %v7031 = vld [vmem:[%s6243 + $0x52] sm:$0xff]
      %v7032 = vld [vmem:[%s6243 + $0x62] sm:$0xff]
      %v7033 = vld [vmem:[%s6243 + $0x6a] sm:$0xff]
      %v7034 = vld [vmem:[%s6243 + $0x7a] sm:$0xff]
      %v7035 = vld [vmem:[%s6243 + $0x82] sm:$0xff]
      %v7036 = vld [vmem:[%s6243 + $0x92] sm:$0xff]
      %v7037 = vld [vmem:[%s6243 + $0x9a] sm:$0xff]
      %v7038 = vld [vmem:[%s6243 + $0xaa] sm:$0xff]
      %v7039 = vld [vmem:[%s6243 + $0xb2] sm:$0xff]
      %v7040 = vld [vmem:[%s6243 + $0xc2] sm:$0xff]
      %v7041 = vld [vmem:[%s6243 + $0xca] sm:$0xff]
      %v7042 = vld [vmem:[%s6243 + $0xda] sm:$0xff]
      %v7043 = vld [vmem:[%s6243 + $0xe2] sm:$0xff]
      %v7044 = vld [vmem:[%s6243 + $0xf2] sm:$0xff]
      %v7045 = vld [vmem:[%s6243 + $0xfa] sm:$0xff]
      %v7046 = vld [vmem:[%s6243 + $0x10a] sm:$0xff]
      %v7047 = vld [vmem:[%s6243 + $0x112] sm:$0xff]
      %v7048 = vld [vmem:[%s6243 + $0x122] sm:$0xff]
      %v7049 = vld [vmem:[%s6243 + $0x12a] sm:$0xff]
      %v7050 = vld [vmem:[%s6243 + $0x13a] sm:$0xff]
      %v7051 = vld [vmem:[%s6243 + $0x142] sm:$0xff]
      %v7052 = vld [vmem:[%s6243 + $0x152] sm:$0xff]
      %v7053 = vld [vmem:[%s6243 + $0x15a] sm:$0xff]
      %v7054 = vld [vmem:[%s6243 + $0x16a] sm:$0xff]
      %v7055 = vld [vmem:[%s6243 + $0x172] sm:$0xff]
      %s7056 = scalar_lea.vmem %s2, 32
      %v7057 = vld [vmem:[%s7056] sm:$0xf]
      %v7059 = vsel %vm171, %v7024, 0
      %v7062 = vsel %vm171, %v7025, 0
      %v7065 = vsel %vm171, %v7026, 0
      %v7068 = vsel %vm171, %v7027, 0
      %v7071 = vsel %vm171, %v7028, 0
      %v7074 = vsel %vm171, %v7029, 0
      %v7077 = vsel %vm171, %v7030, 0
      %v7080 = vsel %vm171, %v7031, 0
      %v7083 = vsel %vm171, %v7032, 0
      %v7086 = vsel %vm171, %v7033, 0
      %v7089 = vsel %vm171, %v7034, 0
      %v7092 = vsel %vm171, %v7035, 0
      %v7095 = vsel %vm171, %v7036, 0
      %v7098 = vsel %vm171, %v7037, 0
      %v7101 = vsel %vm171, %v7038, 0
      %v7104 = vsel %vm171, %v7039, 0
      %v7107 = vsel %vm171, %v7040, 0
      %v7110 = vsel %vm171, %v7041, 0
      %v7113 = vsel %vm171, %v7042, 0
      %v7116 = vsel %vm171, %v7043, 0
      %v7119 = vsel %vm171, %v7044, 0
      %v7122 = vsel %vm171, %v7045, 0
      %v7125 = vsel %vm171, %v7046, 0
      %v7128 = vsel %vm171, %v7047, 0
      %v7131 = vsel %vm171, %v7048, 0
      %v7134 = vsel %vm171, %v7049, 0
      %v7137 = vsel %vm171, %v7050, 0
      %v7140 = vsel %vm171, %v7051, 0
      %v7143 = vsel %vm171, %v7052, 0
      %v7146 = vsel %vm171, %v7053, 0
      %v7149 = vsel %vm171, %v7054, 0
      %v7152 = vsel %vm171, %v7055, 0
      %v7155 = vsel %vm413, %v7057, 0
      %7157 = vmatprep.subr.mxu0 0.0
      %7158 = vmatpush1.msra.mxu0 0.0
      %7159 = vmatprep.subr.mxu0 0.0
      %7160 = vmatpush1.msra.mxu0 0.0
      %7161 = vmatprep.subr.mxu0 0.0
      %7162 = vmatpush1.msra.mxu0 0.0
      %7163 = vmatprep.subr.mxu0 0.0
      %7164 = vmatpush1.msra.mxu0 0.0
      %7165 = vmatprep.subr.mxu0 0.0
      %7166 = vmatpush1.msra.mxu0 0.0
      %7167 = vmatprep.subr.mxu0 0.0
      %7168 = vmatpush1.msra.mxu0 0.0
      %7169 = vmatprep.subr.mxu0 0.0
      %7170 = vmatpush1.msra.mxu0 0.0
      %7171 = vmatprep.subr.mxu0 0.0
      %7172 = vmatpush1.msra.mxu0 0.0
      %7173 = vmatprep.subr.mxu0 0.0
      %7174 = vmatpush1.msra.mxu0 0.0
      %7175 = vmatprep.subr.mxu0 0.0
      %7176 = vmatpush1.msra.mxu0 0.0
      %7177 = vmatprep.subr.mxu0 0.0
      %7178 = vmatpush1.msra.mxu0 0.0
      %7179 = vmatprep.subr.mxu0 0.0
      %7180 = vmatpush1.msra.mxu0 0.0
      %7181 = vmatprep.subr.mxu0 0.0
      %7182 = vmatpush1.msra.mxu0 0.0
      %7183 = vmatprep.subr.mxu0 0.0
      %7184 = vmatpush1.msra.mxu0 0.0
      %7185 = vmatprep.subr.mxu0 0.0
      %7186 = vmatpush1.msra.mxu0 0.0
      %7187 = vmatprep.subr.mxu0 0.0
      %7188 = vmatpush1.msra.mxu0 %v7155
      %7189 = vmatprep.subr.mxu0 0.0
      %7190 = vmatpush2.msra.mxu0 0.0
      %7191 = vmatprep.subr.mxu0 0.0
      %7192 = vmatpush2.msra.mxu0 0.0
      %7193 = vmatprep.subr.mxu0 0.0
      %7194 = vmatpush2.msra.mxu0 0.0
      %7195 = vmatprep.subr.mxu0 0.0
      %7196 = vmatpush2.msra.mxu0 0.0
      %7197 = vmatprep.subr.mxu0 0.0
      %7198 = vmatpush2.msra.mxu0 0.0
      %7199 = vmatprep.subr.mxu0 0.0
      %7200 = vmatpush2.msra.mxu0 0.0
      %7201 = vmatprep.subr.mxu0 0.0
      %7202 = vmatpush2.msra.mxu0 0.0
      %7203 = vmatprep.subr.mxu0 0.0
      %7204 = vmatpush2.msra.mxu0 0.0
      %7205 = vmatprep.subr.mxu0 0.0
      %7206 = vmatpush2.msra.mxu0 0.0
      %7207 = vmatprep.subr.mxu0 0.0
      %7208 = vmatpush2.msra.mxu0 0.0
      %7209 = vmatprep.subr.mxu0 0.0
      %7210 = vmatpush2.msra.mxu0 0.0
      %7211 = vmatprep.subr.mxu0 0.0
      %7212 = vmatpush2.msra.mxu0 0.0
      %7213 = vmatprep.subr.mxu0 0.0
      %7214 = vmatpush2.msra.mxu0 0.0
      %7215 = vmatprep.subr.mxu0 0.0
      %7216 = vmatpush2.msra.mxu0 0.0
      %7217 = vmatprep.subr.mxu0 0.0
      %7218 = vmatpush2.msra.mxu0 0.0
      %7219 = vmatprep.subr.mxu0 0.0
      %7220 = vmatpush2.msra.mxu0 0.0
      %7221 = vmatprep.mubr.f32.mxu0 0.0
      %7222 = vmatmul.mubr.f32.gmra.mxu0 %v7059
      %v7223 = vpop.f32.mrf.mxu0
      %v7224 = vadd.f32 0.0, %v7223
      %v7225 = vpop.f32.mrf.mxu0
      %7226 = vmatprep.mubr.f32.mxu0 0.0
      %7227 = vmatmul.mubr.f32.gmra.mxu0 %v7062
      %v7228 = vpop.f32.mrf.mxu0
      %v7229 = vadd.f32 0.0, %v7228
      %v7230 = vpop.f32.mrf.mxu0
      %7231 = vmatprep.mubr.f32.mxu0 0.0
      %7232 = vmatmul.mubr.f32.gmra.mxu0 %v7065
      %v7233 = vpop.f32.mrf.mxu0
      %v7234 = vadd.f32 0.0, %v7233
      %v7235 = vpop.f32.mrf.mxu0
      %7236 = vmatprep.mubr.f32.mxu0 0.0
      %7237 = vmatmul.mubr.f32.gmra.mxu0 %v7068
      %v7238 = vpop.f32.mrf.mxu0
      %v7239 = vadd.f32 0.0, %v7238
      %v7240 = vpop.f32.mrf.mxu0
      %7241 = vmatprep.mubr.f32.mxu0 0.0
      %7242 = vmatmul.mubr.f32.gmra.mxu0 %v7071
      %v7243 = vpop.f32.mrf.mxu0
      %v7244 = vadd.f32 0.0, %v7243
      %v7245 = vpop.f32.mrf.mxu0
      %7246 = vmatprep.mubr.f32.mxu0 0.0
      %7247 = vmatmul.mubr.f32.gmra.mxu0 %v7074
      %v7248 = vpop.f32.mrf.mxu0
      %v7249 = vadd.f32 0.0, %v7248
      %v7250 = vpop.f32.mrf.mxu0
      %7251 = vmatprep.mubr.f32.mxu0 0.0
      %7252 = vmatmul.mubr.f32.gmra.mxu0 %v7077
      %v7253 = vpop.f32.mrf.mxu0
      %v7254 = vadd.f32 0.0, %v7253
      %v7255 = vpop.f32.mrf.mxu0
      %7256 = vmatprep.mubr.f32.mxu0 0.0
      %7257 = vmatmul.mubr.f32.gmra.mxu0 %v7080
      %v7258 = vpop.f32.mrf.mxu0
      %v7259 = vadd.f32 0.0, %v7258
      %v7260 = vpop.f32.mrf.mxu0
      %7261 = vmatprep.mubr.f32.mxu0 0.0
      %7262 = vmatmul.mubr.f32.gmra.mxu0 %v7083
      %v7263 = vpop.f32.mrf.mxu0
      %v7264 = vadd.f32 0.0, %v7263
      %v7265 = vpop.f32.mrf.mxu0
      %7266 = vmatprep.mubr.f32.mxu0 0.0
      %7267 = vmatmul.mubr.f32.gmra.mxu0 %v7086
      %v7268 = vpop.f32.mrf.mxu0
      %v7269 = vadd.f32 0.0, %v7268
      %v7270 = vpop.f32.mrf.mxu0
      %7271 = vmatprep.mubr.f32.mxu0 0.0
      %7272 = vmatmul.mubr.f32.gmra.mxu0 %v7089
      %v7273 = vpop.f32.mrf.mxu0
      %v7274 = vadd.f32 0.0, %v7273
      %v7275 = vpop.f32.mrf.mxu0
      %7276 = vmatprep.mubr.f32.mxu0 0.0
      %7277 = vmatmul.mubr.f32.gmra.mxu0 %v7092
      %v7278 = vpop.f32.mrf.mxu0
      %v7279 = vadd.f32 0.0, %v7278
      %v7280 = vpop.f32.mrf.mxu0
      %7281 = vmatprep.mubr.f32.mxu0 0.0
      %7282 = vmatmul.mubr.f32.gmra.mxu0 %v7095
      %v7283 = vpop.f32.mrf.mxu0
      %v7284 = vadd.f32 0.0, %v7283
      %v7285 = vpop.f32.mrf.mxu0
      %7286 = vmatprep.mubr.f32.mxu0 0.0
      %7287 = vmatmul.mubr.f32.gmra.mxu0 %v7098
      %v7288 = vpop.f32.mrf.mxu0
      %v7289 = vadd.f32 0.0, %v7288
      %v7290 = vpop.f32.mrf.mxu0
      %7291 = vmatprep.mubr.f32.mxu0 0.0
      %7292 = vmatmul.mubr.f32.gmra.mxu0 %v7101
      %v7293 = vpop.f32.mrf.mxu0
      %v7294 = vadd.f32 0.0, %v7293
      %v7295 = vpop.f32.mrf.mxu0
      %7296 = vmatprep.mubr.f32.mxu0 0.0
      %7297 = vmatmul.mubr.f32.gmra.mxu0 %v7104
      %v7298 = vpop.f32.mrf.mxu0
      %v7299 = vadd.f32 0.0, %v7298
      %v7300 = vpop.f32.mrf.mxu0
      %7301 = vmatprep.mubr.f32.mxu0 0.0
      %7302 = vmatmul.mubr.f32.gmra.mxu0 %v7107
      %v7303 = vpop.f32.mrf.mxu0
      %v7304 = vadd.f32 0.0, %v7303
      %v7305 = vpop.f32.mrf.mxu0
      %7306 = vmatprep.mubr.f32.mxu0 0.0
      %7307 = vmatmul.mubr.f32.gmra.mxu0 %v7110
      %v7308 = vpop.f32.mrf.mxu0
      %v7309 = vadd.f32 0.0, %v7308
      %v7310 = vpop.f32.mrf.mxu0
      %7311 = vmatprep.mubr.f32.mxu0 0.0
      %7312 = vmatmul.mubr.f32.gmra.mxu0 %v7113
      %v7313 = vpop.f32.mrf.mxu0
      %v7314 = vadd.f32 0.0, %v7313
      %v7315 = vpop.f32.mrf.mxu0
      %7316 = vmatprep.mubr.f32.mxu0 0.0
      %7317 = vmatmul.mubr.f32.gmra.mxu0 %v7116
      %v7318 = vpop.f32.mrf.mxu0
      %v7319 = vadd.f32 0.0, %v7318
      %v7320 = vpop.f32.mrf.mxu0
      %7321 = vmatprep.mubr.f32.mxu0 0.0
      %7322 = vmatmul.mubr.f32.gmra.mxu0 %v7119
      %v7323 = vpop.f32.mrf.mxu0
      %v7324 = vadd.f32 0.0, %v7323
      %v7325 = vpop.f32.mrf.mxu0
      %7326 = vmatprep.mubr.f32.mxu0 0.0
      %7327 = vmatmul.mubr.f32.gmra.mxu0 %v7122
      %v7328 = vpop.f32.mrf.mxu0
      %v7329 = vadd.f32 0.0, %v7328
      %v7330 = vpop.f32.mrf.mxu0
      %7331 = vmatprep.mubr.f32.mxu0 0.0
      %7332 = vmatmul.mubr.f32.gmra.mxu0 %v7125
      %v7333 = vpop.f32.mrf.mxu0
      %v7334 = vadd.f32 0.0, %v7333
      %v7335 = vpop.f32.mrf.mxu0
      %7336 = vmatprep.mubr.f32.mxu0 0.0
      %7337 = vmatmul.mubr.f32.gmra.mxu0 %v7128
      %v7338 = vpop.f32.mrf.mxu0
      %v7339 = vadd.f32 0.0, %v7338
      %v7340 = vpop.f32.mrf.mxu0
      %7341 = vmatprep.mubr.f32.mxu0 0.0
      %7342 = vmatmul.mubr.f32.gmra.mxu0 %v7131
      %v7343 = vpop.f32.mrf.mxu0
      %v7344 = vadd.f32 0.0, %v7343
      %v7345 = vpop.f32.mrf.mxu0
      %7346 = vmatprep.mubr.f32.mxu0 0.0
      %7347 = vmatmul.mubr.f32.gmra.mxu0 %v7134
      %v7348 = vpop.f32.mrf.mxu0
      %v7349 = vadd.f32 0.0, %v7348
      %v7350 = vpop.f32.mrf.mxu0
      %7351 = vmatprep.mubr.f32.mxu0 0.0
      %7352 = vmatmul.mubr.f32.gmra.mxu0 %v7137
      %v7353 = vpop.f32.mrf.mxu0
      %v7354 = vadd.f32 0.0, %v7353
      %v7355 = vpop.f32.mrf.mxu0
      %7356 = vmatprep.mubr.f32.mxu0 0.0
      %7357 = vmatmul.mubr.f32.gmra.mxu0 %v7140
      %v7358 = vpop.f32.mrf.mxu0
      %v7359 = vadd.f32 0.0, %v7358
      %v7360 = vpop.f32.mrf.mxu0
      %7361 = vmatprep.mubr.f32.mxu0 0.0
      %7362 = vmatmul.mubr.f32.gmra.mxu0 %v7143
      %v7363 = vpop.f32.mrf.mxu0
      %v7364 = vadd.f32 0.0, %v7363
      %v7365 = vpop.f32.mrf.mxu0
      %7366 = vmatprep.mubr.f32.mxu0 0.0
      %7367 = vmatmul.mubr.f32.gmra.mxu0 %v7146
      %v7368 = vpop.f32.mrf.mxu0
      %v7369 = vadd.f32 0.0, %v7368
      %v7370 = vpop.f32.mrf.mxu0
      %7371 = vmatprep.mubr.f32.mxu0 0.0
      %7372 = vmatmul.mubr.f32.gmra.mxu0 %v7149
      %v7373 = vpop.f32.mrf.mxu0
      %v7374 = vadd.f32 0.0, %v7373
      %v7375 = vpop.f32.mrf.mxu0
      %7376 = vmatprep.mubr.f32.mxu0 0.0
      %7377 = vmatmul.mubr.f32.gmra.mxu0 %v7152
      %v7378 = vpop.f32.mrf.mxu0
      %v7379 = vadd.f32 0.0, %v7378
      %v7380 = vpop.f32.mrf.mxu0
      %7381 = vdwg.mxu0
      %v7382 = vadd.f32 %v6992, %v7224
      %v7383 = vadd.f32 %v6993, %v7229
      %v7384 = vadd.f32 %v6994, %v7234
      %v7385 = vadd.f32 %v6995, %v7239
      %v7386 = vadd.f32 %v6996, %v7244
      %v7387 = vadd.f32 %v6997, %v7249
      %v7388 = vadd.f32 %v6998, %v7254
      %v7389 = vadd.f32 %v6999, %v7259
      %v7390 = vadd.f32 %v7000, %v7264
      %v7391 = vadd.f32 %v7001, %v7269
      %v7392 = vadd.f32 %v7002, %v7274
      %v7393 = vadd.f32 %v7003, %v7279
      %v7394 = vadd.f32 %v7004, %v7284
      %v7395 = vadd.f32 %v7005, %v7289
      %v7396 = vadd.f32 %v7006, %v7294
      %v7397 = vadd.f32 %v7007, %v7299
      %v7398 = vadd.f32 %v7008, %v7304
      %v7399 = vadd.f32 %v7009, %v7309
      %v7400 = vadd.f32 %v7010, %v7314
      %v7401 = vadd.f32 %v7011, %v7319
      %v7402 = vadd.f32 %v7012, %v7324
      %v7403 = vadd.f32 %v7013, %v7329
      %v7404 = vadd.f32 %v7014, %v7334
      %v7405 = vadd.f32 %v7015, %v7339
      %v7406 = vadd.f32 %v7016, %v7344
      %v7407 = vadd.f32 %v7017, %v7349
      %v7408 = vadd.f32 %v7018, %v7354
      %v7409 = vadd.f32 %v7019, %v7359
      %v7410 = vadd.f32 %v7020, %v7364
      %v7411 = vadd.f32 %v7021, %v7369
      %v7412 = vadd.f32 %v7022, %v7374
      %v7413 = vadd.f32 %v7023, %v7379
      %v7414 = vsel %vm171, %v7382, 0.0
      %v7415 = vsel %vm171, %v7383, 0.0
      %v7416 = vadd.f32 %v7414, %v7415
      %v7417 = vsel %vm171, %v7384, 0.0
      %v7418 = vadd.f32 %v7416, %v7417
      %v7419 = vsel %vm171, %v7385, 0.0
      %v7420 = vadd.f32 %v7418, %v7419
      %v7421 = vsel %vm171, %v7386, 0.0
      %v7422 = vadd.f32 %v7420, %v7421
      %v7423 = vsel %vm171, %v7387, 0.0
      %v7424 = vadd.f32 %v7422, %v7423
      %v7425 = vsel %vm171, %v7388, 0.0
      %v7426 = vadd.f32 %v7424, %v7425
      %v7427 = vsel %vm171, %v7389, 0.0
      %v7428 = vadd.f32 %v7426, %v7427
      %v7429 = vsel %vm171, %v7390, 0.0
      %v7430 = vadd.f32 %v7428, %v7429
      %v7431 = vsel %vm171, %v7391, 0.0
      %v7432 = vadd.f32 %v7430, %v7431
      %v7433 = vsel %vm171, %v7392, 0.0
      %v7434 = vadd.f32 %v7432, %v7433
      %v7435 = vsel %vm171, %v7393, 0.0
      %v7436 = vadd.f32 %v7434, %v7435
      %v7437 = vsel %vm171, %v7394, 0.0
      %v7438 = vadd.f32 %v7436, %v7437
      %v7439 = vsel %vm171, %v7395, 0.0
      %v7440 = vadd.f32 %v7438, %v7439
      %v7441 = vsel %vm171, %v7396, 0.0
      %v7442 = vadd.f32 %v7440, %v7441
      %v7443 = vsel %vm171, %v7397, 0.0
      %v7444 = vadd.f32 %v7442, %v7443
      %v7445 = vsel %vm171, %v7398, 0.0
      %v7446 = vadd.f32 %v7444, %v7445
      %v7447 = vsel %vm171, %v7399, 0.0
      %v7448 = vadd.f32 %v7446, %v7447
      %v7449 = vsel %vm171, %v7400, 0.0
      %v7450 = vadd.f32 %v7448, %v7449
      %v7451 = vsel %vm171, %v7401, 0.0
      %v7452 = vadd.f32 %v7450, %v7451
      %v7453 = vsel %vm171, %v7402, 0.0
      %v7454 = vadd.f32 %v7452, %v7453
      %v7455 = vsel %vm171, %v7403, 0.0
      %v7456 = vadd.f32 %v7454, %v7455
      %v7457 = vsel %vm171, %v7404, 0.0
      %v7458 = vadd.f32 %v7456, %v7457
      %v7459 = vsel %vm171, %v7405, 0.0
      %v7460 = vadd.f32 %v7458, %v7459
      %v7461 = vsel %vm171, %v7406, 0.0
      %v7462 = vadd.f32 %v7460, %v7461
      %v7463 = vsel %vm171, %v7407, 0.0
      %v7464 = vadd.f32 %v7462, %v7463
      %v7465 = vsel %vm171, %v7408, 0.0
      %v7466 = vadd.f32 %v7464, %v7465
      %v7467 = vsel %vm171, %v7409, 0.0
      %v7468 = vadd.f32 %v7466, %v7467
      %v7469 = vsel %vm171, %v7410, 0.0
      %v7470 = vadd.f32 %v7468, %v7469
      %v7471 = vsel %vm171, %v7411, 0.0
      %v7472 = vadd.f32 %v7470, %v7471
      %v7473 = vsel %vm171, %v7412, 0.0
      %v7474 = vadd.f32 %v7472, %v7473
      %v7475 = vsel %vm171, %v7413, 0.0
      %v7476 = vadd.f32 %v7474, %v7475
      %v7477 = vrot.slane %v7476, 4
      %v7478 = vadd.f32 %v7476, %v7477
      %v7479 = vrot.slane %v7478, 2
      %v7480 = vadd.f32 %v7478, %v7479
      %v7481 = vrot.slane %v7480, 1
      %v7482 = vadd.f32 %v7480, %v7481
      %v7483 = vmul.f32 %v7482, 0.00390625
      %v7484 = vsub.f32 %v7382, %v7483
      %v7485 = vsub.f32 %v7383, %v7483
      %v7486 = vsub.f32 %v7384, %v7483
      %v7487 = vsub.f32 %v7385, %v7483
      %v7488 = vsub.f32 %v7386, %v7483
      %v7489 = vsub.f32 %v7387, %v7483
      %v7490 = vsub.f32 %v7388, %v7483
      %v7491 = vsub.f32 %v7389, %v7483
      %v7492 = vsub.f32 %v7390, %v7483
      %v7493 = vsub.f32 %v7391, %v7483
      %v7494 = vsub.f32 %v7392, %v7483
      %v7495 = vsub.f32 %v7393, %v7483
      %v7496 = vsub.f32 %v7394, %v7483
      %v7497 = vsub.f32 %v7395, %v7483
      %v7498 = vsub.f32 %v7396, %v7483
      %v7499 = vsub.f32 %v7397, %v7483
      %v7500 = vsub.f32 %v7398, %v7483
      %v7501 = vsub.f32 %v7399, %v7483
      %v7502 = vsub.f32 %v7400, %v7483
      %v7503 = vsub.f32 %v7401, %v7483
      %v7504 = vsub.f32 %v7402, %v7483
      %v7505 = vsub.f32 %v7403, %v7483
      %v7506 = vsub.f32 %v7404, %v7483
      %v7507 = vsub.f32 %v7405, %v7483
      %v7508 = vsub.f32 %v7406, %v7483
      %v7509 = vsub.f32 %v7407, %v7483
      %v7510 = vsub.f32 %v7408, %v7483
      %v7511 = vsub.f32 %v7409, %v7483
      %v7512 = vsub.f32 %v7410, %v7483
      %v7513 = vsub.f32 %v7411, %v7483
      %v7514 = vsub.f32 %v7412, %v7483
      %v7515 = vsub.f32 %v7413, %v7483
      %v7516 = vmul.f32 %v7484, %v7484
      %v7517 = vmul.f32 %v7485, %v7485
      %v7518 = vmul.f32 %v7486, %v7486
      %v7519 = vmul.f32 %v7487, %v7487
      %v7520 = vmul.f32 %v7488, %v7488
      %v7521 = vmul.f32 %v7489, %v7489
      %v7522 = vmul.f32 %v7490, %v7490
      %v7523 = vmul.f32 %v7491, %v7491
      %v7524 = vmul.f32 %v7492, %v7492
      %v7525 = vmul.f32 %v7493, %v7493
      %v7526 = vmul.f32 %v7494, %v7494
      %v7527 = vmul.f32 %v7495, %v7495
      %v7528 = vmul.f32 %v7496, %v7496
      %v7529 = vmul.f32 %v7497, %v7497
      %v7530 = vmul.f32 %v7498, %v7498
      %v7531 = vmul.f32 %v7499, %v7499
      %v7532 = vmul.f32 %v7500, %v7500
      %v7533 = vmul.f32 %v7501, %v7501
      %v7534 = vmul.f32 %v7502, %v7502
      %v7535 = vmul.f32 %v7503, %v7503
      %v7536 = vmul.f32 %v7504, %v7504
      %v7537 = vmul.f32 %v7505, %v7505
      %v7538 = vmul.f32 %v7506, %v7506
      %v7539 = vmul.f32 %v7507, %v7507
      %v7540 = vmul.f32 %v7508, %v7508
      %v7541 = vmul.f32 %v7509, %v7509
      %v7542 = vmul.f32 %v7510, %v7510
      %v7543 = vmul.f32 %v7511, %v7511
      %v7544 = vmul.f32 %v7512, %v7512
      %v7545 = vmul.f32 %v7513, %v7513
      %v7546 = vmul.f32 %v7514, %v7514
      %v7547 = vmul.f32 %v7515, %v7515
      %v7548 = vsel %vm171, %v7516, 0.0
      %v7549 = vsel %vm171, %v7517, 0.0
      %v7550 = vadd.f32 %v7548, %v7549
      %v7551 = vsel %vm171, %v7518, 0.0
      %v7552 = vadd.f32 %v7550, %v7551
      %v7553 = vsel %vm171, %v7519, 0.0
      %v7554 = vadd.f32 %v7552, %v7553
      %v7555 = vsel %vm171, %v7520, 0.0
      %v7556 = vadd.f32 %v7554, %v7555
      %v7557 = vsel %vm171, %v7521, 0.0
      %v7558 = vadd.f32 %v7556, %v7557
      %v7559 = vsel %vm171, %v7522, 0.0
      %v7560 = vadd.f32 %v7558, %v7559
      %v7561 = vsel %vm171, %v7523, 0.0
      %v7562 = vadd.f32 %v7560, %v7561
      %v7563 = vsel %vm171, %v7524, 0.0
      %v7564 = vadd.f32 %v7562, %v7563
      %v7565 = vsel %vm171, %v7525, 0.0
      %v7566 = vadd.f32 %v7564, %v7565
      %v7567 = vsel %vm171, %v7526, 0.0
      %v7568 = vadd.f32 %v7566, %v7567
      %v7569 = vsel %vm171, %v7527, 0.0
      %v7570 = vadd.f32 %v7568, %v7569
      %v7571 = vsel %vm171, %v7528, 0.0
      %v7572 = vadd.f32 %v7570, %v7571
      %v7573 = vsel %vm171, %v7529, 0.0
      %v7574 = vadd.f32 %v7572, %v7573
      %v7575 = vsel %vm171, %v7530, 0.0
      %v7576 = vadd.f32 %v7574, %v7575
      %v7577 = vsel %vm171, %v7531, 0.0
      %v7578 = vadd.f32 %v7576, %v7577
      %v7579 = vsel %vm171, %v7532, 0.0
      %v7580 = vadd.f32 %v7578, %v7579
      %v7581 = vsel %vm171, %v7533, 0.0
      %v7582 = vadd.f32 %v7580, %v7581
      %v7583 = vsel %vm171, %v7534, 0.0
      %v7584 = vadd.f32 %v7582, %v7583
      %v7585 = vsel %vm171, %v7535, 0.0
      %v7586 = vadd.f32 %v7584, %v7585
      %v7587 = vsel %vm171, %v7536, 0.0
      %v7588 = vadd.f32 %v7586, %v7587
      %v7589 = vsel %vm171, %v7537, 0.0
      %v7590 = vadd.f32 %v7588, %v7589
      %v7591 = vsel %vm171, %v7538, 0.0
      %v7592 = vadd.f32 %v7590, %v7591
      %v7593 = vsel %vm171, %v7539, 0.0
      %v7594 = vadd.f32 %v7592, %v7593
      %v7595 = vsel %vm171, %v7540, 0.0
      %v7596 = vadd.f32 %v7594, %v7595
      %v7597 = vsel %vm171, %v7541, 0.0
      %v7598 = vadd.f32 %v7596, %v7597
      %v7599 = vsel %vm171, %v7542, 0.0
      %v7600 = vadd.f32 %v7598, %v7599
      %v7601 = vsel %vm171, %v7543, 0.0
      %v7602 = vadd.f32 %v7600, %v7601
      %v7603 = vsel %vm171, %v7544, 0.0
      %v7604 = vadd.f32 %v7602, %v7603
      %v7605 = vsel %vm171, %v7545, 0.0
      %v7606 = vadd.f32 %v7604, %v7605
      %v7607 = vsel %vm171, %v7546, 0.0
      %v7608 = vadd.f32 %v7606, %v7607
      %v7609 = vsel %vm171, %v7547, 0.0
      %v7610 = vadd.f32 %v7608, %v7609
      %v7611 = vrot.slane %v7610, 4
      %v7612 = vadd.f32 %v7610, %v7611
      %v7613 = vrot.slane %v7612, 2
      %v7614 = vadd.f32 %v7612, %v7613
      %v7615 = vrot.slane %v7614, 1
      %v7616 = vadd.f32 %v7614, %v7615
      %v7617 = vmul.f32 %v7616, 0.00390625
      %v7618 = vadd.f32 %v7617, 1e-05
      %v7619 = vrsqrt.pop %v7618
      %v7620 = vmul.f32 %v7484, %v7619
      %v7621 = vmul.f32 %v7485, %v7619
      %v7622 = vmul.f32 %v7486, %v7619
      %v7623 = vmul.f32 %v7487, %v7619
      %v7624 = vmul.f32 %v7488, %v7619
      %v7625 = vmul.f32 %v7489, %v7619
      %v7626 = vmul.f32 %v7490, %v7619
      %v7627 = vmul.f32 %v7491, %v7619
      %v7628 = vmul.f32 %v7492, %v7619
      %v7629 = vmul.f32 %v7493, %v7619
      %v7630 = vmul.f32 %v7494, %v7619
      %v7631 = vmul.f32 %v7495, %v7619
      %v7632 = vmul.f32 %v7496, %v7619
      %v7633 = vmul.f32 %v7497, %v7619
      %v7634 = vmul.f32 %v7498, %v7619
      %v7635 = vmul.f32 %v7499, %v7619
      %v7636 = vmul.f32 %v7500, %v7619
      %v7637 = vmul.f32 %v7501, %v7619
      %v7638 = vmul.f32 %v7502, %v7619
      %v7639 = vmul.f32 %v7503, %v7619
      %v7640 = vmul.f32 %v7504, %v7619
      %v7641 = vmul.f32 %v7505, %v7619
      %v7642 = vmul.f32 %v7506, %v7619
      %v7643 = vmul.f32 %v7507, %v7619
      %v7644 = vmul.f32 %v7508, %v7619
      %v7645 = vmul.f32 %v7509, %v7619
      %v7646 = vmul.f32 %v7510, %v7619
      %v7647 = vmul.f32 %v7511, %v7619
      %v7648 = vmul.f32 %v7512, %v7619
      %v7649 = vmul.f32 %v7513, %v7619
      %v7650 = vmul.f32 %v7514, %v7619
      %v7651 = vmul.f32 %v7515, %v7619
      %v7652 = vadd.f32 %v218, %v7620
      %v7653 = vadd.f32 %v219, %v7621
      %v7654 = vadd.f32 %v220, %v7622
      %v7655 = vadd.f32 %v221, %v7623
      %v7656 = vadd.f32 %v222, %v7624
      %v7657 = vadd.f32 %v223, %v7625
      %v7658 = vadd.f32 %v224, %v7626
      %v7659 = vadd.f32 %v225, %v7627
      %v7660 = vadd.f32 %v226, %v7628
      %v7661 = vadd.f32 %v227, %v7629
      %v7662 = vadd.f32 %v228, %v7630
      %v7663 = vadd.f32 %v229, %v7631
      %v7664 = vadd.f32 %v230, %v7632
      %v7665 = vadd.f32 %v231, %v7633
      %v7666 = vadd.f32 %v232, %v7634
      %v7667 = vadd.f32 %v233, %v7635
      %v7668 = vadd.f32 %v234, %v7636
      %v7669 = vadd.f32 %v235, %v7637
      %v7670 = vadd.f32 %v236, %v7638
      %v7671 = vadd.f32 %v237, %v7639
      %v7672 = vadd.f32 %v238, %v7640
      %v7673 = vadd.f32 %v239, %v7641
      %v7674 = vadd.f32 %v240, %v7642
      %v7675 = vadd.f32 %v241, %v7643
      %v7676 = vadd.f32 %v242, %v7644
      %v7677 = vadd.f32 %v243, %v7645
      %v7678 = vadd.f32 %v244, %v7646
      %v7679 = vadd.f32 %v245, %v7647
      %v7680 = vadd.f32 %v246, %v7648
      %v7681 = vadd.f32 %v247, %v7649
      %v7682 = vadd.f32 %v248, %v7650
      %v7683 = vadd.f32 %v249, %v7651
      %7684 = vst.msk [vmem:[%s170] sm:$0xff] %vm171, %v7652
      %7685 = vst.msk [vmem:[%s170 + $0x8] sm:$0xff] %vm171, %v7653
      %7686 = vst.msk [vmem:[%s170 + $0x10] sm:$0xff] %vm171, %v7654
      %7687 = vst.msk [vmem:[%s170 + $0x18] sm:$0xff] %vm171, %v7655
      %7688 = vst.msk [vmem:[%s170 + $0x20] sm:$0xff] %vm171, %v7656
      %7689 = vst.msk [vmem:[%s170 + $0x28] sm:$0xff] %vm171, %v7657
      %7690 = vst.msk [vmem:[%s170 + $0x30] sm:$0xff] %vm171, %v7658
      %7691 = vst.msk [vmem:[%s170 + $0x38] sm:$0xff] %vm171, %v7659
      %7692 = vst.msk [vmem:[%s170 + $0x40] sm:$0xff] %vm171, %v7660
      %7693 = vst.msk [vmem:[%s170 + $0x48] sm:$0xff] %vm171, %v7661
      %7694 = vst.msk [vmem:[%s170 + $0x50] sm:$0xff] %vm171, %v7662
      %7695 = vst.msk [vmem:[%s170 + $0x58] sm:$0xff] %vm171, %v7663
      %7696 = vst.msk [vmem:[%s170 + $0x60] sm:$0xff] %vm171, %v7664
      %7697 = vst.msk [vmem:[%s170 + $0x68] sm:$0xff] %vm171, %v7665
      %7698 = vst.msk [vmem:[%s170 + $0x70] sm:$0xff] %vm171, %v7666
      %7699 = vst.msk [vmem:[%s170 + $0x78] sm:$0xff] %vm171, %v7667
      %7700 = vst.msk [vmem:[%s170 + $0x80] sm:$0xff] %vm171, %v7668
      %7701 = vst.msk [vmem:[%s170 + $0x88] sm:$0xff] %vm171, %v7669
      %7702 = vst.msk [vmem:[%s170 + $0x90] sm:$0xff] %vm171, %v7670
      %7703 = vst.msk [vmem:[%s170 + $0x98] sm:$0xff] %vm171, %v7671
      %7704 = vst.msk [vmem:[%s170 + $0xa0] sm:$0xff] %vm171, %v7672
      %7705 = vst.msk [vmem:[%s170 + $0xa8] sm:$0xff] %vm171, %v7673
      %7706 = vst.msk [vmem:[%s170 + $0xb0] sm:$0xff] %vm171, %v7674
      %7707 = vst.msk [vmem:[%s170 + $0xb8] sm:$0xff] %vm171, %v7675
      %7708 = vst.msk [vmem:[%s170 + $0xc0] sm:$0xff] %vm171, %v7676
      %7709 = vst.msk [vmem:[%s170 + $0xc8] sm:$0xff] %vm171, %v7677
      %7710 = vst.msk [vmem:[%s170 + $0xd0] sm:$0xff] %vm171, %v7678
      %7711 = vst.msk [vmem:[%s170 + $0xd8] sm:$0xff] %vm171, %v7679
      %7712 = vst.msk [vmem:[%s170 + $0xe0] sm:$0xff] %vm171, %v7680
      %7713 = vst.msk [vmem:[%s170 + $0xe8] sm:$0xff] %vm171, %v7681
      %7714 = vst.msk [vmem:[%s170 + $0xf0] sm:$0xff] %vm171, %v7682
      %7715 = vst.msk [vmem:[%s170 + $0xf8] sm:$0xff] %vm171, %v7683
      %p7716 = scmp.lt.s32.totalorder %s14, 1
      %s7717 = scalar_select %p7716, %s14, 1
      %s7718 = smul.addr %s7717, 32
      %s7719 = smul.addr %s7718, 8
      %s7720 = scalar_lea.vmem %s3, %s7719
      // Predicated region
      $region33: #{tpu_custom_call.1} parent=31 // pred_check
        %p7721 = pneg %p100
      $region34: #{tpu_custom_call.1} parent=31 // pred_check_branch
        %7723 = sbr.rel (%p7721) target = $region36
      $region35: #{tpu_custom_call.1} parent=31 // pred_region
        _
      $region36: #{tpu_custom_call.1} parent=31 // pred_fallthru
        _
    $region32: #{tpu_custom_call.1} parent=5 // pred_fallthru
      _
    %p7724 = scmp.le.s32.totalorder 2, %s9
    // Predicated region
    $region37: #{tpu_custom_call.1} parent=5 // pred_check
      %p7725 = pneg %p7724
    $region38: #{tpu_custom_call.1} parent=5 // pred_check_branch
      %7727 = sbr.rel (%p7725) target = $region40
    $region39: #{tpu_custom_call.1} parent=5 // pred_region
      %s7728 = ssub.s32 %s9, 2
      // Predicated region
      $region41: #{tpu_custom_call.1} parent=39 // pred_check
        %p7729 = pneg %p106
      $region42: #{tpu_custom_call.1} parent=39 // pred_check_branch
        %7731 = sbr.rel (%p7729) target = $region44
      $region43: #{tpu_custom_call.1} parent=39 // pred_region
        %p7732 = scmp.lt.s32.totalorder %s15, 1
        %s7733 = scalar_select %p7732, %s15, 1
        %s7734 = smul.addr %s7733, 32
        %s7735 = smul.addr %s7734, 8
        %s7736 = scalar_lea.vmem %s3, %s7735
      $region44: #{tpu_custom_call.1} parent=39 // pred_fallthru
        _
    $region40: #{tpu_custom_call.1} parent=5 // pred_fallthru
      _
  $region6: #{tpu_custom_call.1} parent=0 // loop_footer
    %s13 = sadd.s32 1, %s9
  $region7: #{tpu_custom_call.1} parent=0 // loop_footer_branch
    %8 = sbr.rel target = $region3
  $region8: #{tpu_custom_call.1} parent=0 // loop_exit
    _

</llo_original>
